<compile_context>
chip_gen: v5e
topology: v5e:2x2
jax: 0.10.0
libtpu: 0.0.40
codegen_flags: <defaults>
</compile_context>

<pallas_src>
import functools

import jax
import jax.numpy as jnp
from jax.experimental import pallas as pl
from jax.experimental.pallas import tpu as pltpu

# ---------------- config (mirrors elmo_embed's config, TPU-friendly sizes) ----------------
B = 2            # batch
T = 8            # tokens per sentence, incl. <bos>/<eos>
MAX_CHARS = 8
CHAR_DIM = 16
WORD_DIM = 16
FILTERS = ((1, 32), (2, 32), (3, 64))     # (width, n_filters) -> 128 total (lane-dense)
MAX_WIDTH = max(w for w, _ in FILTERS)
N_FILTERS = sum(c for _, c in FILTERS)    # 128
N_HIGHWAY = 2
PROJ_DIM = 128                            # projection_dim (lane-aligned)
ENCODE_DIM = 128                          # LSTM hidden size (lane-aligned gate slices)
ENCODE_LAYERS = 2
CELL_CLIP = 3.0
PROJ_CLIP = 3.0
CHAR_VOCAB = 64
WORD_VOCAB = 128


# ============================= fused Pallas kernel =============================

def _elmo_fused_kernel(win_ref, we_ref, conv_w_ref, conv_b_ref, pool_mask_ref,
                       hw_wt_ref, hw_bt_ref, hw_wh_ref, hw_bh_ref,
                       pww_ref, pwc_ref, pb_ref,
                       wih_ref, whh_ref, b_ref, wp_ref,
                       out_ref,
                       gxf_ref, gxb_ref, y0f_ref, y0b_ref,
                       *, t_len, b_sz, cell_clip, proj_clip):
    """Whole ELMo forward in one kernel.

    win:  [N*MAX_CHARS, MAX_WIDTH*CHAR_DIM]   im2col'd char embeddings (time-major tokens)
    we:   [N, WORD_DIM]                       word embeddings (time-major)
    conv_w/conv_b/pool_mask: fused char-conv weights / bias / valid-position mask
    hw_*: highway params; pww/pwc/pb: projection split into word / char parts
    wih:  [4, P, 4H]  (0=l0 fwd, 1=l0 bwd, 2=l1 fwd, 3=l1 bwd), bf16
    whh:  [2, 2P, 4H] per layer, fwd rows stacked over bwd rows, bf16
    b:    [4, 1, 4H] f32 ; wp: [2, 2H, P] per layer (fwd over bwd), bf16
    out:  [N, 2P]  (fwd output in lanes 0:P, bwd in P:2P), layer-1 + skip
    scratch: gxf/gxb [N, 4H] f32 (hoisted input-side gates), y0f/y0b [N, P] f32
    """
    N = t_len * b_sz
    H = ENCODE_DIM
    P = PROJ_DIM

    # ---------------- char-CNN: one dense MXU push (im2col done in wrapper) ----------------
    s = jnp.dot(win_ref[...].astype(jnp.bfloat16), conv_w_ref[...],
                preferred_element_type=jnp.float32)                 # [N*L, C]
    s = jnp.maximum(s + conv_b_ref[...], 0.0)                       # relu
    s = s.reshape(N, MAX_CHARS, N_FILTERS)
    # Max-over-time pool; invalid conv positions contribute 0 (safe only because relu >= 0).
    x = jnp.max(s * pool_mask_ref[...], axis=1)                     # [N, C]

    # ---------------- highway: x = g*relu(Wh x + bh) + (1-g)*x ----------------
    for l in range(N_HIGHWAY):                                      # static unroll
        xb = x.astype(jnp.bfloat16)
        g = jax.nn.sigmoid(
            jnp.dot(xb, hw_wt_ref[l], preferred_element_type=jnp.float32) + hw_bt_ref[l])
        hwy = jnp.maximum(
            jnp.dot(xb, hw_wh_ref[l], preferred_element_type=jnp.float32) + hw_bh_ref[l], 0.0)
        x = g * hwy + (1.0 - g) * x

    # ---------------- projection of concat([word, char]) == sum of two matmuls ----------------
    tok = (jnp.dot(we_ref[...].astype(jnp.bfloat16), pww_ref[...],
                   preferred_element_type=jnp.float32)
           + jnp.dot(x.astype(jnp.bfloat16), pwc_ref[...],
                     preferred_element_type=jnp.float32)
           + pb_ref[...])                                           # [N, P] time-major

    # ---------------- bi-LSTM encoder ----------------
    # Block-diag selection mask: rows 0:B keep lanes 0:H (fwd), rows B:2B keep lanes H:2H (bwd).
    row = jax.lax.broadcasted_iota(jnp.int32, (2 * b_sz, 2 * H), 0)
    col = jax.lax.broadcasted_iota(jnp.int32, (2 * b_sz, 2 * H), 1)
    bd_mask = (row < b_sz) == (col < H)

    def fused_step(gx, h_prev, c_prev, layer):
        # gx: [2B,4H] precomputed x@Wih+b (rows 0:B = fwd @t, B:2B = bwd @T-1-t)
        # h_prev/c_prev: [2B,H] f32 combined fwd/bwd state.
        hh = jnp.concatenate([h_prev, h_prev], axis=-1)             # [2B, 2H]
        bd = jnp.where(bd_mask, hh, 0.0).astype(jnp.bfloat16)       # [[h_f,0],[0,h_b]]
        gates = gx + jnp.dot(bd, whh_ref[layer],                    # one K=2H push, both dirs
                             preferred_element_type=jnp.float32)    # [2B, 4H]
        i_g = jax.nn.sigmoid(gates[:, 0:H])                         # 128-lane aligned slices
        f_g = jax.nn.sigmoid(gates[:, H:2 * H])
        g_g = jnp.tanh(gates[:, 2 * H:3 * H])
        o_g = jax.nn.sigmoid(gates[:, 3 * H:4 * H])
        c = jnp.clip(f_g * c_prev + i_g * g_g, -cell_clip, cell_clip)
        ct = o_g * jnp.tanh(c)                                      # [2B, H]
        cc = jnp.concatenate([ct, ct], axis=-1)
        bd2 = jnp.where(bd_mask, cc, 0.0).astype(jnp.bfloat16)
        h = jnp.clip(jnp.dot(bd2, wp_ref[layer],                    # fused projection
                             preferred_element_type=jnp.float32),
                     -proj_clip, proj_clip)                         # [2B, P]
        return h, c

    def gate_gemm(src_f, src_b, i_f, i_b):
        # Input-side gate GEMM hoisted out of the recurrence (one M=T*B matmul per direction).
        gxf_ref[...] = (jnp.dot(src_f.astype(jnp.bfloat16), wih_ref[i_f],
                                preferred_element_type=jnp.float32) + b_ref[i_f])
        gxb_ref[...] = (jnp.dot(src_b.astype(jnp.bfloat16), wih_ref[i_b],
                                preferred_element_type=jnp.float32) + b_ref[i_b])

    def run_layer(layer):
        h = jnp.zeros((2 * b_sz, H), jnp.float32)
        c = jnp.zeros((2 * b_sz, H), jnp.float32)
        yf = [None] * t_len
        yb = [None] * t_len
        for t in range(t_len):                                      # static unroll (T small)
            tb = t_len - 1 - t
            gx = jnp.concatenate([gxf_ref[pl.ds(t * b_sz, b_sz), :],
                                  gxb_ref[pl.ds(tb * b_sz, b_sz), :]], axis=0)
            h, c = fused_step(gx, h, c, layer)
            yf[t] = h[0:b_sz]
            yb[tb] = h[b_sz:2 * b_sz]
        return jnp.concatenate(yf, axis=0), jnp.concatenate(yb, axis=0)   # [N,P] each

    # ---- layer 0 ----
    gate_gemm(tok, tok, 0, 1)
    y0f, y0b = run_layer(0)
    y0f_ref[...] = y0f                                              # dense slab stores
    y0b_ref[...] = y0b

    # ---- layer 1 (ELMo skip connection), single dense lane-aligned output store ----
    gate_gemm(y0f_ref[...], y0b_ref[...], 2, 3)
    y1f, y1b = run_layer(1)
    out_ref[...] = jnp.concatenate([y1f + y0f_ref[...],
                                    y1b + y0b_ref[...]], axis=-1)   # [N, 2P]


# ============================= wrapper =============================

def elmo_pallas(win, we, p):
    N = T * B
    kernel = functools.partial(_elmo_fused_kernel, t_len=T, b_sz=B,
                               cell_clip=CELL_CLIP, proj_clip=PROJ_CLIP)
    return pl.pallas_call(
        kernel,
        out_shape=jax.ShapeDtypeStruct((N, 2 * PROJ_DIM), jnp.float32),
        scratch_shapes=[pltpu.VMEM((N, 4 * ENCODE_DIM), jnp.float32),   # gxf
                        pltpu.VMEM((N, 4 * ENCODE_DIM), jnp.float32),   # gxb
                        pltpu.VMEM((N, PROJ_DIM), jnp.float32),         # y0f (layer-0 fwd out)
                        pltpu.VMEM((N, PROJ_DIM), jnp.float32)],        # y0b (layer-0 bwd out)
    )(win, we, p["conv_w"], p["conv_b"], p["pool_mask"],
      p["hw_wt"], p["hw_bt"], p["hw_wh"], p["hw_bh"],
      p["proj_w_word"], p["proj_w_char"], p["proj_b"],
      p["lstm_wih"], p["lstm_whh"], p["lstm_b"], p["lstm_wp"])


# ============================= params (synthetic) =============================

def init_params(key):
    ks = jax.random.split(key, 20)
    f32, bf16 = jnp.float32, jnp.bfloat16
    p = {}
    p["char_emb"] = 0.1 * jax.random.normal(ks[0], (CHAR_VOCAB, CHAR_DIM), f32)
    p["word_emb"] = 0.1 * jax.random.normal(ks[1], (WORD_VOCAB, WORD_DIM), f32)

    # Fuse all conv filters into one [MAX_WIDTH*CHAR_DIM, N_FILTERS] weight: a width-w
    # filter's weight lives in the first w*CHAR_DIM contraction rows (zeros elsewhere),
    # and its invalid conv positions are masked out in the max-pool.
    cw_blocks, mask_cols = [], []
    for idx, (w, c) in enumerate(FILTERS):
        wgt = 0.1 * jax.random.normal(ks[2 + idx], (w * CHAR_DIM, c), f32)
        wgt = jnp.pad(wgt, ((0, (MAX_WIDTH - w) * CHAR_DIM), (0, 0)))
        cw_blocks.append(wgt)
        valid = (jnp.arange(MAX_CHARS) < (MAX_CHARS - w + 1)).astype(f32)
        mask_cols.append(jnp.tile(valid[:, None], (1, c)))
    p["conv_w"] = jnp.concatenate(cw_blocks, axis=1).astype(bf16)        # [48, 128]
    p["conv_b"] = jnp.zeros((1, N_FILTERS), f32)
    p["pool_mask"] = jnp.concatenate(mask_cols, axis=1)                  # [MAX_CHARS, 128]

    F = N_FILTERS
    p["hw_wt"] = (0.1 * jax.random.normal(ks[6], (N_HIGHWAY, F, F), f32)).astype(bf16)
    p["hw_bt"] = jnp.full((N_HIGHWAY, 1, F), -1.0, f32)                  # bias gate toward carry
    p["hw_wh"] = (0.1 * jax.random.normal(ks[7], (N_HIGHWAY, F, F), f32)).astype(bf16)
    p["hw_bh"] = jnp.zeros((N_HIGHWAY, 1, F), f32)

    # Projection of concat([word, char]) split into two weights (equivalent math).
    p["proj_w_word"] = (0.1 * jax.random.normal(ks[8], (WORD_DIM, PROJ_DIM), f32)).astype(bf16)
    p["proj_w_char"] = (0.1 * jax.random.normal(ks[9], (F, PROJ_DIM), f32)).astype(bf16)
    p["proj_b"] = jnp.zeros((1, PROJ_DIM), f32)

    # LSTM weights: wih per direction/layer; whh & wproj concatenated fwd-over-bwd per layer
    # so the in-kernel block-diag LHS does both directions in one K=2H matmul.
    wih, b, whh_cat, wp_cat = [], [], [], []
    k_i = 10
    for _layer in range(ENCODE_LAYERS):
        whh_dir, wp_dir = [], []
        for _direction in range(2):
            kk = jax.random.split(ks[k_i], 3)
            k_i += 1
            wih.append(0.1 * jax.random.normal(kk[0], (PROJ_DIM, 4 * ENCODE_DIM), f32))
            whh_dir.append(0.1 * jax.random.normal(kk[1], (PROJ_DIM, 4 * ENCODE_DIM), f32))
            b.append(jnp.zeros((1, 4 * ENCODE_DIM), f32))
            wp_dir.append(0.1 * jax.random.normal(kk[2], (ENCODE_DIM, PROJ_DIM), f32))
        whh_cat.append(jnp.concatenate(whh_dir, axis=0))                 # [2P, 4H]
        wp_cat.append(jnp.concatenate(wp_dir, axis=0))                   # [2H, P]
    p["lstm_wih"] = jnp.stack(wih).astype(bf16)                          # [4, P, 4H]
    p["lstm_whh"] = jnp.stack(whh_cat).astype(bf16)                      # [2, 2P, 4H]
    p["lstm_b"] = jnp.stack(b)                                           # [4, 1, 4H] f32
    p["lstm_wp"] = jnp.stack(wp_cat).astype(bf16)                        # [2, 2H, P]
    return p


# ============================= forward =============================

@jax.jit
def elmo_forward(params, word_ids, char_ids):
    Bsz, Tlen = word_ids.shape
    N = Bsz * Tlen

    # Time-major gathers so the token embedder emits rows already in (t*B + b) order:
    # no transpose between the CNN and the encoder.
    w_tm = jnp.transpose(word_ids, (1, 0)).reshape(N)
    c_tm = jnp.transpose(char_ids, (1, 0, 2)).reshape(N, MAX_CHARS)
    we = params["word_emb"][w_tm]                                        # [N, WORD_DIM]
    ce = params["char_emb"][c_tm]                                        # [N, MAX_CHARS, CHAR_DIM]
    ce = jnp.pad(ce, ((0, 0), (0, MAX_WIDTH - 1), (0, 0)))
    # Wrapper-side im2col: [N*MAX_CHARS, MAX_WIDTH*CHAR_DIM] (layout plumbing, not compute).
    win = jnp.concatenate([ce[:, o:o + MAX_CHARS, :] for o in range(MAX_WIDTH)],
                          axis=-1).reshape(N * MAX_CHARS, MAX_WIDTH * CHAR_DIM)

    # TODO(synk): variable-length masking / sequence packing from gen_mini_batches is not
    # implemented; the synthetic batch is full-length (mask == 1 everywhere). Dropout is a
    # no-op at inference.
    out = elmo_pallas(win, we, params)                                   # [T*B, 2P] time-major
    out = jnp.transpose(out.reshape(Tlen, Bsz, 2 * PROJ_DIM), (1, 0, 2)) # [B, T, 2P]
    return out[:, 1:-1]                                                  # strip <bos>/<eos>


# ============================= main =============================

if __name__ == "__main__":
    key = jax.random.PRNGKey(0)
    pkey, wkey, ckey = jax.random.split(key, 3)
    params = init_params(pkey)
    word_ids = jax.random.randint(wkey, (B, T), 0, WORD_VOCAB, dtype=jnp.int32)
    char_ids = jax.random.randint(ckey, (B, T, MAX_CHARS), 0, CHAR_VOCAB, dtype=jnp.int32)

    out = elmo_forward(params, word_ids, char_ids)
    out = jax.block_until_ready(out)
    assert out.shape == (B, T - 2, 2 * PROJ_DIM), out.shape
    assert bool(jnp.all(jnp.isfinite(out)))
    print("KERNEL_OK")
</pallas_src>

<mosaic_0001>
module attributes {stable_mosaic.version = 11 : i64} {
  func.func @_elmo_fused_kernel(%arg0: memref<128x48xf32, #tpu.memory_space<vmem>>, %arg1: memref<16x16xf32, #tpu.memory_space<vmem>>, %arg2: memref<48x128xbf16, #tpu.memory_space<vmem>>, %arg3: memref<1x128xf32, #tpu.memory_space<vmem>>, %arg4: memref<8x128xf32, #tpu.memory_space<vmem>>, %arg5: memref<2x128x128xbf16, #tpu.memory_space<vmem>>, %arg6: memref<2x1x128xf32, #tpu.memory_space<vmem>>, %arg7: memref<2x128x128xbf16, #tpu.memory_space<vmem>>, %arg8: memref<2x1x128xf32, #tpu.memory_space<vmem>>, %arg9: memref<16x128xbf16, #tpu.memory_space<vmem>>, %arg10: memref<128x128xbf16, #tpu.memory_space<vmem>>, %arg11: memref<1x128xf32, #tpu.memory_space<vmem>>, %arg12: memref<4x128x512xbf16, #tpu.memory_space<vmem>>, %arg13: memref<2x256x512xbf16, #tpu.memory_space<vmem>>, %arg14: memref<4x1x512xf32, #tpu.memory_space<vmem>>, %arg15: memref<2x256x128xbf16, #tpu.memory_space<vmem>>, %arg16: memref<16x256xf32, #tpu.memory_space<vmem>>, %arg17: memref<16x512xf32, #tpu.memory_space<vmem>>, %arg18: memref<16x512xf32, #tpu.memory_space<vmem>>, %arg19: memref<16x128xf32, #tpu.memory_space<vmem>>, %arg20: memref<16x128xf32, #tpu.memory_space<vmem>>) attributes {dimension_semantics = [], scalar_prefetch = 0 : i64, scratch_operands = 4 : i64, tpu.core_type = #tpu.core_type<tc>} {
    %c0 = arith.constant 0 : index
    %c0_0 = arith.constant 0 : index
    %0 = vector.load %arg0[%c0, %c0_0] : memref<128x48xf32, #tpu.memory_space<vmem>>, vector<128x48xf32>
    %1 = arith.truncf %0 : vector<128x48xf32> to vector<128x48xbf16>
    %c0_1 = arith.constant 0 : index
    %c0_2 = arith.constant 0 : index
    %2 = vector.load %arg2[%c0_1, %c0_2] : memref<48x128xbf16, #tpu.memory_space<vmem>>, vector<48x128xbf16>
    %cst = arith.constant dense<0.000000e+00> : vector<128x128xf32>
    %3 = tpu.matmul %1, %2, %cst {dimension_numbers = #tpu.dot_dimension_numbers<[1], [0], [0], [1], [0, 0, 1, 1], [], []>} : vector<128x48xbf16>, vector<48x128xbf16>, vector<128x128xf32> -> vector<128x128xf32>
    %c0_3 = arith.constant 0 : index
    %c0_4 = arith.constant 0 : index
    %4 = vector.load %arg3[%c0_3, %c0_4] : memref<1x128xf32, #tpu.memory_space<vmem>>, vector<1x128xf32>
    %5 = vector.broadcast %4 : vector<1x128xf32> to vector<128x128xf32>
    %6 = arith.addf %3, %5 : vector<128x128xf32>
    %cst_5 = arith.constant 0.000000e+00 : f32
    %7 = vector.broadcast %cst_5 : f32 to vector<128x128xf32>
    %8 = arith.maximumf %6, %7 : vector<128x128xf32>
    %9 = vector.shape_cast %8 : vector<128x128xf32> to vector<16x8x128xf32>
    %c0_6 = arith.constant 0 : index
    %c0_7 = arith.constant 0 : index
    %10 = vector.load %arg4[%c0_6, %c0_7] : memref<8x128xf32, #tpu.memory_space<vmem>>, vector<8x128xf32>
    %11 = vector.shape_cast %10 : vector<8x128xf32> to vector<1x8x128xf32>
    %12 = vector.broadcast %11 : vector<1x8x128xf32> to vector<16x8x128xf32>
    %13 = arith.mulf %9, %12 : vector<16x8x128xf32>
    %cst_8 = arith.constant dense<0xFF800000> : vector<16x128xf32>
    %14 = vector.multi_reduction <maximumf>, %13, %cst_8 [1] : vector<16x8x128xf32> to vector<16x128xf32>
    %15 = arith.truncf %14 : vector<16x128xf32> to vector<16x128xbf16>
    %c0_9 = arith.constant 0 : index
    %c0_10 = arith.constant 0 : index
    %c0_11 = arith.constant 0 : index
    %16 = vector.load %arg5[%c0_9, %c0_10, %c0_11] : memref<2x128x128xbf16, #tpu.memory_space<vmem>>, vector<1x128x128xbf16>
    %17 = vector.shape_cast %16 : vector<1x128x128xbf16> to vector<128x128xbf16>
    %cst_12 = arith.constant dense<0.000000e+00> : vector<16x128xf32>
    %18 = tpu.matmul %15, %17, %cst_12 {dimension_numbers = #tpu.dot_dimension_numbers<[1], [0], [0], [1], [0, 0, 1, 1], [], []>} : vector<16x128xbf16>, vector<128x128xbf16>, vector<16x128xf32> -> vector<16x128xf32>
    %c0_13 = arith.constant 0 : index
    %c0_14 = arith.constant 0 : index
    %c0_15 = arith.constant 0 : index
    %19 = vector.load %arg6[%c0_13, %c0_14, %c0_15] : memref<2x1x128xf32, #tpu.memory_space<vmem>>, vector<1x1x128xf32>
    %20 = vector.shape_cast %19 : vector<1x1x128xf32> to vector<1x128xf32>
    %21 = vector.broadcast %20 : vector<1x128xf32> to vector<16x128xf32>
    %22 = arith.addf %18, %21 : vector<16x128xf32>
    %23 = arith.negf %22 : vector<16x128xf32>
    %24 = math.exp %23 : vector<16x128xf32>
    %cst_16 = arith.constant 1.000000e+00 : f32
    %25 = vector.broadcast %cst_16 : f32 to vector<16x128xf32>
    %26 = arith.addf %25, %24 : vector<16x128xf32>
    %27 = arith.divf %25, %26 : vector<16x128xf32>
    %c0_17 = arith.constant 0 : index
    %c0_18 = arith.constant 0 : index
    %c0_19 = arith.constant 0 : index
    %28 = vector.load %arg7[%c0_17, %c0_18, %c0_19] : memref<2x128x128xbf16, #tpu.memory_space<vmem>>, vector<1x128x128xbf16>
    %29 = vector.shape_cast %28 : vector<1x128x128xbf16> to vector<128x128xbf16>
    %cst_20 = arith.constant dense<0.000000e+00> : vector<16x128xf32>
    %30 = tpu.matmul %15, %29, %cst_20 {dimension_numbers = #tpu.dot_dimension_numbers<[1], [0], [0], [1], [0, 0, 1, 1], [], []>} : vector<16x128xbf16>, vector<128x128xbf16>, vector<16x128xf32> -> vector<16x128xf32>
    %c0_21 = arith.constant 0 : index
    %c0_22 = arith.constant 0 : index
    %c0_23 = arith.constant 0 : index
    %31 = vector.load %arg8[%c0_21, %c0_22, %c0_23] : memref<2x1x128xf32, #tpu.memory_space<vmem>>, vector<1x1x128xf32>
    %32 = vector.shape_cast %31 : vector<1x1x128xf32> to vector<1x128xf32>
    %33 = vector.broadcast %32 : vector<1x128xf32> to vector<16x128xf32>
    %34 = arith.addf %30, %33 : vector<16x128xf32>
    %cst_24 = arith.constant 0.000000e+00 : f32
    %35 = vector.broadcast %cst_24 : f32 to vector<16x128xf32>
    %36 = arith.maximumf %34, %35 : vector<16x128xf32>
    %37 = arith.mulf %27, %36 : vector<16x128xf32>
    %cst_25 = arith.constant 1.000000e+00 : f32
    %38 = vector.broadcast %cst_25 : f32 to vector<16x128xf32>
    %39 = arith.subf %38, %27 : vector<16x128xf32>
    %40 = arith.mulf %39, %14 : vector<16x128xf32>
    %41 = arith.addf %37, %40 : vector<16x128xf32>
    %42 = arith.truncf %41 : vector<16x128xf32> to vector<16x128xbf16>
    %c1 = arith.constant 1 : index
    %c0_26 = arith.constant 0 : index
    %c0_27 = arith.constant 0 : index
    %43 = vector.load %arg5[%c1, %c0_26, %c0_27] : memref<2x128x128xbf16, #tpu.memory_space<vmem>>, vector<1x128x128xbf16>
    %44 = vector.shape_cast %43 : vector<1x128x128xbf16> to vector<128x128xbf16>
    %cst_28 = arith.constant dense<0.000000e+00> : vector<16x128xf32>
    %45 = tpu.matmul %42, %44, %cst_28 {dimension_numbers = #tpu.dot_dimension_numbers<[1], [0], [0], [1], [0, 0, 1, 1], [], []>} : vector<16x128xbf16>, vector<128x128xbf16>, vector<16x128xf32> -> vector<16x128xf32>
    %c1_29 = arith.constant 1 : index
    %c0_30 = arith.constant 0 : index
    %c0_31 = arith.constant 0 : index
    %46 = vector.load %arg6[%c1_29, %c0_30, %c0_31] : memref<2x1x128xf32, #tpu.memory_space<vmem>>, vector<1x1x128xf32>
    %47 = vector.shape_cast %46 : vector<1x1x128xf32> to vector<1x128xf32>
    %48 = vector.broadcast %47 : vector<1x128xf32> to vector<16x128xf32>
    %49 = arith.addf %45, %48 : vector<16x128xf32>
    %50 = arith.negf %49 : vector<16x128xf32>
    %51 = math.exp %50 : vector<16x128xf32>
    %cst_32 = arith.constant 1.000000e+00 : f32
    %52 = vector.broadcast %cst_32 : f32 to vector<16x128xf32>
    %53 = arith.addf %52, %51 : vector<16x128xf32>
    %54 = arith.divf %52, %53 : vector<16x128xf32>
    %c1_33 = arith.constant 1 : index
    %c0_34 = arith.constant 0 : index
    %c0_35 = arith.constant 0 : index
    %55 = vector.load %arg7[%c1_33, %c0_34, %c0_35] : memref<2x128x128xbf16, #tpu.memory_space<vmem>>, vector<1x128x128xbf16>
    %56 = vector.shape_cast %55 : vector<1x128x128xbf16> to vector<128x128xbf16>
    %cst_36 = arith.constant dense<0.000000e+00> : vector<16x128xf32>
    %57 = tpu.matmul %42, %56, %cst_36 {dimension_numbers = #tpu.dot_dimension_numbers<[1], [0], [0], [1], [0, 0, 1, 1], [], []>} : vector<16x128xbf16>, vector<128x128xbf16>, vector<16x128xf32> -> vector<16x128xf32>
    %c1_37 = arith.constant 1 : index
    %c0_38 = arith.constant 0 : index
    %c0_39 = arith.constant 0 : index
    %58 = vector.load %arg8[%c1_37, %c0_38, %c0_39] : memref<2x1x128xf32, #tpu.memory_space<vmem>>, vector<1x1x128xf32>
    %59 = vector.shape_cast %58 : vector<1x1x128xf32> to vector<1x128xf32>
    %60 = vector.broadcast %59 : vector<1x128xf32> to vector<16x128xf32>
    %61 = arith.addf %57, %60 : vector<16x128xf32>
    %cst_40 = arith.constant 0.000000e+00 : f32
    %62 = vector.broadcast %cst_40 : f32 to vector<16x128xf32>
    %63 = arith.maximumf %61, %62 : vector<16x128xf32>
    %64 = arith.mulf %54, %63 : vector<16x128xf32>
    %cst_41 = arith.constant 1.000000e+00 : f32
    %65 = vector.broadcast %cst_41 : f32 to vector<16x128xf32>
    %66 = arith.subf %65, %54 : vector<16x128xf32>
    %67 = arith.mulf %66, %41 : vector<16x128xf32>
    %68 = arith.addf %64, %67 : vector<16x128xf32>
    %c0_42 = arith.constant 0 : index
    %c0_43 = arith.constant 0 : index
    %69 = vector.load %arg1[%c0_42, %c0_43] : memref<16x16xf32, #tpu.memory_space<vmem>>, vector<16x16xf32>
    %70 = arith.truncf %69 : vector<16x16xf32> to vector<16x16xbf16>
    %c0_44 = arith.constant 0 : index
    %c0_45 = arith.constant 0 : index
    %71 = vector.load %arg9[%c0_44, %c0_45] : memref<16x128xbf16, #tpu.memory_space<vmem>>, vector<16x128xbf16>
    %cst_46 = arith.constant dense<0.000000e+00> : vector<16x128xf32>
    %72 = tpu.matmul %70, %71, %cst_46 {dimension_numbers = #tpu.dot_dimension_numbers<[1], [0], [0], [1], [0, 0, 1, 1], [], []>} : vector<16x16xbf16>, vector<16x128xbf16>, vector<16x128xf32> -> vector<16x128xf32>
    %73 = arith.truncf %68 : vector<16x128xf32> to vector<16x128xbf16>
    %c0_47 = arith.constant 0 : index
    %c0_48 = arith.constant 0 : index
    %74 = vector.load %arg10[%c0_47, %c0_48] : memref<128x128xbf16, #tpu.memory_space<vmem>>, vector<128x128xbf16>
    %cst_49 = arith.constant dense<0.000000e+00> : vector<16x128xf32>
    %75 = tpu.matmul %73, %74, %cst_49 {dimension_numbers = #tpu.dot_dimension_numbers<[1], [0], [0], [1], [0, 0, 1, 1], [], []>} : vector<16x128xbf16>, vector<128x128xbf16>, vector<16x128xf32> -> vector<16x128xf32>
    %76 = arith.addf %72, %75 : vector<16x128xf32>
    %c0_50 = arith.constant 0 : index
    %c0_51 = arith.constant 0 : index
    %77 = vector.load %arg11[%c0_50, %c0_51] : memref<1x128xf32, #tpu.memory_space<vmem>>, vector<1x128xf32>
    %78 = vector.broadcast %77 : vector<1x128xf32> to vector<16x128xf32>
    %79 = arith.addf %76, %78 : vector<16x128xf32>
    %80 = tpu.iota {dimensions = array<i32: 0>} : vector<4x256xi32>
    %81 = tpu.iota {dimensions = array<i32: 1>} : vector<4x256xi32>
    %c2_i32 = arith.constant 2 : i32
    %82 = vector.broadcast %c2_i32 : i32 to vector<4x256xi32>
    %83 = arith.cmpi slt, %80, %82 : vector<4x256xi32>
    %c128_i32 = arith.constant 128 : i32
    %84 = vector.broadcast %c128_i32 : i32 to vector<4x256xi32>
    %85 = arith.cmpi slt, %81, %84 : vector<4x256xi32>
    %86 = arith.xori %83, %85 : vector<4x256xi1>
    %cst_52 = arith.constant dense<true> : vector<4x256xi1>
    %87 = arith.xori %86, %cst_52 : vector<4x256xi1>
    %88 = arith.truncf %79 : vector<16x128xf32> to vector<16x128xbf16>
    %c0_53 = arith.constant 0 : index
    %c0_54 = arith.constant 0 : index
    %c0_55 = arith.constant 0 : index
    %89 = vector.load %arg12[%c0_53, %c0_54, %c0_55] : memref<4x128x512xbf16, #tpu.memory_space<vmem>>, vector<1x128x512xbf16>
    %90 = vector.shape_cast %89 : vector<1x128x512xbf16> to vector<128x512xbf16>
    %cst_56 = arith.constant dense<0.000000e+00> : vector<16x512xf32>
    %91 = tpu.matmul %88, %90, %cst_56 {dimension_numbers = #tpu.dot_dimension_numbers<[1], [0], [0], [1], [0, 0, 1, 1], [], []>} : vector<16x128xbf16>, vector<128x512xbf16>, vector<16x512xf32> -> vector<16x512xf32>
    %c0_57 = arith.constant 0 : index
    %c0_58 = arith.constant 0 : index
    %c0_59 = arith.constant 0 : index
    %92 = vector.load %arg14[%c0_57, %c0_58, %c0_59] : memref<4x1x512xf32, #tpu.memory_space<vmem>>, vector<1x1x512xf32>
    %93 = vector.shape_cast %92 : vector<1x1x512xf32> to vector<1x512xf32>
    %94 = vector.broadcast %93 : vector<1x512xf32> to vector<16x512xf32>
    %95 = arith.addf %91, %94 : vector<16x512xf32>
    %c0_60 = arith.constant 0 : index
    %c0_61 = arith.constant 0 : index
    %96 = vector.load %arg17[%c0_60, %c0_61] : memref<16x512xf32, #tpu.memory_space<vmem>>, vector<16x512xf32>
    tpu.vector_store %arg17[%c0_60, %c0_61], %95 {strides = array<i32>} : memref<16x512xf32, #tpu.memory_space<vmem>>, vector<16x512xf32>,
    %97 = arith.truncf %79 : vector<16x128xf32> to vector<16x128xbf16>
    %c1_62 = arith.constant 1 : index
    %c0_63 = arith.constant 0 : index
    %c0_64 = arith.constant 0 : index
    %98 = vector.load %arg12[%c1_62, %c0_63, %c0_64] : memref<4x128x512xbf16, #tpu.memory_space<vmem>>, vector<1x128x512xbf16>
    %99 = vector.shape_cast %98 : vector<1x128x512xbf16> to vector<128x512xbf16>
    %cst_65 = arith.constant dense<0.000000e+00> : vector<16x512xf32>
    %100 = tpu.matmul %97, %99, %cst_65 {dimension_numbers = #tpu.dot_dimension_numbers<[1], [0], [0], [1], [0, 0, 1, 1], [], []>} : vector<16x128xbf16>, vector<128x512xbf16>, vector<16x512xf32> -> vector<16x512xf32>
    %c1_66 = arith.constant 1 : index
    %c0_67 = arith.constant 0 : index
    %c0_68 = arith.constant 0 : index
    %101 = vector.load %arg14[%c1_66, %c0_67, %c0_68] : memref<4x1x512xf32, #tpu.memory_space<vmem>>, vector<1x1x512xf32>
    %102 = vector.shape_cast %101 : vector<1x1x512xf32> to vector<1x512xf32>
    %103 = vector.broadcast %102 : vector<1x512xf32> to vector<16x512xf32>
    %104 = arith.addf %100, %103 : vector<16x512xf32>
    %c0_69 = arith.constant 0 : index
    %c0_70 = arith.constant 0 : index
    %105 = vector.load %arg18[%c0_69, %c0_70] : memref<16x512xf32, #tpu.memory_space<vmem>>, vector<16x512xf32>
    tpu.vector_store %arg18[%c0_69, %c0_70], %104 {strides = array<i32>} : memref<16x512xf32, #tpu.memory_space<vmem>>, vector<16x512xf32>,
    %cst_71 = arith.constant 0.000000e+00 : f32
    %106 = vector.broadcast %cst_71 : f32 to vector<4x128xf32>
    %cst_72 = arith.constant 0.000000e+00 : f32
    %107 = vector.broadcast %cst_72 : f32 to vector<4x128xf32>
    %c0_73 = arith.constant 0 : index
    %c0_74 = arith.constant 0 : index
    %108 = vector.load %arg17[%c0_73, %c0_74] : memref<16x512xf32, #tpu.memory_space<vmem>>, vector<2x512xf32>
    %c14 = arith.constant 14 : index
    %c0_75 = arith.constant 0 : index
    %109 = vector.load %arg18[%c14, %c0_75] : memref<16x512xf32, #tpu.memory_space<vmem>>, vector<2x512xf32>
    %110 = tpu.concatenate %108, %109 in 0 : vector<2x512xf32>, vector<2x512xf32> -> vector<4x512xf32>
    %111 = tpu.concatenate %106, %106 in 1 : vector<4x128xf32>, vector<4x128xf32> -> vector<4x256xf32>
    %cst_76 = arith.constant 0.000000e+00 : f32
    %112 = vector.broadcast %cst_76 : f32 to vector<4x256xf32>
    %113 = arith.select %87, %111, %112 : vector<4x256xi1>, vector<4x256xf32>
    %114 = arith.truncf %113 : vector<4x256xf32> to vector<4x256xbf16>
    %c0_77 = arith.constant 0 : index
    %c0_78 = arith.constant 0 : index
    %c0_79 = arith.constant 0 : index
    %115 = vector.load %arg13[%c0_77, %c0_78, %c0_79] : memref<2x256x512xbf16, #tpu.memory_space<vmem>>, vector<1x256x512xbf16>
    %116 = vector.shape_cast %115 : vector<1x256x512xbf16> to vector<256x512xbf16>
    %cst_80 = arith.constant dense<0.000000e+00> : vector<4x512xf32>
    %117 = tpu.matmul %114, %116, %cst_80 {dimension_numbers = #tpu.dot_dimension_numbers<[1], [0], [0], [1], [0, 0, 1, 1], [], []>} : vector<4x256xbf16>, vector<256x512xbf16>, vector<4x512xf32> -> vector<4x512xf32>
    %118 = arith.addf %110, %117 : vector<4x512xf32>
    %119 = vector.extract_strided_slice %118 {offsets = [0, 0], sizes = [4, 128], strides = [1, 1]} : vector<4x512xf32> to vector<4x128xf32>
    %120 = arith.negf %119 : vector<4x128xf32>
    %121 = math.exp %120 : vector<4x128xf32>
    %cst_81 = arith.constant 1.000000e+00 : f32
    %122 = vector.broadcast %cst_81 : f32 to vector<4x128xf32>
    %123 = arith.addf %122, %121 : vector<4x128xf32>
    %124 = arith.divf %122, %123 : vector<4x128xf32>
    %125 = vector.extract_strided_slice %118 {offsets = [0, 128], sizes = [4, 128], strides = [1, 1]} : vector<4x512xf32> to vector<4x128xf32>
    %126 = arith.negf %125 : vector<4x128xf32>
    %127 = math.exp %126 : vector<4x128xf32>
    %cst_82 = arith.constant 1.000000e+00 : f32
    %128 = vector.broadcast %cst_82 : f32 to vector<4x128xf32>
    %129 = arith.addf %128, %127 : vector<4x128xf32>
    %130 = arith.divf %128, %129 : vector<4x128xf32>
    %131 = vector.extract_strided_slice %118 {offsets = [0, 256], sizes = [4, 128], strides = [1, 1]} : vector<4x512xf32> to vector<4x128xf32>
    %132 = math.tanh %131 : vector<4x128xf32>
    %133 = vector.extract_strided_slice %118 {offsets = [0, 384], sizes = [4, 128], strides = [1, 1]} : vector<4x512xf32> to vector<4x128xf32>
    %134 = arith.negf %133 : vector<4x128xf32>
    %135 = math.exp %134 : vector<4x128xf32>
    %cst_83 = arith.constant 1.000000e+00 : f32
    %136 = vector.broadcast %cst_83 : f32 to vector<4x128xf32>
    %137 = arith.addf %136, %135 : vector<4x128xf32>
    %138 = arith.divf %136, %137 : vector<4x128xf32>
    %139 = arith.mulf %130, %107 : vector<4x128xf32>
    %140 = arith.mulf %124, %132 : vector<4x128xf32>
    %141 = arith.addf %139, %140 : vector<4x128xf32>
    %cst_84 = arith.constant -3.000000e+00 : f32
    %cst_85 = arith.constant 3.000000e+00 : f32
    %142 = vector.broadcast %cst_84 : f32 to vector<4x128xf32>
    %143 = arith.maximumf %142, %141 : vector<4x128xf32>
    %144 = vector.broadcast %cst_85 : f32 to vector<4x128xf32>
    %145 = arith.minimumf %144, %143 : vector<4x128xf32>
    %146 = math.tanh %145 : vector<4x128xf32>
    %147 = arith.mulf %138, %146 : vector<4x128xf32>
    %148 = tpu.concatenate %147, %147 in 1 : vector<4x128xf32>, vector<4x128xf32> -> vector<4x256xf32>
    %cst_86 = arith.constant 0.000000e+00 : f32
    %149 = vector.broadcast %cst_86 : f32 to vector<4x256xf32>
    %150 = arith.select %87, %148, %149 : vector<4x256xi1>, vector<4x256xf32>
    %151 = arith.truncf %150 : vector<4x256xf32> to vector<4x256xbf16>
    %c0_87 = arith.constant 0 : index
    %c0_88 = arith.constant 0 : index
    %c0_89 = arith.constant 0 : index
    %152 = vector.load %arg15[%c0_87, %c0_88, %c0_89] : memref<2x256x128xbf16, #tpu.memory_space<vmem>>, vector<1x256x128xbf16>
    %153 = vector.shape_cast %152 : vector<1x256x128xbf16> to vector<256x128xbf16>
    %cst_90 = arith.constant dense<0.000000e+00> : vector<4x128xf32>
    %154 = tpu.matmul %151, %153, %cst_90 {dimension_numbers = #tpu.dot_dimension_numbers<[1], [0], [0], [1], [0, 0, 1, 1], [], []>} : vector<4x256xbf16>, vector<256x128xbf16>, vector<4x128xf32> -> vector<4x128xf32>
    %cst_91 = arith.constant -3.000000e+00 : f32
    %cst_92 = arith.constant 3.000000e+00 : f32
    %155 = vector.broadcast %cst_91 : f32 to vector<4x128xf32>
    %156 = arith.maximumf %155, %154 : vector<4x128xf32>
    %157 = vector.broadcast %cst_92 : f32 to vector<4x128xf32>
    %158 = arith.minimumf %157, %156 : vector<4x128xf32>
    %159 = vector.extract_strided_slice %158 {offsets = [0, 0], sizes = [2, 128], strides = [1, 1]} : vector<4x128xf32> to vector<2x128xf32>
    %160 = vector.extract_strided_slice %158 {offsets = [2, 0], sizes = [2, 128], strides = [1, 1]} : vector<4x128xf32> to vector<2x128xf32>
    %c2 = arith.constant 2 : index
    %c0_93 = arith.constant 0 : index
    %161 = vector.load %arg17[%c2, %c0_93] : memref<16x512xf32, #tpu.memory_space<vmem>>, vector<2x512xf32>
    %c12 = arith.constant 12 : index
    %c0_94 = arith.constant 0 : index
    %162 = vector.load %arg18[%c12, %c0_94] : memref<16x512xf32, #tpu.memory_space<vmem>>, vector<2x512xf32>
    %163 = tpu.concatenate %161, %162 in 0 : vector<2x512xf32>, vector<2x512xf32> -> vector<4x512xf32>
    %164 = tpu.concatenate %158, %158 in 1 : vector<4x128xf32>, vector<4x128xf32> -> vector<4x256xf32>
    %cst_95 = arith.constant 0.000000e+00 : f32
    %165 = vector.broadcast %cst_95 : f32 to vector<4x256xf32>
    %166 = arith.select %87, %164, %165 : vector<4x256xi1>, vector<4x256xf32>
    %167 = arith.truncf %166 : vector<4x256xf32> to vector<4x256xbf16>
    %c0_96 = arith.constant 0 : index
    %c0_97 = arith.constant 0 : index
    %c0_98 = arith.constant 0 : index
    %168 = vector.load %arg13[%c0_96, %c0_97, %c0_98] : memref<2x256x512xbf16, #tpu.memory_space<vmem>>, vector<1x256x512xbf16>
    %169 = vector.shape_cast %168 : vector<1x256x512xbf16> to vector<256x512xbf16>
    %cst_99 = arith.constant dense<0.000000e+00> : vector<4x512xf32>
    %170 = tpu.matmul %167, %169, %cst_99 {dimension_numbers = #tpu.dot_dimension_numbers<[1], [0], [0], [1], [0, 0, 1, 1], [], []>} : vector<4x256xbf16>, vector<256x512xbf16>, vector<4x512xf32> -> vector<4x512xf32>
    %171 = arith.addf %163, %170 : vector<4x512xf32>
    %172 = vector.extract_strided_slice %171 {offsets = [0, 0], sizes = [4, 128], strides = [1, 1]} : vector<4x512xf32> to vector<4x128xf32>
    %173 = arith.negf %172 : vector<4x128xf32>
    %174 = math.exp %173 : vector<4x128xf32>
    %cst_100 = arith.constant 1.000000e+00 : f32
    %175 = vector.broadcast %cst_100 : f32 to vector<4x128xf32>
    %176 = arith.addf %175, %174 : vector<4x128xf32>
    %177 = arith.divf %175, %176 : vector<4x128xf32>
    %178 = vector.extract_strided_slice %171 {offsets = [0, 128], sizes = [4, 128], strides = [1, 1]} : vector<4x512xf32> to vector<4x128xf32>
    %179 = arith.negf %178 : vector<4x128xf32>
    %180 = math.exp %179 : vector<4x128xf32>
    %cst_101 = arith.constant 1.000000e+00 : f32
    %181 = vector.broadcast %cst_101 : f32 to vector<4x128xf32>
    %182 = arith.addf %181, %180 : vector<4x128xf32>
    %183 = arith.divf %181, %182 : vector<4x128xf32>
    %184 = vector.extract_strided_slice %171 {offsets = [0, 256], sizes = [4, 128], strides = [1, 1]} : vector<4x512xf32> to vector<4x128xf32>
    %185 = math.tanh %184 : vector<4x128xf32>
    %186 = vector.extract_strided_slice %171 {offsets = [0, 384], sizes = [4, 128], strides = [1, 1]} : vector<4x512xf32> to vector<4x128xf32>
    %187 = arith.negf %186 : vector<4x128xf32>
    %188 = math.exp %187 : vector<4x128xf32>
    %cst_102 = arith.constant 1.000000e+00 : f32
    %189 = vector.broadcast %cst_102 : f32 to vector<4x128xf32>
    %190 = arith.addf %189, %188 : vector<4x128xf32>
    %191 = arith.divf %189, %190 : vector<4x128xf32>
    %192 = arith.mulf %183, %145 : vector<4x128xf32>
    %193 = arith.mulf %177, %185 : vector<4x128xf32>
    %194 = arith.addf %192, %193 : vector<4x128xf32>
    %cst_103 = arith.constant -3.000000e+00 : f32
    %cst_104 = arith.constant 3.000000e+00 : f32
    %195 = vector.broadcast %cst_103 : f32 to vector<4x128xf32>
    %196 = arith.maximumf %195, %194 : vector<4x128xf32>
    %197 = vector.broadcast %cst_104 : f32 to vector<4x128xf32>
    %198 = arith.minimumf %197, %196 : vector<4x128xf32>
    %199 = math.tanh %198 : vector<4x128xf32>
    %200 = arith.mulf %191, %199 : vector<4x128xf32>
    %201 = tpu.concatenate %200, %200 in 1 : vector<4x128xf32>, vector<4x128xf32> -> vector<4x256xf32>
    %cst_105 = arith.constant 0.000000e+00 : f32
    %202 = vector.broadcast %cst_105 : f32 to vector<4x256xf32>
    %203 = arith.select %87, %201, %202 : vector<4x256xi1>, vector<4x256xf32>
    %204 = arith.truncf %203 : vector<4x256xf32> to vector<4x256xbf16>
    %c0_106 = arith.constant 0 : index
    %c0_107 = arith.constant 0 : index
    %c0_108 = arith.constant 0 : index
    %205 = vector.load %arg15[%c0_106, %c0_107, %c0_108] : memref<2x256x128xbf16, #tpu.memory_space<vmem>>, vector<1x256x128xbf16>
    %206 = vector.shape_cast %205 : vector<1x256x128xbf16> to vector<256x128xbf16>
    %cst_109 = arith.constant dense<0.000000e+00> : vector<4x128xf32>
    %207 = tpu.matmul %204, %206, %cst_109 {dimension_numbers = #tpu.dot_dimension_numbers<[1], [0], [0], [1], [0, 0, 1, 1], [], []>} : vector<4x256xbf16>, vector<256x128xbf16>, vector<4x128xf32> -> vector<4x128xf32>
    %cst_110 = arith.constant -3.000000e+00 : f32
    %cst_111 = arith.constant 3.000000e+00 : f32
    %208 = vector.broadcast %cst_110 : f32 to vector<4x128xf32>
    %209 = arith.maximumf %208, %207 : vector<4x128xf32>
    %210 = vector.broadcast %cst_111 : f32 to vector<4x128xf32>
    %211 = arith.minimumf %210, %209 : vector<4x128xf32>
    %212 = vector.extract_strided_slice %211 {offsets = [0, 0], sizes = [2, 128], strides = [1, 1]} : vector<4x128xf32> to vector<2x128xf32>
    %213 = vector.extract_strided_slice %211 {offsets = [2, 0], sizes = [2, 128], strides = [1, 1]} : vector<4x128xf32> to vector<2x128xf32>
    %c4 = arith.constant 4 : index
    %c0_112 = arith.constant 0 : index
    %214 = vector.load %arg17[%c4, %c0_112] : memref<16x512xf32, #tpu.memory_space<vmem>>, vector<2x512xf32>
    %c10 = arith.constant 10 : index
    %c0_113 = arith.constant 0 : index
    %215 = vector.load %arg18[%c10, %c0_113] : memref<16x512xf32, #tpu.memory_space<vmem>>, vector<2x512xf32>
    %216 = tpu.concatenate %214, %215 in 0 : vector<2x512xf32>, vector<2x512xf32> -> vector<4x512xf32>
    %217 = tpu.concatenate %211, %211 in 1 : vector<4x128xf32>, vector<4x128xf32> -> vector<4x256xf32>
    %cst_114 = arith.constant 0.000000e+00 : f32
    %218 = vector.broadcast %cst_114 : f32 to vector<4x256xf32>
    %219 = arith.select %87, %217, %218 : vector<4x256xi1>, vector<4x256xf32>
    %220 = arith.truncf %219 : vector<4x256xf32> to vector<4x256xbf16>
    %c0_115 = arith.constant 0 : index
    %c0_116 = arith.constant 0 : index
    %c0_117 = arith.constant 0 : index
    %221 = vector.load %arg13[%c0_115, %c0_116, %c0_117] : memref<2x256x512xbf16, #tpu.memory_space<vmem>>, vector<1x256x512xbf16>
    %222 = vector.shape_cast %221 : vector<1x256x512xbf16> to vector<256x512xbf16>
    %cst_118 = arith.constant dense<0.000000e+00> : vector<4x512xf32>
    %223 = tpu.matmul %220, %222, %cst_118 {dimension_numbers = #tpu.dot_dimension_numbers<[1], [0], [0], [1], [0, 0, 1, 1], [], []>} : vector<4x256xbf16>, vector<256x512xbf16>, vector<4x512xf32> -> vector<4x512xf32>
    %224 = arith.addf %216, %223 : vector<4x512xf32>
    %225 = vector.extract_strided_slice %224 {offsets = [0, 0], sizes = [4, 128], strides = [1, 1]} : vector<4x512xf32> to vector<4x128xf32>
    %226 = arith.negf %225 : vector<4x128xf32>
    %227 = math.exp %226 : vector<4x128xf32>
    %cst_119 = arith.constant 1.000000e+00 : f32
    %228 = vector.broadcast %cst_119 : f32 to vector<4x128xf32>
    %229 = arith.addf %228, %227 : vector<4x128xf32>
    %230 = arith.divf %228, %229 : vector<4x128xf32>
    %231 = vector.extract_strided_slice %224 {offsets = [0, 128], sizes = [4, 128], strides = [1, 1]} : vector<4x512xf32> to vector<4x128xf32>
    %232 = arith.negf %231 : vector<4x128xf32>
    %233 = math.exp %232 : vector<4x128xf32>
    %cst_120 = arith.constant 1.000000e+00 : f32
    %234 = vector.broadcast %cst_120 : f32 to vector<4x128xf32>
    %235 = arith.addf %234, %233 : vector<4x128xf32>
    %236 = arith.divf %234, %235 : vector<4x128xf32>
    %237 = vector.extract_strided_slice %224 {offsets = [0, 256], sizes = [4, 128], strides = [1, 1]} : vector<4x512xf32> to vector<4x128xf32>
    %238 = math.tanh %237 : vector<4x128xf32>
    %239 = vector.extract_strided_slice %224 {offsets = [0, 384], sizes = [4, 128], strides = [1, 1]} : vector<4x512xf32> to vector<4x128xf32>
    %240 = arith.negf %239 : vector<4x128xf32>
    %241 = math.exp %240 : vector<4x128xf32>
    %cst_121 = arith.constant 1.000000e+00 : f32
    %242 = vector.broadcast %cst_121 : f32 to vector<4x128xf32>
    %243 = arith.addf %242, %241 : vector<4x128xf32>
    %244 = arith.divf %242, %243 : vector<4x128xf32>
    %245 = arith.mulf %236, %198 : vector<4x128xf32>
    %246 = arith.mulf %230, %238 : vector<4x128xf32>
    %247 = arith.addf %245, %246 : vector<4x128xf32>
    %cst_122 = arith.constant -3.000000e+00 : f32
    %cst_123 = arith.constant 3.000000e+00 : f32
    %248 = vector.broadcast %cst_122 : f32 to vector<4x128xf32>
    %249 = arith.maximumf %248, %247 : vector<4x128xf32>
    %250 = vector.broadcast %cst_123 : f32 to vector<4x128xf32>
    %251 = arith.minimumf %250, %249 : vector<4x128xf32>
    %252 = math.tanh %251 : vector<4x128xf32>
    %253 = arith.mulf %244, %252 : vector<4x128xf32>
    %254 = tpu.concatenate %253, %253 in 1 : vector<4x128xf32>, vector<4x128xf32> -> vector<4x256xf32>
    %cst_124 = arith.constant 0.000000e+00 : f32
    %255 = vector.broadcast %cst_124 : f32 to vector<4x256xf32>
    %256 = arith.select %87, %254, %255 : vector<4x256xi1>, vector<4x256xf32>
    %257 = arith.truncf %256 : vector<4x256xf32> to vector<4x256xbf16>
    %c0_125 = arith.constant 0 : index
    %c0_126 = arith.constant 0 : index
    %c0_127 = arith.constant 0 : index
    %258 = vector.load %arg15[%c0_125, %c0_126, %c0_127] : memref<2x256x128xbf16, #tpu.memory_space<vmem>>, vector<1x256x128xbf16>
    %259 = vector.shape_cast %258 : vector<1x256x128xbf16> to vector<256x128xbf16>
    %cst_128 = arith.constant dense<0.000000e+00> : vector<4x128xf32>
    %260 = tpu.matmul %257, %259, %cst_128 {dimension_numbers = #tpu.dot_dimension_numbers<[1], [0], [0], [1], [0, 0, 1, 1], [], []>} : vector<4x256xbf16>, vector<256x128xbf16>, vector<4x128xf32> -> vector<4x128xf32>
    %cst_129 = arith.constant -3.000000e+00 : f32
    %cst_130 = arith.constant 3.000000e+00 : f32
    %261 = vector.broadcast %cst_129 : f32 to vector<4x128xf32>
    %262 = arith.maximumf %261, %260 : vector<4x128xf32>
    %263 = vector.broadcast %cst_130 : f32 to vector<4x128xf32>
    %264 = arith.minimumf %263, %262 : vector<4x128xf32>
    %265 = vector.extract_strided_slice %264 {offsets = [0, 0], sizes = [2, 128], strides = [1, 1]} : vector<4x128xf32> to vector<2x128xf32>
    %266 = vector.extract_strided_slice %264 {offsets = [2, 0], sizes = [2, 128], strides = [1, 1]} : vector<4x128xf32> to vector<2x128xf32>
    %c6 = arith.constant 6 : index
    %c0_131 = arith.constant 0 : index
    %267 = vector.load %arg17[%c6, %c0_131] : memref<16x512xf32, #tpu.memory_space<vmem>>, vector<2x512xf32>
    %c8 = arith.constant 8 : index
    %c0_132 = arith.constant 0 : index
    %268 = vector.load %arg18[%c8, %c0_132] : memref<16x512xf32, #tpu.memory_space<vmem>>, vector<2x512xf32>
    %269 = tpu.concatenate %267, %268 in 0 : vector<2x512xf32>, vector<2x512xf32> -> vector<4x512xf32>
    %270 = tpu.concatenate %264, %264 in 1 : vector<4x128xf32>, vector<4x128xf32> -> vector<4x256xf32>
    %cst_133 = arith.constant 0.000000e+00 : f32
    %271 = vector.broadcast %cst_133 : f32 to vector<4x256xf32>
    %272 = arith.select %87, %270, %271 : vector<4x256xi1>, vector<4x256xf32>
    %273 = arith.truncf %272 : vector<4x256xf32> to vector<4x256xbf16>
    %c0_134 = arith.constant 0 : index
    %c0_135 = arith.constant 0 : index
    %c0_136 = arith.constant 0 : index
    %274 = vector.load %arg13[%c0_134, %c0_135, %c0_136] : memref<2x256x512xbf16, #tpu.memory_space<vmem>>, vector<1x256x512xbf16>
    %275 = vector.shape_cast %274 : vector<1x256x512xbf16> to vector<256x512xbf16>
    %cst_137 = arith.constant dense<0.000000e+00> : vector<4x512xf32>
    %276 = tpu.matmul %273, %275, %cst_137 {dimension_numbers = #tpu.dot_dimension_numbers<[1], [0], [0], [1], [0, 0, 1, 1], [], []>} : vector<4x256xbf16>, vector<256x512xbf16>, vector<4x512xf32> -> vector<4x512xf32>
    %277 = arith.addf %269, %276 : vector<4x512xf32>
    %278 = vector.extract_strided_slice %277 {offsets = [0, 0], sizes = [4, 128], strides = [1, 1]} : vector<4x512xf32> to vector<4x128xf32>
    %279 = arith.negf %278 : vector<4x128xf32>
    %280 = math.exp %279 : vector<4x128xf32>
    %cst_138 = arith.constant 1.000000e+00 : f32
    %281 = vector.broadcast %cst_138 : f32 to vector<4x128xf32>
    %282 = arith.addf %281, %280 : vector<4x128xf32>
    %283 = arith.divf %281, %282 : vector<4x128xf32>
    %284 = vector.extract_strided_slice %277 {offsets = [0, 128], sizes = [4, 128], strides = [1, 1]} : vector<4x512xf32> to vector<4x128xf32>
    %285 = arith.negf %284 : vector<4x128xf32>
    %286 = math.exp %285 : vector<4x128xf32>
    %cst_139 = arith.constant 1.000000e+00 : f32
    %287 = vector.broadcast %cst_139 : f32 to vector<4x128xf32>
    %288 = arith.addf %287, %286 : vector<4x128xf32>
    %289 = arith.divf %287, %288 : vector<4x128xf32>
    %290 = vector.extract_strided_slice %277 {offsets = [0, 256], sizes = [4, 128], strides = [1, 1]} : vector<4x512xf32> to vector<4x128xf32>
    %291 = math.tanh %290 : vector<4x128xf32>
    %292 = vector.extract_strided_slice %277 {offsets = [0, 384], sizes = [4, 128], strides = [1, 1]} : vector<4x512xf32> to vector<4x128xf32>
    %293 = arith.negf %292 : vector<4x128xf32>
    %294 = math.exp %293 : vector<4x128xf32>
    %cst_140 = arith.constant 1.000000e+00 : f32
    %295 = vector.broadcast %cst_140 : f32 to vector<4x128xf32>
    %296 = arith.addf %295, %294 : vector<4x128xf32>
    %297 = arith.divf %295, %296 : vector<4x128xf32>
    %298 = arith.mulf %289, %251 : vector<4x128xf32>
    %299 = arith.mulf %283, %291 : vector<4x128xf32>
    %300 = arith.addf %298, %299 : vector<4x128xf32>
    %cst_141 = arith.constant -3.000000e+00 : f32
    %cst_142 = arith.constant 3.000000e+00 : f32
    %301 = vector.broadcast %cst_141 : f32 to vector<4x128xf32>
    %302 = arith.maximumf %301, %300 : vector<4x128xf32>
    %303 = vector.broadcast %cst_142 : f32 to vector<4x128xf32>
    %304 = arith.minimumf %303, %302 : vector<4x128xf32>
    %305 = math.tanh %304 : vector<4x128xf32>
    %306 = arith.mulf %297, %305 : vector<4x128xf32>
    %307 = tpu.concatenate %306, %306 in 1 : vector<4x128xf32>, vector<4x128xf32> -> vector<4x256xf32>
    %cst_143 = arith.constant 0.000000e+00 : f32
    %308 = vector.broadcast %cst_143 : f32 to vector<4x256xf32>
    %309 = arith.select %87, %307, %308 : vector<4x256xi1>, vector<4x256xf32>
    %310 = arith.truncf %309 : vector<4x256xf32> to vector<4x256xbf16>
    %c0_144 = arith.constant 0 : index
    %c0_145 = arith.constant 0 : index
    %c0_146 = arith.constant 0 : index
    %311 = vector.load %arg15[%c0_144, %c0_145, %c0_146] : memref<2x256x128xbf16, #tpu.memory_space<vmem>>, vector<1x256x128xbf16>
    %312 = vector.shape_cast %311 : vector<1x256x128xbf16> to vector<256x128xbf16>
    %cst_147 = arith.constant dense<0.000000e+00> : vector<4x128xf32>
    %313 = tpu.matmul %310, %312, %cst_147 {dimension_numbers = #tpu.dot_dimension_numbers<[1], [0], [0], [1], [0, 0, 1, 1], [], []>} : vector<4x256xbf16>, vector<256x128xbf16>, vector<4x128xf32> -> vector<4x128xf32>
    %cst_148 = arith.constant -3.000000e+00 : f32
    %cst_149 = arith.constant 3.000000e+00 : f32
    %314 = vector.broadcast %cst_148 : f32 to vector<4x128xf32>
    %315 = arith.maximumf %314, %313 : vector<4x128xf32>
    %316 = vector.broadcast %cst_149 : f32 to vector<4x128xf32>
    %317 = arith.minimumf %316, %315 : vector<4x128xf32>
    %318 = vector.extract_strided_slice %317 {offsets = [0, 0], sizes = [2, 128], strides = [1, 1]} : vector<4x128xf32> to vector<2x128xf32>
    %319 = vector.extract_strided_slice %317 {offsets = [2, 0], sizes = [2, 128], strides = [1, 1]} : vector<4x128xf32> to vector<2x128xf32>
    %c8_150 = arith.constant 8 : index
    %c0_151 = arith.constant 0 : index
    %320 = vector.load %arg17[%c8_150, %c0_151] : memref<16x512xf32, #tpu.memory_space<vmem>>, vector<2x512xf32>
    %c6_152 = arith.constant 6 : index
    %c0_153 = arith.constant 0 : index
    %321 = vector.load %arg18[%c6_152, %c0_153] : memref<16x512xf32, #tpu.memory_space<vmem>>, vector<2x512xf32>
    %322 = tpu.concatenate %320, %321 in 0 : vector<2x512xf32>, vector<2x512xf32> -> vector<4x512xf32>
    %323 = tpu.concatenate %317, %317 in 1 : vector<4x128xf32>, vector<4x128xf32> -> vector<4x256xf32>
    %cst_154 = arith.constant 0.000000e+00 : f32
    %324 = vector.broadcast %cst_154 : f32 to vector<4x256xf32>
    %325 = arith.select %87, %323, %324 : vector<4x256xi1>, vector<4x256xf32>
    %326 = arith.truncf %325 : vector<4x256xf32> to vector<4x256xbf16>
    %c0_155 = arith.constant 0 : index
    %c0_156 = arith.constant 0 : index
    %c0_157 = arith.constant 0 : index
    %327 = vector.load %arg13[%c0_155, %c0_156, %c0_157] : memref<2x256x512xbf16, #tpu.memory_space<vmem>>, vector<1x256x512xbf16>
    %328 = vector.shape_cast %327 : vector<1x256x512xbf16> to vector<256x512xbf16>
    %cst_158 = arith.constant dense<0.000000e+00> : vector<4x512xf32>
    %329 = tpu.matmul %326, %328, %cst_158 {dimension_numbers = #tpu.dot_dimension_numbers<[1], [0], [0], [1], [0, 0, 1, 1], [], []>} : vector<4x256xbf16>, vector<256x512xbf16>, vector<4x512xf32> -> vector<4x512xf32>
    %330 = arith.addf %322, %329 : vector<4x512xf32>
    %331 = vector.extract_strided_slice %330 {offsets = [0, 0], sizes = [4, 128], strides = [1, 1]} : vector<4x512xf32> to vector<4x128xf32>
    %332 = arith.negf %331 : vector<4x128xf32>
    %333 = math.exp %332 : vector<4x128xf32>
    %cst_159 = arith.constant 1.000000e+00 : f32
    %334 = vector.broadcast %cst_159 : f32 to vector<4x128xf32>
    %335 = arith.addf %334, %333 : vector<4x128xf32>
    %336 = arith.divf %334, %335 : vector<4x128xf32>
    %337 = vector.extract_strided_slice %330 {offsets = [0, 128], sizes = [4, 128], strides = [1, 1]} : vector<4x512xf32> to vector<4x128xf32>
    %338 = arith.negf %337 : vector<4x128xf32>
    %339 = math.exp %338 : vector<4x128xf32>
    %cst_160 = arith.constant 1.000000e+00 : f32
    %340 = vector.broadcast %cst_160 : f32 to vector<4x128xf32>
    %341 = arith.addf %340, %339 : vector<4x128xf32>
    %342 = arith.divf %340, %341 : vector<4x128xf32>
    %343 = vector.extract_strided_slice %330 {offsets = [0, 256], sizes = [4, 128], strides = [1, 1]} : vector<4x512xf32> to vector<4x128xf32>
    %344 = math.tanh %343 : vector<4x128xf32>
    %345 = vector.extract_strided_slice %330 {offsets = [0, 384], sizes = [4, 128], strides = [1, 1]} : vector<4x512xf32> to vector<4x128xf32>
    %346 = arith.negf %345 : vector<4x128xf32>
    %347 = math.exp %346 : vector<4x128xf32>
    %cst_161 = arith.constant 1.000000e+00 : f32
    %348 = vector.broadcast %cst_161 : f32 to vector<4x128xf32>
    %349 = arith.addf %348, %347 : vector<4x128xf32>
    %350 = arith.divf %348, %349 : vector<4x128xf32>
    %351 = arith.mulf %342, %304 : vector<4x128xf32>
    %352 = arith.mulf %336, %344 : vector<4x128xf32>
    %353 = arith.addf %351, %352 : vector<4x128xf32>
    %cst_162 = arith.constant -3.000000e+00 : f32
    %cst_163 = arith.constant 3.000000e+00 : f32
    %354 = vector.broadcast %cst_162 : f32 to vector<4x128xf32>
    %355 = arith.maximumf %354, %353 : vector<4x128xf32>
    %356 = vector.broadcast %cst_163 : f32 to vector<4x128xf32>
    %357 = arith.minimumf %356, %355 : vector<4x128xf32>
    %358 = math.tanh %357 : vector<4x128xf32>
    %359 = arith.mulf %350, %358 : vector<4x128xf32>
    %360 = tpu.concatenate %359, %359 in 1 : vector<4x128xf32>, vector<4x128xf32> -> vector<4x256xf32>
    %cst_164 = arith.constant 0.000000e+00 : f32
    %361 = vector.broadcast %cst_164 : f32 to vector<4x256xf32>
    %362 = arith.select %87, %360, %361 : vector<4x256xi1>, vector<4x256xf32>
    %363 = arith.truncf %362 : vector<4x256xf32> to vector<4x256xbf16>
    %c0_165 = arith.constant 0 : index
    %c0_166 = arith.constant 0 : index
    %c0_167 = arith.constant 0 : index
    %364 = vector.load %arg15[%c0_165, %c0_166, %c0_167] : memref<2x256x128xbf16, #tpu.memory_space<vmem>>, vector<1x256x128xbf16>
    %365 = vector.shape_cast %364 : vector<1x256x128xbf16> to vector<256x128xbf16>
    %cst_168 = arith.constant dense<0.000000e+00> : vector<4x128xf32>
    %366 = tpu.matmul %363, %365, %cst_168 {dimension_numbers = #tpu.dot_dimension_numbers<[1], [0], [0], [1], [0, 0, 1, 1], [], []>} : vector<4x256xbf16>, vector<256x128xbf16>, vector<4x128xf32> -> vector<4x128xf32>
    %cst_169 = arith.constant -3.000000e+00 : f32
    %cst_170 = arith.constant 3.000000e+00 : f32
    %367 = vector.broadcast %cst_169 : f32 to vector<4x128xf32>
    %368 = arith.maximumf %367, %366 : vector<4x128xf32>
    %369 = vector.broadcast %cst_170 : f32 to vector<4x128xf32>
    %370 = arith.minimumf %369, %368 : vector<4x128xf32>
    %371 = vector.extract_strided_slice %370 {offsets = [0, 0], sizes = [2, 128], strides = [1, 1]} : vector<4x128xf32> to vector<2x128xf32>
    %372 = vector.extract_strided_slice %370 {offsets = [2, 0], sizes = [2, 128], strides = [1, 1]} : vector<4x128xf32> to vector<2x128xf32>
    %c10_171 = arith.constant 10 : index
    %c0_172 = arith.constant 0 : index
    %373 = vector.load %arg17[%c10_171, %c0_172] : memref<16x512xf32, #tpu.memory_space<vmem>>, vector<2x512xf32>
    %c4_173 = arith.constant 4 : index
    %c0_174 = arith.constant 0 : index
    %374 = vector.load %arg18[%c4_173, %c0_174] : memref<16x512xf32, #tpu.memory_space<vmem>>, vector<2x512xf32>
    %375 = tpu.concatenate %373, %374 in 0 : vector<2x512xf32>, vector<2x512xf32> -> vector<4x512xf32>
    %376 = tpu.concatenate %370, %370 in 1 : vector<4x128xf32>, vector<4x128xf32> -> vector<4x256xf32>
    %cst_175 = arith.constant 0.000000e+00 : f32
    %377 = vector.broadcast %cst_175 : f32 to vector<4x256xf32>
    %378 = arith.select %87, %376, %377 : vector<4x256xi1>, vector<4x256xf32>
    %379 = arith.truncf %378 : vector<4x256xf32> to vector<4x256xbf16>
    %c0_176 = arith.constant 0 : index
    %c0_177 = arith.constant 0 : index
    %c0_178 = arith.constant 0 : index
    %380 = vector.load %arg13[%c0_176, %c0_177, %c0_178] : memref<2x256x512xbf16, #tpu.memory_space<vmem>>, vector<1x256x512xbf16>
    %381 = vector.shape_cast %380 : vector<1x256x512xbf16> to vector<256x512xbf16>
    %cst_179 = arith.constant dense<0.000000e+00> : vector<4x512xf32>
    %382 = tpu.matmul %379, %381, %cst_179 {dimension_numbers = #tpu.dot_dimension_numbers<[1], [0], [0], [1], [0, 0, 1, 1], [], []>} : vector<4x256xbf16>, vector<256x512xbf16>, vector<4x512xf32> -> vector<4x512xf32>
    %383 = arith.addf %375, %382 : vector<4x512xf32>
    %384 = vector.extract_strided_slice %383 {offsets = [0, 0], sizes = [4, 128], strides = [1, 1]} : vector<4x512xf32> to vector<4x128xf32>
    %385 = arith.negf %384 : vector<4x128xf32>
    %386 = math.exp %385 : vector<4x128xf32>
    %cst_180 = arith.constant 1.000000e+00 : f32
    %387 = vector.broadcast %cst_180 : f32 to vector<4x128xf32>
    %388 = arith.addf %387, %386 : vector<4x128xf32>
    %389 = arith.divf %387, %388 : vector<4x128xf32>
    %390 = vector.extract_strided_slice %383 {offsets = [0, 128], sizes = [4, 128], strides = [1, 1]} : vector<4x512xf32> to vector<4x128xf32>
    %391 = arith.negf %390 : vector<4x128xf32>
    %392 = math.exp %391 : vector<4x128xf32>
    %cst_181 = arith.constant 1.000000e+00 : f32
    %393 = vector.broadcast %cst_181 : f32 to vector<4x128xf32>
    %394 = arith.addf %393, %392 : vector<4x128xf32>
    %395 = arith.divf %393, %394 : vector<4x128xf32>
    %396 = vector.extract_strided_slice %383 {offsets = [0, 256], sizes = [4, 128], strides = [1, 1]} : vector<4x512xf32> to vector<4x128xf32>
    %397 = math.tanh %396 : vector<4x128xf32>
    %398 = vector.extract_strided_slice %383 {offsets = [0, 384], sizes = [4, 128], strides = [1, 1]} : vector<4x512xf32> to vector<4x128xf32>
    %399 = arith.negf %398 : vector<4x128xf32>
    %400 = math.exp %399 : vector<4x128xf32>
    %cst_182 = arith.constant 1.000000e+00 : f32
    %401 = vector.broadcast %cst_182 : f32 to vector<4x128xf32>
    %402 = arith.addf %401, %400 : vector<4x128xf32>
    %403 = arith.divf %401, %402 : vector<4x128xf32>
    %404 = arith.mulf %395, %357 : vector<4x128xf32>
    %405 = arith.mulf %389, %397 : vector<4x128xf32>
    %406 = arith.addf %404, %405 : vector<4x128xf32>
    %cst_183 = arith.constant -3.000000e+00 : f32
    %cst_184 = arith.constant 3.000000e+00 : f32
    %407 = vector.broadcast %cst_183 : f32 to vector<4x128xf32>
    %408 = arith.maximumf %407, %406 : vector<4x128xf32>
    %409 = vector.broadcast %cst_184 : f32 to vector<4x128xf32>
    %410 = arith.minimumf %409, %408 : vector<4x128xf32>
    %411 = math.tanh %410 : vector<4x128xf32>
    %412 = arith.mulf %403, %411 : vector<4x128xf32>
    %413 = tpu.concatenate %412, %412 in 1 : vector<4x128xf32>, vector<4x128xf32> -> vector<4x256xf32>
    %cst_185 = arith.constant 0.000000e+00 : f32
    %414 = vector.broadcast %cst_185 : f32 to vector<4x256xf32>
    %415 = arith.select %87, %413, %414 : vector<4x256xi1>, vector<4x256xf32>
    %416 = arith.truncf %415 : vector<4x256xf32> to vector<4x256xbf16>
    %c0_186 = arith.constant 0 : index
    %c0_187 = arith.constant 0 : index
    %c0_188 = arith.constant 0 : index
    %417 = vector.load %arg15[%c0_186, %c0_187, %c0_188] : memref<2x256x128xbf16, #tpu.memory_space<vmem>>, vector<1x256x128xbf16>
    %418 = vector.shape_cast %417 : vector<1x256x128xbf16> to vector<256x128xbf16>
    %cst_189 = arith.constant dense<0.000000e+00> : vector<4x128xf32>
    %419 = tpu.matmul %416, %418, %cst_189 {dimension_numbers = #tpu.dot_dimension_numbers<[1], [0], [0], [1], [0, 0, 1, 1], [], []>} : vector<4x256xbf16>, vector<256x128xbf16>, vector<4x128xf32> -> vector<4x128xf32>
    %cst_190 = arith.constant -3.000000e+00 : f32
    %cst_191 = arith.constant 3.000000e+00 : f32
    %420 = vector.broadcast %cst_190 : f32 to vector<4x128xf32>
    %421 = arith.maximumf %420, %419 : vector<4x128xf32>
    %422 = vector.broadcast %cst_191 : f32 to vector<4x128xf32>
    %423 = arith.minimumf %422, %421 : vector<4x128xf32>
    %424 = vector.extract_strided_slice %423 {offsets = [0, 0], sizes = [2, 128], strides = [1, 1]} : vector<4x128xf32> to vector<2x128xf32>
    %425 = vector.extract_strided_slice %423 {offsets = [2, 0], sizes = [2, 128], strides = [1, 1]} : vector<4x128xf32> to vector<2x128xf32>
    %c12_192 = arith.constant 12 : index
    %c0_193 = arith.constant 0 : index
    %426 = vector.load %arg17[%c12_192, %c0_193] : memref<16x512xf32, #tpu.memory_space<vmem>>, vector<2x512xf32>
    %c2_194 = arith.constant 2 : index
    %c0_195 = arith.constant 0 : index
    %427 = vector.load %arg18[%c2_194, %c0_195] : memref<16x512xf32, #tpu.memory_space<vmem>>, vector<2x512xf32>
    %428 = tpu.concatenate %426, %427 in 0 : vector<2x512xf32>, vector<2x512xf32> -> vector<4x512xf32>
    %429 = tpu.concatenate %423, %423 in 1 : vector<4x128xf32>, vector<4x128xf32> -> vector<4x256xf32>
    %cst_196 = arith.constant 0.000000e+00 : f32
    %430 = vector.broadcast %cst_196 : f32 to vector<4x256xf32>
    %431 = arith.select %87, %429, %430 : vector<4x256xi1>, vector<4x256xf32>
    %432 = arith.truncf %431 : vector<4x256xf32> to vector<4x256xbf16>
    %c0_197 = arith.constant 0 : index
    %c0_198 = arith.constant 0 : index
    %c0_199 = arith.constant 0 : index
    %433 = vector.load %arg13[%c0_197, %c0_198, %c0_199] : memref<2x256x512xbf16, #tpu.memory_space<vmem>>, vector<1x256x512xbf16>
    %434 = vector.shape_cast %433 : vector<1x256x512xbf16> to vector<256x512xbf16>
    %cst_200 = arith.constant dense<0.000000e+00> : vector<4x512xf32>
    %435 = tpu.matmul %432, %434, %cst_200 {dimension_numbers = #tpu.dot_dimension_numbers<[1], [0], [0], [1], [0, 0, 1, 1], [], []>} : vector<4x256xbf16>, vector<256x512xbf16>, vector<4x512xf32> -> vector<4x512xf32>
    %436 = arith.addf %428, %435 : vector<4x512xf32>
    %437 = vector.extract_strided_slice %436 {offsets = [0, 0], sizes = [4, 128], strides = [1, 1]} : vector<4x512xf32> to vector<4x128xf32>
    %438 = arith.negf %437 : vector<4x128xf32>
    %439 = math.exp %438 : vector<4x128xf32>
    %cst_201 = arith.constant 1.000000e+00 : f32
    %440 = vector.broadcast %cst_201 : f32 to vector<4x128xf32>
    %441 = arith.addf %440, %439 : vector<4x128xf32>
    %442 = arith.divf %440, %441 : vector<4x128xf32>
    %443 = vector.extract_strided_slice %436 {offsets = [0, 128], sizes = [4, 128], strides = [1, 1]} : vector<4x512xf32> to vector<4x128xf32>
    %444 = arith.negf %443 : vector<4x128xf32>
    %445 = math.exp %444 : vector<4x128xf32>
    %cst_202 = arith.constant 1.000000e+00 : f32
    %446 = vector.broadcast %cst_202 : f32 to vector<4x128xf32>
    %447 = arith.addf %446, %445 : vector<4x128xf32>
    %448 = arith.divf %446, %447 : vector<4x128xf32>
    %449 = vector.extract_strided_slice %436 {offsets = [0, 256], sizes = [4, 128], strides = [1, 1]} : vector<4x512xf32> to vector<4x128xf32>
    %450 = math.tanh %449 : vector<4x128xf32>
    %451 = vector.extract_strided_slice %436 {offsets = [0, 384], sizes = [4, 128], strides = [1, 1]} : vector<4x512xf32> to vector<4x128xf32>
    %452 = arith.negf %451 : vector<4x128xf32>
    %453 = math.exp %452 : vector<4x128xf32>
    %cst_203 = arith.constant 1.000000e+00 : f32
    %454 = vector.broadcast %cst_203 : f32 to vector<4x128xf32>
    %455 = arith.addf %454, %453 : vector<4x128xf32>
    %456 = arith.divf %454, %455 : vector<4x128xf32>
    %457 = arith.mulf %448, %410 : vector<4x128xf32>
    %458 = arith.mulf %442, %450 : vector<4x128xf32>
    %459 = arith.addf %457, %458 : vector<4x128xf32>
    %cst_204 = arith.constant -3.000000e+00 : f32
    %cst_205 = arith.constant 3.000000e+00 : f32
    %460 = vector.broadcast %cst_204 : f32 to vector<4x128xf32>
    %461 = arith.maximumf %460, %459 : vector<4x128xf32>
    %462 = vector.broadcast %cst_205 : f32 to vector<4x128xf32>
    %463 = arith.minimumf %462, %461 : vector<4x128xf32>
    %464 = math.tanh %463 : vector<4x128xf32>
    %465 = arith.mulf %456, %464 : vector<4x128xf32>
    %466 = tpu.concatenate %465, %465 in 1 : vector<4x128xf32>, vector<4x128xf32> -> vector<4x256xf32>
    %cst_206 = arith.constant 0.000000e+00 : f32
    %467 = vector.broadcast %cst_206 : f32 to vector<4x256xf32>
    %468 = arith.select %87, %466, %467 : vector<4x256xi1>, vector<4x256xf32>
    %469 = arith.truncf %468 : vector<4x256xf32> to vector<4x256xbf16>
    %c0_207 = arith.constant 0 : index
    %c0_208 = arith.constant 0 : index
    %c0_209 = arith.constant 0 : index
    %470 = vector.load %arg15[%c0_207, %c0_208, %c0_209] : memref<2x256x128xbf16, #tpu.memory_space<vmem>>, vector<1x256x128xbf16>
    %471 = vector.shape_cast %470 : vector<1x256x128xbf16> to vector<256x128xbf16>
    %cst_210 = arith.constant dense<0.000000e+00> : vector<4x128xf32>
    %472 = tpu.matmul %469, %471, %cst_210 {dimension_numbers = #tpu.dot_dimension_numbers<[1], [0], [0], [1], [0, 0, 1, 1], [], []>} : vector<4x256xbf16>, vector<256x128xbf16>, vector<4x128xf32> -> vector<4x128xf32>
    %cst_211 = arith.constant -3.000000e+00 : f32
    %cst_212 = arith.constant 3.000000e+00 : f32
    %473 = vector.broadcast %cst_211 : f32 to vector<4x128xf32>
    %474 = arith.maximumf %473, %472 : vector<4x128xf32>
    %475 = vector.broadcast %cst_212 : f32 to vector<4x128xf32>
    %476 = arith.minimumf %475, %474 : vector<4x128xf32>
    %477 = vector.extract_strided_slice %476 {offsets = [0, 0], sizes = [2, 128], strides = [1, 1]} : vector<4x128xf32> to vector<2x128xf32>
    %478 = vector.extract_strided_slice %476 {offsets = [2, 0], sizes = [2, 128], strides = [1, 1]} : vector<4x128xf32> to vector<2x128xf32>
    %c14_213 = arith.constant 14 : index
    %c0_214 = arith.constant 0 : index
    %479 = vector.load %arg17[%c14_213, %c0_214] : memref<16x512xf32, #tpu.memory_space<vmem>>, vector<2x512xf32>
    %c0_215 = arith.constant 0 : index
    %c0_216 = arith.constant 0 : index
    %480 = vector.load %arg18[%c0_215, %c0_216] : memref<16x512xf32, #tpu.memory_space<vmem>>, vector<2x512xf32>
    %481 = tpu.concatenate %479, %480 in 0 : vector<2x512xf32>, vector<2x512xf32> -> vector<4x512xf32>
    %482 = tpu.concatenate %476, %476 in 1 : vector<4x128xf32>, vector<4x128xf32> -> vector<4x256xf32>
    %cst_217 = arith.constant 0.000000e+00 : f32
    %483 = vector.broadcast %cst_217 : f32 to vector<4x256xf32>
    %484 = arith.select %87, %482, %483 : vector<4x256xi1>, vector<4x256xf32>
    %485 = arith.truncf %484 : vector<4x256xf32> to vector<4x256xbf16>
    %c0_218 = arith.constant 0 : index
    %c0_219 = arith.constant 0 : index
    %c0_220 = arith.constant 0 : index
    %486 = vector.load %arg13[%c0_218, %c0_219, %c0_220] : memref<2x256x512xbf16, #tpu.memory_space<vmem>>, vector<1x256x512xbf16>
    %487 = vector.shape_cast %486 : vector<1x256x512xbf16> to vector<256x512xbf16>
    %cst_221 = arith.constant dense<0.000000e+00> : vector<4x512xf32>
    %488 = tpu.matmul %485, %487, %cst_221 {dimension_numbers = #tpu.dot_dimension_numbers<[1], [0], [0], [1], [0, 0, 1, 1], [], []>} : vector<4x256xbf16>, vector<256x512xbf16>, vector<4x512xf32> -> vector<4x512xf32>
    %489 = arith.addf %481, %488 : vector<4x512xf32>
    %490 = vector.extract_strided_slice %489 {offsets = [0, 0], sizes = [4, 128], strides = [1, 1]} : vector<4x512xf32> to vector<4x128xf32>
    %491 = arith.negf %490 : vector<4x128xf32>
    %492 = math.exp %491 : vector<4x128xf32>
    %cst_222 = arith.constant 1.000000e+00 : f32
    %493 = vector.broadcast %cst_222 : f32 to vector<4x128xf32>
    %494 = arith.addf %493, %492 : vector<4x128xf32>
    %495 = arith.divf %493, %494 : vector<4x128xf32>
    %496 = vector.extract_strided_slice %489 {offsets = [0, 128], sizes = [4, 128], strides = [1, 1]} : vector<4x512xf32> to vector<4x128xf32>
    %497 = arith.negf %496 : vector<4x128xf32>
    %498 = math.exp %497 : vector<4x128xf32>
    %cst_223 = arith.constant 1.000000e+00 : f32
    %499 = vector.broadcast %cst_223 : f32 to vector<4x128xf32>
    %500 = arith.addf %499, %498 : vector<4x128xf32>
    %501 = arith.divf %499, %500 : vector<4x128xf32>
    %502 = vector.extract_strided_slice %489 {offsets = [0, 256], sizes = [4, 128], strides = [1, 1]} : vector<4x512xf32> to vector<4x128xf32>
    %503 = math.tanh %502 : vector<4x128xf32>
    %504 = vector.extract_strided_slice %489 {offsets = [0, 384], sizes = [4, 128], strides = [1, 1]} : vector<4x512xf32> to vector<4x128xf32>
    %505 = arith.negf %504 : vector<4x128xf32>
    %506 = math.exp %505 : vector<4x128xf32>
    %cst_224 = arith.constant 1.000000e+00 : f32
    %507 = vector.broadcast %cst_224 : f32 to vector<4x128xf32>
    %508 = arith.addf %507, %506 : vector<4x128xf32>
    %509 = arith.divf %507, %508 : vector<4x128xf32>
    %510 = arith.mulf %501, %463 : vector<4x128xf32>
    %511 = arith.mulf %495, %503 : vector<4x128xf32>
    %512 = arith.addf %510, %511 : vector<4x128xf32>
    %cst_225 = arith.constant -3.000000e+00 : f32
    %cst_226 = arith.constant 3.000000e+00 : f32
    %513 = vector.broadcast %cst_225 : f32 to vector<4x128xf32>
    %514 = arith.maximumf %513, %512 : vector<4x128xf32>
    %515 = vector.broadcast %cst_226 : f32 to vector<4x128xf32>
    %516 = arith.minimumf %515, %514 : vector<4x128xf32>
    %517 = math.tanh %516 : vector<4x128xf32>
    %518 = arith.mulf %509, %517 : vector<4x128xf32>
    %519 = tpu.concatenate %518, %518 in 1 : vector<4x128xf32>, vector<4x128xf32> -> vector<4x256xf32>
    %cst_227 = arith.constant 0.000000e+00 : f32
    %520 = vector.broadcast %cst_227 : f32 to vector<4x256xf32>
    %521 = arith.select %87, %519, %520 : vector<4x256xi1>, vector<4x256xf32>
    %522 = arith.truncf %521 : vector<4x256xf32> to vector<4x256xbf16>
    %c0_228 = arith.constant 0 : index
    %c0_229 = arith.constant 0 : index
    %c0_230 = arith.constant 0 : index
    %523 = vector.load %arg15[%c0_228, %c0_229, %c0_230] : memref<2x256x128xbf16, #tpu.memory_space<vmem>>, vector<1x256x128xbf16>
    %524 = vector.shape_cast %523 : vector<1x256x128xbf16> to vector<256x128xbf16>
    %cst_231 = arith.constant dense<0.000000e+00> : vector<4x128xf32>
    %525 = tpu.matmul %522, %524, %cst_231 {dimension_numbers = #tpu.dot_dimension_numbers<[1], [0], [0], [1], [0, 0, 1, 1], [], []>} : vector<4x256xbf16>, vector<256x128xbf16>, vector<4x128xf32> -> vector<4x128xf32>
    %cst_232 = arith.constant -3.000000e+00 : f32
    %cst_233 = arith.constant 3.000000e+00 : f32
    %526 = vector.broadcast %cst_232 : f32 to vector<4x128xf32>
    %527 = arith.maximumf %526, %525 : vector<4x128xf32>
    %528 = vector.broadcast %cst_233 : f32 to vector<4x128xf32>
    %529 = arith.minimumf %528, %527 : vector<4x128xf32>
    %530 = vector.extract_strided_slice %529 {offsets = [0, 0], sizes = [2, 128], strides = [1, 1]} : vector<4x128xf32> to vector<2x128xf32>
    %531 = vector.extract_strided_slice %529 {offsets = [2, 0], sizes = [2, 128], strides = [1, 1]} : vector<4x128xf32> to vector<2x128xf32>
    %532 = tpu.concatenate %159, %212, %265, %318, %371, %424, %477, %530 in 0 : vector<2x128xf32>, vector<2x128xf32>, vector<2x128xf32>, vector<2x128xf32>, vector<2x128xf32>, vector<2x128xf32>, vector<2x128xf32>, vector<2x128xf32> -> vector<16x128xf32>
    %533 = tpu.concatenate %531, %478, %425, %372, %319, %266, %213, %160 in 0 : vector<2x128xf32>, vector<2x128xf32>, vector<2x128xf32>, vector<2x128xf32>, vector<2x128xf32>, vector<2x128xf32>, vector<2x128xf32>, vector<2x128xf32> -> vector<16x128xf32>
    %c0_234 = arith.constant 0 : index
    %c0_235 = arith.constant 0 : index
    %534 = vector.load %arg19[%c0_234, %c0_235] : memref<16x128xf32, #tpu.memory_space<vmem>>, vector<16x128xf32>
    tpu.vector_store %arg19[%c0_234, %c0_235], %532 {strides = array<i32>} : memref<16x128xf32, #tpu.memory_space<vmem>>, vector<16x128xf32>,
    %c0_236 = arith.constant 0 : index
    %c0_237 = arith.constant 0 : index
    %535 = vector.load %arg20[%c0_236, %c0_237] : memref<16x128xf32, #tpu.memory_space<vmem>>, vector<16x128xf32>
    tpu.vector_store %arg20[%c0_236, %c0_237], %533 {strides = array<i32>} : memref<16x128xf32, #tpu.memory_space<vmem>>, vector<16x128xf32>,
    %c0_238 = arith.constant 0 : index
    %c0_239 = arith.constant 0 : index
    %536 = vector.load %arg19[%c0_238, %c0_239] : memref<16x128xf32, #tpu.memory_space<vmem>>, vector<16x128xf32>
    %c0_240 = arith.constant 0 : index
    %c0_241 = arith.constant 0 : index
    %537 = vector.load %arg20[%c0_240, %c0_241] : memref<16x128xf32, #tpu.memory_space<vmem>>, vector<16x128xf32>
    %538 = arith.truncf %536 : vector<16x128xf32> to vector<16x128xbf16>
    %c2_242 = arith.constant 2 : index
    %c0_243 = arith.constant 0 : index
    %c0_244 = arith.constant 0 : index
    %539 = vector.load %arg12[%c2_242, %c0_243, %c0_244] : memref<4x128x512xbf16, #tpu.memory_space<vmem>>, vector<1x128x512xbf16>
    %540 = vector.shape_cast %539 : vector<1x128x512xbf16> to vector<128x512xbf16>
    %cst_245 = arith.constant dense<0.000000e+00> : vector<16x512xf32>
    %541 = tpu.matmul %538, %540, %cst_245 {dimension_numbers = #tpu.dot_dimension_numbers<[1], [0], [0], [1], [0, 0, 1, 1], [], []>} : vector<16x128xbf16>, vector<128x512xbf16>, vector<16x512xf32> -> vector<16x512xf32>
    %c2_246 = arith.constant 2 : index
    %c0_247 = arith.constant 0 : index
    %c0_248 = arith.constant 0 : index
    %542 = vector.load %arg14[%c2_246, %c0_247, %c0_248] : memref<4x1x512xf32, #tpu.memory_space<vmem>>, vector<1x1x512xf32>
    %543 = vector.shape_cast %542 : vector<1x1x512xf32> to vector<1x512xf32>
    %544 = vector.broadcast %543 : vector<1x512xf32> to vector<16x512xf32>
    %545 = arith.addf %541, %544 : vector<16x512xf32>
    %c0_249 = arith.constant 0 : index
    %c0_250 = arith.constant 0 : index
    %546 = vector.load %arg17[%c0_249, %c0_250] : memref<16x512xf32, #tpu.memory_space<vmem>>, vector<16x512xf32>
    tpu.vector_store %arg17[%c0_249, %c0_250], %545 {strides = array<i32>} : memref<16x512xf32, #tpu.memory_space<vmem>>, vector<16x512xf32>,
    %547 = arith.truncf %537 : vector<16x128xf32> to vector<16x128xbf16>
    %c3 = arith.constant 3 : index
    %c0_251 = arith.constant 0 : index
    %c0_252 = arith.constant 0 : index
    %548 = vector.load %arg12[%c3, %c0_251, %c0_252] : memref<4x128x512xbf16, #tpu.memory_space<vmem>>, vector<1x128x512xbf16>
    %549 = vector.shape_cast %548 : vector<1x128x512xbf16> to vector<128x512xbf16>
    %cst_253 = arith.constant dense<0.000000e+00> : vector<16x512xf32>
    %550 = tpu.matmul %547, %549, %cst_253 {dimension_numbers = #tpu.dot_dimension_numbers<[1], [0], [0], [1], [0, 0, 1, 1], [], []>} : vector<16x128xbf16>, vector<128x512xbf16>, vector<16x512xf32> -> vector<16x512xf32>
    %c3_254 = arith.constant 3 : index
    %c0_255 = arith.constant 0 : index
    %c0_256 = arith.constant 0 : index
    %551 = vector.load %arg14[%c3_254, %c0_255, %c0_256] : memref<4x1x512xf32, #tpu.memory_space<vmem>>, vector<1x1x512xf32>
    %552 = vector.shape_cast %551 : vector<1x1x512xf32> to vector<1x512xf32>
    %553 = vector.broadcast %552 : vector<1x512xf32> to vector<16x512xf32>
    %554 = arith.addf %550, %553 : vector<16x512xf32>
    %c0_257 = arith.constant 0 : index
    %c0_258 = arith.constant 0 : index
    %555 = vector.load %arg18[%c0_257, %c0_258] : memref<16x512xf32, #tpu.memory_space<vmem>>, vector<16x512xf32>
    tpu.vector_store %arg18[%c0_257, %c0_258], %554 {strides = array<i32>} : memref<16x512xf32, #tpu.memory_space<vmem>>, vector<16x512xf32>,
    %cst_259 = arith.constant 0.000000e+00 : f32
    %556 = vector.broadcast %cst_259 : f32 to vector<4x128xf32>
    %cst_260 = arith.constant 0.000000e+00 : f32
    %557 = vector.broadcast %cst_260 : f32 to vector<4x128xf32>
    %c0_261 = arith.constant 0 : index
    %c0_262 = arith.constant 0 : index
    %558 = vector.load %arg17[%c0_261, %c0_262] : memref<16x512xf32, #tpu.memory_space<vmem>>, vector<2x512xf32>
    %c14_263 = arith.constant 14 : index
    %c0_264 = arith.constant 0 : index
    %559 = vector.load %arg18[%c14_263, %c0_264] : memref<16x512xf32, #tpu.memory_space<vmem>>, vector<2x512xf32>
    %560 = tpu.concatenate %558, %559 in 0 : vector<2x512xf32>, vector<2x512xf32> -> vector<4x512xf32>
    %561 = tpu.concatenate %556, %556 in 1 : vector<4x128xf32>, vector<4x128xf32> -> vector<4x256xf32>
    %cst_265 = arith.constant 0.000000e+00 : f32
    %562 = vector.broadcast %cst_265 : f32 to vector<4x256xf32>
    %563 = arith.select %87, %561, %562 : vector<4x256xi1>, vector<4x256xf32>
    %564 = arith.truncf %563 : vector<4x256xf32> to vector<4x256xbf16>
    %c1_266 = arith.constant 1 : index
    %c0_267 = arith.constant 0 : index
    %c0_268 = arith.constant 0 : index
    %565 = vector.load %arg13[%c1_266, %c0_267, %c0_268] : memref<2x256x512xbf16, #tpu.memory_space<vmem>>, vector<1x256x512xbf16>
    %566 = vector.shape_cast %565 : vector<1x256x512xbf16> to vector<256x512xbf16>
    %cst_269 = arith.constant dense<0.000000e+00> : vector<4x512xf32>
    %567 = tpu.matmul %564, %566, %cst_269 {dimension_numbers = #tpu.dot_dimension_numbers<[1], [0], [0], [1], [0, 0, 1, 1], [], []>} : vector<4x256xbf16>, vector<256x512xbf16>, vector<4x512xf32> -> vector<4x512xf32>
    %568 = arith.addf %560, %567 : vector<4x512xf32>
    %569 = vector.extract_strided_slice %568 {offsets = [0, 0], sizes = [4, 128], strides = [1, 1]} : vector<4x512xf32> to vector<4x128xf32>
    %570 = arith.negf %569 : vector<4x128xf32>
    %571 = math.exp %570 : vector<4x128xf32>
    %cst_270 = arith.constant 1.000000e+00 : f32
    %572 = vector.broadcast %cst_270 : f32 to vector<4x128xf32>
    %573 = arith.addf %572, %571 : vector<4x128xf32>
    %574 = arith.divf %572, %573 : vector<4x128xf32>
    %575 = vector.extract_strided_slice %568 {offsets = [0, 128], sizes = [4, 128], strides = [1, 1]} : vector<4x512xf32> to vector<4x128xf32>
    %576 = arith.negf %575 : vector<4x128xf32>
    %577 = math.exp %576 : vector<4x128xf32>
    %cst_271 = arith.constant 1.000000e+00 : f32
    %578 = vector.broadcast %cst_271 : f32 to vector<4x128xf32>
    %579 = arith.addf %578, %577 : vector<4x128xf32>
    %580 = arith.divf %578, %579 : vector<4x128xf32>
    %581 = vector.extract_strided_slice %568 {offsets = [0, 256], sizes = [4, 128], strides = [1, 1]} : vector<4x512xf32> to vector<4x128xf32>
    %582 = math.tanh %581 : vector<4x128xf32>
    %583 = vector.extract_strided_slice %568 {offsets = [0, 384], sizes = [4, 128], strides = [1, 1]} : vector<4x512xf32> to vector<4x128xf32>
    %584 = arith.negf %583 : vector<4x128xf32>
    %585 = math.exp %584 : vector<4x128xf32>
    %cst_272 = arith.constant 1.000000e+00 : f32
    %586 = vector.broadcast %cst_272 : f32 to vector<4x128xf32>
    %587 = arith.addf %586, %585 : vector<4x128xf32>
    %588 = arith.divf %586, %587 : vector<4x128xf32>
    %589 = arith.mulf %580, %557 : vector<4x128xf32>
    %590 = arith.mulf %574, %582 : vector<4x128xf32>
    %591 = arith.addf %589, %590 : vector<4x128xf32>
    %cst_273 = arith.constant -3.000000e+00 : f32
    %cst_274 = arith.constant 3.000000e+00 : f32
    %592 = vector.broadcast %cst_273 : f32 to vector<4x128xf32>
    %593 = arith.maximumf %592, %591 : vector<4x128xf32>
    %594 = vector.broadcast %cst_274 : f32 to vector<4x128xf32>
    %595 = arith.minimumf %594, %593 : vector<4x128xf32>
    %596 = math.tanh %595 : vector<4x128xf32>
    %597 = arith.mulf %588, %596 : vector<4x128xf32>
    %598 = tpu.concatenate %597, %597 in 1 : vector<4x128xf32>, vector<4x128xf32> -> vector<4x256xf32>
    %cst_275 = arith.constant 0.000000e+00 : f32
    %599 = vector.broadcast %cst_275 : f32 to vector<4x256xf32>
    %600 = arith.select %87, %598, %599 : vector<4x256xi1>, vector<4x256xf32>
    %601 = arith.truncf %600 : vector<4x256xf32> to vector<4x256xbf16>
    %c1_276 = arith.constant 1 : index
    %c0_277 = arith.constant 0 : index
    %c0_278 = arith.constant 0 : index
    %602 = vector.load %arg15[%c1_276, %c0_277, %c0_278] : memref<2x256x128xbf16, #tpu.memory_space<vmem>>, vector<1x256x128xbf16>
    %603 = vector.shape_cast %602 : vector<1x256x128xbf16> to vector<256x128xbf16>
    %cst_279 = arith.constant dense<0.000000e+00> : vector<4x128xf32>
    %604 = tpu.matmul %601, %603, %cst_279 {dimension_numbers = #tpu.dot_dimension_numbers<[1], [0], [0], [1], [0, 0, 1, 1], [], []>} : vector<4x256xbf16>, vector<256x128xbf16>, vector<4x128xf32> -> vector<4x128xf32>
    %cst_280 = arith.constant -3.000000e+00 : f32
    %cst_281 = arith.constant 3.000000e+00 : f32
    %605 = vector.broadcast %cst_280 : f32 to vector<4x128xf32>
    %606 = arith.maximumf %605, %604 : vector<4x128xf32>
    %607 = vector.broadcast %cst_281 : f32 to vector<4x128xf32>
    %608 = arith.minimumf %607, %606 : vector<4x128xf32>
    %609 = vector.extract_strided_slice %608 {offsets = [0, 0], sizes = [2, 128], strides = [1, 1]} : vector<4x128xf32> to vector<2x128xf32>
    %610 = vector.extract_strided_slice %608 {offsets = [2, 0], sizes = [2, 128], strides = [1, 1]} : vector<4x128xf32> to vector<2x128xf32>
    %c2_282 = arith.constant 2 : index
    %c0_283 = arith.constant 0 : index
    %611 = vector.load %arg17[%c2_282, %c0_283] : memref<16x512xf32, #tpu.memory_space<vmem>>, vector<2x512xf32>
    %c12_284 = arith.constant 12 : index
    %c0_285 = arith.constant 0 : index
    %612 = vector.load %arg18[%c12_284, %c0_285] : memref<16x512xf32, #tpu.memory_space<vmem>>, vector<2x512xf32>
    %613 = tpu.concatenate %611, %612 in 0 : vector<2x512xf32>, vector<2x512xf32> -> vector<4x512xf32>
    %614 = tpu.concatenate %608, %608 in 1 : vector<4x128xf32>, vector<4x128xf32> -> vector<4x256xf32>
    %cst_286 = arith.constant 0.000000e+00 : f32
    %615 = vector.broadcast %cst_286 : f32 to vector<4x256xf32>
    %616 = arith.select %87, %614, %615 : vector<4x256xi1>, vector<4x256xf32>
    %617 = arith.truncf %616 : vector<4x256xf32> to vector<4x256xbf16>
    %c1_287 = arith.constant 1 : index
    %c0_288 = arith.constant 0 : index
    %c0_289 = arith.constant 0 : index
    %618 = vector.load %arg13[%c1_287, %c0_288, %c0_289] : memref<2x256x512xbf16, #tpu.memory_space<vmem>>, vector<1x256x512xbf16>
    %619 = vector.shape_cast %618 : vector<1x256x512xbf16> to vector<256x512xbf16>
    %cst_290 = arith.constant dense<0.000000e+00> : vector<4x512xf32>
    %620 = tpu.matmul %617, %619, %cst_290 {dimension_numbers = #tpu.dot_dimension_numbers<[1], [0], [0], [1], [0, 0, 1, 1], [], []>} : vector<4x256xbf16>, vector<256x512xbf16>, vector<4x512xf32> -> vector<4x512xf32>
    %621 = arith.addf %613, %620 : vector<4x512xf32>
    %622 = vector.extract_strided_slice %621 {offsets = [0, 0], sizes = [4, 128], strides = [1, 1]} : vector<4x512xf32> to vector<4x128xf32>
    %623 = arith.negf %622 : vector<4x128xf32>
    %624 = math.exp %623 : vector<4x128xf32>
    %cst_291 = arith.constant 1.000000e+00 : f32
    %625 = vector.broadcast %cst_291 : f32 to vector<4x128xf32>
    %626 = arith.addf %625, %624 : vector<4x128xf32>
    %627 = arith.divf %625, %626 : vector<4x128xf32>
    %628 = vector.extract_strided_slice %621 {offsets = [0, 128], sizes = [4, 128], strides = [1, 1]} : vector<4x512xf32> to vector<4x128xf32>
    %629 = arith.negf %628 : vector<4x128xf32>
    %630 = math.exp %629 : vector<4x128xf32>
    %cst_292 = arith.constant 1.000000e+00 : f32
    %631 = vector.broadcast %cst_292 : f32 to vector<4x128xf32>
    %632 = arith.addf %631, %630 : vector<4x128xf32>
    %633 = arith.divf %631, %632 : vector<4x128xf32>
    %634 = vector.extract_strided_slice %621 {offsets = [0, 256], sizes = [4, 128], strides = [1, 1]} : vector<4x512xf32> to vector<4x128xf32>
    %635 = math.tanh %634 : vector<4x128xf32>
    %636 = vector.extract_strided_slice %621 {offsets = [0, 384], sizes = [4, 128], strides = [1, 1]} : vector<4x512xf32> to vector<4x128xf32>
    %637 = arith.negf %636 : vector<4x128xf32>
    %638 = math.exp %637 : vector<4x128xf32>
    %cst_293 = arith.constant 1.000000e+00 : f32
    %639 = vector.broadcast %cst_293 : f32 to vector<4x128xf32>
    %640 = arith.addf %639, %638 : vector<4x128xf32>
    %641 = arith.divf %639, %640 : vector<4x128xf32>
    %642 = arith.mulf %633, %595 : vector<4x128xf32>
    %643 = arith.mulf %627, %635 : vector<4x128xf32>
    %644 = arith.addf %642, %643 : vector<4x128xf32>
    %cst_294 = arith.constant -3.000000e+00 : f32
    %cst_295 = arith.constant 3.000000e+00 : f32
    %645 = vector.broadcast %cst_294 : f32 to vector<4x128xf32>
    %646 = arith.maximumf %645, %644 : vector<4x128xf32>
    %647 = vector.broadcast %cst_295 : f32 to vector<4x128xf32>
    %648 = arith.minimumf %647, %646 : vector<4x128xf32>
    %649 = math.tanh %648 : vector<4x128xf32>
    %650 = arith.mulf %641, %649 : vector<4x128xf32>
    %651 = tpu.concatenate %650, %650 in 1 : vector<4x128xf32>, vector<4x128xf32> -> vector<4x256xf32>
    %cst_296 = arith.constant 0.000000e+00 : f32
    %652 = vector.broadcast %cst_296 : f32 to vector<4x256xf32>
    %653 = arith.select %87, %651, %652 : vector<4x256xi1>, vector<4x256xf32>
    %654 = arith.truncf %653 : vector<4x256xf32> to vector<4x256xbf16>
    %c1_297 = arith.constant 1 : index
    %c0_298 = arith.constant 0 : index
    %c0_299 = arith.constant 0 : index
    %655 = vector.load %arg15[%c1_297, %c0_298, %c0_299] : memref<2x256x128xbf16, #tpu.memory_space<vmem>>, vector<1x256x128xbf16>
    %656 = vector.shape_cast %655 : vector<1x256x128xbf16> to vector<256x128xbf16>
    %cst_300 = arith.constant dense<0.000000e+00> : vector<4x128xf32>
    %657 = tpu.matmul %654, %656, %cst_300 {dimension_numbers = #tpu.dot_dimension_numbers<[1], [0], [0], [1], [0, 0, 1, 1], [], []>} : vector<4x256xbf16>, vector<256x128xbf16>, vector<4x128xf32> -> vector<4x128xf32>
    %cst_301 = arith.constant -3.000000e+00 : f32
    %cst_302 = arith.constant 3.000000e+00 : f32
    %658 = vector.broadcast %cst_301 : f32 to vector<4x128xf32>
    %659 = arith.maximumf %658, %657 : vector<4x128xf32>
    %660 = vector.broadcast %cst_302 : f32 to vector<4x128xf32>
    %661 = arith.minimumf %660, %659 : vector<4x128xf32>
    %662 = vector.extract_strided_slice %661 {offsets = [0, 0], sizes = [2, 128], strides = [1, 1]} : vector<4x128xf32> to vector<2x128xf32>
    %663 = vector.extract_strided_slice %661 {offsets = [2, 0], sizes = [2, 128], strides = [1, 1]} : vector<4x128xf32> to vector<2x128xf32>
    %c4_303 = arith.constant 4 : index
    %c0_304 = arith.constant 0 : index
    %664 = vector.load %arg17[%c4_303, %c0_304] : memref<16x512xf32, #tpu.memory_space<vmem>>, vector<2x512xf32>
    %c10_305 = arith.constant 10 : index
    %c0_306 = arith.constant 0 : index
    %665 = vector.load %arg18[%c10_305, %c0_306] : memref<16x512xf32, #tpu.memory_space<vmem>>, vector<2x512xf32>
    %666 = tpu.concatenate %664, %665 in 0 : vector<2x512xf32>, vector<2x512xf32> -> vector<4x512xf32>
    %667 = tpu.concatenate %661, %661 in 1 : vector<4x128xf32>, vector<4x128xf32> -> vector<4x256xf32>
    %cst_307 = arith.constant 0.000000e+00 : f32
    %668 = vector.broadcast %cst_307 : f32 to vector<4x256xf32>
    %669 = arith.select %87, %667, %668 : vector<4x256xi1>, vector<4x256xf32>
    %670 = arith.truncf %669 : vector<4x256xf32> to vector<4x256xbf16>
    %c1_308 = arith.constant 1 : index
    %c0_309 = arith.constant 0 : index
    %c0_310 = arith.constant 0 : index
    %671 = vector.load %arg13[%c1_308, %c0_309, %c0_310] : memref<2x256x512xbf16, #tpu.memory_space<vmem>>, vector<1x256x512xbf16>
    %672 = vector.shape_cast %671 : vector<1x256x512xbf16> to vector<256x512xbf16>
    %cst_311 = arith.constant dense<0.000000e+00> : vector<4x512xf32>
    %673 = tpu.matmul %670, %672, %cst_311 {dimension_numbers = #tpu.dot_dimension_numbers<[1], [0], [0], [1], [0, 0, 1, 1], [], []>} : vector<4x256xbf16>, vector<256x512xbf16>, vector<4x512xf32> -> vector<4x512xf32>
    %674 = arith.addf %666, %673 : vector<4x512xf32>
    %675 = vector.extract_strided_slice %674 {offsets = [0, 0], sizes = [4, 128], strides = [1, 1]} : vector<4x512xf32> to vector<4x128xf32>
    %676 = arith.negf %675 : vector<4x128xf32>
    %677 = math.exp %676 : vector<4x128xf32>
    %cst_312 = arith.constant 1.000000e+00 : f32
    %678 = vector.broadcast %cst_312 : f32 to vector<4x128xf32>
    %679 = arith.addf %678, %677 : vector<4x128xf32>
    %680 = arith.divf %678, %679 : vector<4x128xf32>
    %681 = vector.extract_strided_slice %674 {offsets = [0, 128], sizes = [4, 128], strides = [1, 1]} : vector<4x512xf32> to vector<4x128xf32>
    %682 = arith.negf %681 : vector<4x128xf32>
    %683 = math.exp %682 : vector<4x128xf32>
    %cst_313 = arith.constant 1.000000e+00 : f32
    %684 = vector.broadcast %cst_313 : f32 to vector<4x128xf32>
    %685 = arith.addf %684, %683 : vector<4x128xf32>
    %686 = arith.divf %684, %685 : vector<4x128xf32>
    %687 = vector.extract_strided_slice %674 {offsets = [0, 256], sizes = [4, 128], strides = [1, 1]} : vector<4x512xf32> to vector<4x128xf32>
    %688 = math.tanh %687 : vector<4x128xf32>
    %689 = vector.extract_strided_slice %674 {offsets = [0, 384], sizes = [4, 128], strides = [1, 1]} : vector<4x512xf32> to vector<4x128xf32>
    %690 = arith.negf %689 : vector<4x128xf32>
    %691 = math.exp %690 : vector<4x128xf32>
    %cst_314 = arith.constant 1.000000e+00 : f32
    %692 = vector.broadcast %cst_314 : f32 to vector<4x128xf32>
    %693 = arith.addf %692, %691 : vector<4x128xf32>
    %694 = arith.divf %692, %693 : vector<4x128xf32>
    %695 = arith.mulf %686, %648 : vector<4x128xf32>
    %696 = arith.mulf %680, %688 : vector<4x128xf32>
    %697 = arith.addf %695, %696 : vector<4x128xf32>
    %cst_315 = arith.constant -3.000000e+00 : f32
    %cst_316 = arith.constant 3.000000e+00 : f32
    %698 = vector.broadcast %cst_315 : f32 to vector<4x128xf32>
    %699 = arith.maximumf %698, %697 : vector<4x128xf32>
    %700 = vector.broadcast %cst_316 : f32 to vector<4x128xf32>
    %701 = arith.minimumf %700, %699 : vector<4x128xf32>
    %702 = math.tanh %701 : vector<4x128xf32>
    %703 = arith.mulf %694, %702 : vector<4x128xf32>
    %704 = tpu.concatenate %703, %703 in 1 : vector<4x128xf32>, vector<4x128xf32> -> vector<4x256xf32>
    %cst_317 = arith.constant 0.000000e+00 : f32
    %705 = vector.broadcast %cst_317 : f32 to vector<4x256xf32>
    %706 = arith.select %87, %704, %705 : vector<4x256xi1>, vector<4x256xf32>
    %707 = arith.truncf %706 : vector<4x256xf32> to vector<4x256xbf16>
    %c1_318 = arith.constant 1 : index
    %c0_319 = arith.constant 0 : index
    %c0_320 = arith.constant 0 : index
    %708 = vector.load %arg15[%c1_318, %c0_319, %c0_320] : memref<2x256x128xbf16, #tpu.memory_space<vmem>>, vector<1x256x128xbf16>
    %709 = vector.shape_cast %708 : vector<1x256x128xbf16> to vector<256x128xbf16>
    %cst_321 = arith.constant dense<0.000000e+00> : vector<4x128xf32>
    %710 = tpu.matmul %707, %709, %cst_321 {dimension_numbers = #tpu.dot_dimension_numbers<[1], [0], [0], [1], [0, 0, 1, 1], [], []>} : vector<4x256xbf16>, vector<256x128xbf16>, vector<4x128xf32> -> vector<4x128xf32>
    %cst_322 = arith.constant -3.000000e+00 : f32
    %cst_323 = arith.constant 3.000000e+00 : f32
    %711 = vector.broadcast %cst_322 : f32 to vector<4x128xf32>
    %712 = arith.maximumf %711, %710 : vector<4x128xf32>
    %713 = vector.broadcast %cst_323 : f32 to vector<4x128xf32>
    %714 = arith.minimumf %713, %712 : vector<4x128xf32>
    %715 = vector.extract_strided_slice %714 {offsets = [0, 0], sizes = [2, 128], strides = [1, 1]} : vector<4x128xf32> to vector<2x128xf32>
    %716 = vector.extract_strided_slice %714 {offsets = [2, 0], sizes = [2, 128], strides = [1, 1]} : vector<4x128xf32> to vector<2x128xf32>
    %c6_324 = arith.constant 6 : index
    %c0_325 = arith.constant 0 : index
    %717 = vector.load %arg17[%c6_324, %c0_325] : memref<16x512xf32, #tpu.memory_space<vmem>>, vector<2x512xf32>
    %c8_326 = arith.constant 8 : index
    %c0_327 = arith.constant 0 : index
    %718 = vector.load %arg18[%c8_326, %c0_327] : memref<16x512xf32, #tpu.memory_space<vmem>>, vector<2x512xf32>
    %719 = tpu.concatenate %717, %718 in 0 : vector<2x512xf32>, vector<2x512xf32> -> vector<4x512xf32>
    %720 = tpu.concatenate %714, %714 in 1 : vector<4x128xf32>, vector<4x128xf32> -> vector<4x256xf32>
    %cst_328 = arith.constant 0.000000e+00 : f32
    %721 = vector.broadcast %cst_328 : f32 to vector<4x256xf32>
    %722 = arith.select %87, %720, %721 : vector<4x256xi1>, vector<4x256xf32>
    %723 = arith.truncf %722 : vector<4x256xf32> to vector<4x256xbf16>
    %c1_329 = arith.constant 1 : index
    %c0_330 = arith.constant 0 : index
    %c0_331 = arith.constant 0 : index
    %724 = vector.load %arg13[%c1_329, %c0_330, %c0_331] : memref<2x256x512xbf16, #tpu.memory_space<vmem>>, vector<1x256x512xbf16>
    %725 = vector.shape_cast %724 : vector<1x256x512xbf16> to vector<256x512xbf16>
    %cst_332 = arith.constant dense<0.000000e+00> : vector<4x512xf32>
    %726 = tpu.matmul %723, %725, %cst_332 {dimension_numbers = #tpu.dot_dimension_numbers<[1], [0], [0], [1], [0, 0, 1, 1], [], []>} : vector<4x256xbf16>, vector<256x512xbf16>, vector<4x512xf32> -> vector<4x512xf32>
    %727 = arith.addf %719, %726 : vector<4x512xf32>
    %728 = vector.extract_strided_slice %727 {offsets = [0, 0], sizes = [4, 128], strides = [1, 1]} : vector<4x512xf32> to vector<4x128xf32>
    %729 = arith.negf %728 : vector<4x128xf32>
    %730 = math.exp %729 : vector<4x128xf32>
    %cst_333 = arith.constant 1.000000e+00 : f32
    %731 = vector.broadcast %cst_333 : f32 to vector<4x128xf32>
    %732 = arith.addf %731, %730 : vector<4x128xf32>
    %733 = arith.divf %731, %732 : vector<4x128xf32>
    %734 = vector.extract_strided_slice %727 {offsets = [0, 128], sizes = [4, 128], strides = [1, 1]} : vector<4x512xf32> to vector<4x128xf32>
    %735 = arith.negf %734 : vector<4x128xf32>
    %736 = math.exp %735 : vector<4x128xf32>
    %cst_334 = arith.constant 1.000000e+00 : f32
    %737 = vector.broadcast %cst_334 : f32 to vector<4x128xf32>
    %738 = arith.addf %737, %736 : vector<4x128xf32>
    %739 = arith.divf %737, %738 : vector<4x128xf32>
    %740 = vector.extract_strided_slice %727 {offsets = [0, 256], sizes = [4, 128], strides = [1, 1]} : vector<4x512xf32> to vector<4x128xf32>
    %741 = math.tanh %740 : vector<4x128xf32>
    %742 = vector.extract_strided_slice %727 {offsets = [0, 384], sizes = [4, 128], strides = [1, 1]} : vector<4x512xf32> to vector<4x128xf32>
    %743 = arith.negf %742 : vector<4x128xf32>
    %744 = math.exp %743 : vector<4x128xf32>
    %cst_335 = arith.constant 1.000000e+00 : f32
    %745 = vector.broadcast %cst_335 : f32 to vector<4x128xf32>
    %746 = arith.addf %745, %744 : vector<4x128xf32>
    %747 = arith.divf %745, %746 : vector<4x128xf32>
    %748 = arith.mulf %739, %701 : vector<4x128xf32>
    %749 = arith.mulf %733, %741 : vector<4x128xf32>
    %750 = arith.addf %748, %749 : vector<4x128xf32>
    %cst_336 = arith.constant -3.000000e+00 : f32
    %cst_337 = arith.constant 3.000000e+00 : f32
    %751 = vector.broadcast %cst_336 : f32 to vector<4x128xf32>
    %752 = arith.maximumf %751, %750 : vector<4x128xf32>
    %753 = vector.broadcast %cst_337 : f32 to vector<4x128xf32>
    %754 = arith.minimumf %753, %752 : vector<4x128xf32>
    %755 = math.tanh %754 : vector<4x128xf32>
    %756 = arith.mulf %747, %755 : vector<4x128xf32>
    %757 = tpu.concatenate %756, %756 in 1 : vector<4x128xf32>, vector<4x128xf32> -> vector<4x256xf32>
    %cst_338 = arith.constant 0.000000e+00 : f32
    %758 = vector.broadcast %cst_338 : f32 to vector<4x256xf32>
    %759 = arith.select %87, %757, %758 : vector<4x256xi1>, vector<4x256xf32>
    %760 = arith.truncf %759 : vector<4x256xf32> to vector<4x256xbf16>
    %c1_339 = arith.constant 1 : index
    %c0_340 = arith.constant 0 : index
    %c0_341 = arith.constant 0 : index
    %761 = vector.load %arg15[%c1_339, %c0_340, %c0_341] : memref<2x256x128xbf16, #tpu.memory_space<vmem>>, vector<1x256x128xbf16>
    %762 = vector.shape_cast %761 : vector<1x256x128xbf16> to vector<256x128xbf16>
    %cst_342 = arith.constant dense<0.000000e+00> : vector<4x128xf32>
    %763 = tpu.matmul %760, %762, %cst_342 {dimension_numbers = #tpu.dot_dimension_numbers<[1], [0], [0], [1], [0, 0, 1, 1], [], []>} : vector<4x256xbf16>, vector<256x128xbf16>, vector<4x128xf32> -> vector<4x128xf32>
    %cst_343 = arith.constant -3.000000e+00 : f32
    %cst_344 = arith.constant 3.000000e+00 : f32
    %764 = vector.broadcast %cst_343 : f32 to vector<4x128xf32>
    %765 = arith.maximumf %764, %763 : vector<4x128xf32>
    %766 = vector.broadcast %cst_344 : f32 to vector<4x128xf32>
    %767 = arith.minimumf %766, %765 : vector<4x128xf32>
    %768 = vector.extract_strided_slice %767 {offsets = [0, 0], sizes = [2, 128], strides = [1, 1]} : vector<4x128xf32> to vector<2x128xf32>
    %769 = vector.extract_strided_slice %767 {offsets = [2, 0], sizes = [2, 128], strides = [1, 1]} : vector<4x128xf32> to vector<2x128xf32>
    %c8_345 = arith.constant 8 : index
    %c0_346 = arith.constant 0 : index
    %770 = vector.load %arg17[%c8_345, %c0_346] : memref<16x512xf32, #tpu.memory_space<vmem>>, vector<2x512xf32>
    %c6_347 = arith.constant 6 : index
    %c0_348 = arith.constant 0 : index
    %771 = vector.load %arg18[%c6_347, %c0_348] : memref<16x512xf32, #tpu.memory_space<vmem>>, vector<2x512xf32>
    %772 = tpu.concatenate %770, %771 in 0 : vector<2x512xf32>, vector<2x512xf32> -> vector<4x512xf32>
    %773 = tpu.concatenate %767, %767 in 1 : vector<4x128xf32>, vector<4x128xf32> -> vector<4x256xf32>
    %cst_349 = arith.constant 0.000000e+00 : f32
    %774 = vector.broadcast %cst_349 : f32 to vector<4x256xf32>
    %775 = arith.select %87, %773, %774 : vector<4x256xi1>, vector<4x256xf32>
    %776 = arith.truncf %775 : vector<4x256xf32> to vector<4x256xbf16>
    %c1_350 = arith.constant 1 : index
    %c0_351 = arith.constant 0 : index
    %c0_352 = arith.constant 0 : index
    %777 = vector.load %arg13[%c1_350, %c0_351, %c0_352] : memref<2x256x512xbf16, #tpu.memory_space<vmem>>, vector<1x256x512xbf16>
    %778 = vector.shape_cast %777 : vector<1x256x512xbf16> to vector<256x512xbf16>
    %cst_353 = arith.constant dense<0.000000e+00> : vector<4x512xf32>
    %779 = tpu.matmul %776, %778, %cst_353 {dimension_numbers = #tpu.dot_dimension_numbers<[1], [0], [0], [1], [0, 0, 1, 1], [], []>} : vector<4x256xbf16>, vector<256x512xbf16>, vector<4x512xf32> -> vector<4x512xf32>
    %780 = arith.addf %772, %779 : vector<4x512xf32>
    %781 = vector.extract_strided_slice %780 {offsets = [0, 0], sizes = [4, 128], strides = [1, 1]} : vector<4x512xf32> to vector<4x128xf32>
    %782 = arith.negf %781 : vector<4x128xf32>
    %783 = math.exp %782 : vector<4x128xf32>
    %cst_354 = arith.constant 1.000000e+00 : f32
    %784 = vector.broadcast %cst_354 : f32 to vector<4x128xf32>
    %785 = arith.addf %784, %783 : vector<4x128xf32>
    %786 = arith.divf %784, %785 : vector<4x128xf32>
    %787 = vector.extract_strided_slice %780 {offsets = [0, 128], sizes = [4, 128], strides = [1, 1]} : vector<4x512xf32> to vector<4x128xf32>
    %788 = arith.negf %787 : vector<4x128xf32>
    %789 = math.exp %788 : vector<4x128xf32>
    %cst_355 = arith.constant 1.000000e+00 : f32
    %790 = vector.broadcast %cst_355 : f32 to vector<4x128xf32>
    %791 = arith.addf %790, %789 : vector<4x128xf32>
    %792 = arith.divf %790, %791 : vector<4x128xf32>
    %793 = vector.extract_strided_slice %780 {offsets = [0, 256], sizes = [4, 128], strides = [1, 1]} : vector<4x512xf32> to vector<4x128xf32>
    %794 = math.tanh %793 : vector<4x128xf32>
    %795 = vector.extract_strided_slice %780 {offsets = [0, 384], sizes = [4, 128], strides = [1, 1]} : vector<4x512xf32> to vector<4x128xf32>
    %796 = arith.negf %795 : vector<4x128xf32>
    %797 = math.exp %796 : vector<4x128xf32>
    %cst_356 = arith.constant 1.000000e+00 : f32
    %798 = vector.broadcast %cst_356 : f32 to vector<4x128xf32>
    %799 = arith.addf %798, %797 : vector<4x128xf32>
    %800 = arith.divf %798, %799 : vector<4x128xf32>
    %801 = arith.mulf %792, %754 : vector<4x128xf32>
    %802 = arith.mulf %786, %794 : vector<4x128xf32>
    %803 = arith.addf %801, %802 : vector<4x128xf32>
    %cst_357 = arith.constant -3.000000e+00 : f32
    %cst_358 = arith.constant 3.000000e+00 : f32
    %804 = vector.broadcast %cst_357 : f32 to vector<4x128xf32>
    %805 = arith.maximumf %804, %803 : vector<4x128xf32>
    %806 = vector.broadcast %cst_358 : f32 to vector<4x128xf32>
    %807 = arith.minimumf %806, %805 : vector<4x128xf32>
    %808 = math.tanh %807 : vector<4x128xf32>
    %809 = arith.mulf %800, %808 : vector<4x128xf32>
    %810 = tpu.concatenate %809, %809 in 1 : vector<4x128xf32>, vector<4x128xf32> -> vector<4x256xf32>
    %cst_359 = arith.constant 0.000000e+00 : f32
    %811 = vector.broadcast %cst_359 : f32 to vector<4x256xf32>
    %812 = arith.select %87, %810, %811 : vector<4x256xi1>, vector<4x256xf32>
    %813 = arith.truncf %812 : vector<4x256xf32> to vector<4x256xbf16>
    %c1_360 = arith.constant 1 : index
    %c0_361 = arith.constant 0 : index
    %c0_362 = arith.constant 0 : index
    %814 = vector.load %arg15[%c1_360, %c0_361, %c0_362] : memref<2x256x128xbf16, #tpu.memory_space<vmem>>, vector<1x256x128xbf16>
    %815 = vector.shape_cast %814 : vector<1x256x128xbf16> to vector<256x128xbf16>
    %cst_363 = arith.constant dense<0.000000e+00> : vector<4x128xf32>
    %816 = tpu.matmul %813, %815, %cst_363 {dimension_numbers = #tpu.dot_dimension_numbers<[1], [0], [0], [1], [0, 0, 1, 1], [], []>} : vector<4x256xbf16>, vector<256x128xbf16>, vector<4x128xf32> -> vector<4x128xf32>
    %cst_364 = arith.constant -3.000000e+00 : f32
    %cst_365 = arith.constant 3.000000e+00 : f32
    %817 = vector.broadcast %cst_364 : f32 to vector<4x128xf32>
    %818 = arith.maximumf %817, %816 : vector<4x128xf32>
    %819 = vector.broadcast %cst_365 : f32 to vector<4x128xf32>
    %820 = arith.minimumf %819, %818 : vector<4x128xf32>
    %821 = vector.extract_strided_slice %820 {offsets = [0, 0], sizes = [2, 128], strides = [1, 1]} : vector<4x128xf32> to vector<2x128xf32>
    %822 = vector.extract_strided_slice %820 {offsets = [2, 0], sizes = [2, 128], strides = [1, 1]} : vector<4x128xf32> to vector<2x128xf32>
    %c10_366 = arith.constant 10 : index
    %c0_367 = arith.constant 0 : index
    %823 = vector.load %arg17[%c10_366, %c0_367] : memref<16x512xf32, #tpu.memory_space<vmem>>, vector<2x512xf32>
    %c4_368 = arith.constant 4 : index
    %c0_369 = arith.constant 0 : index
    %824 = vector.load %arg18[%c4_368, %c0_369] : memref<16x512xf32, #tpu.memory_space<vmem>>, vector<2x512xf32>
    %825 = tpu.concatenate %823, %824 in 0 : vector<2x512xf32>, vector<2x512xf32> -> vector<4x512xf32>
    %826 = tpu.concatenate %820, %820 in 1 : vector<4x128xf32>, vector<4x128xf32> -> vector<4x256xf32>
    %cst_370 = arith.constant 0.000000e+00 : f32
    %827 = vector.broadcast %cst_370 : f32 to vector<4x256xf32>
    %828 = arith.select %87, %826, %827 : vector<4x256xi1>, vector<4x256xf32>
    %829 = arith.truncf %828 : vector<4x256xf32> to vector<4x256xbf16>
    %c1_371 = arith.constant 1 : index
    %c0_372 = arith.constant 0 : index
    %c0_373 = arith.constant 0 : index
    %830 = vector.load %arg13[%c1_371, %c0_372, %c0_373] : memref<2x256x512xbf16, #tpu.memory_space<vmem>>, vector<1x256x512xbf16>
    %831 = vector.shape_cast %830 : vector<1x256x512xbf16> to vector<256x512xbf16>
    %cst_374 = arith.constant dense<0.000000e+00> : vector<4x512xf32>
    %832 = tpu.matmul %829, %831, %cst_374 {dimension_numbers = #tpu.dot_dimension_numbers<[1], [0], [0], [1], [0, 0, 1, 1], [], []>} : vector<4x256xbf16>, vector<256x512xbf16>, vector<4x512xf32> -> vector<4x512xf32>
    %833 = arith.addf %825, %832 : vector<4x512xf32>
    %834 = vector.extract_strided_slice %833 {offsets = [0, 0], sizes = [4, 128], strides = [1, 1]} : vector<4x512xf32> to vector<4x128xf32>
    %835 = arith.negf %834 : vector<4x128xf32>
    %836 = math.exp %835 : vector<4x128xf32>
    %cst_375 = arith.constant 1.000000e+00 : f32
    %837 = vector.broadcast %cst_375 : f32 to vector<4x128xf32>
    %838 = arith.addf %837, %836 : vector<4x128xf32>
    %839 = arith.divf %837, %838 : vector<4x128xf32>
    %840 = vector.extract_strided_slice %833 {offsets = [0, 128], sizes = [4, 128], strides = [1, 1]} : vector<4x512xf32> to vector<4x128xf32>
    %841 = arith.negf %840 : vector<4x128xf32>
    %842 = math.exp %841 : vector<4x128xf32>
    %cst_376 = arith.constant 1.000000e+00 : f32
    %843 = vector.broadcast %cst_376 : f32 to vector<4x128xf32>
    %844 = arith.addf %843, %842 : vector<4x128xf32>
    %845 = arith.divf %843, %844 : vector<4x128xf32>
    %846 = vector.extract_strided_slice %833 {offsets = [0, 256], sizes = [4, 128], strides = [1, 1]} : vector<4x512xf32> to vector<4x128xf32>
    %847 = math.tanh %846 : vector<4x128xf32>
    %848 = vector.extract_strided_slice %833 {offsets = [0, 384], sizes = [4, 128], strides = [1, 1]} : vector<4x512xf32> to vector<4x128xf32>
    %849 = arith.negf %848 : vector<4x128xf32>
    %850 = math.exp %849 : vector<4x128xf32>
    %cst_377 = arith.constant 1.000000e+00 : f32
    %851 = vector.broadcast %cst_377 : f32 to vector<4x128xf32>
    %852 = arith.addf %851, %850 : vector<4x128xf32>
    %853 = arith.divf %851, %852 : vector<4x128xf32>
    %854 = arith.mulf %845, %807 : vector<4x128xf32>
    %855 = arith.mulf %839, %847 : vector<4x128xf32>
    %856 = arith.addf %854, %855 : vector<4x128xf32>
    %cst_378 = arith.constant -3.000000e+00 : f32
    %cst_379 = arith.constant 3.000000e+00 : f32
    %857 = vector.broadcast %cst_378 : f32 to vector<4x128xf32>
    %858 = arith.maximumf %857, %856 : vector<4x128xf32>
    %859 = vector.broadcast %cst_379 : f32 to vector<4x128xf32>
    %860 = arith.minimumf %859, %858 : vector<4x128xf32>
    %861 = math.tanh %860 : vector<4x128xf32>
    %862 = arith.mulf %853, %861 : vector<4x128xf32>
    %863 = tpu.concatenate %862, %862 in 1 : vector<4x128xf32>, vector<4x128xf32> -> vector<4x256xf32>
    %cst_380 = arith.constant 0.000000e+00 : f32
    %864 = vector.broadcast %cst_380 : f32 to vector<4x256xf32>
    %865 = arith.select %87, %863, %864 : vector<4x256xi1>, vector<4x256xf32>
    %866 = arith.truncf %865 : vector<4x256xf32> to vector<4x256xbf16>
    %c1_381 = arith.constant 1 : index
    %c0_382 = arith.constant 0 : index
    %c0_383 = arith.constant 0 : index
    %867 = vector.load %arg15[%c1_381, %c0_382, %c0_383] : memref<2x256x128xbf16, #tpu.memory_space<vmem>>, vector<1x256x128xbf16>
    %868 = vector.shape_cast %867 : vector<1x256x128xbf16> to vector<256x128xbf16>
    %cst_384 = arith.constant dense<0.000000e+00> : vector<4x128xf32>
    %869 = tpu.matmul %866, %868, %cst_384 {dimension_numbers = #tpu.dot_dimension_numbers<[1], [0], [0], [1], [0, 0, 1, 1], [], []>} : vector<4x256xbf16>, vector<256x128xbf16>, vector<4x128xf32> -> vector<4x128xf32>
    %cst_385 = arith.constant -3.000000e+00 : f32
    %cst_386 = arith.constant 3.000000e+00 : f32
    %870 = vector.broadcast %cst_385 : f32 to vector<4x128xf32>
    %871 = arith.maximumf %870, %869 : vector<4x128xf32>
    %872 = vector.broadcast %cst_386 : f32 to vector<4x128xf32>
    %873 = arith.minimumf %872, %871 : vector<4x128xf32>
    %874 = vector.extract_strided_slice %873 {offsets = [0, 0], sizes = [2, 128], strides = [1, 1]} : vector<4x128xf32> to vector<2x128xf32>
    %875 = vector.extract_strided_slice %873 {offsets = [2, 0], sizes = [2, 128], strides = [1, 1]} : vector<4x128xf32> to vector<2x128xf32>
    %c12_387 = arith.constant 12 : index
    %c0_388 = arith.constant 0 : index
    %876 = vector.load %arg17[%c12_387, %c0_388] : memref<16x512xf32, #tpu.memory_space<vmem>>, vector<2x512xf32>
    %c2_389 = arith.constant 2 : index
    %c0_390 = arith.constant 0 : index
    %877 = vector.load %arg18[%c2_389, %c0_390] : memref<16x512xf32, #tpu.memory_space<vmem>>, vector<2x512xf32>
    %878 = tpu.concatenate %876, %877 in 0 : vector<2x512xf32>, vector<2x512xf32> -> vector<4x512xf32>
    %879 = tpu.concatenate %873, %873 in 1 : vector<4x128xf32>, vector<4x128xf32> -> vector<4x256xf32>
    %cst_391 = arith.constant 0.000000e+00 : f32
    %880 = vector.broadcast %cst_391 : f32 to vector<4x256xf32>
    %881 = arith.select %87, %879, %880 : vector<4x256xi1>, vector<4x256xf32>
    %882 = arith.truncf %881 : vector<4x256xf32> to vector<4x256xbf16>
    %c1_392 = arith.constant 1 : index
    %c0_393 = arith.constant 0 : index
    %c0_394 = arith.constant 0 : index
    %883 = vector.load %arg13[%c1_392, %c0_393, %c0_394] : memref<2x256x512xbf16, #tpu.memory_space<vmem>>, vector<1x256x512xbf16>
    %884 = vector.shape_cast %883 : vector<1x256x512xbf16> to vector<256x512xbf16>
    %cst_395 = arith.constant dense<0.000000e+00> : vector<4x512xf32>
    %885 = tpu.matmul %882, %884, %cst_395 {dimension_numbers = #tpu.dot_dimension_numbers<[1], [0], [0], [1], [0, 0, 1, 1], [], []>} : vector<4x256xbf16>, vector<256x512xbf16>, vector<4x512xf32> -> vector<4x512xf32>
    %886 = arith.addf %878, %885 : vector<4x512xf32>
    %887 = vector.extract_strided_slice %886 {offsets = [0, 0], sizes = [4, 128], strides = [1, 1]} : vector<4x512xf32> to vector<4x128xf32>
    %888 = arith.negf %887 : vector<4x128xf32>
    %889 = math.exp %888 : vector<4x128xf32>
    %cst_396 = arith.constant 1.000000e+00 : f32
    %890 = vector.broadcast %cst_396 : f32 to vector<4x128xf32>
    %891 = arith.addf %890, %889 : vector<4x128xf32>
    %892 = arith.divf %890, %891 : vector<4x128xf32>
    %893 = vector.extract_strided_slice %886 {offsets = [0, 128], sizes = [4, 128], strides = [1, 1]} : vector<4x512xf32> to vector<4x128xf32>
    %894 = arith.negf %893 : vector<4x128xf32>
    %895 = math.exp %894 : vector<4x128xf32>
    %cst_397 = arith.constant 1.000000e+00 : f32
    %896 = vector.broadcast %cst_397 : f32 to vector<4x128xf32>
    %897 = arith.addf %896, %895 : vector<4x128xf32>
    %898 = arith.divf %896, %897 : vector<4x128xf32>
    %899 = vector.extract_strided_slice %886 {offsets = [0, 256], sizes = [4, 128], strides = [1, 1]} : vector<4x512xf32> to vector<4x128xf32>
    %900 = math.tanh %899 : vector<4x128xf32>
    %901 = vector.extract_strided_slice %886 {offsets = [0, 384], sizes = [4, 128], strides = [1, 1]} : vector<4x512xf32> to vector<4x128xf32>
    %902 = arith.negf %901 : vector<4x128xf32>
    %903 = math.exp %902 : vector<4x128xf32>
    %cst_398 = arith.constant 1.000000e+00 : f32
    %904 = vector.broadcast %cst_398 : f32 to vector<4x128xf32>
    %905 = arith.addf %904, %903 : vector<4x128xf32>
    %906 = arith.divf %904, %905 : vector<4x128xf32>
    %907 = arith.mulf %898, %860 : vector<4x128xf32>
    %908 = arith.mulf %892, %900 : vector<4x128xf32>
    %909 = arith.addf %907, %908 : vector<4x128xf32>
    %cst_399 = arith.constant -3.000000e+00 : f32
    %cst_400 = arith.constant 3.000000e+00 : f32
    %910 = vector.broadcast %cst_399 : f32 to vector<4x128xf32>
    %911 = arith.maximumf %910, %909 : vector<4x128xf32>
    %912 = vector.broadcast %cst_400 : f32 to vector<4x128xf32>
    %913 = arith.minimumf %912, %911 : vector<4x128xf32>
    %914 = math.tanh %913 : vector<4x128xf32>
    %915 = arith.mulf %906, %914 : vector<4x128xf32>
    %916 = tpu.concatenate %915, %915 in 1 : vector<4x128xf32>, vector<4x128xf32> -> vector<4x256xf32>
    %cst_401 = arith.constant 0.000000e+00 : f32
    %917 = vector.broadcast %cst_401 : f32 to vector<4x256xf32>
    %918 = arith.select %87, %916, %917 : vector<4x256xi1>, vector<4x256xf32>
    %919 = arith.truncf %918 : vector<4x256xf32> to vector<4x256xbf16>
    %c1_402 = arith.constant 1 : index
    %c0_403 = arith.constant 0 : index
    %c0_404 = arith.constant 0 : index
    %920 = vector.load %arg15[%c1_402, %c0_403, %c0_404] : memref<2x256x128xbf16, #tpu.memory_space<vmem>>, vector<1x256x128xbf16>
    %921 = vector.shape_cast %920 : vector<1x256x128xbf16> to vector<256x128xbf16>
    %cst_405 = arith.constant dense<0.000000e+00> : vector<4x128xf32>
    %922 = tpu.matmul %919, %921, %cst_405 {dimension_numbers = #tpu.dot_dimension_numbers<[1], [0], [0], [1], [0, 0, 1, 1], [], []>} : vector<4x256xbf16>, vector<256x128xbf16>, vector<4x128xf32> -> vector<4x128xf32>
    %cst_406 = arith.constant -3.000000e+00 : f32
    %cst_407 = arith.constant 3.000000e+00 : f32
    %923 = vector.broadcast %cst_406 : f32 to vector<4x128xf32>
    %924 = arith.maximumf %923, %922 : vector<4x128xf32>
    %925 = vector.broadcast %cst_407 : f32 to vector<4x128xf32>
    %926 = arith.minimumf %925, %924 : vector<4x128xf32>
    %927 = vector.extract_strided_slice %926 {offsets = [0, 0], sizes = [2, 128], strides = [1, 1]} : vector<4x128xf32> to vector<2x128xf32>
    %928 = vector.extract_strided_slice %926 {offsets = [2, 0], sizes = [2, 128], strides = [1, 1]} : vector<4x128xf32> to vector<2x128xf32>
    %c14_408 = arith.constant 14 : index
    %c0_409 = arith.constant 0 : index
    %929 = vector.load %arg17[%c14_408, %c0_409] : memref<16x512xf32, #tpu.memory_space<vmem>>, vector<2x512xf32>
    %c0_410 = arith.constant 0 : index
    %c0_411 = arith.constant 0 : index
    %930 = vector.load %arg18[%c0_410, %c0_411] : memref<16x512xf32, #tpu.memory_space<vmem>>, vector<2x512xf32>
    %931 = tpu.concatenate %929, %930 in 0 : vector<2x512xf32>, vector<2x512xf32> -> vector<4x512xf32>
    %932 = tpu.concatenate %926, %926 in 1 : vector<4x128xf32>, vector<4x128xf32> -> vector<4x256xf32>
    %cst_412 = arith.constant 0.000000e+00 : f32
    %933 = vector.broadcast %cst_412 : f32 to vector<4x256xf32>
    %934 = arith.select %87, %932, %933 : vector<4x256xi1>, vector<4x256xf32>
    %935 = arith.truncf %934 : vector<4x256xf32> to vector<4x256xbf16>
    %c1_413 = arith.constant 1 : index
    %c0_414 = arith.constant 0 : index
    %c0_415 = arith.constant 0 : index
    %936 = vector.load %arg13[%c1_413, %c0_414, %c0_415] : memref<2x256x512xbf16, #tpu.memory_space<vmem>>, vector<1x256x512xbf16>
    %937 = vector.shape_cast %936 : vector<1x256x512xbf16> to vector<256x512xbf16>
    %cst_416 = arith.constant dense<0.000000e+00> : vector<4x512xf32>
    %938 = tpu.matmul %935, %937, %cst_416 {dimension_numbers = #tpu.dot_dimension_numbers<[1], [0], [0], [1], [0, 0, 1, 1], [], []>} : vector<4x256xbf16>, vector<256x512xbf16>, vector<4x512xf32> -> vector<4x512xf32>
    %939 = arith.addf %931, %938 : vector<4x512xf32>
    %940 = vector.extract_strided_slice %939 {offsets = [0, 0], sizes = [4, 128], strides = [1, 1]} : vector<4x512xf32> to vector<4x128xf32>
    %941 = arith.negf %940 : vector<4x128xf32>
    %942 = math.exp %941 : vector<4x128xf32>
    %cst_417 = arith.constant 1.000000e+00 : f32
    %943 = vector.broadcast %cst_417 : f32 to vector<4x128xf32>
    %944 = arith.addf %943, %942 : vector<4x128xf32>
    %945 = arith.divf %943, %944 : vector<4x128xf32>
    %946 = vector.extract_strided_slice %939 {offsets = [0, 128], sizes = [4, 128], strides = [1, 1]} : vector<4x512xf32> to vector<4x128xf32>
    %947 = arith.negf %946 : vector<4x128xf32>
    %948 = math.exp %947 : vector<4x128xf32>
    %cst_418 = arith.constant 1.000000e+00 : f32
    %949 = vector.broadcast %cst_418 : f32 to vector<4x128xf32>
    %950 = arith.addf %949, %948 : vector<4x128xf32>
    %951 = arith.divf %949, %950 : vector<4x128xf32>
    %952 = vector.extract_strided_slice %939 {offsets = [0, 256], sizes = [4, 128], strides = [1, 1]} : vector<4x512xf32> to vector<4x128xf32>
    %953 = math.tanh %952 : vector<4x128xf32>
    %954 = vector.extract_strided_slice %939 {offsets = [0, 384], sizes = [4, 128], strides = [1, 1]} : vector<4x512xf32> to vector<4x128xf32>
    %955 = arith.negf %954 : vector<4x128xf32>
    %956 = math.exp %955 : vector<4x128xf32>
    %cst_419 = arith.constant 1.000000e+00 : f32
    %957 = vector.broadcast %cst_419 : f32 to vector<4x128xf32>
    %958 = arith.addf %957, %956 : vector<4x128xf32>
    %959 = arith.divf %957, %958 : vector<4x128xf32>
    %960 = arith.mulf %951, %913 : vector<4x128xf32>
    %961 = arith.mulf %945, %953 : vector<4x128xf32>
    %962 = arith.addf %960, %961 : vector<4x128xf32>
    %cst_420 = arith.constant -3.000000e+00 : f32
    %cst_421 = arith.constant 3.000000e+00 : f32
    %963 = vector.broadcast %cst_420 : f32 to vector<4x128xf32>
    %964 = arith.maximumf %963, %962 : vector<4x128xf32>
    %965 = vector.broadcast %cst_421 : f32 to vector<4x128xf32>
    %966 = arith.minimumf %965, %964 : vector<4x128xf32>
    %967 = math.tanh %966 : vector<4x128xf32>
    %968 = arith.mulf %959, %967 : vector<4x128xf32>
    %969 = tpu.concatenate %968, %968 in 1 : vector<4x128xf32>, vector<4x128xf32> -> vector<4x256xf32>
    %cst_422 = arith.constant 0.000000e+00 : f32
    %970 = vector.broadcast %cst_422 : f32 to vector<4x256xf32>
    %971 = arith.select %87, %969, %970 : vector<4x256xi1>, vector<4x256xf32>
    %972 = arith.truncf %971 : vector<4x256xf32> to vector<4x256xbf16>
    %c1_423 = arith.constant 1 : index
    %c0_424 = arith.constant 0 : index
    %c0_425 = arith.constant 0 : index
    %973 = vector.load %arg15[%c1_423, %c0_424, %c0_425] : memref<2x256x128xbf16, #tpu.memory_space<vmem>>, vector<1x256x128xbf16>
    %974 = vector.shape_cast %973 : vector<1x256x128xbf16> to vector<256x128xbf16>
    %cst_426 = arith.constant dense<0.000000e+00> : vector<4x128xf32>
    %975 = tpu.matmul %972, %974, %cst_426 {dimension_numbers = #tpu.dot_dimension_numbers<[1], [0], [0], [1], [0, 0, 1, 1], [], []>} : vector<4x256xbf16>, vector<256x128xbf16>, vector<4x128xf32> -> vector<4x128xf32>
    %cst_427 = arith.constant -3.000000e+00 : f32
    %cst_428 = arith.constant 3.000000e+00 : f32
    %976 = vector.broadcast %cst_427 : f32 to vector<4x128xf32>
    %977 = arith.maximumf %976, %975 : vector<4x128xf32>
    %978 = vector.broadcast %cst_428 : f32 to vector<4x128xf32>
    %979 = arith.minimumf %978, %977 : vector<4x128xf32>
    %980 = vector.extract_strided_slice %979 {offsets = [0, 0], sizes = [2, 128], strides = [1, 1]} : vector<4x128xf32> to vector<2x128xf32>
    %981 = vector.extract_strided_slice %979 {offsets = [2, 0], sizes = [2, 128], strides = [1, 1]} : vector<4x128xf32> to vector<2x128xf32>
    %982 = tpu.concatenate %609, %662, %715, %768, %821, %874, %927, %980 in 0 : vector<2x128xf32>, vector<2x128xf32>, vector<2x128xf32>, vector<2x128xf32>, vector<2x128xf32>, vector<2x128xf32>, vector<2x128xf32>, vector<2x128xf32> -> vector<16x128xf32>
    %983 = tpu.concatenate %981, %928, %875, %822, %769, %716, %663, %610 in 0 : vector<2x128xf32>, vector<2x128xf32>, vector<2x128xf32>, vector<2x128xf32>, vector<2x128xf32>, vector<2x128xf32>, vector<2x128xf32>, vector<2x128xf32> -> vector<16x128xf32>
    %c0_429 = arith.constant 0 : index
    %c0_430 = arith.constant 0 : index
    %984 = vector.load %arg19[%c0_429, %c0_430] : memref<16x128xf32, #tpu.memory_space<vmem>>, vector<16x128xf32>
    %985 = arith.addf %982, %984 : vector<16x128xf32>
    %c0_431 = arith.constant 0 : index
    %c0_432 = arith.constant 0 : index
    %986 = vector.load %arg20[%c0_431, %c0_432] : memref<16x128xf32, #tpu.memory_space<vmem>>, vector<16x128xf32>
    %987 = arith.addf %983, %986 : vector<16x128xf32>
    %988 = tpu.concatenate %985, %987 in 1 : vector<16x128xf32>, vector<16x128xf32> -> vector<16x256xf32>
    %c0_433 = arith.constant 0 : index
    %c0_434 = arith.constant 0 : index
    %989 = vector.load %arg16[%c0_433, %c0_434] : memref<16x256xf32, #tpu.memory_space<vmem>>, vector<16x256xf32>
    tpu.vector_store %arg16[%c0_433, %c0_434], %988 {strides = array<i32>} : memref<16x256xf32, #tpu.memory_space<vmem>>, vector<16x256xf32>,
    return
  }
}

</mosaic_0001>

<llo_original>
// kernel: elmo_forward.1
$region0: #{elmo_forward.1}
  #allocation0 [shape = 'u32[]', space=smem, size = 0x4, offset = 0x4, fixed_abs, tag = 'smem constant byte address 0x4 - core index']
  #allocation1 [shape = 'u32[72,128]{1,0:T(1,128)}', space=vmem, size = 0x9000, scoped, tag = 'internal scratch']
  #allocation2 [shape = 'f32[16,512]{1,0:T(8,128)}', space=vmem, size = 0x8000, scoped, tag = 'scratch operand']
  #allocation3 [shape = 'f32[16,512]{1,0:T(8,128)}', space=vmem, size = 0x8000, scoped, tag = 'scratch operand']
  #allocation4 [shape = 'f32[16,128]{1,0:T(8,128)}', space=vmem, size = 0x2000, scoped, tag = 'scratch operand']
  #allocation5 [shape = 'f32[16,128]{1,0:T(8,128)}', space=vmem, size = 0x2000, scoped, tag = 'scratch operand']
  %s0 = inlined_call_operand.vmem [shape: f32[128,48], index: 0, kind: input, shape index: {}]
  %s1 = inlined_call_operand.vmem [shape: f32[16,16], index: 1, kind: input, shape index: {}]
  %s2 = inlined_call_operand.vmem [shape: bf16[48,128], index: 2, kind: input, shape index: {}]
  %s3 = inlined_call_operand.hbm [shape: f32[1,128], index: 3, kind: input, shape index: {}]
  %s4 = inlined_call_operand.hbm [shape: f32[8,128], index: 4, kind: input, shape index: {}]
  %s5 = inlined_call_operand.vmem [shape: bf16[2,128,128], index: 5, kind: input, shape index: {}]
  %s6 = inlined_call_operand.vmem [shape: f32[2,1,128], index: 6, kind: input, shape index: {}]
  %s7 = inlined_call_operand.hbm [shape: bf16[2,128,128], index: 7, kind: input, shape index: {}]
  %s8 = inlined_call_operand.vmem [shape: f32[2,1,128], index: 8, kind: input, shape index: {}]
  %s9 = inlined_call_operand.hbm [shape: bf16[16,128], index: 9, kind: input, shape index: {}]
  %s10 = inlined_call_operand.vmem [shape: bf16[128,128], index: 10, kind: input, shape index: {}]
  %s11 = inlined_call_operand.hbm [shape: f32[1,128], index: 11, kind: input, shape index: {}]
  %s12 = inlined_call_operand.vmem [shape: bf16[4,128,512], index: 12, kind: input, shape index: {}]
  %s13 = inlined_call_operand.vmem [shape: bf16[2,256,512], index: 13, kind: input, shape index: {}]
  %s14 = inlined_call_operand.hbm [shape: f32[4,1,512], index: 14, kind: input, shape index: {}]
  %s15 = inlined_call_operand.vmem [shape: bf16[2,256,128], index: 15, kind: input, shape index: {}]
  %s16 = inlined_call_operand.vmem [shape: f32[16,256], index: 16, kind: output, shape index: {}]
  %s17 = sld [smem:[#allocation0]]
  $region98: #{elmo_forward.1} parent=0
    _
  %s19 = ssub.s32 1, %s17
  %s20 = scalar_select 0, %s19, %s17
  $region1: #{elmo_forward.1} parent=0
    #allocation6 [shape = 'u8[512]{0}', space=vmem, size = 0x400, scoped, tag = 'input window, operand 3, single buffered']
    #allocation7 [shape = 's32[1]{0}', space=sflag, size = 0x4, scoped, tag = 'scoped memory for elmo_forward.1']
    #allocation8 [shape = 'u8[4096]{0}', space=vmem, size = 0x1000, scoped, tag = 'input window, operand 4, single buffered']
    #allocation9 [shape = 's32[1]{0}', space=sflag, size = 0x4, scoped, tag = 'scoped memory for elmo_forward.1']
    #allocation10 [shape = 'u8[65536]{0}', space=vmem, size = 0x10000, scoped, tag = 'input window, operand 7, single buffered']
    #allocation11 [shape = 'u8[4096]{0}', space=vmem, size = 0x1000, scoped, tag = 'input window, operand 9, single buffered']
    #allocation12 [shape = 's32[1]{0}', space=sflag, size = 0x4, scoped, tag = 'scoped memory for elmo_forward.1']
    #allocation13 [shape = 'u8[512]{0}', space=vmem, size = 0x400, scoped, tag = 'input window, operand 11, single buffered']
    #allocation14 [shape = 'u8[8192]{0}', space=vmem, size = 0x2000, scoped, tag = 'input window, operand 14, single buffered']
    #allocation15 [shape = 's32[1]{0}', space=sflag, size = 0x4, scoped, tag = 'scoped memory for elmo_forward.1']
    %21 = vsyncpa [#allocation7], 0
    %22 = vsyncpa [#allocation9], 0
    %23 = vsyncpa [#allocation12], 0
    %24 = vsyncpa [#allocation15], 0
    // Predicated region
    $region2: #{elmo_forward.1} parent=1 // pred_check
      _
    $region3: #{elmo_forward.1} parent=1 // pred_check_branch
      %26 = sbr.rel (0) target = $region5
    $region4: #{elmo_forward.1} parent=1 // pred_region
      _
    $region5: #{elmo_forward.1} parent=1 // pred_fallthru
      _
    // Predicated region
    $region6: #{elmo_forward.1} parent=1 // pred_check
      _
    $region7: #{elmo_forward.1} parent=1 // pred_check_branch
      %28 = sbr.rel (0) target = $region9
    $region8: #{elmo_forward.1} parent=1 // pred_region
      _
    $region9: #{elmo_forward.1} parent=1 // pred_fallthru
      _
    // Predicated region
    $region10: #{elmo_forward.1} parent=1 // pred_check
      _
    $region11: #{elmo_forward.1} parent=1 // pred_check_branch
      %30 = sbr.rel (0) target = $region13
    $region12: #{elmo_forward.1} parent=1 // pred_region
      _
    $region13: #{elmo_forward.1} parent=1 // pred_fallthru
      _
    // Predicated region
    $region14: #{elmo_forward.1} parent=1 // pred_check
      _
    $region15: #{elmo_forward.1} parent=1 // pred_check_branch
      %32 = sbr.rel (0) target = $region17
    $region16: #{elmo_forward.1} parent=1 // pred_region
      %34 = vsyncadd [#allocation7], 0
      %s36 = sshll.u32 %s3, 4
      %s37 = int_to_ptr.hbm [resolvable:$true] %s36
      %s38 = sshll.u32 [#allocation6], 4
      %s39 = int_to_ptr.vmem [resolvable:$true] %s38
      %41 = dma.hbm_to_vmem [thread:$0]  %s37, 16, %s39, [#allocation7]
    $region17: #{elmo_forward.1} parent=1 // pred_fallthru
      _
    // Predicated region
    $region18: #{elmo_forward.1} parent=1 // pred_check
      _
    $region19: #{elmo_forward.1} parent=1 // pred_check_branch
      %43 = sbr.rel (0) target = $region21
    $region20: #{elmo_forward.1} parent=1 // pred_region
      %45 = vsyncadd [#allocation9], 0
      %s47 = sshll.u32 %s4, 4
      %s48 = int_to_ptr.hbm [resolvable:$true] %s47
      %s49 = sshll.u32 [#allocation8], 4
      %s50 = int_to_ptr.vmem [resolvable:$true] %s49
      %52 = dma.hbm_to_vmem [thread:$0]  %s48, 128, %s50, [#allocation9]
    $region21: #{elmo_forward.1} parent=1 // pred_fallthru
      _
    // Predicated region
    $region22: #{elmo_forward.1} parent=1 // pred_check
      _
    $region23: #{elmo_forward.1} parent=1 // pred_check_branch
      %54 = sbr.rel (0) target = $region25
    $region24: #{elmo_forward.1} parent=1 // pred_region
      _
    $region25: #{elmo_forward.1} parent=1 // pred_fallthru
      _
    // Predicated region
    $region26: #{elmo_forward.1} parent=1 // pred_check
      _
    $region27: #{elmo_forward.1} parent=1 // pred_check_branch
      %56 = sbr.rel (0) target = $region29
    $region28: #{elmo_forward.1} parent=1 // pred_region
      _
    $region29: #{elmo_forward.1} parent=1 // pred_fallthru
      _
    // Predicated region
    $region30: #{elmo_forward.1} parent=1 // pred_check
      _
    $region31: #{elmo_forward.1} parent=1 // pred_check_branch
      %58 = sbr.rel (0) target = $region33
    $region32: #{elmo_forward.1} parent=1 // pred_region
      %60 = vsyncadd [#allocation9], 0
      %s61 = sshll.u32 %s7, 4
      %s62 = int_to_ptr.hbm [resolvable:$true] %s61
      %s63 = sshll.u32 [#allocation10], 4
      %s64 = int_to_ptr.vmem [resolvable:$true] %s63
      %69 = dma.hbm_to_vmem [thread:$0]  %s62, 2048, %s64, [#allocation9], 64, 64, 4
    $region33: #{elmo_forward.1} parent=1 // pred_fallthru
      _
    // Predicated region
    $region34: #{elmo_forward.1} parent=1 // pred_check
      _
    $region35: #{elmo_forward.1} parent=1 // pred_check_branch
      %71 = sbr.rel (0) target = $region37
    $region36: #{elmo_forward.1} parent=1 // pred_region
      _
    $region37: #{elmo_forward.1} parent=1 // pred_fallthru
      _
    // Predicated region
    $region38: #{elmo_forward.1} parent=1 // pred_check
      _
    $region39: #{elmo_forward.1} parent=1 // pred_check_branch
      %73 = sbr.rel (0) target = $region41
    $region40: #{elmo_forward.1} parent=1 // pred_region
      %75 = vsyncadd [#allocation12], 0
      %s76 = sshll.u32 %s9, 4
      %s77 = int_to_ptr.hbm [resolvable:$true] %s76
      %s78 = sshll.u32 [#allocation11], 4
      %s79 = int_to_ptr.vmem [resolvable:$true] %s78
      %84 = dma.hbm_to_vmem [thread:$0]  %s77, 128, %s79, [#allocation12], 64, 64, 4
    $region41: #{elmo_forward.1} parent=1 // pred_fallthru
      _
    // Predicated region
    $region42: #{elmo_forward.1} parent=1 // pred_check
      _
    $region43: #{elmo_forward.1} parent=1 // pred_check_branch
      %86 = sbr.rel (0) target = $region45
    $region44: #{elmo_forward.1} parent=1 // pred_region
      _
    $region45: #{elmo_forward.1} parent=1 // pred_fallthru
      _
    // Predicated region
    $region46: #{elmo_forward.1} parent=1 // pred_check
      _
    $region47: #{elmo_forward.1} parent=1 // pred_check_branch
      %88 = sbr.rel (0) target = $region49
    $region48: #{elmo_forward.1} parent=1 // pred_region
      %90 = vsyncadd [#allocation12], 0
      %s92 = sshll.u32 %s11, 4
      %s93 = int_to_ptr.hbm [resolvable:$true] %s92
      %s94 = sshll.u32 [#allocation13], 4
      %s95 = int_to_ptr.vmem [resolvable:$true] %s94
      %97 = dma.hbm_to_vmem [thread:$0]  %s93, 16, %s95, [#allocation12]
    $region49: #{elmo_forward.1} parent=1 // pred_fallthru
      _
    // Predicated region
    $region50: #{elmo_forward.1} parent=1 // pred_check
      _
    $region51: #{elmo_forward.1} parent=1 // pred_check_branch
      %99 = sbr.rel (0) target = $region53
    $region52: #{elmo_forward.1} parent=1 // pred_region
      _
    $region53: #{elmo_forward.1} parent=1 // pred_fallthru
      _
    // Predicated region
    $region54: #{elmo_forward.1} parent=1 // pred_check
      _
    $region55: #{elmo_forward.1} parent=1 // pred_check_branch
      %101 = sbr.rel (0) target = $region57
    $region56: #{elmo_forward.1} parent=1 // pred_region
      _
    $region57: #{elmo_forward.1} parent=1 // pred_fallthru
      _
    // Predicated region
    $region58: #{elmo_forward.1} parent=1 // pred_check
      _
    $region59: #{elmo_forward.1} parent=1 // pred_check_branch
      %103 = sbr.rel (0) target = $region61
    $region60: #{elmo_forward.1} parent=1 // pred_region
      %105 = vsyncadd [#allocation15], 0
      %s106 = sshll.u32 %s14, 4
      %s107 = int_to_ptr.hbm [resolvable:$true] %s106
      %s108 = sshll.u32 [#allocation14], 4
      %s109 = int_to_ptr.vmem [resolvable:$true] %s108
      %114 = dma.hbm_to_vmem [thread:$0]  %s107, 256, %s109, [#allocation15], 64, 64, 4
    $region61: #{elmo_forward.1} parent=1 // pred_fallthru
      _
    // Predicated region
    $region62: #{elmo_forward.1} parent=1 // pred_check
      _
    $region63: #{elmo_forward.1} parent=1 // pred_check_branch
      %116 = sbr.rel (0) target = $region65
    $region64: #{elmo_forward.1} parent=1 // pred_region
      _
    $region65: #{elmo_forward.1} parent=1 // pred_fallthru
      _
    // Predicated region
    $region66: #{elmo_forward.1} parent=1 // pred_check
      _
    $region67: #{elmo_forward.1} parent=1 // pred_check_branch
      %118 = sbr.rel (0) target = $region69
    $region68: #{elmo_forward.1} parent=1 // pred_region
      %120 = dma.done [#allocation7], 16
    $region69: #{elmo_forward.1} parent=1 // pred_fallthru
      _
    // Predicated region
    $region70: #{elmo_forward.1} parent=1 // pred_check
      _
    $region71: #{elmo_forward.1} parent=1 // pred_check_branch
      %122 = sbr.rel (0) target = $region73
    $region72: #{elmo_forward.1} parent=1 // pred_region
      %124 = dma.done [#allocation9], 128
    $region73: #{elmo_forward.1} parent=1 // pred_fallthru
      _
    // Predicated region
    $region74: #{elmo_forward.1} parent=1 // pred_check
      _
    $region75: #{elmo_forward.1} parent=1 // pred_check_branch
      %126 = sbr.rel (0) target = $region77
    $region76: #{elmo_forward.1} parent=1 // pred_region
      %128 = dma.done [#allocation9], 2048
    $region77: #{elmo_forward.1} parent=1 // pred_fallthru
      _
    // Predicated region
    $region78: #{elmo_forward.1} parent=1 // pred_check
      _
    $region79: #{elmo_forward.1} parent=1 // pred_check_branch
      %130 = sbr.rel (0) target = $region81
    $region80: #{elmo_forward.1} parent=1 // pred_region
      %132 = dma.done [#allocation12], 128
    $region81: #{elmo_forward.1} parent=1 // pred_fallthru
      _
    // Predicated region
    $region82: #{elmo_forward.1} parent=1 // pred_check
      _
    $region83: #{elmo_forward.1} parent=1 // pred_check_branch
      %134 = sbr.rel (0) target = $region85
    $region84: #{elmo_forward.1} parent=1 // pred_region
      %136 = dma.done [#allocation12], 16
    $region85: #{elmo_forward.1} parent=1 // pred_fallthru
      _
    // Predicated region
    $region86: #{elmo_forward.1} parent=1 // pred_check
      _
    $region87: #{elmo_forward.1} parent=1 // pred_check_branch
      %138 = sbr.rel (0) target = $region89
    $region88: #{elmo_forward.1} parent=1 // pred_region
      %140 = dma.done [#allocation15], 256
    $region89: #{elmo_forward.1} parent=1 // pred_fallthru
      _
    %v142 = vld [vmem:[%s0] sm:$0xff]
    %v143 = vld [vmem:[%s0 + $0x8] sm:$0xff]
    %v144 = vld [vmem:[%s0 + $0x10] sm:$0xff]
    %v145 = vld [vmem:[%s0 + $0x18] sm:$0xff]
    %v146 = vld [vmem:[%s0 + $0x20] sm:$0xff]
    %v147 = vld [vmem:[%s0 + $0x28] sm:$0xff]
    %v148 = vld [vmem:[%s0 + $0x30] sm:$0xff]
    %v149 = vld [vmem:[%s0 + $0x38] sm:$0xff]
    %v150 = vld [vmem:[%s0 + $0x40] sm:$0xff]
    %v151 = vld [vmem:[%s0 + $0x48] sm:$0xff]
    %v152 = vld [vmem:[%s0 + $0x50] sm:$0xff]
    %v153 = vld [vmem:[%s0 + $0x58] sm:$0xff]
    %v154 = vld [vmem:[%s0 + $0x60] sm:$0xff]
    %v155 = vld [vmem:[%s0 + $0x68] sm:$0xff]
    %v156 = vld [vmem:[%s0 + $0x70] sm:$0xff]
    %v157 = vld [vmem:[%s0 + $0x78] sm:$0xff]
    %v158 = vpack.c.bf16 %v143, %v142
    %v159 = vpack.c.bf16 %v145, %v144
    %v160 = vpack.c.bf16 %v147, %v146
    %v161 = vpack.c.bf16 %v149, %v148
    %v162 = vpack.c.bf16 %v151, %v150
    %v163 = vpack.c.bf16 %v153, %v152
    %v164 = vpack.c.bf16 %v155, %v154
    %v165 = vpack.c.bf16 %v157, %v156
    %v166 = vld [vmem:[%s2] sm:$0xf]
    %v167 = vld [vmem:[%s2 + $0x4] sm:$0xf]
    %v168 = vld [vmem:[%s2 + $0x8] sm:$0xf]
    %v169 = vld [vmem:[%s2 + $0xc] sm:$0xf]
    %v170 = vld [vmem:[%s2 + $0x10] sm:$0xf]
    %v171 = vld [vmem:[%s2 + $0x14] sm:$0xf]
    %v172 = vld [vmem:[#allocation6] sm:$0x1]
    %v174 = vperm.slane %v172, 0
    %v182 = vunpack.c.l.b16 %v166
    %v183 = vunpack.c.l.b16 %v167
    %v184 = vunpack.c.l.b16 %v168
    %v185 = vunpack.c.l.b16 %v169
    %v186 = vunpack.c.l.b16 %v170
    %v187 = vunpack.c.l.b16 %v171
    %v188 = vpack.c.b16 %v183, %v182
    %v189 = vpack.c.b16 %v185, %v184
    %v190 = vpack.c.b16 %v187, %v186
    %vm194 = vcmask 392192
    %v196 = vsel %vm194, %v158, 0
    %v199 = vsel %vm194, %v159, 0
    %v202 = vsel %vm194, %v160, 0
    %v205 = vsel %vm194, %v161, 0
    %v208 = vsel %vm194, %v162, 0
    %v211 = vsel %vm194, %v163, 0
    %v214 = vsel %vm194, %v164, 0
    %v217 = vsel %vm194, %v165, 0
    %219 = vmatpush.bf16.msra.mxu0 0
    %220 = vmatpush.bf16.msra.mxu0 0
    %221 = vmatpush.bf16.msra.mxu0 0
    %222 = vmatpush.bf16.msra.mxu0 0
    %223 = vmatpush.bf16.msra.mxu0 0
    %224 = vmatpush.bf16.msra.mxu0 %v190
    %225 = vmatpush.bf16.msra.mxu0 %v189
    %226 = vmatpush.bf16.msra.mxu0 %v188
    %227 = vmatmul.bf16.gmra.mxu0 %v196
    %v228 = vpop.f32.mrf.mxu0
    %v229 = vadd.f32 %v174, %v228
    %v230 = vpop.f32.mrf.mxu0
    %v231 = vadd.f32 %v174, %v230
    %232 = vmatmul.bf16.gmra.mxu0 %v199
    %v233 = vpop.f32.mrf.mxu0
    %v234 = vadd.f32 %v174, %v233
    %v235 = vpop.f32.mrf.mxu0
    %v236 = vadd.f32 %v174, %v235
    %237 = vmatmul.bf16.gmra.mxu0 %v202
    %v238 = vpop.f32.mrf.mxu0
    %v239 = vadd.f32 %v174, %v238
    %v240 = vpop.f32.mrf.mxu0
    %v241 = vadd.f32 %v174, %v240
    %242 = vmatmul.bf16.gmra.mxu0 %v205
    %v243 = vpop.f32.mrf.mxu0
    %v244 = vadd.f32 %v174, %v243
    %v245 = vpop.f32.mrf.mxu0
    %v246 = vadd.f32 %v174, %v245
    %247 = vmatmul.bf16.gmra.mxu0 %v208
    %v248 = vpop.f32.mrf.mxu0
    %v249 = vadd.f32 %v174, %v248
    %v250 = vpop.f32.mrf.mxu0
    %v251 = vadd.f32 %v174, %v250
    %252 = vmatmul.bf16.gmra.mxu0 %v211
    %v253 = vpop.f32.mrf.mxu0
    %v254 = vadd.f32 %v174, %v253
    %v255 = vpop.f32.mrf.mxu0
    %v256 = vadd.f32 %v174, %v255
    %257 = vmatmul.bf16.gmra.mxu0 %v214
    %v258 = vpop.f32.mrf.mxu0
    %v259 = vadd.f32 %v174, %v258
    %v260 = vpop.f32.mrf.mxu0
    %v261 = vadd.f32 %v174, %v260
    %262 = vmatmul.bf16.gmra.mxu0 %v217
    %v263 = vpop.f32.mrf.mxu0
    %v264 = vadd.f32 %v174, %v263
    %v265 = vpop.f32.mrf.mxu0
    %v266 = vadd.f32 %v174, %v265
    %267 = vdwg.mxu0
    %v268 = vmax.f32 %v229, 0.0
    %v269 = vmax.f32 %v231, 0.0
    %v270 = vmax.f32 %v234, 0.0
    %v271 = vmax.f32 %v236, 0.0
    %v272 = vmax.f32 %v239, 0.0
    %v273 = vmax.f32 %v241, 0.0
    %v274 = vmax.f32 %v244, 0.0
    %v275 = vmax.f32 %v246, 0.0
    %v276 = vmax.f32 %v249, 0.0
    %v277 = vmax.f32 %v251, 0.0
    %v278 = vmax.f32 %v254, 0.0
    %v279 = vmax.f32 %v256, 0.0
    %v280 = vmax.f32 %v259, 0.0
    %v281 = vmax.f32 %v261, 0.0
    %v282 = vmax.f32 %v264, 0.0
    %v283 = vmax.f32 %v266, 0.0
    %v284 = vld [vmem:[#allocation8] sm:$0xff]
    %v285 = vmul.f32 %v268, %v284
    %v286 = vmul.f32 %v269, %v284
    %v287 = vmul.f32 %v270, %v284
    %v288 = vmul.f32 %v271, %v284
    %v289 = vmul.f32 %v272, %v284
    %v290 = vmul.f32 %v273, %v284
    %v291 = vmul.f32 %v274, %v284
    %v292 = vmul.f32 %v275, %v284
    %v293 = vmul.f32 %v276, %v284
    %v294 = vmul.f32 %v277, %v284
    %v295 = vmul.f32 %v278, %v284
    %v296 = vmul.f32 %v279, %v284
    %v297 = vmul.f32 %v280, %v284
    %v298 = vmul.f32 %v281, %v284
    %v299 = vmul.f32 %v282, %v284
    %v300 = vmul.f32 %v283, %v284
    %v301 = vrot.slane %v285, 4
    %v302 = vmax.f32 %v285, %v301
    %v303 = vrot.slane %v302, 2
    %v304 = vmax.f32 %v302, %v303
    %v305 = vrot.slane %v304, 1
    %v306 = vmax.f32 %v304, %v305
    %v307 = vrot.slane %v286, 4
    %v308 = vmax.f32 %v286, %v307
    %v309 = vrot.slane %v308, 2
    %v310 = vmax.f32 %v308, %v309
    %v311 = vrot.slane %v310, 1
    %v312 = vmax.f32 %v310, %v311
    %v313 = vrot.slane %v287, 4
    %v314 = vmax.f32 %v287, %v313
    %v315 = vrot.slane %v314, 2
    %v316 = vmax.f32 %v314, %v315
    %v317 = vrot.slane %v316, 1
    %v318 = vmax.f32 %v316, %v317
    %v319 = vrot.slane %v288, 4
    %v320 = vmax.f32 %v288, %v319
    %v321 = vrot.slane %v320, 2
    %v322 = vmax.f32 %v320, %v321
    %v323 = vrot.slane %v322, 1
    %v324 = vmax.f32 %v322, %v323
    %v325 = vrot.slane %v289, 4
    %v326 = vmax.f32 %v289, %v325
    %v327 = vrot.slane %v326, 2
    %v328 = vmax.f32 %v326, %v327
    %v329 = vrot.slane %v328, 1
    %v330 = vmax.f32 %v328, %v329
    %v331 = vrot.slane %v290, 4
    %v332 = vmax.f32 %v290, %v331
    %v333 = vrot.slane %v332, 2
    %v334 = vmax.f32 %v332, %v333
    %v335 = vrot.slane %v334, 1
    %v336 = vmax.f32 %v334, %v335
    %v337 = vrot.slane %v291, 4
    %v338 = vmax.f32 %v291, %v337
    %v339 = vrot.slane %v338, 2
    %v340 = vmax.f32 %v338, %v339
    %v341 = vrot.slane %v340, 1
    %v342 = vmax.f32 %v340, %v341
    %v343 = vrot.slane %v292, 4
    %v344 = vmax.f32 %v292, %v343
    %v345 = vrot.slane %v344, 2
    %v346 = vmax.f32 %v344, %v345
    %v347 = vrot.slane %v346, 1
    %v348 = vmax.f32 %v346, %v347
    %v349 = vrot.slane %v293, 4
    %v350 = vmax.f32 %v293, %v349
    %v351 = vrot.slane %v350, 2
    %v352 = vmax.f32 %v350, %v351
    %v353 = vrot.slane %v352, 1
    %v354 = vmax.f32 %v352, %v353
    %v355 = vrot.slane %v294, 4
    %v356 = vmax.f32 %v294, %v355
    %v357 = vrot.slane %v356, 2
    %v358 = vmax.f32 %v356, %v357
    %v359 = vrot.slane %v358, 1
    %v360 = vmax.f32 %v358, %v359
    %v361 = vrot.slane %v295, 4
    %v362 = vmax.f32 %v295, %v361
    %v363 = vrot.slane %v362, 2
    %v364 = vmax.f32 %v362, %v363
    %v365 = vrot.slane %v364, 1
    %v366 = vmax.f32 %v364, %v365
    %v367 = vrot.slane %v296, 4
    %v368 = vmax.f32 %v296, %v367
    %v369 = vrot.slane %v368, 2
    %v370 = vmax.f32 %v368, %v369
    %v371 = vrot.slane %v370, 1
    %v372 = vmax.f32 %v370, %v371
    %v373 = vrot.slane %v297, 4
    %v374 = vmax.f32 %v297, %v373
    %v375 = vrot.slane %v374, 2
    %v376 = vmax.f32 %v374, %v375
    %v377 = vrot.slane %v376, 1
    %v378 = vmax.f32 %v376, %v377
    %v379 = vrot.slane %v298, 4
    %v380 = vmax.f32 %v298, %v379
    %v381 = vrot.slane %v380, 2
    %v382 = vmax.f32 %v380, %v381
    %v383 = vrot.slane %v382, 1
    %v384 = vmax.f32 %v382, %v383
    %v385 = vrot.slane %v299, 4
    %v386 = vmax.f32 %v299, %v385
    %v387 = vrot.slane %v386, 2
    %v388 = vmax.f32 %v386, %v387
    %v389 = vrot.slane %v388, 1
    %v390 = vmax.f32 %v388, %v389
    %v391 = vrot.slane %v300, 4
    %v392 = vmax.f32 %v300, %v391
    %v393 = vrot.slane %v392, 2
    %v394 = vmax.f32 %v392, %v393
    %v395 = vrot.slane %v394, 1
    %v396 = vmax.f32 %v394, %v395
    %v397 = vpack.c.bf16 %v306, %v306
    %v398 = vpack.c.bf16 %v312, %v312
    %v399 = vpack.c.bf16 %v318, %v318
    %v400 = vpack.c.bf16 %v324, %v324
    %v401 = vpack.c.bf16 %v330, %v330
    %v402 = vpack.c.bf16 %v336, %v336
    %v403 = vpack.c.bf16 %v342, %v342
    %v404 = vpack.c.bf16 %v348, %v348
    %v405 = vpack.c.bf16 %v354, %v354
    %v406 = vpack.c.bf16 %v360, %v360
    %v407 = vpack.c.bf16 %v366, %v366
    %v408 = vpack.c.bf16 %v372, %v372
    %v409 = vpack.c.bf16 %v378, %v378
    %v410 = vpack.c.bf16 %v384, %v384
    %v411 = vpack.c.bf16 %v390, %v390
    %v412 = vpack.c.bf16 %v396, %v396
    %v413 = vld [vmem:[%s5] sm:$0xf]
    %v414 = vld [vmem:[%s5 + $0x4] sm:$0xf]
    %v415 = vld [vmem:[%s5 + $0x8] sm:$0xf]
    %v416 = vld [vmem:[%s5 + $0xc] sm:$0xf]
    %v417 = vld [vmem:[%s5 + $0x10] sm:$0xf]
    %v418 = vld [vmem:[%s5 + $0x14] sm:$0xf]
    %v419 = vld [vmem:[%s5 + $0x18] sm:$0xf]
    %v420 = vld [vmem:[%s5 + $0x1c] sm:$0xf]
    %v421 = vld [vmem:[%s5 + $0x20] sm:$0xf]
    %v422 = vld [vmem:[%s5 + $0x24] sm:$0xf]
    %v423 = vld [vmem:[%s5 + $0x28] sm:$0xf]
    %v424 = vld [vmem:[%s5 + $0x2c] sm:$0xf]
    %v425 = vld [vmem:[%s5 + $0x30] sm:$0xf]
    %v426 = vld [vmem:[%s5 + $0x34] sm:$0xf]
    %v427 = vld [vmem:[%s5 + $0x38] sm:$0xf]
    %v428 = vld [vmem:[%s5 + $0x3c] sm:$0xf]
    %v429 = vld [vmem:[%s6] sm:$0x1]
    %v431 = vperm.slane %v429, 0
    %v449 = vunpack.c.l.b16 %v397
    %v450 = vunpack.c.l.b16 %v398
    %v451 = vunpack.c.l.b16 %v399
    %v452 = vunpack.c.l.b16 %v400
    %v453 = vunpack.c.l.b16 %v401
    %v454 = vunpack.c.l.b16 %v402
    %v455 = vunpack.c.l.b16 %v403
    %v456 = vunpack.c.l.b16 %v404
    %v457 = vunpack.c.l.b16 %v405
    %v458 = vunpack.c.l.b16 %v406
    %v459 = vunpack.c.l.b16 %v407
    %v460 = vunpack.c.l.b16 %v408
    %v461 = vunpack.c.l.b16 %v409
    %v462 = vunpack.c.l.b16 %v410
    %v463 = vunpack.c.l.b16 %v411
    %v464 = vunpack.c.l.b16 %v412
    %vm465 = vcmask 1041409
    %v466 = vsel %vm465, %v450, %v449
    %vm467 = vcmask 1042434
    %v468 = vsel %vm467, %v451, %v466
    %vm469 = vcmask 1043459
    %v470 = vsel %vm469, %v452, %v468
    %vm471 = vcmask 1044484
    %v472 = vsel %vm471, %v453, %v470
    %vm473 = vcmask 1045509
    %v474 = vsel %vm473, %v454, %v472
    %vm475 = vcmask 1046534
    %v476 = vsel %vm475, %v455, %v474
    %vm477 = vcmask 1047559
    %v478 = vsel %vm477, %v456, %v476
    %v479 = vsel %vm465, %v458, %v457
    %v480 = vsel %vm467, %v459, %v479
    %v481 = vsel %vm469, %v460, %v480
    %v482 = vsel %vm471, %v461, %v481
    %v483 = vsel %vm473, %v462, %v482
    %v484 = vsel %vm475, %v463, %v483
    %v485 = vsel %vm477, %v464, %v484
    %v486 = vpack.c.b16 %v485, %v478
    %v504 = vunpack.c.l.b16 %v413
    %v505 = vunpack.c.l.b16 %v414
    %v506 = vunpack.c.l.b16 %v415
    %v507 = vunpack.c.l.b16 %v416
    %v508 = vunpack.c.l.b16 %v417
    %v509 = vunpack.c.l.b16 %v418
    %v510 = vunpack.c.l.b16 %v419
    %v511 = vunpack.c.l.b16 %v420
    %v512 = vunpack.c.l.b16 %v421
    %v513 = vunpack.c.l.b16 %v422
    %v514 = vunpack.c.l.b16 %v423
    %v515 = vunpack.c.l.b16 %v424
    %v516 = vunpack.c.l.b16 %v425
    %v517 = vunpack.c.l.b16 %v426
    %v518 = vunpack.c.l.b16 %v427
    %v519 = vunpack.c.l.b16 %v428
    %v520 = vpack.c.b16 %v505, %v504
    %v521 = vpack.c.b16 %v507, %v506
    %v522 = vpack.c.b16 %v509, %v508
    %v523 = vpack.c.b16 %v511, %v510
    %v524 = vpack.c.b16 %v513, %v512
    %v525 = vpack.c.b16 %v515, %v514
    %v526 = vpack.c.b16 %v517, %v516
    %v527 = vpack.c.b16 %v519, %v518
    %536 = vmatpush.bf16.msra.mxu0 %v527
    %537 = vmatpush.bf16.msra.mxu0 %v526
    %538 = vmatpush.bf16.msra.mxu0 %v525
    %539 = vmatpush.bf16.msra.mxu0 %v524
    %540 = vmatpush.bf16.msra.mxu0 %v523
    %541 = vmatpush.bf16.msra.mxu0 %v522
    %542 = vmatpush.bf16.msra.mxu0 %v521
    %543 = vmatpush.bf16.msra.mxu0 %v520
    %544 = vmatmul.bf16.gmra.mxu0 %v486
    %v545 = vpop.f32.mrf.mxu0
    %v546 = vadd.f32 %v431, %v545
    %v547 = vpop.f32.mrf.mxu0
    %v548 = vadd.f32 %v431, %v547
    %549 = vdwg.mxu0
    %v550 = vxor.u32 %v546, 2147483648
    %v551 = vxor.u32 %v548, 2147483648
    %v552 = vmul.f32 %v550, 1.442695
    %v553 = vpow.pop %v552
    %v554 = vmul.f32 %v551, 1.442695
    %v555 = vpow.pop %v554
    %v556 = vadd.f32 %v553, 1.0
    %v557 = vadd.f32 %v555, 1.0
    %v558 = vrcp.pop %v556
    %v559 = vmul.f32 %v556, %v558
    %v560 = vsub.f32 1.0, %v559
    %v561 = vmul.f32 %v558, %v560
    %v562 = vadd.f32 %v558, %v561
    %vm563 = vweird.f32 %v556
    %vm564 = vweird.f32 %v558
    %vm565 = vmor %vm563, %vm564
    %v566 = vsel %vm565, %v558, %v562
    %v567 = vand.u32 2147483647, %v556
    %vm568 = vcmp.eq.f32.partialorder %v567, 8.507059e+37
    %v569 = vand.u32 %v556, 2147483648
    %v570 = vor.u32 1.1754944e-38, %v569
    %v571 = vsel %vm568, %v570, %v566
    %v572 = vmul.f32 1.0, %v571
    %v573 = vrcp.pop %v557
    %v574 = vmul.f32 %v557, %v573
    %v575 = vsub.f32 1.0, %v574
    %v576 = vmul.f32 %v573, %v575
    %v577 = vadd.f32 %v573, %v576
    %vm578 = vweird.f32 %v557
    %vm579 = vweird.f32 %v573
    %vm580 = vmor %vm578, %vm579
    %v581 = vsel %vm580, %v573, %v577
    %v582 = vand.u32 2147483647, %v557
    %vm583 = vcmp.eq.f32.partialorder %v582, 8.507059e+37
    %v584 = vand.u32 %v557, 2147483648
    %v585 = vor.u32 1.1754944e-38, %v584
    %v586 = vsel %vm583, %v585, %v581
    %v587 = vmul.f32 1.0, %v586
    %v588 = vld [vmem:[#allocation10] sm:$0xf]
    %v589 = vld [vmem:[#allocation10 + $0x4] sm:$0xf]
    %v590 = vld [vmem:[#allocation10 + $0x8] sm:$0xf]
    %v591 = vld [vmem:[#allocation10 + $0xc] sm:$0xf]
    %v592 = vld [vmem:[#allocation10 + $0x10] sm:$0xf]
    %v593 = vld [vmem:[#allocation10 + $0x14] sm:$0xf]
    %v594 = vld [vmem:[#allocation10 + $0x18] sm:$0xf]
    %v595 = vld [vmem:[#allocation10 + $0x1c] sm:$0xf]
    %v596 = vld [vmem:[#allocation10 + $0x20] sm:$0xf]
    %v597 = vld [vmem:[#allocation10 + $0x24] sm:$0xf]
    %v598 = vld [vmem:[#allocation10 + $0x28] sm:$0xf]
    %v599 = vld [vmem:[#allocation10 + $0x2c] sm:$0xf]
    %v600 = vld [vmem:[#allocation10 + $0x30] sm:$0xf]
    %v601 = vld [vmem:[#allocation10 + $0x34] sm:$0xf]
    %v602 = vld [vmem:[#allocation10 + $0x38] sm:$0xf]
    %v603 = vld [vmem:[#allocation10 + $0x3c] sm:$0xf]
    %v604 = vld [vmem:[%s8] sm:$0x1]
    %v606 = vperm.slane %v604, 0
    %v624 = vunpack.c.l.b16 %v588
    %v625 = vunpack.c.l.b16 %v589
    %v626 = vunpack.c.l.b16 %v590
    %v627 = vunpack.c.l.b16 %v591
    %v628 = vunpack.c.l.b16 %v592
    %v629 = vunpack.c.l.b16 %v593
    %v630 = vunpack.c.l.b16 %v594
    %v631 = vunpack.c.l.b16 %v595
    %v632 = vunpack.c.l.b16 %v596
    %v633 = vunpack.c.l.b16 %v597
    %v634 = vunpack.c.l.b16 %v598
    %v635 = vunpack.c.l.b16 %v599
    %v636 = vunpack.c.l.b16 %v600
    %v637 = vunpack.c.l.b16 %v601
    %v638 = vunpack.c.l.b16 %v602
    %v639 = vunpack.c.l.b16 %v603
    %v640 = vpack.c.b16 %v625, %v624
    %v641 = vpack.c.b16 %v627, %v626
    %v642 = vpack.c.b16 %v629, %v628
    %v643 = vpack.c.b16 %v631, %v630
    %v644 = vpack.c.b16 %v633, %v632
    %v645 = vpack.c.b16 %v635, %v634
    %v646 = vpack.c.b16 %v637, %v636
    %v647 = vpack.c.b16 %v639, %v638
    %656 = vmatpush.bf16.msra.mxu0 %v647
    %657 = vmatpush.bf16.msra.mxu0 %v646
    %658 = vmatpush.bf16.msra.mxu0 %v645
    %659 = vmatpush.bf16.msra.mxu0 %v644
    %660 = vmatpush.bf16.msra.mxu0 %v643
    %661 = vmatpush.bf16.msra.mxu0 %v642
    %662 = vmatpush.bf16.msra.mxu0 %v641
    %663 = vmatpush.bf16.msra.mxu0 %v640
    %664 = vmatmul.bf16.gmra.mxu0 %v486
    %v665 = vpop.f32.mrf.mxu0
    %v666 = vadd.f32 %v606, %v665
    %v667 = vpop.f32.mrf.mxu0
    %v668 = vadd.f32 %v606, %v667
    %669 = vdwg.mxu0
    %v670 = vmax.f32 %v666, 0.0
    %v671 = vmax.f32 %v668, 0.0
    %v672 = vmul.f32 %v572, %v670
    %v673 = vmul.f32 %v587, %v671
    %v674 = vsub.f32 1.0, %v572
    %v675 = vsub.f32 1.0, %v587
    %v692 = vsel %vm465, %v312, %v306
    %v693 = vsel %vm467, %v318, %v692
    %v694 = vsel %vm469, %v324, %v693
    %v695 = vsel %vm471, %v330, %v694
    %v696 = vsel %vm473, %v336, %v695
    %v697 = vsel %vm475, %v342, %v696
    %v698 = vsel %vm477, %v348, %v697
    %v699 = vsel %vm465, %v360, %v354
    %v700 = vsel %vm467, %v366, %v699
    %v701 = vsel %vm469, %v372, %v700
    %v702 = vsel %vm471, %v378, %v701
    %v703 = vsel %vm473, %v384, %v702
    %v704 = vsel %vm475, %v390, %v703
    %v705 = vsel %vm477, %v396, %v704
    %v708 = vmul.f32 %v674, %v698
    %v709 = vmul.f32 %v675, %v705
    %v710 = vadd.f32 %v672, %v708
    %v711 = vadd.f32 %v673, %v709
    %v712 = vpack.c.bf16 %v711, %v710
    %s713 = scalar_lea.vmem %s5, 64
    %v714 = vld [vmem:[%s713] sm:$0xf]
    %v715 = vld [vmem:[%s713 + $0x4] sm:$0xf]
    %v716 = vld [vmem:[%s713 + $0x8] sm:$0xf]
    %v717 = vld [vmem:[%s713 + $0xc] sm:$0xf]
    %v718 = vld [vmem:[%s713 + $0x10] sm:$0xf]
    %v719 = vld [vmem:[%s713 + $0x14] sm:$0xf]
    %v720 = vld [vmem:[%s713 + $0x18] sm:$0xf]
    %v721 = vld [vmem:[%s713 + $0x1c] sm:$0xf]
    %v722 = vld [vmem:[%s713 + $0x20] sm:$0xf]
    %v723 = vld [vmem:[%s713 + $0x24] sm:$0xf]
    %v724 = vld [vmem:[%s713 + $0x28] sm:$0xf]
    %v725 = vld [vmem:[%s713 + $0x2c] sm:$0xf]
    %v726 = vld [vmem:[%s713 + $0x30] sm:$0xf]
    %v727 = vld [vmem:[%s713 + $0x34] sm:$0xf]
    %v728 = vld [vmem:[%s713 + $0x38] sm:$0xf]
    %v729 = vld [vmem:[%s713 + $0x3c] sm:$0xf]
    %s730 = scalar_lea.vmem %s6, 1
    %v731 = vld [vmem:[%s730] sm:$0x1]
    %v733 = vperm.slane %v731, 0
    %v751 = vunpack.c.l.b16 %v714
    %v752 = vunpack.c.l.b16 %v715
    %v753 = vunpack.c.l.b16 %v716
    %v754 = vunpack.c.l.b16 %v717
    %v755 = vunpack.c.l.b16 %v718
    %v756 = vunpack.c.l.b16 %v719
    %v757 = vunpack.c.l.b16 %v720
    %v758 = vunpack.c.l.b16 %v721
    %v759 = vunpack.c.l.b16 %v722
    %v760 = vunpack.c.l.b16 %v723
    %v761 = vunpack.c.l.b16 %v724
    %v762 = vunpack.c.l.b16 %v725
    %v763 = vunpack.c.l.b16 %v726
    %v764 = vunpack.c.l.b16 %v727
    %v765 = vunpack.c.l.b16 %v728
    %v766 = vunpack.c.l.b16 %v729
    %v767 = vpack.c.b16 %v752, %v751
    %v768 = vpack.c.b16 %v754, %v753
    %v769 = vpack.c.b16 %v756, %v755
    %v770 = vpack.c.b16 %v758, %v757
    %v771 = vpack.c.b16 %v760, %v759
    %v772 = vpack.c.b16 %v762, %v761
    %v773 = vpack.c.b16 %v764, %v763
    %v774 = vpack.c.b16 %v766, %v765
    %783 = vmatpush.bf16.msra.mxu0 %v774
    %784 = vmatpush.bf16.msra.mxu0 %v773
    %785 = vmatpush.bf16.msra.mxu0 %v772
    %786 = vmatpush.bf16.msra.mxu0 %v771
    %787 = vmatpush.bf16.msra.mxu0 %v770
    %788 = vmatpush.bf16.msra.mxu0 %v769
    %789 = vmatpush.bf16.msra.mxu0 %v768
    %790 = vmatpush.bf16.msra.mxu0 %v767
    %791 = vmatmul.bf16.gmra.mxu0 %v712
    %v792 = vpop.f32.mrf.mxu0
    %v793 = vadd.f32 %v733, %v792
    %v794 = vpop.f32.mrf.mxu0
    %v795 = vadd.f32 %v733, %v794
    %796 = vdwg.mxu0
    %v797 = vxor.u32 %v793, 2147483648
    %v798 = vxor.u32 %v795, 2147483648
    %v799 = vmul.f32 %v797, 1.442695
    %v800 = vpow.pop %v799
    %v801 = vmul.f32 %v798, 1.442695
    %v802 = vpow.pop %v801
    %v803 = vadd.f32 %v800, 1.0
    %v804 = vadd.f32 %v802, 1.0
    %v805 = vrcp.pop %v803
    %v806 = vmul.f32 %v803, %v805
    %v807 = vsub.f32 1.0, %v806
    %v808 = vmul.f32 %v805, %v807
    %v809 = vadd.f32 %v805, %v808
    %vm810 = vweird.f32 %v803
    %vm811 = vweird.f32 %v805
    %vm812 = vmor %vm810, %vm811
    %v813 = vsel %vm812, %v805, %v809
    %v814 = vand.u32 2147483647, %v803
    %vm815 = vcmp.eq.f32.partialorder %v814, 8.507059e+37
    %v816 = vand.u32 %v803, 2147483648
    %v817 = vor.u32 1.1754944e-38, %v816
    %v818 = vsel %vm815, %v817, %v813
    %v819 = vmul.f32 1.0, %v818
    %v820 = vrcp.pop %v804
    %v821 = vmul.f32 %v804, %v820
    %v822 = vsub.f32 1.0, %v821
    %v823 = vmul.f32 %v820, %v822
    %v824 = vadd.f32 %v820, %v823
    %vm825 = vweird.f32 %v804
    %vm826 = vweird.f32 %v820
    %vm827 = vmor %vm825, %vm826
    %v828 = vsel %vm827, %v820, %v824
    %v829 = vand.u32 2147483647, %v804
    %vm830 = vcmp.eq.f32.partialorder %v829, 8.507059e+37
    %v831 = vand.u32 %v804, 2147483648
    %v832 = vor.u32 1.1754944e-38, %v831
    %v833 = vsel %vm830, %v832, %v828
    %v834 = vmul.f32 1.0, %v833
    %s835 = scalar_lea.vmem [#allocation10], 64
    %v836 = vld [vmem:[%s835] sm:$0xf]
    %v837 = vld [vmem:[%s835 + $0x4] sm:$0xf]
    %v838 = vld [vmem:[%s835 + $0x8] sm:$0xf]
    %v839 = vld [vmem:[%s835 + $0xc] sm:$0xf]
    %v840 = vld [vmem:[%s835 + $0x10] sm:$0xf]
    %v841 = vld [vmem:[%s835 + $0x14] sm:$0xf]
    %v842 = vld [vmem:[%s835 + $0x18] sm:$0xf]
    %v843 = vld [vmem:[%s835 + $0x1c] sm:$0xf]
    %v844 = vld [vmem:[%s835 + $0x20] sm:$0xf]
    %v845 = vld [vmem:[%s835 + $0x24] sm:$0xf]
    %v846 = vld [vmem:[%s835 + $0x28] sm:$0xf]
    %v847 = vld [vmem:[%s835 + $0x2c] sm:$0xf]
    %v848 = vld [vmem:[%s835 + $0x30] sm:$0xf]
    %v849 = vld [vmem:[%s835 + $0x34] sm:$0xf]
    %v850 = vld [vmem:[%s835 + $0x38] sm:$0xf]
    %v851 = vld [vmem:[%s835 + $0x3c] sm:$0xf]
    %s852 = scalar_lea.vmem %s8, 1
    %v853 = vld [vmem:[%s852] sm:$0x1]
    %v855 = vperm.slane %v853, 0
    %v873 = vunpack.c.l.b16 %v836
    %v874 = vunpack.c.l.b16 %v837
    %v875 = vunpack.c.l.b16 %v838
    %v876 = vunpack.c.l.b16 %v839
    %v877 = vunpack.c.l.b16 %v840
    %v878 = vunpack.c.l.b16 %v841
    %v879 = vunpack.c.l.b16 %v842
    %v880 = vunpack.c.l.b16 %v843
    %v881 = vunpack.c.l.b16 %v844
    %v882 = vunpack.c.l.b16 %v845
    %v883 = vunpack.c.l.b16 %v846
    %v884 = vunpack.c.l.b16 %v847
    %v885 = vunpack.c.l.b16 %v848
    %v886 = vunpack.c.l.b16 %v849
    %v887 = vunpack.c.l.b16 %v850
    %v888 = vunpack.c.l.b16 %v851
    %v889 = vpack.c.b16 %v874, %v873
    %v890 = vpack.c.b16 %v876, %v875
    %v891 = vpack.c.b16 %v878, %v877
    %v892 = vpack.c.b16 %v880, %v879
    %v893 = vpack.c.b16 %v882, %v881
    %v894 = vpack.c.b16 %v884, %v883
    %v895 = vpack.c.b16 %v886, %v885
    %v896 = vpack.c.b16 %v888, %v887
    %905 = vmatpush.bf16.msra.mxu0 %v896
    %906 = vmatpush.bf16.msra.mxu0 %v895
    %907 = vmatpush.bf16.msra.mxu0 %v894
    %908 = vmatpush.bf16.msra.mxu0 %v893
    %909 = vmatpush.bf16.msra.mxu0 %v892
    %910 = vmatpush.bf16.msra.mxu0 %v891
    %911 = vmatpush.bf16.msra.mxu0 %v890
    %912 = vmatpush.bf16.msra.mxu0 %v889
    %913 = vmatmul.bf16.gmra.mxu0 %v712
    %v914 = vpop.f32.mrf.mxu0
    %v915 = vadd.f32 %v855, %v914
    %v916 = vpop.f32.mrf.mxu0
    %v917 = vadd.f32 %v855, %v916
    %918 = vdwg.mxu0
    %v919 = vmax.f32 %v915, 0.0
    %v920 = vmax.f32 %v917, 0.0
    %v921 = vmul.f32 %v819, %v919
    %v922 = vmul.f32 %v834, %v920
    %v923 = vsub.f32 1.0, %v819
    %v924 = vsub.f32 1.0, %v834
    %v925 = vmul.f32 %v923, %v710
    %v926 = vmul.f32 %v924, %v711
    %v927 = vadd.f32 %v921, %v925
    %v928 = vadd.f32 %v922, %v926
    %v929 = vld [vmem:[%s1] sm:$0xff]
    %v930 = vld [vmem:[%s1 + $0x8] sm:$0xff]
    %v931 = vpack.c.bf16 %v930, %v929
    %v932 = vld [vmem:[#allocation11] sm:$0xf]
    %v933 = vld [vmem:[#allocation11 + $0x4] sm:$0xf]
    %v934 = vpack.c.bf16 %v928, %v927
    %v935 = vld [vmem:[%s10] sm:$0xf]
    %v936 = vld [vmem:[%s10 + $0x4] sm:$0xf]
    %v937 = vld [vmem:[%s10 + $0x8] sm:$0xf]
    %v938 = vld [vmem:[%s10 + $0xc] sm:$0xf]
    %v939 = vld [vmem:[%s10 + $0x10] sm:$0xf]
    %v940 = vld [vmem:[%s10 + $0x14] sm:$0xf]
    %v941 = vld [vmem:[%s10 + $0x18] sm:$0xf]
    %v942 = vld [vmem:[%s10 + $0x1c] sm:$0xf]
    %v943 = vld [vmem:[%s10 + $0x20] sm:$0xf]
    %v944 = vld [vmem:[%s10 + $0x24] sm:$0xf]
    %v945 = vld [vmem:[%s10 + $0x28] sm:$0xf]
    %v946 = vld [vmem:[%s10 + $0x2c] sm:$0xf]
    %v947 = vld [vmem:[%s10 + $0x30] sm:$0xf]
    %v948 = vld [vmem:[%s10 + $0x34] sm:$0xf]
    %v949 = vld [vmem:[%s10 + $0x38] sm:$0xf]
    %v950 = vld [vmem:[%s10 + $0x3c] sm:$0xf]
    %v967 = vunpack.c.l.b16 %v935
    %v968 = vunpack.c.l.b16 %v936
    %v969 = vunpack.c.l.b16 %v937
    %v970 = vunpack.c.l.b16 %v938
    %v971 = vunpack.c.l.b16 %v939
    %v972 = vunpack.c.l.b16 %v940
    %v973 = vunpack.c.l.b16 %v941
    %v974 = vunpack.c.l.b16 %v942
    %v975 = vunpack.c.l.b16 %v943
    %v976 = vunpack.c.l.b16 %v944
    %v977 = vunpack.c.l.b16 %v945
    %v978 = vunpack.c.l.b16 %v946
    %v979 = vunpack.c.l.b16 %v947
    %v980 = vunpack.c.l.b16 %v948
    %v981 = vunpack.c.l.b16 %v949
    %v982 = vunpack.c.l.b16 %v950
    %v983 = vpack.c.b16 %v968, %v967
    %v984 = vpack.c.b16 %v970, %v969
    %v985 = vpack.c.b16 %v972, %v971
    %v986 = vpack.c.b16 %v974, %v973
    %v987 = vpack.c.b16 %v976, %v975
    %v988 = vpack.c.b16 %v978, %v977
    %v989 = vpack.c.b16 %v980, %v979
    %v990 = vpack.c.b16 %v982, %v981
    %999 = vmatpush.bf16.msra.mxu0 %v990
    %1000 = vmatpush.bf16.msra.mxu0 %v989
    %1001 = vmatpush.bf16.msra.mxu0 %v988
    %1002 = vmatpush.bf16.msra.mxu0 %v987
    %1003 = vmatpush.bf16.msra.mxu0 %v986
    %1004 = vmatpush.bf16.msra.mxu0 %v985
    %1005 = vmatpush.bf16.msra.mxu0 %v984
    %1006 = vmatpush.bf16.msra.mxu0 %v983
    %1007 = vmatmul.bf16.gmra.mxu0 %v934
    %v1008 = vpop.f32.mrf.mxu0
    %v1009 = vadd.f32 0.0, %v1008
    %v1010 = vpop.f32.mrf.mxu0
    %v1011 = vadd.f32 0.0, %v1010
    %1012 = vdwg.mxu0
    %v1015 = vunpack.c.l.b16 %v932
    %v1016 = vunpack.c.l.b16 %v933
    %v1017 = vpack.c.b16 %v1016, %v1015
    %vm1019 = vcmask 130048
    %v1021 = vsel %vm1019, %v931, 0
    %1023 = vmatpush.bf16.msra.mxu0 0
    %1024 = vmatpush.bf16.msra.mxu0 0
    %1025 = vmatpush.bf16.msra.mxu0 0
    %1026 = vmatpush.bf16.msra.mxu0 0
    %1027 = vmatpush.bf16.msra.mxu0 0
    %1028 = vmatpush.bf16.msra.mxu0 0
    %1029 = vmatpush.bf16.msra.mxu0 0
    %1030 = vmatpush.bf16.msra.mxu0 %v1017
    %1031 = vmatmul.bf16.gmra.mxu0 %v1021
    %v1032 = vpop.f32.mrf.mxu0
    %v1033 = vadd.f32 %v1009, %v1032
    %v1034 = vpop.f32.mrf.mxu0
    %v1035 = vadd.f32 %v1011, %v1034
    %1036 = vdwg.mxu0
    %v1037 = vld [vmem:[#allocation13] sm:$0x1]
    %v1039 = vperm.slane %v1037, 0
    %v1041 = vadd.f32 %v1033, %v1039
    %v1042 = vadd.f32 %v1035, %v1039
    %v1043 = vlaneseq
    %v1044 = vshrl.u32 %v1043, 7
    %v1045 = vlaneseq
    %v1046 = vand.u32 %v1045, 127
    %v1047 = vadd.s32 %v1046, 128
    %vm1048 = vcmp.lt.s32.totalorder %v1044, 2
    %vm1049 = vcmp.lt.s32.totalorder %v1046, 128
    %vm1050 = vcmp.lt.s32.totalorder %v1047, 128
    %vm1051 = vmxor %vm1048, %vm1049
    %vm1052 = vmxor %vm1048, %vm1050
    %vm1053 = vmxor %vm1051, 1
    %vm1054 = vmxor %vm1052, 1
    %v1055 = vpack.c.bf16 %v1042, %v1041
    %v1056 = vld [vmem:[%s12] sm:$0xff]
    %v1057 = vld [vmem:[%s12 + $0x8] sm:$0xff]
    %v1058 = vld [vmem:[%s12 + $0x10] sm:$0xff]
    %v1059 = vld [vmem:[%s12 + $0x18] sm:$0xff]
    %v1060 = vld [vmem:[%s12 + $0x20] sm:$0xff]
    %v1061 = vld [vmem:[%s12 + $0x28] sm:$0xff]
    %v1062 = vld [vmem:[%s12 + $0x30] sm:$0xff]
    %v1063 = vld [vmem:[%s12 + $0x38] sm:$0xff]
    %v1064 = vld [vmem:[%s12 + $0x40] sm:$0xff]
    %v1065 = vld [vmem:[%s12 + $0x48] sm:$0xff]
    %v1066 = vld [vmem:[%s12 + $0x50] sm:$0xff]
    %v1067 = vld [vmem:[%s12 + $0x58] sm:$0xff]
    %v1068 = vld [vmem:[%s12 + $0x60] sm:$0xff]
    %v1069 = vld [vmem:[%s12 + $0x68] sm:$0xff]
    %v1070 = vld [vmem:[%s12 + $0x70] sm:$0xff]
    %v1071 = vld [vmem:[%s12 + $0x78] sm:$0xff]
    %v1072 = vld [vmem:[%s12 + $0x80] sm:$0xff]
    %v1073 = vld [vmem:[%s12 + $0x88] sm:$0xff]
    %v1074 = vld [vmem:[%s12 + $0x90] sm:$0xff]
    %v1075 = vld [vmem:[%s12 + $0x98] sm:$0xff]
    %v1076 = vld [vmem:[%s12 + $0xa0] sm:$0xff]
    %v1077 = vld [vmem:[%s12 + $0xa8] sm:$0xff]
    %v1078 = vld [vmem:[%s12 + $0xb0] sm:$0xff]
    %v1079 = vld [vmem:[%s12 + $0xb8] sm:$0xff]
    %v1080 = vld [vmem:[%s12 + $0xc0] sm:$0xff]
    %v1081 = vld [vmem:[%s12 + $0xc8] sm:$0xff]
    %v1082 = vld [vmem:[%s12 + $0xd0] sm:$0xff]
    %v1083 = vld [vmem:[%s12 + $0xd8] sm:$0xff]
    %v1084 = vld [vmem:[%s12 + $0xe0] sm:$0xff]
    %v1085 = vld [vmem:[%s12 + $0xe8] sm:$0xff]
    %v1086 = vld [vmem:[%s12 + $0xf0] sm:$0xff]
    %v1087 = vld [vmem:[%s12 + $0xf8] sm:$0xff]
    %v1088 = vld [vmem:[#allocation14] sm:$0xf]
    %v1090 = vperm.slane %v1088, 0
    %v1091 = vperm.slane %v1088, 1
    %v1092 = vperm.slane %v1088, 2
    %v1093 = vperm.slane %v1088, 3
    %v1130 = vunpack.c.l.b16 %v1056
    %v1131 = vunpack.c.h.b16 %v1056
    %v1132 = vunpack.c.l.b16 %v1057
    %v1133 = vunpack.c.h.b16 %v1057
    %v1134 = vunpack.c.l.b16 %v1058
    %v1135 = vunpack.c.h.b16 %v1058
    %v1136 = vunpack.c.l.b16 %v1059
    %v1137 = vunpack.c.h.b16 %v1059
    %v1138 = vunpack.c.l.b16 %v1060
    %v1139 = vunpack.c.h.b16 %v1060
    %v1140 = vunpack.c.l.b16 %v1061
    %v1141 = vunpack.c.h.b16 %v1061
    %v1142 = vunpack.c.l.b16 %v1062
    %v1143 = vunpack.c.h.b16 %v1062
    %v1144 = vunpack.c.l.b16 %v1063
    %v1145 = vunpack.c.h.b16 %v1063
    %v1146 = vunpack.c.l.b16 %v1064
    %v1147 = vunpack.c.h.b16 %v1064
    %v1148 = vunpack.c.l.b16 %v1065
    %v1149 = vunpack.c.h.b16 %v1065
    %v1150 = vunpack.c.l.b16 %v1066
    %v1151 = vunpack.c.h.b16 %v1066
    %v1152 = vunpack.c.l.b16 %v1067
    %v1153 = vunpack.c.h.b16 %v1067
    %v1154 = vunpack.c.l.b16 %v1068
    %v1155 = vunpack.c.h.b16 %v1068
    %v1156 = vunpack.c.l.b16 %v1069
    %v1157 = vunpack.c.h.b16 %v1069
    %v1158 = vunpack.c.l.b16 %v1070
    %v1159 = vunpack.c.h.b16 %v1070
    %v1160 = vunpack.c.l.b16 %v1071
    %v1161 = vunpack.c.h.b16 %v1071
    %v1162 = vunpack.c.l.b16 %v1072
    %v1163 = vunpack.c.h.b16 %v1072
    %v1164 = vunpack.c.l.b16 %v1073
    %v1165 = vunpack.c.h.b16 %v1073
    %v1166 = vunpack.c.l.b16 %v1074
    %v1167 = vunpack.c.h.b16 %v1074
    %v1168 = vunpack.c.l.b16 %v1075
    %v1169 = vunpack.c.h.b16 %v1075
    %v1170 = vunpack.c.l.b16 %v1076
    %v1171 = vunpack.c.h.b16 %v1076
    %v1172 = vunpack.c.l.b16 %v1077
    %v1173 = vunpack.c.h.b16 %v1077
    %v1174 = vunpack.c.l.b16 %v1078
    %v1175 = vunpack.c.h.b16 %v1078
    %v1176 = vunpack.c.l.b16 %v1079
    %v1177 = vunpack.c.h.b16 %v1079
    %v1178 = vunpack.c.l.b16 %v1080
    %v1179 = vunpack.c.h.b16 %v1080
    %v1180 = vunpack.c.l.b16 %v1081
    %v1181 = vunpack.c.h.b16 %v1081
    %v1182 = vunpack.c.l.b16 %v1082
    %v1183 = vunpack.c.h.b16 %v1082
    %v1184 = vunpack.c.l.b16 %v1083
    %v1185 = vunpack.c.h.b16 %v1083
    %v1186 = vunpack.c.l.b16 %v1084
    %v1187 = vunpack.c.h.b16 %v1084
    %v1188 = vunpack.c.l.b16 %v1085
    %v1189 = vunpack.c.h.b16 %v1085
    %v1190 = vunpack.c.l.b16 %v1086
    %v1191 = vunpack.c.h.b16 %v1086
    %v1192 = vunpack.c.l.b16 %v1087
    %v1193 = vunpack.c.h.b16 %v1087
    %v1194 = vpack.c.b16 %v1134, %v1130
    %v1195 = vpack.c.b16 %v1135, %v1131
    %v1196 = vpack.c.b16 %v1136, %v1132
    %v1197 = vpack.c.b16 %v1137, %v1133
    %v1198 = vpack.c.b16 %v1142, %v1138
    %v1199 = vpack.c.b16 %v1143, %v1139
    %v1200 = vpack.c.b16 %v1144, %v1140
    %v1201 = vpack.c.b16 %v1145, %v1141
    %v1202 = vpack.c.b16 %v1150, %v1146
    %v1203 = vpack.c.b16 %v1151, %v1147
    %v1204 = vpack.c.b16 %v1152, %v1148
    %v1205 = vpack.c.b16 %v1153, %v1149
    %v1206 = vpack.c.b16 %v1158, %v1154
    %v1207 = vpack.c.b16 %v1159, %v1155
    %v1208 = vpack.c.b16 %v1160, %v1156
    %v1209 = vpack.c.b16 %v1161, %v1157
    %v1210 = vpack.c.b16 %v1166, %v1162
    %v1211 = vpack.c.b16 %v1167, %v1163
    %v1212 = vpack.c.b16 %v1168, %v1164
    %v1213 = vpack.c.b16 %v1169, %v1165
    %v1214 = vpack.c.b16 %v1174, %v1170
    %v1215 = vpack.c.b16 %v1175, %v1171
    %v1216 = vpack.c.b16 %v1176, %v1172
    %v1217 = vpack.c.b16 %v1177, %v1173
    %v1218 = vpack.c.b16 %v1182, %v1178
    %v1219 = vpack.c.b16 %v1183, %v1179
    %v1220 = vpack.c.b16 %v1184, %v1180
    %v1221 = vpack.c.b16 %v1185, %v1181
    %v1222 = vpack.c.b16 %v1190, %v1186
    %v1223 = vpack.c.b16 %v1191, %v1187
    %v1224 = vpack.c.b16 %v1192, %v1188
    %v1225 = vpack.c.b16 %v1193, %v1189
    %1258 = vmatpush.bf16.msra.mxu0 %v1222
    %1259 = vmatpush.bf16.msra.mxu0 %v1218
    %1260 = vmatpush.bf16.msra.mxu0 %v1214
    %1261 = vmatpush.bf16.msra.mxu0 %v1210
    %1262 = vmatpush.bf16.msra.mxu0 %v1206
    %1263 = vmatpush.bf16.msra.mxu0 %v1202
    %1264 = vmatpush.bf16.msra.mxu0 %v1198
    %1265 = vmatpush.bf16.msra.mxu0 %v1194
    %1266 = vmatmul.bf16.gmra.mxu0 %v1055
    %v1267 = vpop.f32.mrf.mxu0
    %v1268 = vadd.f32 %v1090, %v1267
    %v1269 = vpop.f32.mrf.mxu0
    %v1270 = vadd.f32 %v1090, %v1269
    %1271 = vdwg.mxu0
    %1272 = vmatpush.bf16.msra.mxu0 %v1223
    %1273 = vmatpush.bf16.msra.mxu0 %v1219
    %1274 = vmatpush.bf16.msra.mxu0 %v1215
    %1275 = vmatpush.bf16.msra.mxu0 %v1211
    %1276 = vmatpush.bf16.msra.mxu0 %v1207
    %1277 = vmatpush.bf16.msra.mxu0 %v1203
    %1278 = vmatpush.bf16.msra.mxu0 %v1199
    %1279 = vmatpush.bf16.msra.mxu0 %v1195
    %1280 = vmatmul.bf16.gmra.mxu0 %v1055
    %v1281 = vpop.f32.mrf.mxu0
    %v1282 = vadd.f32 %v1091, %v1281
    %v1283 = vpop.f32.mrf.mxu0
    %v1284 = vadd.f32 %v1091, %v1283
    %1285 = vdwg.mxu0
    %1286 = vmatpush.bf16.msra.mxu0 %v1224
    %1287 = vmatpush.bf16.msra.mxu0 %v1220
    %1288 = vmatpush.bf16.msra.mxu0 %v1216
    %1289 = vmatpush.bf16.msra.mxu0 %v1212
    %1290 = vmatpush.bf16.msra.mxu0 %v1208
    %1291 = vmatpush.bf16.msra.mxu0 %v1204
    %1292 = vmatpush.bf16.msra.mxu0 %v1200
    %1293 = vmatpush.bf16.msra.mxu0 %v1196
    %1294 = vmatmul.bf16.gmra.mxu0 %v1055
    %v1295 = vpop.f32.mrf.mxu0
    %v1296 = vadd.f32 %v1092, %v1295
    %v1297 = vpop.f32.mrf.mxu0
    %v1298 = vadd.f32 %v1092, %v1297
    %1299 = vdwg.mxu0
    %1300 = vmatpush.bf16.msra.mxu0 %v1225
    %1301 = vmatpush.bf16.msra.mxu0 %v1221
    %1302 = vmatpush.bf16.msra.mxu0 %v1217
    %1303 = vmatpush.bf16.msra.mxu0 %v1213
    %1304 = vmatpush.bf16.msra.mxu0 %v1209
    %1305 = vmatpush.bf16.msra.mxu0 %v1205
    %1306 = vmatpush.bf16.msra.mxu0 %v1201
    %1307 = vmatpush.bf16.msra.mxu0 %v1197
    %1308 = vmatmul.bf16.gmra.mxu0 %v1055
    %v1309 = vpop.f32.mrf.mxu0
    %v1310 = vadd.f32 %v1093, %v1309
    %v1311 = vpop.f32.mrf.mxu0
    %v1312 = vadd.f32 %v1093, %v1311
    %1313 = vdwg.mxu0
    %1314 = vst [vmem:[#allocation2] sm:$0xff] %v1268
    %1315 = vst [vmem:[#allocation2 + $0x8] sm:$0xff] %v1282
    %1316 = vst [vmem:[#allocation2 + $0x10] sm:$0xff] %v1296
    %1317 = vst [vmem:[#allocation2 + $0x18] sm:$0xff] %v1310
    %1318 = vst [vmem:[#allocation2 + $0x20] sm:$0xff] %v1270
    %1319 = vst [vmem:[#allocation2 + $0x28] sm:$0xff] %v1284
    %1320 = vst [vmem:[#allocation2 + $0x30] sm:$0xff] %v1298
    %1321 = vst [vmem:[#allocation2 + $0x38] sm:$0xff] %v1312
    %s1322 = scalar_lea.vmem %s12, 256
    %v1323 = vld [vmem:[%s1322] sm:$0xff]
    %v1324 = vld [vmem:[%s1322 + $0x8] sm:$0xff]
    %v1325 = vld [vmem:[%s1322 + $0x10] sm:$0xff]
    %v1326 = vld [vmem:[%s1322 + $0x18] sm:$0xff]
    %v1327 = vld [vmem:[%s1322 + $0x20] sm:$0xff]
    %v1328 = vld [vmem:[%s1322 + $0x28] sm:$0xff]
    %v1329 = vld [vmem:[%s1322 + $0x30] sm:$0xff]
    %v1330 = vld [vmem:[%s1322 + $0x38] sm:$0xff]
    %v1331 = vld [vmem:[%s1322 + $0x40] sm:$0xff]
    %v1332 = vld [vmem:[%s1322 + $0x48] sm:$0xff]
    %v1333 = vld [vmem:[%s1322 + $0x50] sm:$0xff]
    %v1334 = vld [vmem:[%s1322 + $0x58] sm:$0xff]
    %v1335 = vld [vmem:[%s1322 + $0x60] sm:$0xff]
    %v1336 = vld [vmem:[%s1322 + $0x68] sm:$0xff]
    %v1337 = vld [vmem:[%s1322 + $0x70] sm:$0xff]
    %v1338 = vld [vmem:[%s1322 + $0x78] sm:$0xff]
    %v1339 = vld [vmem:[%s1322 + $0x80] sm:$0xff]
    %v1340 = vld [vmem:[%s1322 + $0x88] sm:$0xff]
    %v1341 = vld [vmem:[%s1322 + $0x90] sm:$0xff]
    %v1342 = vld [vmem:[%s1322 + $0x98] sm:$0xff]
    %v1343 = vld [vmem:[%s1322 + $0xa0] sm:$0xff]
    %v1344 = vld [vmem:[%s1322 + $0xa8] sm:$0xff]
    %v1345 = vld [vmem:[%s1322 + $0xb0] sm:$0xff]
    %v1346 = vld [vmem:[%s1322 + $0xb8] sm:$0xff]
    %v1347 = vld [vmem:[%s1322 + $0xc0] sm:$0xff]
    %v1348 = vld [vmem:[%s1322 + $0xc8] sm:$0xff]
    %v1349 = vld [vmem:[%s1322 + $0xd0] sm:$0xff]
    %v1350 = vld [vmem:[%s1322 + $0xd8] sm:$0xff]
    %v1351 = vld [vmem:[%s1322 + $0xe0] sm:$0xff]
    %v1352 = vld [vmem:[%s1322 + $0xe8] sm:$0xff]
    %v1353 = vld [vmem:[%s1322 + $0xf0] sm:$0xff]
    %v1354 = vld [vmem:[%s1322 + $0xf8] sm:$0xff]
    %s1355 = scalar_lea.vmem [#allocation14], 4
    %v1356 = vld [vmem:[%s1355] sm:$0xf]
    %v1358 = vperm.slane %v1356, 0
    %v1359 = vperm.slane %v1356, 1
    %v1360 = vperm.slane %v1356, 2
    %v1361 = vperm.slane %v1356, 3
    %v1398 = vunpack.c.l.b16 %v1323
    %v1399 = vunpack.c.h.b16 %v1323
    %v1400 = vunpack.c.l.b16 %v1324
    %v1401 = vunpack.c.h.b16 %v1324
    %v1402 = vunpack.c.l.b16 %v1325
    %v1403 = vunpack.c.h.b16 %v1325
    %v1404 = vunpack.c.l.b16 %v1326
    %v1405 = vunpack.c.h.b16 %v1326
    %v1406 = vunpack.c.l.b16 %v1327
    %v1407 = vunpack.c.h.b16 %v1327
    %v1408 = vunpack.c.l.b16 %v1328
    %v1409 = vunpack.c.h.b16 %v1328
    %v1410 = vunpack.c.l.b16 %v1329
    %v1411 = vunpack.c.h.b16 %v1329
    %v1412 = vunpack.c.l.b16 %v1330
    %v1413 = vunpack.c.h.b16 %v1330
    %v1414 = vunpack.c.l.b16 %v1331
    %v1415 = vunpack.c.h.b16 %v1331
    %v1416 = vunpack.c.l.b16 %v1332
    %v1417 = vunpack.c.h.b16 %v1332
    %v1418 = vunpack.c.l.b16 %v1333
    %v1419 = vunpack.c.h.b16 %v1333
    %v1420 = vunpack.c.l.b16 %v1334
    %v1421 = vunpack.c.h.b16 %v1334
    %v1422 = vunpack.c.l.b16 %v1335
    %v1423 = vunpack.c.h.b16 %v1335
    %v1424 = vunpack.c.l.b16 %v1336
    %v1425 = vunpack.c.h.b16 %v1336
    %v1426 = vunpack.c.l.b16 %v1337
    %v1427 = vunpack.c.h.b16 %v1337
    %v1428 = vunpack.c.l.b16 %v1338
    %v1429 = vunpack.c.h.b16 %v1338
    %v1430 = vunpack.c.l.b16 %v1339
    %v1431 = vunpack.c.h.b16 %v1339
    %v1432 = vunpack.c.l.b16 %v1340
    %v1433 = vunpack.c.h.b16 %v1340
    %v1434 = vunpack.c.l.b16 %v1341
    %v1435 = vunpack.c.h.b16 %v1341
    %v1436 = vunpack.c.l.b16 %v1342
    %v1437 = vunpack.c.h.b16 %v1342
    %v1438 = vunpack.c.l.b16 %v1343
    %v1439 = vunpack.c.h.b16 %v1343
    %v1440 = vunpack.c.l.b16 %v1344
    %v1441 = vunpack.c.h.b16 %v1344
    %v1442 = vunpack.c.l.b16 %v1345
    %v1443 = vunpack.c.h.b16 %v1345
    %v1444 = vunpack.c.l.b16 %v1346
    %v1445 = vunpack.c.h.b16 %v1346
    %v1446 = vunpack.c.l.b16 %v1347
    %v1447 = vunpack.c.h.b16 %v1347
    %v1448 = vunpack.c.l.b16 %v1348
    %v1449 = vunpack.c.h.b16 %v1348
    %v1450 = vunpack.c.l.b16 %v1349
    %v1451 = vunpack.c.h.b16 %v1349
    %v1452 = vunpack.c.l.b16 %v1350
    %v1453 = vunpack.c.h.b16 %v1350
    %v1454 = vunpack.c.l.b16 %v1351
    %v1455 = vunpack.c.h.b16 %v1351
    %v1456 = vunpack.c.l.b16 %v1352
    %v1457 = vunpack.c.h.b16 %v1352
    %v1458 = vunpack.c.l.b16 %v1353
    %v1459 = vunpack.c.h.b16 %v1353
    %v1460 = vunpack.c.l.b16 %v1354
    %v1461 = vunpack.c.h.b16 %v1354
    %v1462 = vpack.c.b16 %v1402, %v1398
    %v1463 = vpack.c.b16 %v1403, %v1399
    %v1464 = vpack.c.b16 %v1404, %v1400
    %v1465 = vpack.c.b16 %v1405, %v1401
    %v1466 = vpack.c.b16 %v1410, %v1406
    %v1467 = vpack.c.b16 %v1411, %v1407
    %v1468 = vpack.c.b16 %v1412, %v1408
    %v1469 = vpack.c.b16 %v1413, %v1409
    %v1470 = vpack.c.b16 %v1418, %v1414
    %v1471 = vpack.c.b16 %v1419, %v1415
    %v1472 = vpack.c.b16 %v1420, %v1416
    %v1473 = vpack.c.b16 %v1421, %v1417
    %v1474 = vpack.c.b16 %v1426, %v1422
    %v1475 = vpack.c.b16 %v1427, %v1423
    %v1476 = vpack.c.b16 %v1428, %v1424
    %v1477 = vpack.c.b16 %v1429, %v1425
    %v1478 = vpack.c.b16 %v1434, %v1430
    %v1479 = vpack.c.b16 %v1435, %v1431
    %v1480 = vpack.c.b16 %v1436, %v1432
    %v1481 = vpack.c.b16 %v1437, %v1433
    %v1482 = vpack.c.b16 %v1442, %v1438
    %v1483 = vpack.c.b16 %v1443, %v1439
    %v1484 = vpack.c.b16 %v1444, %v1440
    %v1485 = vpack.c.b16 %v1445, %v1441
    %v1486 = vpack.c.b16 %v1450, %v1446
    %v1487 = vpack.c.b16 %v1451, %v1447
    %v1488 = vpack.c.b16 %v1452, %v1448
    %v1489 = vpack.c.b16 %v1453, %v1449
    %v1490 = vpack.c.b16 %v1458, %v1454
    %v1491 = vpack.c.b16 %v1459, %v1455
    %v1492 = vpack.c.b16 %v1460, %v1456
    %v1493 = vpack.c.b16 %v1461, %v1457
    %1526 = vmatpush.bf16.msra.mxu0 %v1490
    %1527 = vmatpush.bf16.msra.mxu0 %v1486
    %1528 = vmatpush.bf16.msra.mxu0 %v1482
    %1529 = vmatpush.bf16.msra.mxu0 %v1478
    %1530 = vmatpush.bf16.msra.mxu0 %v1474
    %1531 = vmatpush.bf16.msra.mxu0 %v1470
    %1532 = vmatpush.bf16.msra.mxu0 %v1466
    %1533 = vmatpush.bf16.msra.mxu0 %v1462
    %1534 = vmatmul.bf16.gmra.mxu0 %v1055
    %v1535 = vpop.f32.mrf.mxu0
    %v1536 = vadd.f32 %v1358, %v1535
    %v1537 = vpop.f32.mrf.mxu0
    %v1538 = vadd.f32 %v1358, %v1537
    %1539 = vdwg.mxu0
    %1540 = vmatpush.bf16.msra.mxu0 %v1491
    %1541 = vmatpush.bf16.msra.mxu0 %v1487
    %1542 = vmatpush.bf16.msra.mxu0 %v1483
    %1543 = vmatpush.bf16.msra.mxu0 %v1479
    %1544 = vmatpush.bf16.msra.mxu0 %v1475
    %1545 = vmatpush.bf16.msra.mxu0 %v1471
    %1546 = vmatpush.bf16.msra.mxu0 %v1467
    %1547 = vmatpush.bf16.msra.mxu0 %v1463
    %1548 = vmatmul.bf16.gmra.mxu0 %v1055
    %v1549 = vpop.f32.mrf.mxu0
    %v1550 = vadd.f32 %v1359, %v1549
    %v1551 = vpop.f32.mrf.mxu0
    %v1552 = vadd.f32 %v1359, %v1551
    %1553 = vdwg.mxu0
    %1554 = vmatpush.bf16.msra.mxu0 %v1492
    %1555 = vmatpush.bf16.msra.mxu0 %v1488
    %1556 = vmatpush.bf16.msra.mxu0 %v1484
    %1557 = vmatpush.bf16.msra.mxu0 %v1480
    %1558 = vmatpush.bf16.msra.mxu0 %v1476
    %1559 = vmatpush.bf16.msra.mxu0 %v1472
    %1560 = vmatpush.bf16.msra.mxu0 %v1468
    %1561 = vmatpush.bf16.msra.mxu0 %v1464
    %1562 = vmatmul.bf16.gmra.mxu0 %v1055
    %v1563 = vpop.f32.mrf.mxu0
    %v1564 = vadd.f32 %v1360, %v1563
    %v1565 = vpop.f32.mrf.mxu0
    %v1566 = vadd.f32 %v1360, %v1565
    %1567 = vdwg.mxu0
    %1568 = vmatpush.bf16.msra.mxu0 %v1493
    %1569 = vmatpush.bf16.msra.mxu0 %v1489
    %1570 = vmatpush.bf16.msra.mxu0 %v1485
    %1571 = vmatpush.bf16.msra.mxu0 %v1481
    %1572 = vmatpush.bf16.msra.mxu0 %v1477
    %1573 = vmatpush.bf16.msra.mxu0 %v1473
    %1574 = vmatpush.bf16.msra.mxu0 %v1469
    %1575 = vmatpush.bf16.msra.mxu0 %v1465
    %1576 = vmatmul.bf16.gmra.mxu0 %v1055
    %v1577 = vpop.f32.mrf.mxu0
    %v1578 = vadd.f32 %v1361, %v1577
    %v1579 = vpop.f32.mrf.mxu0
    %v1580 = vadd.f32 %v1361, %v1579
    %1581 = vdwg.mxu0
    %1582 = vst [vmem:[#allocation3] sm:$0xff] %v1536
    %1583 = vst [vmem:[#allocation3 + $0x8] sm:$0xff] %v1550
    %1584 = vst [vmem:[#allocation3 + $0x10] sm:$0xff] %v1564
    %1585 = vst [vmem:[#allocation3 + $0x18] sm:$0xff] %v1578
    %1586 = vst [vmem:[#allocation3 + $0x20] sm:$0xff] %v1538
    %1587 = vst [vmem:[#allocation3 + $0x28] sm:$0xff] %v1552
    %1588 = vst [vmem:[#allocation3 + $0x30] sm:$0xff] %v1566
    %1589 = vst [vmem:[#allocation3 + $0x38] sm:$0xff] %v1580
    %v1590 = vld [vmem:[#allocation2] sm:$0x3]
    %v1591 = vld [vmem:[#allocation2 + $0x8] sm:$0x3]
    %v1592 = vld [vmem:[#allocation2 + $0x10] sm:$0x3]
    %v1593 = vld [vmem:[#allocation2 + $0x18] sm:$0x3]
    %v1594 = vld [vmem:[#allocation3 + $0x20] sm:$0xc0]
    %v1595 = vld [vmem:[#allocation3 + $0x28] sm:$0xc0]
    %v1596 = vld [vmem:[#allocation3 + $0x30] sm:$0xc0]
    %v1597 = vld [vmem:[#allocation3 + $0x38] sm:$0xc0]
    %v1602 = vrot.slane %v1594, 4
    %v1603 = vrot.slane %v1595, 4
    %v1604 = vrot.slane %v1596, 4
    %v1605 = vrot.slane %v1597, 4
    %vm1610 = vcmask 1041408
    %v1611 = vsel %vm1610, %v1590, %v1602
    %v1612 = vsel %vm1610, %v1591, %v1603
    %v1613 = vsel %vm1610, %v1592, %v1604
    %v1614 = vsel %vm1610, %v1593, %v1605
    %v1615 = vpack.c.bf16 0.0, 0.0
    %v1616 = vld [vmem:[%s13] sm:$0xff]
    %v1617 = vld [vmem:[%s13 + $0x8] sm:$0xff]
    %v1618 = vld [vmem:[%s13 + $0x10] sm:$0xff]
    %v1619 = vld [vmem:[%s13 + $0x18] sm:$0xff]
    %v1620 = vld [vmem:[%s13 + $0x20] sm:$0xff]
    %v1621 = vld [vmem:[%s13 + $0x28] sm:$0xff]
    %v1622 = vld [vmem:[%s13 + $0x30] sm:$0xff]
    %v1623 = vld [vmem:[%s13 + $0x38] sm:$0xff]
    %v1624 = vld [vmem:[%s13 + $0x40] sm:$0xff]
    %v1625 = vld [vmem:[%s13 + $0x48] sm:$0xff]
    %v1626 = vld [vmem:[%s13 + $0x50] sm:$0xff]
    %v1627 = vld [vmem:[%s13 + $0x58] sm:$0xff]
    %v1628 = vld [vmem:[%s13 + $0x60] sm:$0xff]
    %v1629 = vld [vmem:[%s13 + $0x68] sm:$0xff]
    %v1630 = vld [vmem:[%s13 + $0x70] sm:$0xff]
    %v1631 = vld [vmem:[%s13 + $0x78] sm:$0xff]
    %v1632 = vld [vmem:[%s13 + $0x80] sm:$0xff]
    %v1633 = vld [vmem:[%s13 + $0x88] sm:$0xff]
    %v1634 = vld [vmem:[%s13 + $0x90] sm:$0xff]
    %v1635 = vld [vmem:[%s13 + $0x98] sm:$0xff]
    %v1636 = vld [vmem:[%s13 + $0xa0] sm:$0xff]
    %v1637 = vld [vmem:[%s13 + $0xa8] sm:$0xff]
    %v1638 = vld [vmem:[%s13 + $0xb0] sm:$0xff]
    %v1639 = vld [vmem:[%s13 + $0xb8] sm:$0xff]
    %v1640 = vld [vmem:[%s13 + $0xc0] sm:$0xff]
    %v1641 = vld [vmem:[%s13 + $0xc8] sm:$0xff]
    %v1642 = vld [vmem:[%s13 + $0xd0] sm:$0xff]
    %v1643 = vld [vmem:[%s13 + $0xd8] sm:$0xff]
    %v1644 = vld [vmem:[%s13 + $0xe0] sm:$0xff]
    %v1645 = vld [vmem:[%s13 + $0xe8] sm:$0xff]
    %v1646 = vld [vmem:[%s13 + $0xf0] sm:$0xff]
    %v1647 = vld [vmem:[%s13 + $0xf8] sm:$0xff]
    %v1648 = vld [vmem:[%s13 + $0x100] sm:$0xff]
    %v1649 = vld [vmem:[%s13 + $0x108] sm:$0xff]
    %v1650 = vld [vmem:[%s13 + $0x110] sm:$0xff]
    %v1651 = vld [vmem:[%s13 + $0x118] sm:$0xff]
    %v1652 = vld [vmem:[%s13 + $0x120] sm:$0xff]
    %v1653 = vld [vmem:[%s13 + $0x128] sm:$0xff]
    %v1654 = vld [vmem:[%s13 + $0x130] sm:$0xff]
    %v1655 = vld [vmem:[%s13 + $0x138] sm:$0xff]
    %v1656 = vld [vmem:[%s13 + $0x140] sm:$0xff]
    %v1657 = vld [vmem:[%s13 + $0x148] sm:$0xff]
    %v1658 = vld [vmem:[%s13 + $0x150] sm:$0xff]
    %v1659 = vld [vmem:[%s13 + $0x158] sm:$0xff]
    %v1660 = vld [vmem:[%s13 + $0x160] sm:$0xff]
    %v1661 = vld [vmem:[%s13 + $0x168] sm:$0xff]
    %v1662 = vld [vmem:[%s13 + $0x170] sm:$0xff]
    %v1663 = vld [vmem:[%s13 + $0x178] sm:$0xff]
    %v1664 = vld [vmem:[%s13 + $0x180] sm:$0xff]
    %v1665 = vld [vmem:[%s13 + $0x188] sm:$0xff]
    %v1666 = vld [vmem:[%s13 + $0x190] sm:$0xff]
    %v1667 = vld [vmem:[%s13 + $0x198] sm:$0xff]
    %v1668 = vld [vmem:[%s13 + $0x1a0] sm:$0xff]
    %v1669 = vld [vmem:[%s13 + $0x1a8] sm:$0xff]
    %v1670 = vld [vmem:[%s13 + $0x1b0] sm:$0xff]
    %v1671 = vld [vmem:[%s13 + $0x1b8] sm:$0xff]
    %v1672 = vld [vmem:[%s13 + $0x1c0] sm:$0xff]
    %v1673 = vld [vmem:[%s13 + $0x1c8] sm:$0xff]
    %v1674 = vld [vmem:[%s13 + $0x1d0] sm:$0xff]
    %v1675 = vld [vmem:[%s13 + $0x1d8] sm:$0xff]
    %v1676 = vld [vmem:[%s13 + $0x1e0] sm:$0xff]
    %v1677 = vld [vmem:[%s13 + $0x1e8] sm:$0xff]
    %v1678 = vld [vmem:[%s13 + $0x1f0] sm:$0xff]
    %v1679 = vld [vmem:[%s13 + $0x1f8] sm:$0xff]
    %v1744 = vunpack.c.l.b16 %v1616
    %v1745 = vunpack.c.h.b16 %v1616
    %v1746 = vunpack.c.l.b16 %v1617
    %v1747 = vunpack.c.h.b16 %v1617
    %v1748 = vunpack.c.l.b16 %v1618
    %v1749 = vunpack.c.h.b16 %v1618
    %v1750 = vunpack.c.l.b16 %v1619
    %v1751 = vunpack.c.h.b16 %v1619
    %v1752 = vunpack.c.l.b16 %v1620
    %v1753 = vunpack.c.h.b16 %v1620
    %v1754 = vunpack.c.l.b16 %v1621
    %v1755 = vunpack.c.h.b16 %v1621
    %v1756 = vunpack.c.l.b16 %v1622
    %v1757 = vunpack.c.h.b16 %v1622
    %v1758 = vunpack.c.l.b16 %v1623
    %v1759 = vunpack.c.h.b16 %v1623
    %v1760 = vunpack.c.l.b16 %v1624
    %v1761 = vunpack.c.h.b16 %v1624
    %v1762 = vunpack.c.l.b16 %v1625
    %v1763 = vunpack.c.h.b16 %v1625
    %v1764 = vunpack.c.l.b16 %v1626
    %v1765 = vunpack.c.h.b16 %v1626
    %v1766 = vunpack.c.l.b16 %v1627
    %v1767 = vunpack.c.h.b16 %v1627
    %v1768 = vunpack.c.l.b16 %v1628
    %v1769 = vunpack.c.h.b16 %v1628
    %v1770 = vunpack.c.l.b16 %v1629
    %v1771 = vunpack.c.h.b16 %v1629
    %v1772 = vunpack.c.l.b16 %v1630
    %v1773 = vunpack.c.h.b16 %v1630
    %v1774 = vunpack.c.l.b16 %v1631
    %v1775 = vunpack.c.h.b16 %v1631
    %v1776 = vunpack.c.l.b16 %v1632
    %v1777 = vunpack.c.h.b16 %v1632
    %v1778 = vunpack.c.l.b16 %v1633
    %v1779 = vunpack.c.h.b16 %v1633
    %v1780 = vunpack.c.l.b16 %v1634
    %v1781 = vunpack.c.h.b16 %v1634
    %v1782 = vunpack.c.l.b16 %v1635
    %v1783 = vunpack.c.h.b16 %v1635
    %v1784 = vunpack.c.l.b16 %v1636
    %v1785 = vunpack.c.h.b16 %v1636
    %v1786 = vunpack.c.l.b16 %v1637
    %v1787 = vunpack.c.h.b16 %v1637
    %v1788 = vunpack.c.l.b16 %v1638
    %v1789 = vunpack.c.h.b16 %v1638
    %v1790 = vunpack.c.l.b16 %v1639
    %v1791 = vunpack.c.h.b16 %v1639
    %v1792 = vunpack.c.l.b16 %v1640
    %v1793 = vunpack.c.h.b16 %v1640
    %v1794 = vunpack.c.l.b16 %v1641
    %v1795 = vunpack.c.h.b16 %v1641
    %v1796 = vunpack.c.l.b16 %v1642
    %v1797 = vunpack.c.h.b16 %v1642
    %v1798 = vunpack.c.l.b16 %v1643
    %v1799 = vunpack.c.h.b16 %v1643
    %v1800 = vunpack.c.l.b16 %v1644
    %v1801 = vunpack.c.h.b16 %v1644
    %v1802 = vunpack.c.l.b16 %v1645
    %v1803 = vunpack.c.h.b16 %v1645
    %v1804 = vunpack.c.l.b16 %v1646
    %v1805 = vunpack.c.h.b16 %v1646
    %v1806 = vunpack.c.l.b16 %v1647
    %v1807 = vunpack.c.h.b16 %v1647
    %v1808 = vunpack.c.l.b16 %v1648
    %v1809 = vunpack.c.h.b16 %v1648
    %v1810 = vunpack.c.l.b16 %v1649
    %v1811 = vunpack.c.h.b16 %v1649
    %v1812 = vunpack.c.l.b16 %v1650
    %v1813 = vunpack.c.h.b16 %v1650
    %v1814 = vunpack.c.l.b16 %v1651
    %v1815 = vunpack.c.h.b16 %v1651
    %v1816 = vunpack.c.l.b16 %v1652
    %v1817 = vunpack.c.h.b16 %v1652
    %v1818 = vunpack.c.l.b16 %v1653
    %v1819 = vunpack.c.h.b16 %v1653
    %v1820 = vunpack.c.l.b16 %v1654
    %v1821 = vunpack.c.h.b16 %v1654
    %v1822 = vunpack.c.l.b16 %v1655
    %v1823 = vunpack.c.h.b16 %v1655
    %v1824 = vunpack.c.l.b16 %v1656
    %v1825 = vunpack.c.h.b16 %v1656
    %v1826 = vunpack.c.l.b16 %v1657
    %v1827 = vunpack.c.h.b16 %v1657
    %v1828 = vunpack.c.l.b16 %v1658
    %v1829 = vunpack.c.h.b16 %v1658
    %v1830 = vunpack.c.l.b16 %v1659
    %v1831 = vunpack.c.h.b16 %v1659
    %v1832 = vunpack.c.l.b16 %v1660
    %v1833 = vunpack.c.h.b16 %v1660
    %v1834 = vunpack.c.l.b16 %v1661
    %v1835 = vunpack.c.h.b16 %v1661
    %v1836 = vunpack.c.l.b16 %v1662
    %v1837 = vunpack.c.h.b16 %v1662
    %v1838 = vunpack.c.l.b16 %v1663
    %v1839 = vunpack.c.h.b16 %v1663
    %v1840 = vunpack.c.l.b16 %v1664
    %v1841 = vunpack.c.h.b16 %v1664
    %v1842 = vunpack.c.l.b16 %v1665
    %v1843 = vunpack.c.h.b16 %v1665
    %v1844 = vunpack.c.l.b16 %v1666
    %v1845 = vunpack.c.h.b16 %v1666
    %v1846 = vunpack.c.l.b16 %v1667
    %v1847 = vunpack.c.h.b16 %v1667
    %v1848 = vunpack.c.l.b16 %v1668
    %v1849 = vunpack.c.h.b16 %v1668
    %v1850 = vunpack.c.l.b16 %v1669
    %v1851 = vunpack.c.h.b16 %v1669
    %v1852 = vunpack.c.l.b16 %v1670
    %v1853 = vunpack.c.h.b16 %v1670
    %v1854 = vunpack.c.l.b16 %v1671
    %v1855 = vunpack.c.h.b16 %v1671
    %v1856 = vunpack.c.l.b16 %v1672
    %v1857 = vunpack.c.h.b16 %v1672
    %v1858 = vunpack.c.l.b16 %v1673
    %v1859 = vunpack.c.h.b16 %v1673
    %v1860 = vunpack.c.l.b16 %v1674
    %v1861 = vunpack.c.h.b16 %v1674
    %v1862 = vunpack.c.l.b16 %v1675
    %v1863 = vunpack.c.h.b16 %v1675
    %v1864 = vunpack.c.l.b16 %v1676
    %v1865 = vunpack.c.h.b16 %v1676
    %v1866 = vunpack.c.l.b16 %v1677
    %v1867 = vunpack.c.h.b16 %v1677
    %v1868 = vunpack.c.l.b16 %v1678
    %v1869 = vunpack.c.h.b16 %v1678
    %v1870 = vunpack.c.l.b16 %v1679
    %v1871 = vunpack.c.h.b16 %v1679
    %v1872 = vpack.c.b16 %v1748, %v1744
    %v1873 = vpack.c.b16 %v1749, %v1745
    %v1874 = vpack.c.b16 %v1750, %v1746
    %v1875 = vpack.c.b16 %v1751, %v1747
    %v1876 = vpack.c.b16 %v1756, %v1752
    %v1877 = vpack.c.b16 %v1757, %v1753
    %v1878 = vpack.c.b16 %v1758, %v1754
    %v1879 = vpack.c.b16 %v1759, %v1755
    %v1880 = vpack.c.b16 %v1764, %v1760
    %v1881 = vpack.c.b16 %v1765, %v1761
    %v1882 = vpack.c.b16 %v1766, %v1762
    %v1883 = vpack.c.b16 %v1767, %v1763
    %v1884 = vpack.c.b16 %v1772, %v1768
    %v1885 = vpack.c.b16 %v1773, %v1769
    %v1886 = vpack.c.b16 %v1774, %v1770
    %v1887 = vpack.c.b16 %v1775, %v1771
    %v1888 = vpack.c.b16 %v1780, %v1776
    %v1889 = vpack.c.b16 %v1781, %v1777
    %v1890 = vpack.c.b16 %v1782, %v1778
    %v1891 = vpack.c.b16 %v1783, %v1779
    %v1892 = vpack.c.b16 %v1788, %v1784
    %v1893 = vpack.c.b16 %v1789, %v1785
    %v1894 = vpack.c.b16 %v1790, %v1786
    %v1895 = vpack.c.b16 %v1791, %v1787
    %v1896 = vpack.c.b16 %v1796, %v1792
    %v1897 = vpack.c.b16 %v1797, %v1793
    %v1898 = vpack.c.b16 %v1798, %v1794
    %v1899 = vpack.c.b16 %v1799, %v1795
    %v1900 = vpack.c.b16 %v1804, %v1800
    %v1901 = vpack.c.b16 %v1805, %v1801
    %v1902 = vpack.c.b16 %v1806, %v1802
    %v1903 = vpack.c.b16 %v1807, %v1803
    %v1904 = vpack.c.b16 %v1812, %v1808
    %v1905 = vpack.c.b16 %v1813, %v1809
    %v1906 = vpack.c.b16 %v1814, %v1810
    %v1907 = vpack.c.b16 %v1815, %v1811
    %v1908 = vpack.c.b16 %v1820, %v1816
    %v1909 = vpack.c.b16 %v1821, %v1817
    %v1910 = vpack.c.b16 %v1822, %v1818
    %v1911 = vpack.c.b16 %v1823, %v1819
    %v1912 = vpack.c.b16 %v1828, %v1824
    %v1913 = vpack.c.b16 %v1829, %v1825
    %v1914 = vpack.c.b16 %v1830, %v1826
    %v1915 = vpack.c.b16 %v1831, %v1827
    %v1916 = vpack.c.b16 %v1836, %v1832
    %v1917 = vpack.c.b16 %v1837, %v1833
    %v1918 = vpack.c.b16 %v1838, %v1834
    %v1919 = vpack.c.b16 %v1839, %v1835
    %v1920 = vpack.c.b16 %v1844, %v1840
    %v1921 = vpack.c.b16 %v1845, %v1841
    %v1922 = vpack.c.b16 %v1846, %v1842
    %v1923 = vpack.c.b16 %v1847, %v1843
    %v1924 = vpack.c.b16 %v1852, %v1848
    %v1925 = vpack.c.b16 %v1853, %v1849
    %v1926 = vpack.c.b16 %v1854, %v1850
    %v1927 = vpack.c.b16 %v1855, %v1851
    %v1928 = vpack.c.b16 %v1860, %v1856
    %v1929 = vpack.c.b16 %v1861, %v1857
    %v1930 = vpack.c.b16 %v1862, %v1858
    %v1931 = vpack.c.b16 %v1863, %v1859
    %v1932 = vpack.c.b16 %v1868, %v1864
    %v1933 = vpack.c.b16 %v1869, %v1865
    %v1934 = vpack.c.b16 %v1870, %v1866
    %v1935 = vpack.c.b16 %v1871, %v1867
    %2000 = vmatpush.bf16.msra.mxu0 %v1900
    %2001 = vmatpush.bf16.msra.mxu0 %v1896
    %2002 = vmatpush.bf16.msra.mxu0 %v1892
    %2003 = vmatpush.bf16.msra.mxu0 %v1888
    %2004 = vmatpush.bf16.msra.mxu0 %v1884
    %2005 = vmatpush.bf16.msra.mxu0 %v1880
    %2006 = vmatpush.bf16.msra.mxu0 %v1876
    %2007 = vmatpush.bf16.msra.mxu0 %v1872
    %2008 = vmatmul.bf16.gmra.mxu0 %v1615
    %v2009 = vpop.f32.mrf.mxu0
    %v2010 = vadd.f32 0.0, %v2009
    %v2011 = vpop.f32.mrf.mxu0
    %2012 = vdwg.mxu0
    %2013 = vmatpush.bf16.msra.mxu0 %v1932
    %2014 = vmatpush.bf16.msra.mxu0 %v1928
    %2015 = vmatpush.bf16.msra.mxu0 %v1924
    %2016 = vmatpush.bf16.msra.mxu0 %v1920
    %2017 = vmatpush.bf16.msra.mxu0 %v1916
    %2018 = vmatpush.bf16.msra.mxu0 %v1912
    %2019 = vmatpush.bf16.msra.mxu0 %v1908
    %2020 = vmatpush.bf16.msra.mxu0 %v1904
    %2021 = vmatmul.bf16.gmra.mxu0 %v1615
    %v2022 = vpop.f32.mrf.mxu0
    %v2023 = vadd.f32 %v2010, %v2022
    %v2024 = vpop.f32.mrf.mxu0
    %2025 = vdwg.mxu0
    %2026 = vmatpush.bf16.msra.mxu0 %v1901
    %2027 = vmatpush.bf16.msra.mxu0 %v1897
    %2028 = vmatpush.bf16.msra.mxu0 %v1893
    %2029 = vmatpush.bf16.msra.mxu0 %v1889
    %2030 = vmatpush.bf16.msra.mxu0 %v1885
    %2031 = vmatpush.bf16.msra.mxu0 %v1881
    %2032 = vmatpush.bf16.msra.mxu0 %v1877
    %2033 = vmatpush.bf16.msra.mxu0 %v1873
    %2034 = vmatmul.bf16.gmra.mxu0 %v1615
    %v2035 = vpop.f32.mrf.mxu0
    %v2036 = vadd.f32 0.0, %v2035
    %v2037 = vpop.f32.mrf.mxu0
    %2038 = vdwg.mxu0
    %2039 = vmatpush.bf16.msra.mxu0 %v1933
    %2040 = vmatpush.bf16.msra.mxu0 %v1929
    %2041 = vmatpush.bf16.msra.mxu0 %v1925
    %2042 = vmatpush.bf16.msra.mxu0 %v1921
    %2043 = vmatpush.bf16.msra.mxu0 %v1917
    %2044 = vmatpush.bf16.msra.mxu0 %v1913
    %2045 = vmatpush.bf16.msra.mxu0 %v1909
    %2046 = vmatpush.bf16.msra.mxu0 %v1905
    %2047 = vmatmul.bf16.gmra.mxu0 %v1615
    %v2048 = vpop.f32.mrf.mxu0
    %v2049 = vadd.f32 %v2036, %v2048
    %v2050 = vpop.f32.mrf.mxu0
    %2051 = vdwg.mxu0
    %2052 = vmatpush.bf16.msra.mxu0 %v1902
    %2053 = vmatpush.bf16.msra.mxu0 %v1898
    %2054 = vmatpush.bf16.msra.mxu0 %v1894
    %2055 = vmatpush.bf16.msra.mxu0 %v1890
    %2056 = vmatpush.bf16.msra.mxu0 %v1886
    %2057 = vmatpush.bf16.msra.mxu0 %v1882
    %2058 = vmatpush.bf16.msra.mxu0 %v1878
    %2059 = vmatpush.bf16.msra.mxu0 %v1874
    %2060 = vmatmul.bf16.gmra.mxu0 %v1615
    %v2061 = vpop.f32.mrf.mxu0
    %v2062 = vadd.f32 0.0, %v2061
    %v2063 = vpop.f32.mrf.mxu0
    %2064 = vdwg.mxu0
    %2065 = vmatpush.bf16.msra.mxu0 %v1934
    %2066 = vmatpush.bf16.msra.mxu0 %v1930
    %2067 = vmatpush.bf16.msra.mxu0 %v1926
    %2068 = vmatpush.bf16.msra.mxu0 %v1922
    %2069 = vmatpush.bf16.msra.mxu0 %v1918
    %2070 = vmatpush.bf16.msra.mxu0 %v1914
    %2071 = vmatpush.bf16.msra.mxu0 %v1910
    %2072 = vmatpush.bf16.msra.mxu0 %v1906
    %2073 = vmatmul.bf16.gmra.mxu0 %v1615
    %v2074 = vpop.f32.mrf.mxu0
    %v2075 = vadd.f32 %v2062, %v2074
    %v2076 = vpop.f32.mrf.mxu0
    %2077 = vdwg.mxu0
    %2078 = vmatpush.bf16.msra.mxu0 %v1903
    %2079 = vmatpush.bf16.msra.mxu0 %v1899
    %2080 = vmatpush.bf16.msra.mxu0 %v1895
    %2081 = vmatpush.bf16.msra.mxu0 %v1891
    %2082 = vmatpush.bf16.msra.mxu0 %v1887
    %2083 = vmatpush.bf16.msra.mxu0 %v1883
    %2084 = vmatpush.bf16.msra.mxu0 %v1879
    %2085 = vmatpush.bf16.msra.mxu0 %v1875
    %2086 = vmatmul.bf16.gmra.mxu0 %v1615
    %v2087 = vpop.f32.mrf.mxu0
    %v2088 = vadd.f32 0.0, %v2087
    %v2089 = vpop.f32.mrf.mxu0
    %2090 = vdwg.mxu0
    %2091 = vmatpush.bf16.msra.mxu0 %v1935
    %2092 = vmatpush.bf16.msra.mxu0 %v1931
    %2093 = vmatpush.bf16.msra.mxu0 %v1927
    %2094 = vmatpush.bf16.msra.mxu0 %v1923
    %2095 = vmatpush.bf16.msra.mxu0 %v1919
    %2096 = vmatpush.bf16.msra.mxu0 %v1915
    %2097 = vmatpush.bf16.msra.mxu0 %v1911
    %2098 = vmatpush.bf16.msra.mxu0 %v1907
    %2099 = vmatmul.bf16.gmra.mxu0 %v1615
    %v2100 = vpop.f32.mrf.mxu0
    %v2101 = vadd.f32 %v2088, %v2100
    %v2102 = vpop.f32.mrf.mxu0
    %2103 = vdwg.mxu0
    %v2104 = vadd.f32 %v1611, %v2023
    %v2105 = vadd.f32 %v1612, %v2049
    %v2106 = vadd.f32 %v1613, %v2075
    %v2107 = vadd.f32 %v1614, %v2101
    %v2108 = vxor.u32 %v2104, 2147483648
    %v2109 = vmul.f32 %v2108, 1.442695
    %v2110 = vpow.pop %v2109
    %v2111 = vadd.f32 %v2110, 1.0
    %v2112 = vrcp.pop %v2111
    %v2113 = vmul.f32 %v2111, %v2112
    %v2114 = vsub.f32 1.0, %v2113
    %v2115 = vmul.f32 %v2112, %v2114
    %v2116 = vadd.f32 %v2112, %v2115
    %vm2117 = vweird.f32 %v2111
    %vm2118 = vweird.f32 %v2112
    %vm2119 = vmor %vm2117, %vm2118
    %v2120 = vsel %vm2119, %v2112, %v2116
    %v2121 = vand.u32 2147483647, %v2111
    %vm2122 = vcmp.eq.f32.partialorder %v2121, 8.507059e+37
    %v2123 = vand.u32 %v2111, 2147483648
    %v2124 = vor.u32 1.1754944e-38, %v2123
    %v2125 = vsel %vm2122, %v2124, %v2120
    %v2126 = vmul.f32 1.0, %v2125
    %v2127 = vxor.u32 %v2105, 2147483648
    %v2128 = vmul.f32 %v2127, 1.442695
    %v2129 = vpow.pop %v2128
    %v2130 = vadd.f32 %v2129, 1.0
    %v2131 = vrcp.pop %v2130
    %v2132 = vmul.f32 %v2130, %v2131
    %v2133 = vsub.f32 1.0, %v2132
    %v2134 = vmul.f32 %v2131, %v2133
    %v2135 = vadd.f32 %v2131, %v2134
    %vm2136 = vweird.f32 %v2130
    %vm2137 = vweird.f32 %v2131
    %vm2138 = vmor %vm2136, %vm2137
    %v2139 = vsel %vm2138, %v2131, %v2135
    %v2140 = vand.u32 2147483647, %v2130
    %vm2141 = vcmp.eq.f32.partialorder %v2140, 8.507059e+37
    %v2142 = vand.u32 %v2130, 2147483648
    %v2143 = vor.u32 1.1754944e-38, %v2142
    %v2144 = vsel %vm2141, %v2143, %v2139
    %v2145 = vmul.f32 1.0, %v2144
    %v2146 = vtanh.pop %v2106
    %v2147 = vxor.u32 %v2107, 2147483648
    %v2148 = vmul.f32 %v2147, 1.442695
    %v2149 = vpow.pop %v2148
    %v2150 = vadd.f32 %v2149, 1.0
    %v2151 = vrcp.pop %v2150
    %v2152 = vmul.f32 %v2150, %v2151
    %v2153 = vsub.f32 1.0, %v2152
    %v2154 = vmul.f32 %v2151, %v2153
    %v2155 = vadd.f32 %v2151, %v2154
    %vm2156 = vweird.f32 %v2150
    %vm2157 = vweird.f32 %v2151
    %vm2158 = vmor %vm2156, %vm2157
    %v2159 = vsel %vm2158, %v2151, %v2155
    %v2160 = vand.u32 2147483647, %v2150
    %vm2161 = vcmp.eq.f32.partialorder %v2160, 8.507059e+37
    %v2162 = vand.u32 %v2150, 2147483648
    %v2163 = vor.u32 1.1754944e-38, %v2162
    %v2164 = vsel %vm2161, %v2163, %v2159
    %v2165 = vmul.f32 1.0, %v2164
    %v2166 = vmul.f32 %v2145, 0.0
    %v2167 = vmul.f32 %v2126, %v2146
    %v2168 = vadd.f32 %v2166, %v2167
    %v2169 = vmax.f32 %v2168, -3.0
    %v2170 = vmin.f32 %v2169, 3.0
    %v2171 = vtanh.pop %v2170
    %v2172 = vmul.f32 %v2165, %v2171
    %v2173 = vsel %vm1053, %v2172, 0.0
    %v2174 = vsel %vm1054, %v2172, 0.0
    %v2175 = vpack.c.bf16 %v2173, %v2173
    %v2176 = vpack.c.bf16 %v2174, %v2174
    %v2177 = vld [vmem:[%s15] sm:$0xf]
    %v2178 = vld [vmem:[%s15 + $0x4] sm:$0xf]
    %v2179 = vld [vmem:[%s15 + $0x8] sm:$0xf]
    %v2180 = vld [vmem:[%s15 + $0xc] sm:$0xf]
    %v2181 = vld [vmem:[%s15 + $0x10] sm:$0xf]
    %v2182 = vld [vmem:[%s15 + $0x14] sm:$0xf]
    %v2183 = vld [vmem:[%s15 + $0x18] sm:$0xf]
    %v2184 = vld [vmem:[%s15 + $0x1c] sm:$0xf]
    %v2185 = vld [vmem:[%s15 + $0x20] sm:$0xf]
    %v2186 = vld [vmem:[%s15 + $0x24] sm:$0xf]
    %v2187 = vld [vmem:[%s15 + $0x28] sm:$0xf]
    %v2188 = vld [vmem:[%s15 + $0x2c] sm:$0xf]
    %v2189 = vld [vmem:[%s15 + $0x30] sm:$0xf]
    %v2190 = vld [vmem:[%s15 + $0x34] sm:$0xf]
    %v2191 = vld [vmem:[%s15 + $0x38] sm:$0xf]
    %v2192 = vld [vmem:[%s15 + $0x3c] sm:$0xf]
    %v2193 = vld [vmem:[%s15 + $0x40] sm:$0xf]
    %v2194 = vld [vmem:[%s15 + $0x44] sm:$0xf]
    %v2195 = vld [vmem:[%s15 + $0x48] sm:$0xf]
    %v2196 = vld [vmem:[%s15 + $0x4c] sm:$0xf]
    %v2197 = vld [vmem:[%s15 + $0x50] sm:$0xf]
    %v2198 = vld [vmem:[%s15 + $0x54] sm:$0xf]
    %v2199 = vld [vmem:[%s15 + $0x58] sm:$0xf]
    %v2200 = vld [vmem:[%s15 + $0x5c] sm:$0xf]
    %v2201 = vld [vmem:[%s15 + $0x60] sm:$0xf]
    %v2202 = vld [vmem:[%s15 + $0x64] sm:$0xf]
    %v2203 = vld [vmem:[%s15 + $0x68] sm:$0xf]
    %v2204 = vld [vmem:[%s15 + $0x6c] sm:$0xf]
    %v2205 = vld [vmem:[%s15 + $0x70] sm:$0xf]
    %v2206 = vld [vmem:[%s15 + $0x74] sm:$0xf]
    %v2207 = vld [vmem:[%s15 + $0x78] sm:$0xf]
    %v2208 = vld [vmem:[%s15 + $0x7c] sm:$0xf]
    %v2241 = vunpack.c.l.b16 %v2177
    %v2242 = vunpack.c.l.b16 %v2178
    %v2243 = vunpack.c.l.b16 %v2179
    %v2244 = vunpack.c.l.b16 %v2180
    %v2245 = vunpack.c.l.b16 %v2181
    %v2246 = vunpack.c.l.b16 %v2182
    %v2247 = vunpack.c.l.b16 %v2183
    %v2248 = vunpack.c.l.b16 %v2184
    %v2249 = vunpack.c.l.b16 %v2185
    %v2250 = vunpack.c.l.b16 %v2186
    %v2251 = vunpack.c.l.b16 %v2187
    %v2252 = vunpack.c.l.b16 %v2188
    %v2253 = vunpack.c.l.b16 %v2189
    %v2254 = vunpack.c.l.b16 %v2190
    %v2255 = vunpack.c.l.b16 %v2191
    %v2256 = vunpack.c.l.b16 %v2192
    %v2257 = vunpack.c.l.b16 %v2193
    %v2258 = vunpack.c.l.b16 %v2194
    %v2259 = vunpack.c.l.b16 %v2195
    %v2260 = vunpack.c.l.b16 %v2196
    %v2261 = vunpack.c.l.b16 %v2197
    %v2262 = vunpack.c.l.b16 %v2198
    %v2263 = vunpack.c.l.b16 %v2199
    %v2264 = vunpack.c.l.b16 %v2200
    %v2265 = vunpack.c.l.b16 %v2201
    %v2266 = vunpack.c.l.b16 %v2202
    %v2267 = vunpack.c.l.b16 %v2203
    %v2268 = vunpack.c.l.b16 %v2204
    %v2269 = vunpack.c.l.b16 %v2205
    %v2270 = vunpack.c.l.b16 %v2206
    %v2271 = vunpack.c.l.b16 %v2207
    %v2272 = vunpack.c.l.b16 %v2208
    %v2273 = vpack.c.b16 %v2242, %v2241
    %v2274 = vpack.c.b16 %v2244, %v2243
    %v2275 = vpack.c.b16 %v2246, %v2245
    %v2276 = vpack.c.b16 %v2248, %v2247
    %v2277 = vpack.c.b16 %v2250, %v2249
    %v2278 = vpack.c.b16 %v2252, %v2251
    %v2279 = vpack.c.b16 %v2254, %v2253
    %v2280 = vpack.c.b16 %v2256, %v2255
    %v2281 = vpack.c.b16 %v2258, %v2257
    %v2282 = vpack.c.b16 %v2260, %v2259
    %v2283 = vpack.c.b16 %v2262, %v2261
    %v2284 = vpack.c.b16 %v2264, %v2263
    %v2285 = vpack.c.b16 %v2266, %v2265
    %v2286 = vpack.c.b16 %v2268, %v2267
    %v2287 = vpack.c.b16 %v2270, %v2269
    %v2288 = vpack.c.b16 %v2272, %v2271
    %2305 = vmatpush.bf16.msra.mxu0 %v2280
    %2306 = vmatpush.bf16.msra.mxu0 %v2279
    %2307 = vmatpush.bf16.msra.mxu0 %v2278
    %2308 = vmatpush.bf16.msra.mxu0 %v2277
    %2309 = vmatpush.bf16.msra.mxu0 %v2276
    %2310 = vmatpush.bf16.msra.mxu0 %v2275
    %2311 = vmatpush.bf16.msra.mxu0 %v2274
    %2312 = vmatpush.bf16.msra.mxu0 %v2273
    %2313 = vmatmul.bf16.gmra.mxu0 %v2175
    %v2314 = vpop.f32.mrf.mxu0
    %v2315 = vadd.f32 0.0, %v2314
    %v2316 = vpop.f32.mrf.mxu0
    %2317 = vdwg.mxu0
    %2318 = vmatpush.bf16.msra.mxu0 %v2288
    %2319 = vmatpush.bf16.msra.mxu0 %v2287
    %2320 = vmatpush.bf16.msra.mxu0 %v2286
    %2321 = vmatpush.bf16.msra.mxu0 %v2285
    %2322 = vmatpush.bf16.msra.mxu0 %v2284
    %2323 = vmatpush.bf16.msra.mxu0 %v2283
    %2324 = vmatpush.bf16.msra.mxu0 %v2282
    %2325 = vmatpush.bf16.msra.mxu0 %v2281
    %2326 = vmatmul.bf16.gmra.mxu0 %v2176
    %v2327 = vpop.f32.mrf.mxu0
    %v2328 = vadd.f32 %v2315, %v2327
    %v2329 = vpop.f32.mrf.mxu0
    %2330 = vdwg.mxu0
    %v2331 = vmax.f32 %v2328, -3.0
    %v2332 = vmin.f32 %v2331, 3.0
    %v2333 = vld [vmem:[#allocation2] sm:$0xc]
    %v2334 = vld [vmem:[#allocation2 + $0x8] sm:$0xc]
    %v2335 = vld [vmem:[#allocation2 + $0x10] sm:$0xc]
    %v2336 = vld [vmem:[#allocation2 + $0x18] sm:$0xc]
    %v2337 = vld [vmem:[#allocation3 + $0x20] sm:$0x30]
    %v2338 = vld [vmem:[#allocation3 + $0x28] sm:$0x30]
    %v2339 = vld [vmem:[#allocation3 + $0x30] sm:$0x30]
    %v2340 = vld [vmem:[#allocation3 + $0x38] sm:$0x30]
    %v2345 = vrot.slane %v2333, 2
    %v2346 = vrot.slane %v2334, 2
    %v2347 = vrot.slane %v2335, 2
    %v2348 = vrot.slane %v2336, 2
    %v2357 = vrot.slane %v2337, 2
    %v2358 = vrot.slane %v2338, 2
    %v2359 = vrot.slane %v2339, 2
    %v2360 = vrot.slane %v2340, 2
    %v2365 = vsel %vm1610, %v2345, %v2357
    %v2366 = vsel %vm1610, %v2346, %v2358
    %v2367 = vsel %vm1610, %v2347, %v2359
    %v2368 = vsel %vm1610, %v2348, %v2360
    %v2369 = vsel %vm1053, %v2332, 0.0
    %v2370 = vsel %vm1054, %v2332, 0.0
    %v2371 = vpack.c.bf16 %v2369, %v2369
    %v2372 = vpack.c.bf16 %v2370, %v2370
    %2373 = vmatpush.bf16.msra.mxu0 %v1900
    %2374 = vmatpush.bf16.msra.mxu0 %v1896
    %2375 = vmatpush.bf16.msra.mxu0 %v1892
    %2376 = vmatpush.bf16.msra.mxu0 %v1888
    %2377 = vmatpush.bf16.msra.mxu0 %v1884
    %2378 = vmatpush.bf16.msra.mxu0 %v1880
    %2379 = vmatpush.bf16.msra.mxu0 %v1876
    %2380 = vmatpush.bf16.msra.mxu0 %v1872
    %2381 = vmatmul.bf16.gmra.mxu0 %v2371
    %v2382 = vpop.f32.mrf.mxu0
    %v2383 = vadd.f32 0.0, %v2382
    %v2384 = vpop.f32.mrf.mxu0
    %2385 = vdwg.mxu0
    %2386 = vmatpush.bf16.msra.mxu0 %v1932
    %2387 = vmatpush.bf16.msra.mxu0 %v1928
    %2388 = vmatpush.bf16.msra.mxu0 %v1924
    %2389 = vmatpush.bf16.msra.mxu0 %v1920
    %2390 = vmatpush.bf16.msra.mxu0 %v1916
    %2391 = vmatpush.bf16.msra.mxu0 %v1912
    %2392 = vmatpush.bf16.msra.mxu0 %v1908
    %2393 = vmatpush.bf16.msra.mxu0 %v1904
    %2394 = vmatmul.bf16.gmra.mxu0 %v2372
    %v2395 = vpop.f32.mrf.mxu0
    %v2396 = vadd.f32 %v2383, %v2395
    %v2397 = vpop.f32.mrf.mxu0
    %2398 = vdwg.mxu0
    %2399 = vmatpush.bf16.msra.mxu0 %v1901
    %2400 = vmatpush.bf16.msra.mxu0 %v1897
    %2401 = vmatpush.bf16.msra.mxu0 %v1893
    %2402 = vmatpush.bf16.msra.mxu0 %v1889
    %2403 = vmatpush.bf16.msra.mxu0 %v1885
    %2404 = vmatpush.bf16.msra.mxu0 %v1881
    %2405 = vmatpush.bf16.msra.mxu0 %v1877
    %2406 = vmatpush.bf16.msra.mxu0 %v1873
    %2407 = vmatmul.bf16.gmra.mxu0 %v2371
    %v2408 = vpop.f32.mrf.mxu0
    %v2409 = vadd.f32 0.0, %v2408
    %v2410 = vpop.f32.mrf.mxu0
    %2411 = vdwg.mxu0
    %2412 = vmatpush.bf16.msra.mxu0 %v1933
    %2413 = vmatpush.bf16.msra.mxu0 %v1929
    %2414 = vmatpush.bf16.msra.mxu0 %v1925
    %2415 = vmatpush.bf16.msra.mxu0 %v1921
    %2416 = vmatpush.bf16.msra.mxu0 %v1917
    %2417 = vmatpush.bf16.msra.mxu0 %v1913
    %2418 = vmatpush.bf16.msra.mxu0 %v1909
    %2419 = vmatpush.bf16.msra.mxu0 %v1905
    %2420 = vmatmul.bf16.gmra.mxu0 %v2372
    %v2421 = vpop.f32.mrf.mxu0
    %v2422 = vadd.f32 %v2409, %v2421
    %v2423 = vpop.f32.mrf.mxu0
    %2424 = vdwg.mxu0
    %2425 = vmatpush.bf16.msra.mxu0 %v1902
    %2426 = vmatpush.bf16.msra.mxu0 %v1898
    %2427 = vmatpush.bf16.msra.mxu0 %v1894
    %2428 = vmatpush.bf16.msra.mxu0 %v1890
    %2429 = vmatpush.bf16.msra.mxu0 %v1886
    %2430 = vmatpush.bf16.msra.mxu0 %v1882
    %2431 = vmatpush.bf16.msra.mxu0 %v1878
    %2432 = vmatpush.bf16.msra.mxu0 %v1874
    %2433 = vmatmul.bf16.gmra.mxu0 %v2371
    %v2434 = vpop.f32.mrf.mxu0
    %v2435 = vadd.f32 0.0, %v2434
    %v2436 = vpop.f32.mrf.mxu0
    %2437 = vdwg.mxu0
    %2438 = vmatpush.bf16.msra.mxu0 %v1934
    %2439 = vmatpush.bf16.msra.mxu0 %v1930
    %2440 = vmatpush.bf16.msra.mxu0 %v1926
    %2441 = vmatpush.bf16.msra.mxu0 %v1922
    %2442 = vmatpush.bf16.msra.mxu0 %v1918
    %2443 = vmatpush.bf16.msra.mxu0 %v1914
    %2444 = vmatpush.bf16.msra.mxu0 %v1910
    %2445 = vmatpush.bf16.msra.mxu0 %v1906
    %2446 = vmatmul.bf16.gmra.mxu0 %v2372
    %v2447 = vpop.f32.mrf.mxu0
    %v2448 = vadd.f32 %v2435, %v2447
    %v2449 = vpop.f32.mrf.mxu0
    %2450 = vdwg.mxu0
    %2451 = vmatpush.bf16.msra.mxu0 %v1903
    %2452 = vmatpush.bf16.msra.mxu0 %v1899
    %2453 = vmatpush.bf16.msra.mxu0 %v1895
    %2454 = vmatpush.bf16.msra.mxu0 %v1891
    %2455 = vmatpush.bf16.msra.mxu0 %v1887
    %2456 = vmatpush.bf16.msra.mxu0 %v1883
    %2457 = vmatpush.bf16.msra.mxu0 %v1879
    %2458 = vmatpush.bf16.msra.mxu0 %v1875
    %2459 = vmatmul.bf16.gmra.mxu0 %v2371
    %v2460 = vpop.f32.mrf.mxu0
    %v2461 = vadd.f32 0.0, %v2460
    %v2462 = vpop.f32.mrf.mxu0
    %2463 = vdwg.mxu0
    %2464 = vmatpush.bf16.msra.mxu0 %v1935
    %2465 = vmatpush.bf16.msra.mxu0 %v1931
    %2466 = vmatpush.bf16.msra.mxu0 %v1927
    %2467 = vmatpush.bf16.msra.mxu0 %v1923
    %2468 = vmatpush.bf16.msra.mxu0 %v1919
    %2469 = vmatpush.bf16.msra.mxu0 %v1915
    %2470 = vmatpush.bf16.msra.mxu0 %v1911
    %2471 = vmatpush.bf16.msra.mxu0 %v1907
    %2472 = vmatmul.bf16.gmra.mxu0 %v2372
    %v2473 = vpop.f32.mrf.mxu0
    %v2474 = vadd.f32 %v2461, %v2473
    %v2475 = vpop.f32.mrf.mxu0
    %2476 = vdwg.mxu0
    %v2477 = vadd.f32 %v2365, %v2396
    %v2478 = vadd.f32 %v2366, %v2422
    %v2479 = vadd.f32 %v2367, %v2448
    %v2480 = vadd.f32 %v2368, %v2474
    %v2481 = vxor.u32 %v2477, 2147483648
    %v2482 = vmul.f32 %v2481, 1.442695
    %v2483 = vpow.pop %v2482
    %v2484 = vadd.f32 %v2483, 1.0
    %v2485 = vrcp.pop %v2484
    %v2486 = vmul.f32 %v2484, %v2485
    %v2487 = vsub.f32 1.0, %v2486
    %v2488 = vmul.f32 %v2485, %v2487
    %v2489 = vadd.f32 %v2485, %v2488
    %vm2490 = vweird.f32 %v2484
    %vm2491 = vweird.f32 %v2485
    %vm2492 = vmor %vm2490, %vm2491
    %v2493 = vsel %vm2492, %v2485, %v2489
    %v2494 = vand.u32 2147483647, %v2484
    %vm2495 = vcmp.eq.f32.partialorder %v2494, 8.507059e+37
    %v2496 = vand.u32 %v2484, 2147483648
    %v2497 = vor.u32 1.1754944e-38, %v2496
    %v2498 = vsel %vm2495, %v2497, %v2493
    %v2499 = vmul.f32 1.0, %v2498
    %v2500 = vxor.u32 %v2478, 2147483648
    %v2501 = vmul.f32 %v2500, 1.442695
    %v2502 = vpow.pop %v2501
    %v2503 = vadd.f32 %v2502, 1.0
    %v2504 = vrcp.pop %v2503
    %v2505 = vmul.f32 %v2503, %v2504
    %v2506 = vsub.f32 1.0, %v2505
    %v2507 = vmul.f32 %v2504, %v2506
    %v2508 = vadd.f32 %v2504, %v2507
    %vm2509 = vweird.f32 %v2503
    %vm2510 = vweird.f32 %v2504
    %vm2511 = vmor %vm2509, %vm2510
    %v2512 = vsel %vm2511, %v2504, %v2508
    %v2513 = vand.u32 2147483647, %v2503
    %vm2514 = vcmp.eq.f32.partialorder %v2513, 8.507059e+37
    %v2515 = vand.u32 %v2503, 2147483648
    %v2516 = vor.u32 1.1754944e-38, %v2515
    %v2517 = vsel %vm2514, %v2516, %v2512
    %v2518 = vmul.f32 1.0, %v2517
    %v2519 = vtanh.pop %v2479
    %v2520 = vxor.u32 %v2480, 2147483648
    %v2521 = vmul.f32 %v2520, 1.442695
    %v2522 = vpow.pop %v2521
    %v2523 = vadd.f32 %v2522, 1.0
    %v2524 = vrcp.pop %v2523
    %v2525 = vmul.f32 %v2523, %v2524
    %v2526 = vsub.f32 1.0, %v2525
    %v2527 = vmul.f32 %v2524, %v2526
    %v2528 = vadd.f32 %v2524, %v2527
    %vm2529 = vweird.f32 %v2523
    %vm2530 = vweird.f32 %v2524
    %vm2531 = vmor %vm2529, %vm2530
    %v2532 = vsel %vm2531, %v2524, %v2528
    %v2533 = vand.u32 2147483647, %v2523
    %vm2534 = vcmp.eq.f32.partialorder %v2533, 8.507059e+37
    %v2535 = vand.u32 %v2523, 2147483648
    %v2536 = vor.u32 1.1754944e-38, %v2535
    %v2537 = vsel %vm2534, %v2536, %v2532
    %v2538 = vmul.f32 1.0, %v2537
    %v2539 = vmul.f32 %v2518, %v2170
    %v2540 = vmul.f32 %v2499, %v2519
    %v2541 = vadd.f32 %v2539, %v2540
    %v2542 = vmax.f32 %v2541, -3.0
    %v2543 = vmin.f32 %v2542, 3.0
    %v2544 = vtanh.pop %v2543
    %v2545 = vmul.f32 %v2538, %v2544
    %v2546 = vsel %vm1053, %v2545, 0.0
    %v2547 = vsel %vm1054, %v2545, 0.0
    %v2548 = vpack.c.bf16 %v2546, %v2546
    %v2549 = vpack.c.bf16 %v2547, %v2547
    %2550 = vmatpush.bf16.msra.mxu0 %v2280
    %2551 = vmatpush.bf16.msra.mxu0 %v2279
    %2552 = vmatpush.bf16.msra.mxu0 %v2278
    %2553 = vmatpush.bf16.msra.mxu0 %v2277
    %2554 = vmatpush.bf16.msra.mxu0 %v2276
    %2555 = vmatpush.bf16.msra.mxu0 %v2275
    %2556 = vmatpush.bf16.msra.mxu0 %v2274
    %2557 = vmatpush.bf16.msra.mxu0 %v2273
    %2558 = vmatmul.bf16.gmra.mxu0 %v2548
    %v2559 = vpop.f32.mrf.mxu0
    %v2560 = vadd.f32 0.0, %v2559
    %v2561 = vpop.f32.mrf.mxu0
    %2562 = vdwg.mxu0
    %2563 = vmatpush.bf16.msra.mxu0 %v2288
    %2564 = vmatpush.bf16.msra.mxu0 %v2287
    %2565 = vmatpush.bf16.msra.mxu0 %v2286
    %2566 = vmatpush.bf16.msra.mxu0 %v2285
    %2567 = vmatpush.bf16.msra.mxu0 %v2284
    %2568 = vmatpush.bf16.msra.mxu0 %v2283
    %2569 = vmatpush.bf16.msra.mxu0 %v2282
    %2570 = vmatpush.bf16.msra.mxu0 %v2281
    %2571 = vmatmul.bf16.gmra.mxu0 %v2549
    %v2572 = vpop.f32.mrf.mxu0
    %v2573 = vadd.f32 %v2560, %v2572
    %v2574 = vpop.f32.mrf.mxu0
    %2575 = vdwg.mxu0
    %v2576 = vmax.f32 %v2573, -3.0
    %v2577 = vmin.f32 %v2576, 3.0
    %v2578 = vld [vmem:[#allocation2] sm:$0x30]
    %v2579 = vld [vmem:[#allocation2 + $0x8] sm:$0x30]
    %v2580 = vld [vmem:[#allocation2 + $0x10] sm:$0x30]
    %v2581 = vld [vmem:[#allocation2 + $0x18] sm:$0x30]
    %v2582 = vld [vmem:[#allocation3 + $0x20] sm:$0xc]
    %v2583 = vld [vmem:[#allocation3 + $0x28] sm:$0xc]
    %v2584 = vld [vmem:[#allocation3 + $0x30] sm:$0xc]
    %v2585 = vld [vmem:[#allocation3 + $0x38] sm:$0xc]
    %v2590 = vrot.slane %v2578, 4
    %v2591 = vrot.slane %v2579, 4
    %v2592 = vrot.slane %v2580, 4
    %v2593 = vrot.slane %v2581, 4
    %v2598 = vsel %vm1610, %v2590, %v2582
    %v2599 = vsel %vm1610, %v2591, %v2583
    %v2600 = vsel %vm1610, %v2592, %v2584
    %v2601 = vsel %vm1610, %v2593, %v2585
    %v2602 = vsel %vm1053, %v2577, 0.0
    %v2603 = vsel %vm1054, %v2577, 0.0
    %v2604 = vpack.c.bf16 %v2602, %v2602
    %v2605 = vpack.c.bf16 %v2603, %v2603
    %2606 = vmatpush.bf16.msra.mxu0 %v1900
    %2607 = vmatpush.bf16.msra.mxu0 %v1896
    %2608 = vmatpush.bf16.msra.mxu0 %v1892
    %2609 = vmatpush.bf16.msra.mxu0 %v1888
    %2610 = vmatpush.bf16.msra.mxu0 %v1884
    %2611 = vmatpush.bf16.msra.mxu0 %v1880
    %2612 = vmatpush.bf16.msra.mxu0 %v1876
    %2613 = vmatpush.bf16.msra.mxu0 %v1872
    %2614 = vmatmul.bf16.gmra.mxu0 %v2604
    %v2615 = vpop.f32.mrf.mxu0
    %v2616 = vadd.f32 0.0, %v2615
    %v2617 = vpop.f32.mrf.mxu0
    %2618 = vdwg.mxu0
    %2619 = vmatpush.bf16.msra.mxu0 %v1932
    %2620 = vmatpush.bf16.msra.mxu0 %v1928
    %2621 = vmatpush.bf16.msra.mxu0 %v1924
    %2622 = vmatpush.bf16.msra.mxu0 %v1920
    %2623 = vmatpush.bf16.msra.mxu0 %v1916
    %2624 = vmatpush.bf16.msra.mxu0 %v1912
    %2625 = vmatpush.bf16.msra.mxu0 %v1908
    %2626 = vmatpush.bf16.msra.mxu0 %v1904
    %2627 = vmatmul.bf16.gmra.mxu0 %v2605
    %v2628 = vpop.f32.mrf.mxu0
    %v2629 = vadd.f32 %v2616, %v2628
    %v2630 = vpop.f32.mrf.mxu0
    %2631 = vdwg.mxu0
    %2632 = vmatpush.bf16.msra.mxu0 %v1901
    %2633 = vmatpush.bf16.msra.mxu0 %v1897
    %2634 = vmatpush.bf16.msra.mxu0 %v1893
    %2635 = vmatpush.bf16.msra.mxu0 %v1889
    %2636 = vmatpush.bf16.msra.mxu0 %v1885
    %2637 = vmatpush.bf16.msra.mxu0 %v1881
    %2638 = vmatpush.bf16.msra.mxu0 %v1877
    %2639 = vmatpush.bf16.msra.mxu0 %v1873
    %2640 = vmatmul.bf16.gmra.mxu0 %v2604
    %v2641 = vpop.f32.mrf.mxu0
    %v2642 = vadd.f32 0.0, %v2641
    %v2643 = vpop.f32.mrf.mxu0
    %2644 = vdwg.mxu0
    %2645 = vmatpush.bf16.msra.mxu0 %v1933
    %2646 = vmatpush.bf16.msra.mxu0 %v1929
    %2647 = vmatpush.bf16.msra.mxu0 %v1925
    %2648 = vmatpush.bf16.msra.mxu0 %v1921
    %2649 = vmatpush.bf16.msra.mxu0 %v1917
    %2650 = vmatpush.bf16.msra.mxu0 %v1913
    %2651 = vmatpush.bf16.msra.mxu0 %v1909
    %2652 = vmatpush.bf16.msra.mxu0 %v1905
    %2653 = vmatmul.bf16.gmra.mxu0 %v2605
    %v2654 = vpop.f32.mrf.mxu0
    %v2655 = vadd.f32 %v2642, %v2654
    %v2656 = vpop.f32.mrf.mxu0
    %2657 = vdwg.mxu0
    %2658 = vmatpush.bf16.msra.mxu0 %v1902
    %2659 = vmatpush.bf16.msra.mxu0 %v1898
    %2660 = vmatpush.bf16.msra.mxu0 %v1894
    %2661 = vmatpush.bf16.msra.mxu0 %v1890
    %2662 = vmatpush.bf16.msra.mxu0 %v1886
    %2663 = vmatpush.bf16.msra.mxu0 %v1882
    %2664 = vmatpush.bf16.msra.mxu0 %v1878
    %2665 = vmatpush.bf16.msra.mxu0 %v1874
    %2666 = vmatmul.bf16.gmra.mxu0 %v2604
    %v2667 = vpop.f32.mrf.mxu0
    %v2668 = vadd.f32 0.0, %v2667
    %v2669 = vpop.f32.mrf.mxu0
    %2670 = vdwg.mxu0
    %2671 = vmatpush.bf16.msra.mxu0 %v1934
    %2672 = vmatpush.bf16.msra.mxu0 %v1930
    %2673 = vmatpush.bf16.msra.mxu0 %v1926
    %2674 = vmatpush.bf16.msra.mxu0 %v1922
    %2675 = vmatpush.bf16.msra.mxu0 %v1918
    %2676 = vmatpush.bf16.msra.mxu0 %v1914
    %2677 = vmatpush.bf16.msra.mxu0 %v1910
    %2678 = vmatpush.bf16.msra.mxu0 %v1906
    %2679 = vmatmul.bf16.gmra.mxu0 %v2605
    %v2680 = vpop.f32.mrf.mxu0
    %v2681 = vadd.f32 %v2668, %v2680
    %v2682 = vpop.f32.mrf.mxu0
    %2683 = vdwg.mxu0
    %2684 = vmatpush.bf16.msra.mxu0 %v1903
    %2685 = vmatpush.bf16.msra.mxu0 %v1899
    %2686 = vmatpush.bf16.msra.mxu0 %v1895
    %2687 = vmatpush.bf16.msra.mxu0 %v1891
    %2688 = vmatpush.bf16.msra.mxu0 %v1887
    %2689 = vmatpush.bf16.msra.mxu0 %v1883
    %2690 = vmatpush.bf16.msra.mxu0 %v1879
    %2691 = vmatpush.bf16.msra.mxu0 %v1875
    %2692 = vmatmul.bf16.gmra.mxu0 %v2604
    %v2693 = vpop.f32.mrf.mxu0
    %v2694 = vadd.f32 0.0, %v2693
    %v2695 = vpop.f32.mrf.mxu0
    %2696 = vdwg.mxu0
    %2697 = vmatpush.bf16.msra.mxu0 %v1935
    %2698 = vmatpush.bf16.msra.mxu0 %v1931
    %2699 = vmatpush.bf16.msra.mxu0 %v1927
    %2700 = vmatpush.bf16.msra.mxu0 %v1923
    %2701 = vmatpush.bf16.msra.mxu0 %v1919
    %2702 = vmatpush.bf16.msra.mxu0 %v1915
    %2703 = vmatpush.bf16.msra.mxu0 %v1911
    %2704 = vmatpush.bf16.msra.mxu0 %v1907
    %2705 = vmatmul.bf16.gmra.mxu0 %v2605
    %v2706 = vpop.f32.mrf.mxu0
    %v2707 = vadd.f32 %v2694, %v2706
    %v2708 = vpop.f32.mrf.mxu0
    %2709 = vdwg.mxu0
    %v2710 = vadd.f32 %v2598, %v2629
    %v2711 = vadd.f32 %v2599, %v2655
    %v2712 = vadd.f32 %v2600, %v2681
    %v2713 = vadd.f32 %v2601, %v2707
    %v2714 = vxor.u32 %v2710, 2147483648
    %v2715 = vmul.f32 %v2714, 1.442695
    %v2716 = vpow.pop %v2715
    %v2717 = vadd.f32 %v2716, 1.0
    %v2718 = vrcp.pop %v2717
    %v2719 = vmul.f32 %v2717, %v2718
    %v2720 = vsub.f32 1.0, %v2719
    %v2721 = vmul.f32 %v2718, %v2720
    %v2722 = vadd.f32 %v2718, %v2721
    %vm2723 = vweird.f32 %v2717
    %vm2724 = vweird.f32 %v2718
    %vm2725 = vmor %vm2723, %vm2724
    %v2726 = vsel %vm2725, %v2718, %v2722
    %v2727 = vand.u32 2147483647, %v2717
    %vm2728 = vcmp.eq.f32.partialorder %v2727, 8.507059e+37
    %v2729 = vand.u32 %v2717, 2147483648
    %v2730 = vor.u32 1.1754944e-38, %v2729
    %v2731 = vsel %vm2728, %v2730, %v2726
    %v2732 = vmul.f32 1.0, %v2731
    %v2733 = vxor.u32 %v2711, 2147483648
    %v2734 = vmul.f32 %v2733, 1.442695
    %v2735 = vpow.pop %v2734
    %v2736 = vadd.f32 %v2735, 1.0
    %v2737 = vrcp.pop %v2736
    %v2738 = vmul.f32 %v2736, %v2737
    %v2739 = vsub.f32 1.0, %v2738
    %v2740 = vmul.f32 %v2737, %v2739
    %v2741 = vadd.f32 %v2737, %v2740
    %vm2742 = vweird.f32 %v2736
    %vm2743 = vweird.f32 %v2737
    %vm2744 = vmor %vm2742, %vm2743
    %v2745 = vsel %vm2744, %v2737, %v2741
    %v2746 = vand.u32 2147483647, %v2736
    %vm2747 = vcmp.eq.f32.partialorder %v2746, 8.507059e+37
    %v2748 = vand.u32 %v2736, 2147483648
    %v2749 = vor.u32 1.1754944e-38, %v2748
    %v2750 = vsel %vm2747, %v2749, %v2745
    %v2751 = vmul.f32 1.0, %v2750
    %v2752 = vtanh.pop %v2712
    %v2753 = vxor.u32 %v2713, 2147483648
    %v2754 = vmul.f32 %v2753, 1.442695
    %v2755 = vpow.pop %v2754
    %v2756 = vadd.f32 %v2755, 1.0
    %v2757 = vrcp.pop %v2756
    %v2758 = vmul.f32 %v2756, %v2757
    %v2759 = vsub.f32 1.0, %v2758
    %v2760 = vmul.f32 %v2757, %v2759
    %v2761 = vadd.f32 %v2757, %v2760
    %vm2762 = vweird.f32 %v2756
    %vm2763 = vweird.f32 %v2757
    %vm2764 = vmor %vm2762, %vm2763
    %v2765 = vsel %vm2764, %v2757, %v2761
    %v2766 = vand.u32 2147483647, %v2756
    %vm2767 = vcmp.eq.f32.partialorder %v2766, 8.507059e+37
    %v2768 = vand.u32 %v2756, 2147483648
    %v2769 = vor.u32 1.1754944e-38, %v2768
    %v2770 = vsel %vm2767, %v2769, %v2765
    %v2771 = vmul.f32 1.0, %v2770
    %v2772 = vmul.f32 %v2751, %v2543
    %v2773 = vmul.f32 %v2732, %v2752
    %v2774 = vadd.f32 %v2772, %v2773
    %v2775 = vmax.f32 %v2774, -3.0
    %v2776 = vmin.f32 %v2775, 3.0
    %v2777 = vtanh.pop %v2776
    %v2778 = vmul.f32 %v2771, %v2777
    %v2779 = vsel %vm1053, %v2778, 0.0
    %v2780 = vsel %vm1054, %v2778, 0.0
    %v2781 = vpack.c.bf16 %v2779, %v2779
    %v2782 = vpack.c.bf16 %v2780, %v2780
    %2783 = vmatpush.bf16.msra.mxu0 %v2280
    %2784 = vmatpush.bf16.msra.mxu0 %v2279
    %2785 = vmatpush.bf16.msra.mxu0 %v2278
    %2786 = vmatpush.bf16.msra.mxu0 %v2277
    %2787 = vmatpush.bf16.msra.mxu0 %v2276
    %2788 = vmatpush.bf16.msra.mxu0 %v2275
    %2789 = vmatpush.bf16.msra.mxu0 %v2274
    %2790 = vmatpush.bf16.msra.mxu0 %v2273
    %2791 = vmatmul.bf16.gmra.mxu0 %v2781
    %v2792 = vpop.f32.mrf.mxu0
    %v2793 = vadd.f32 0.0, %v2792
    %v2794 = vpop.f32.mrf.mxu0
    %2795 = vdwg.mxu0
    %2796 = vmatpush.bf16.msra.mxu0 %v2288
    %2797 = vmatpush.bf16.msra.mxu0 %v2287
    %2798 = vmatpush.bf16.msra.mxu0 %v2286
    %2799 = vmatpush.bf16.msra.mxu0 %v2285
    %2800 = vmatpush.bf16.msra.mxu0 %v2284
    %2801 = vmatpush.bf16.msra.mxu0 %v2283
    %2802 = vmatpush.bf16.msra.mxu0 %v2282
    %2803 = vmatpush.bf16.msra.mxu0 %v2281
    %2804 = vmatmul.bf16.gmra.mxu0 %v2782
    %v2805 = vpop.f32.mrf.mxu0
    %v2806 = vadd.f32 %v2793, %v2805
    %v2807 = vpop.f32.mrf.mxu0
    %2808 = vdwg.mxu0
    %v2809 = vmax.f32 %v2806, -3.0
    %v2810 = vmin.f32 %v2809, 3.0
    %v2811 = vld [vmem:[#allocation2] sm:$0xc0]
    %v2812 = vld [vmem:[#allocation2 + $0x8] sm:$0xc0]
    %v2813 = vld [vmem:[#allocation2 + $0x10] sm:$0xc0]
    %v2814 = vld [vmem:[#allocation2 + $0x18] sm:$0xc0]
    %v2815 = vld [vmem:[#allocation3 + $0x20] sm:$0x3]
    %v2816 = vld [vmem:[#allocation3 + $0x28] sm:$0x3]
    %v2817 = vld [vmem:[#allocation3 + $0x30] sm:$0x3]
    %v2818 = vld [vmem:[#allocation3 + $0x38] sm:$0x3]
    %v2823 = vrot.slane %v2811, 6
    %v2824 = vrot.slane %v2812, 6
    %v2825 = vrot.slane %v2813, 6
    %v2826 = vrot.slane %v2814, 6
    %v2835 = vrot.slane %v2815, 6
    %v2836 = vrot.slane %v2816, 6
    %v2837 = vrot.slane %v2817, 6
    %v2838 = vrot.slane %v2818, 6
    %v2843 = vsel %vm1610, %v2823, %v2835
    %v2844 = vsel %vm1610, %v2824, %v2836
    %v2845 = vsel %vm1610, %v2825, %v2837
    %v2846 = vsel %vm1610, %v2826, %v2838
    %v2847 = vsel %vm1053, %v2810, 0.0
    %v2848 = vsel %vm1054, %v2810, 0.0
    %v2849 = vpack.c.bf16 %v2847, %v2847
    %v2850 = vpack.c.bf16 %v2848, %v2848
    %2851 = vmatpush.bf16.msra.mxu0 %v1900
    %2852 = vmatpush.bf16.msra.mxu0 %v1896
    %2853 = vmatpush.bf16.msra.mxu0 %v1892
    %2854 = vmatpush.bf16.msra.mxu0 %v1888
    %2855 = vmatpush.bf16.msra.mxu0 %v1884
    %2856 = vmatpush.bf16.msra.mxu0 %v1880
    %2857 = vmatpush.bf16.msra.mxu0 %v1876
    %2858 = vmatpush.bf16.msra.mxu0 %v1872
    %2859 = vmatmul.bf16.gmra.mxu0 %v2849
    %v2860 = vpop.f32.mrf.mxu0
    %v2861 = vadd.f32 0.0, %v2860
    %v2862 = vpop.f32.mrf.mxu0
    %2863 = vdwg.mxu0
    %2864 = vmatpush.bf16.msra.mxu0 %v1932
    %2865 = vmatpush.bf16.msra.mxu0 %v1928
    %2866 = vmatpush.bf16.msra.mxu0 %v1924
    %2867 = vmatpush.bf16.msra.mxu0 %v1920
    %2868 = vmatpush.bf16.msra.mxu0 %v1916
    %2869 = vmatpush.bf16.msra.mxu0 %v1912
    %2870 = vmatpush.bf16.msra.mxu0 %v1908
    %2871 = vmatpush.bf16.msra.mxu0 %v1904
    %2872 = vmatmul.bf16.gmra.mxu0 %v2850
    %v2873 = vpop.f32.mrf.mxu0
    %v2874 = vadd.f32 %v2861, %v2873
    %v2875 = vpop.f32.mrf.mxu0
    %2876 = vdwg.mxu0
    %2877 = vmatpush.bf16.msra.mxu0 %v1901
    %2878 = vmatpush.bf16.msra.mxu0 %v1897
    %2879 = vmatpush.bf16.msra.mxu0 %v1893
    %2880 = vmatpush.bf16.msra.mxu0 %v1889
    %2881 = vmatpush.bf16.msra.mxu0 %v1885
    %2882 = vmatpush.bf16.msra.mxu0 %v1881
    %2883 = vmatpush.bf16.msra.mxu0 %v1877
    %2884 = vmatpush.bf16.msra.mxu0 %v1873
    %2885 = vmatmul.bf16.gmra.mxu0 %v2849
    %v2886 = vpop.f32.mrf.mxu0
    %v2887 = vadd.f32 0.0, %v2886
    %v2888 = vpop.f32.mrf.mxu0
    %2889 = vdwg.mxu0
    %2890 = vmatpush.bf16.msra.mxu0 %v1933
    %2891 = vmatpush.bf16.msra.mxu0 %v1929
    %2892 = vmatpush.bf16.msra.mxu0 %v1925
    %2893 = vmatpush.bf16.msra.mxu0 %v1921
    %2894 = vmatpush.bf16.msra.mxu0 %v1917
    %2895 = vmatpush.bf16.msra.mxu0 %v1913
    %2896 = vmatpush.bf16.msra.mxu0 %v1909
    %2897 = vmatpush.bf16.msra.mxu0 %v1905
    %2898 = vmatmul.bf16.gmra.mxu0 %v2850
    %v2899 = vpop.f32.mrf.mxu0
    %v2900 = vadd.f32 %v2887, %v2899
    %v2901 = vpop.f32.mrf.mxu0
    %2902 = vdwg.mxu0
    %2903 = vmatpush.bf16.msra.mxu0 %v1902
    %2904 = vmatpush.bf16.msra.mxu0 %v1898
    %2905 = vmatpush.bf16.msra.mxu0 %v1894
    %2906 = vmatpush.bf16.msra.mxu0 %v1890
    %2907 = vmatpush.bf16.msra.mxu0 %v1886
    %2908 = vmatpush.bf16.msra.mxu0 %v1882
    %2909 = vmatpush.bf16.msra.mxu0 %v1878
    %2910 = vmatpush.bf16.msra.mxu0 %v1874
    %2911 = vmatmul.bf16.gmra.mxu0 %v2849
    %v2912 = vpop.f32.mrf.mxu0
    %v2913 = vadd.f32 0.0, %v2912
    %v2914 = vpop.f32.mrf.mxu0
    %2915 = vdwg.mxu0
    %2916 = vmatpush.bf16.msra.mxu0 %v1934
    %2917 = vmatpush.bf16.msra.mxu0 %v1930
    %2918 = vmatpush.bf16.msra.mxu0 %v1926
    %2919 = vmatpush.bf16.msra.mxu0 %v1922
    %2920 = vmatpush.bf16.msra.mxu0 %v1918
    %2921 = vmatpush.bf16.msra.mxu0 %v1914
    %2922 = vmatpush.bf16.msra.mxu0 %v1910
    %2923 = vmatpush.bf16.msra.mxu0 %v1906
    %2924 = vmatmul.bf16.gmra.mxu0 %v2850
    %v2925 = vpop.f32.mrf.mxu0
    %v2926 = vadd.f32 %v2913, %v2925
    %v2927 = vpop.f32.mrf.mxu0
    %2928 = vdwg.mxu0
    %2929 = vmatpush.bf16.msra.mxu0 %v1903
    %2930 = vmatpush.bf16.msra.mxu0 %v1899
    %2931 = vmatpush.bf16.msra.mxu0 %v1895
    %2932 = vmatpush.bf16.msra.mxu0 %v1891
    %2933 = vmatpush.bf16.msra.mxu0 %v1887
    %2934 = vmatpush.bf16.msra.mxu0 %v1883
    %2935 = vmatpush.bf16.msra.mxu0 %v1879
    %2936 = vmatpush.bf16.msra.mxu0 %v1875
    %2937 = vmatmul.bf16.gmra.mxu0 %v2849
    %v2938 = vpop.f32.mrf.mxu0
    %v2939 = vadd.f32 0.0, %v2938
    %v2940 = vpop.f32.mrf.mxu0
    %2941 = vdwg.mxu0
    %2942 = vmatpush.bf16.msra.mxu0 %v1935
    %2943 = vmatpush.bf16.msra.mxu0 %v1931
    %2944 = vmatpush.bf16.msra.mxu0 %v1927
    %2945 = vmatpush.bf16.msra.mxu0 %v1923
    %2946 = vmatpush.bf16.msra.mxu0 %v1919
    %2947 = vmatpush.bf16.msra.mxu0 %v1915
    %2948 = vmatpush.bf16.msra.mxu0 %v1911
    %2949 = vmatpush.bf16.msra.mxu0 %v1907
    %2950 = vmatmul.bf16.gmra.mxu0 %v2850
    %v2951 = vpop.f32.mrf.mxu0
    %v2952 = vadd.f32 %v2939, %v2951
    %v2953 = vpop.f32.mrf.mxu0
    %2954 = vdwg.mxu0
    %v2955 = vadd.f32 %v2843, %v2874
    %v2956 = vadd.f32 %v2844, %v2900
    %v2957 = vadd.f32 %v2845, %v2926
    %v2958 = vadd.f32 %v2846, %v2952
    %v2959 = vxor.u32 %v2955, 2147483648
    %v2960 = vmul.f32 %v2959, 1.442695
    %v2961 = vpow.pop %v2960
    %v2962 = vadd.f32 %v2961, 1.0
    %v2963 = vrcp.pop %v2962
    %v2964 = vmul.f32 %v2962, %v2963
    %v2965 = vsub.f32 1.0, %v2964
    %v2966 = vmul.f32 %v2963, %v2965
    %v2967 = vadd.f32 %v2963, %v2966
    %vm2968 = vweird.f32 %v2962
    %vm2969 = vweird.f32 %v2963
    %vm2970 = vmor %vm2968, %vm2969
    %v2971 = vsel %vm2970, %v2963, %v2967
    %v2972 = vand.u32 2147483647, %v2962
    %vm2973 = vcmp.eq.f32.partialorder %v2972, 8.507059e+37
    %v2974 = vand.u32 %v2962, 2147483648
    %v2975 = vor.u32 1.1754944e-38, %v2974
    %v2976 = vsel %vm2973, %v2975, %v2971
    %v2977 = vmul.f32 1.0, %v2976
    %v2978 = vxor.u32 %v2956, 2147483648
    %v2979 = vmul.f32 %v2978, 1.442695
    %v2980 = vpow.pop %v2979
    %v2981 = vadd.f32 %v2980, 1.0
    %v2982 = vrcp.pop %v2981
    %v2983 = vmul.f32 %v2981, %v2982
    %v2984 = vsub.f32 1.0, %v2983
    %v2985 = vmul.f32 %v2982, %v2984
    %v2986 = vadd.f32 %v2982, %v2985
    %vm2987 = vweird.f32 %v2981
    %vm2988 = vweird.f32 %v2982
    %vm2989 = vmor %vm2987, %vm2988
    %v2990 = vsel %vm2989, %v2982, %v2986
    %v2991 = vand.u32 2147483647, %v2981
    %vm2992 = vcmp.eq.f32.partialorder %v2991, 8.507059e+37
    %v2993 = vand.u32 %v2981, 2147483648
    %v2994 = vor.u32 1.1754944e-38, %v2993
    %v2995 = vsel %vm2992, %v2994, %v2990
    %v2996 = vmul.f32 1.0, %v2995
    %v2997 = vtanh.pop %v2957
    %v2998 = vxor.u32 %v2958, 2147483648
    %v2999 = vmul.f32 %v2998, 1.442695
    %v3000 = vpow.pop %v2999
    %v3001 = vadd.f32 %v3000, 1.0
    %v3002 = vrcp.pop %v3001
    %v3003 = vmul.f32 %v3001, %v3002
    %v3004 = vsub.f32 1.0, %v3003
    %v3005 = vmul.f32 %v3002, %v3004
    %v3006 = vadd.f32 %v3002, %v3005
    %vm3007 = vweird.f32 %v3001
    %vm3008 = vweird.f32 %v3002
    %vm3009 = vmor %vm3007, %vm3008
    %v3010 = vsel %vm3009, %v3002, %v3006
    %v3011 = vand.u32 2147483647, %v3001
    %vm3012 = vcmp.eq.f32.partialorder %v3011, 8.507059e+37
    %v3013 = vand.u32 %v3001, 2147483648
    %v3014 = vor.u32 1.1754944e-38, %v3013
    %v3015 = vsel %vm3012, %v3014, %v3010
    %v3016 = vmul.f32 1.0, %v3015
    %v3017 = vmul.f32 %v2996, %v2776
    %v3018 = vmul.f32 %v2977, %v2997
    %v3019 = vadd.f32 %v3017, %v3018
    %v3020 = vmax.f32 %v3019, -3.0
    %v3021 = vmin.f32 %v3020, 3.0
    %v3022 = vtanh.pop %v3021
    %v3023 = vmul.f32 %v3016, %v3022
    %v3024 = vsel %vm1053, %v3023, 0.0
    %v3025 = vsel %vm1054, %v3023, 0.0
    %v3026 = vpack.c.bf16 %v3024, %v3024
    %v3027 = vpack.c.bf16 %v3025, %v3025
    %3028 = vmatpush.bf16.msra.mxu0 %v2280
    %3029 = vmatpush.bf16.msra.mxu0 %v2279
    %3030 = vmatpush.bf16.msra.mxu0 %v2278
    %3031 = vmatpush.bf16.msra.mxu0 %v2277
    %3032 = vmatpush.bf16.msra.mxu0 %v2276
    %3033 = vmatpush.bf16.msra.mxu0 %v2275
    %3034 = vmatpush.bf16.msra.mxu0 %v2274
    %3035 = vmatpush.bf16.msra.mxu0 %v2273
    %3036 = vmatmul.bf16.gmra.mxu0 %v3026
    %v3037 = vpop.f32.mrf.mxu0
    %v3038 = vadd.f32 0.0, %v3037
    %v3039 = vpop.f32.mrf.mxu0
    %3040 = vdwg.mxu0
    %3041 = vmatpush.bf16.msra.mxu0 %v2288
    %3042 = vmatpush.bf16.msra.mxu0 %v2287
    %3043 = vmatpush.bf16.msra.mxu0 %v2286
    %3044 = vmatpush.bf16.msra.mxu0 %v2285
    %3045 = vmatpush.bf16.msra.mxu0 %v2284
    %3046 = vmatpush.bf16.msra.mxu0 %v2283
    %3047 = vmatpush.bf16.msra.mxu0 %v2282
    %3048 = vmatpush.bf16.msra.mxu0 %v2281
    %3049 = vmatmul.bf16.gmra.mxu0 %v3027
    %v3050 = vpop.f32.mrf.mxu0
    %v3051 = vadd.f32 %v3038, %v3050
    %v3052 = vpop.f32.mrf.mxu0
    %3053 = vdwg.mxu0
    %v3054 = vmax.f32 %v3051, -3.0
    %v3055 = vmin.f32 %v3054, 3.0
    %v3056 = vld [vmem:[#allocation2 + $0x20] sm:$0x3]
    %v3057 = vld [vmem:[#allocation2 + $0x28] sm:$0x3]
    %v3058 = vld [vmem:[#allocation2 + $0x30] sm:$0x3]
    %v3059 = vld [vmem:[#allocation2 + $0x38] sm:$0x3]
    %v3060 = vld [vmem:[#allocation3] sm:$0xc0]
    %v3061 = vld [vmem:[#allocation3 + $0x8] sm:$0xc0]
    %v3062 = vld [vmem:[#allocation3 + $0x10] sm:$0xc0]
    %v3063 = vld [vmem:[#allocation3 + $0x18] sm:$0xc0]
    %v3068 = vrot.slane %v3060, 4
    %v3069 = vrot.slane %v3061, 4
    %v3070 = vrot.slane %v3062, 4
    %v3071 = vrot.slane %v3063, 4
    %v3076 = vsel %vm1610, %v3056, %v3068
    %v3077 = vsel %vm1610, %v3057, %v3069
    %v3078 = vsel %vm1610, %v3058, %v3070
    %v3079 = vsel %vm1610, %v3059, %v3071
    %v3080 = vsel %vm1053, %v3055, 0.0
    %v3081 = vsel %vm1054, %v3055, 0.0
    %v3082 = vpack.c.bf16 %v3080, %v3080
    %v3083 = vpack.c.bf16 %v3081, %v3081
    %3084 = vmatpush.bf16.msra.mxu0 %v1900
    %3085 = vmatpush.bf16.msra.mxu0 %v1896
    %3086 = vmatpush.bf16.msra.mxu0 %v1892
    %3087 = vmatpush.bf16.msra.mxu0 %v1888
    %3088 = vmatpush.bf16.msra.mxu0 %v1884
    %3089 = vmatpush.bf16.msra.mxu0 %v1880
    %3090 = vmatpush.bf16.msra.mxu0 %v1876
    %3091 = vmatpush.bf16.msra.mxu0 %v1872
    %3092 = vmatmul.bf16.gmra.mxu0 %v3082
    %v3093 = vpop.f32.mrf.mxu0
    %v3094 = vadd.f32 0.0, %v3093
    %v3095 = vpop.f32.mrf.mxu0
    %3096 = vdwg.mxu0
    %3097 = vmatpush.bf16.msra.mxu0 %v1932
    %3098 = vmatpush.bf16.msra.mxu0 %v1928
    %3099 = vmatpush.bf16.msra.mxu0 %v1924
    %3100 = vmatpush.bf16.msra.mxu0 %v1920
    %3101 = vmatpush.bf16.msra.mxu0 %v1916
    %3102 = vmatpush.bf16.msra.mxu0 %v1912
    %3103 = vmatpush.bf16.msra.mxu0 %v1908
    %3104 = vmatpush.bf16.msra.mxu0 %v1904
    %3105 = vmatmul.bf16.gmra.mxu0 %v3083
    %v3106 = vpop.f32.mrf.mxu0
    %v3107 = vadd.f32 %v3094, %v3106
    %v3108 = vpop.f32.mrf.mxu0
    %3109 = vdwg.mxu0
    %3110 = vmatpush.bf16.msra.mxu0 %v1901
    %3111 = vmatpush.bf16.msra.mxu0 %v1897
    %3112 = vmatpush.bf16.msra.mxu0 %v1893
    %3113 = vmatpush.bf16.msra.mxu0 %v1889
    %3114 = vmatpush.bf16.msra.mxu0 %v1885
    %3115 = vmatpush.bf16.msra.mxu0 %v1881
    %3116 = vmatpush.bf16.msra.mxu0 %v1877
    %3117 = vmatpush.bf16.msra.mxu0 %v1873
    %3118 = vmatmul.bf16.gmra.mxu0 %v3082
    %v3119 = vpop.f32.mrf.mxu0
    %v3120 = vadd.f32 0.0, %v3119
    %v3121 = vpop.f32.mrf.mxu0
    %3122 = vdwg.mxu0
    %3123 = vmatpush.bf16.msra.mxu0 %v1933
    %3124 = vmatpush.bf16.msra.mxu0 %v1929
    %3125 = vmatpush.bf16.msra.mxu0 %v1925
    %3126 = vmatpush.bf16.msra.mxu0 %v1921
    %3127 = vmatpush.bf16.msra.mxu0 %v1917
    %3128 = vmatpush.bf16.msra.mxu0 %v1913
    %3129 = vmatpush.bf16.msra.mxu0 %v1909
    %3130 = vmatpush.bf16.msra.mxu0 %v1905
    %3131 = vmatmul.bf16.gmra.mxu0 %v3083
    %v3132 = vpop.f32.mrf.mxu0
    %v3133 = vadd.f32 %v3120, %v3132
    %v3134 = vpop.f32.mrf.mxu0
    %3135 = vdwg.mxu0
    %3136 = vmatpush.bf16.msra.mxu0 %v1902
    %3137 = vmatpush.bf16.msra.mxu0 %v1898
    %3138 = vmatpush.bf16.msra.mxu0 %v1894
    %3139 = vmatpush.bf16.msra.mxu0 %v1890
    %3140 = vmatpush.bf16.msra.mxu0 %v1886
    %3141 = vmatpush.bf16.msra.mxu0 %v1882
    %3142 = vmatpush.bf16.msra.mxu0 %v1878
    %3143 = vmatpush.bf16.msra.mxu0 %v1874
    %3144 = vmatmul.bf16.gmra.mxu0 %v3082
    %v3145 = vpop.f32.mrf.mxu0
    %v3146 = vadd.f32 0.0, %v3145
    %v3147 = vpop.f32.mrf.mxu0
    %3148 = vdwg.mxu0
    %3149 = vmatpush.bf16.msra.mxu0 %v1934
    %3150 = vmatpush.bf16.msra.mxu0 %v1930
    %3151 = vmatpush.bf16.msra.mxu0 %v1926
    %3152 = vmatpush.bf16.msra.mxu0 %v1922
    %3153 = vmatpush.bf16.msra.mxu0 %v1918
    %3154 = vmatpush.bf16.msra.mxu0 %v1914
    %3155 = vmatpush.bf16.msra.mxu0 %v1910
    %3156 = vmatpush.bf16.msra.mxu0 %v1906
    %3157 = vmatmul.bf16.gmra.mxu0 %v3083
    %v3158 = vpop.f32.mrf.mxu0
    %v3159 = vadd.f32 %v3146, %v3158
    %v3160 = vpop.f32.mrf.mxu0
    %3161 = vdwg.mxu0
    %3162 = vmatpush.bf16.msra.mxu0 %v1903
    %3163 = vmatpush.bf16.msra.mxu0 %v1899
    %3164 = vmatpush.bf16.msra.mxu0 %v1895
    %3165 = vmatpush.bf16.msra.mxu0 %v1891
    %3166 = vmatpush.bf16.msra.mxu0 %v1887
    %3167 = vmatpush.bf16.msra.mxu0 %v1883
    %3168 = vmatpush.bf16.msra.mxu0 %v1879
    %3169 = vmatpush.bf16.msra.mxu0 %v1875
    %3170 = vmatmul.bf16.gmra.mxu0 %v3082
    %v3171 = vpop.f32.mrf.mxu0
    %v3172 = vadd.f32 0.0, %v3171
    %v3173 = vpop.f32.mrf.mxu0
    %3174 = vdwg.mxu0
    %3175 = vmatpush.bf16.msra.mxu0 %v1935
    %3176 = vmatpush.bf16.msra.mxu0 %v1931
    %3177 = vmatpush.bf16.msra.mxu0 %v1927
    %3178 = vmatpush.bf16.msra.mxu0 %v1923
    %3179 = vmatpush.bf16.msra.mxu0 %v1919
    %3180 = vmatpush.bf16.msra.mxu0 %v1915
    %3181 = vmatpush.bf16.msra.mxu0 %v1911
    %3182 = vmatpush.bf16.msra.mxu0 %v1907
    %3183 = vmatmul.bf16.gmra.mxu0 %v3083
    %v3184 = vpop.f32.mrf.mxu0
    %v3185 = vadd.f32 %v3172, %v3184
    %v3186 = vpop.f32.mrf.mxu0
    %3187 = vdwg.mxu0
    %v3188 = vadd.f32 %v3076, %v3107
    %v3189 = vadd.f32 %v3077, %v3133
    %v3190 = vadd.f32 %v3078, %v3159
    %v3191 = vadd.f32 %v3079, %v3185
    %v3192 = vxor.u32 %v3188, 2147483648
    %v3193 = vmul.f32 %v3192, 1.442695
    %v3194 = vpow.pop %v3193
    %v3195 = vadd.f32 %v3194, 1.0
    %v3196 = vrcp.pop %v3195
    %v3197 = vmul.f32 %v3195, %v3196
    %v3198 = vsub.f32 1.0, %v3197
    %v3199 = vmul.f32 %v3196, %v3198
    %v3200 = vadd.f32 %v3196, %v3199
    %vm3201 = vweird.f32 %v3195
    %vm3202 = vweird.f32 %v3196
    %vm3203 = vmor %vm3201, %vm3202
    %v3204 = vsel %vm3203, %v3196, %v3200
    %v3205 = vand.u32 2147483647, %v3195
    %vm3206 = vcmp.eq.f32.partialorder %v3205, 8.507059e+37
    %v3207 = vand.u32 %v3195, 2147483648
    %v3208 = vor.u32 1.1754944e-38, %v3207
    %v3209 = vsel %vm3206, %v3208, %v3204
    %v3210 = vmul.f32 1.0, %v3209
    %v3211 = vxor.u32 %v3189, 2147483648
    %v3212 = vmul.f32 %v3211, 1.442695
    %v3213 = vpow.pop %v3212
    %v3214 = vadd.f32 %v3213, 1.0
    %v3215 = vrcp.pop %v3214
    %v3216 = vmul.f32 %v3214, %v3215
    %v3217 = vsub.f32 1.0, %v3216
    %v3218 = vmul.f32 %v3215, %v3217
    %v3219 = vadd.f32 %v3215, %v3218
    %vm3220 = vweird.f32 %v3214
    %vm3221 = vweird.f32 %v3215
    %vm3222 = vmor %vm3220, %vm3221
    %v3223 = vsel %vm3222, %v3215, %v3219
    %v3224 = vand.u32 2147483647, %v3214
    %vm3225 = vcmp.eq.f32.partialorder %v3224, 8.507059e+37
    %v3226 = vand.u32 %v3214, 2147483648
    %v3227 = vor.u32 1.1754944e-38, %v3226
    %v3228 = vsel %vm3225, %v3227, %v3223
    %v3229 = vmul.f32 1.0, %v3228
    %v3230 = vtanh.pop %v3190
    %v3231 = vxor.u32 %v3191, 2147483648
    %v3232 = vmul.f32 %v3231, 1.442695
    %v3233 = vpow.pop %v3232
    %v3234 = vadd.f32 %v3233, 1.0
    %v3235 = vrcp.pop %v3234
    %v3236 = vmul.f32 %v3234, %v3235
    %v3237 = vsub.f32 1.0, %v3236
    %v3238 = vmul.f32 %v3235, %v3237
    %v3239 = vadd.f32 %v3235, %v3238
    %vm3240 = vweird.f32 %v3234
    %vm3241 = vweird.f32 %v3235
    %vm3242 = vmor %vm3240, %vm3241
    %v3243 = vsel %vm3242, %v3235, %v3239
    %v3244 = vand.u32 2147483647, %v3234
    %vm3245 = vcmp.eq.f32.partialorder %v3244, 8.507059e+37
    %v3246 = vand.u32 %v3234, 2147483648
    %v3247 = vor.u32 1.1754944e-38, %v3246
    %v3248 = vsel %vm3245, %v3247, %v3243
    %v3249 = vmul.f32 1.0, %v3248
    %v3250 = vmul.f32 %v3229, %v3021
    %v3251 = vmul.f32 %v3210, %v3230
    %v3252 = vadd.f32 %v3250, %v3251
    %v3253 = vmax.f32 %v3252, -3.0
    %v3254 = vmin.f32 %v3253, 3.0
    %v3255 = vtanh.pop %v3254
    %v3256 = vmul.f32 %v3249, %v3255
    %v3257 = vsel %vm1053, %v3256, 0.0
    %v3258 = vsel %vm1054, %v3256, 0.0
    %v3259 = vpack.c.bf16 %v3257, %v3257
    %v3260 = vpack.c.bf16 %v3258, %v3258
    %3261 = vmatpush.bf16.msra.mxu0 %v2280
    %3262 = vmatpush.bf16.msra.mxu0 %v2279
    %3263 = vmatpush.bf16.msra.mxu0 %v2278
    %3264 = vmatpush.bf16.msra.mxu0 %v2277
    %3265 = vmatpush.bf16.msra.mxu0 %v2276
    %3266 = vmatpush.bf16.msra.mxu0 %v2275
    %3267 = vmatpush.bf16.msra.mxu0 %v2274
    %3268 = vmatpush.bf16.msra.mxu0 %v2273
    %3269 = vmatmul.bf16.gmra.mxu0 %v3259
    %v3270 = vpop.f32.mrf.mxu0
    %v3271 = vadd.f32 0.0, %v3270
    %v3272 = vpop.f32.mrf.mxu0
    %3273 = vdwg.mxu0
    %3274 = vmatpush.bf16.msra.mxu0 %v2288
    %3275 = vmatpush.bf16.msra.mxu0 %v2287
    %3276 = vmatpush.bf16.msra.mxu0 %v2286
    %3277 = vmatpush.bf16.msra.mxu0 %v2285
    %3278 = vmatpush.bf16.msra.mxu0 %v2284
    %3279 = vmatpush.bf16.msra.mxu0 %v2283
    %3280 = vmatpush.bf16.msra.mxu0 %v2282
    %3281 = vmatpush.bf16.msra.mxu0 %v2281
    %3282 = vmatmul.bf16.gmra.mxu0 %v3260
    %v3283 = vpop.f32.mrf.mxu0
    %v3284 = vadd.f32 %v3271, %v3283
    %v3285 = vpop.f32.mrf.mxu0
    %3286 = vdwg.mxu0
    %v3287 = vmax.f32 %v3284, -3.0
    %v3288 = vmin.f32 %v3287, 3.0
    %v3289 = vld [vmem:[#allocation2 + $0x20] sm:$0xc]
    %v3290 = vld [vmem:[#allocation2 + $0x28] sm:$0xc]
    %v3291 = vld [vmem:[#allocation2 + $0x30] sm:$0xc]
    %v3292 = vld [vmem:[#allocation2 + $0x38] sm:$0xc]
    %v3293 = vld [vmem:[#allocation3] sm:$0x30]
    %v3294 = vld [vmem:[#allocation3 + $0x8] sm:$0x30]
    %v3295 = vld [vmem:[#allocation3 + $0x10] sm:$0x30]
    %v3296 = vld [vmem:[#allocation3 + $0x18] sm:$0x30]
    %v3301 = vrot.slane %v3289, 2
    %v3302 = vrot.slane %v3290, 2
    %v3303 = vrot.slane %v3291, 2
    %v3304 = vrot.slane %v3292, 2
    %v3313 = vrot.slane %v3293, 2
    %v3314 = vrot.slane %v3294, 2
    %v3315 = vrot.slane %v3295, 2
    %v3316 = vrot.slane %v3296, 2
    %v3321 = vsel %vm1610, %v3301, %v3313
    %v3322 = vsel %vm1610, %v3302, %v3314
    %v3323 = vsel %vm1610, %v3303, %v3315
    %v3324 = vsel %vm1610, %v3304, %v3316
    %v3325 = vsel %vm1053, %v3288, 0.0
    %v3326 = vsel %vm1054, %v3288, 0.0
    %v3327 = vpack.c.bf16 %v3325, %v3325
    %v3328 = vpack.c.bf16 %v3326, %v3326
    %3329 = vmatpush.bf16.msra.mxu0 %v1900
    %3330 = vmatpush.bf16.msra.mxu0 %v1896
    %3331 = vmatpush.bf16.msra.mxu0 %v1892
    %3332 = vmatpush.bf16.msra.mxu0 %v1888
    %3333 = vmatpush.bf16.msra.mxu0 %v1884
    %3334 = vmatpush.bf16.msra.mxu0 %v1880
    %3335 = vmatpush.bf16.msra.mxu0 %v1876
    %3336 = vmatpush.bf16.msra.mxu0 %v1872
    %3337 = vmatmul.bf16.gmra.mxu0 %v3327
    %v3338 = vpop.f32.mrf.mxu0
    %v3339 = vadd.f32 0.0, %v3338
    %v3340 = vpop.f32.mrf.mxu0
    %3341 = vdwg.mxu0
    %3342 = vmatpush.bf16.msra.mxu0 %v1932
    %3343 = vmatpush.bf16.msra.mxu0 %v1928
    %3344 = vmatpush.bf16.msra.mxu0 %v1924
    %3345 = vmatpush.bf16.msra.mxu0 %v1920
    %3346 = vmatpush.bf16.msra.mxu0 %v1916
    %3347 = vmatpush.bf16.msra.mxu0 %v1912
    %3348 = vmatpush.bf16.msra.mxu0 %v1908
    %3349 = vmatpush.bf16.msra.mxu0 %v1904
    %3350 = vmatmul.bf16.gmra.mxu0 %v3328
    %v3351 = vpop.f32.mrf.mxu0
    %v3352 = vadd.f32 %v3339, %v3351
    %v3353 = vpop.f32.mrf.mxu0
    %3354 = vdwg.mxu0
    %3355 = vmatpush.bf16.msra.mxu0 %v1901
    %3356 = vmatpush.bf16.msra.mxu0 %v1897
    %3357 = vmatpush.bf16.msra.mxu0 %v1893
    %3358 = vmatpush.bf16.msra.mxu0 %v1889
    %3359 = vmatpush.bf16.msra.mxu0 %v1885
    %3360 = vmatpush.bf16.msra.mxu0 %v1881
    %3361 = vmatpush.bf16.msra.mxu0 %v1877
    %3362 = vmatpush.bf16.msra.mxu0 %v1873
    %3363 = vmatmul.bf16.gmra.mxu0 %v3327
    %v3364 = vpop.f32.mrf.mxu0
    %v3365 = vadd.f32 0.0, %v3364
    %v3366 = vpop.f32.mrf.mxu0
    %3367 = vdwg.mxu0
    %3368 = vmatpush.bf16.msra.mxu0 %v1933
    %3369 = vmatpush.bf16.msra.mxu0 %v1929
    %3370 = vmatpush.bf16.msra.mxu0 %v1925
    %3371 = vmatpush.bf16.msra.mxu0 %v1921
    %3372 = vmatpush.bf16.msra.mxu0 %v1917
    %3373 = vmatpush.bf16.msra.mxu0 %v1913
    %3374 = vmatpush.bf16.msra.mxu0 %v1909
    %3375 = vmatpush.bf16.msra.mxu0 %v1905
    %3376 = vmatmul.bf16.gmra.mxu0 %v3328
    %v3377 = vpop.f32.mrf.mxu0
    %v3378 = vadd.f32 %v3365, %v3377
    %v3379 = vpop.f32.mrf.mxu0
    %3380 = vdwg.mxu0
    %3381 = vmatpush.bf16.msra.mxu0 %v1902
    %3382 = vmatpush.bf16.msra.mxu0 %v1898
    %3383 = vmatpush.bf16.msra.mxu0 %v1894
    %3384 = vmatpush.bf16.msra.mxu0 %v1890
    %3385 = vmatpush.bf16.msra.mxu0 %v1886
    %3386 = vmatpush.bf16.msra.mxu0 %v1882
    %3387 = vmatpush.bf16.msra.mxu0 %v1878
    %3388 = vmatpush.bf16.msra.mxu0 %v1874
    %3389 = vmatmul.bf16.gmra.mxu0 %v3327
    %v3390 = vpop.f32.mrf.mxu0
    %v3391 = vadd.f32 0.0, %v3390
    %v3392 = vpop.f32.mrf.mxu0
    %3393 = vdwg.mxu0
    %3394 = vmatpush.bf16.msra.mxu0 %v1934
    %3395 = vmatpush.bf16.msra.mxu0 %v1930
    %3396 = vmatpush.bf16.msra.mxu0 %v1926
    %3397 = vmatpush.bf16.msra.mxu0 %v1922
    %3398 = vmatpush.bf16.msra.mxu0 %v1918
    %3399 = vmatpush.bf16.msra.mxu0 %v1914
    %3400 = vmatpush.bf16.msra.mxu0 %v1910
    %3401 = vmatpush.bf16.msra.mxu0 %v1906
    %3402 = vmatmul.bf16.gmra.mxu0 %v3328
    %v3403 = vpop.f32.mrf.mxu0
    %v3404 = vadd.f32 %v3391, %v3403
    %v3405 = vpop.f32.mrf.mxu0
    %3406 = vdwg.mxu0
    %3407 = vmatpush.bf16.msra.mxu0 %v1903
    %3408 = vmatpush.bf16.msra.mxu0 %v1899
    %3409 = vmatpush.bf16.msra.mxu0 %v1895
    %3410 = vmatpush.bf16.msra.mxu0 %v1891
    %3411 = vmatpush.bf16.msra.mxu0 %v1887
    %3412 = vmatpush.bf16.msra.mxu0 %v1883
    %3413 = vmatpush.bf16.msra.mxu0 %v1879
    %3414 = vmatpush.bf16.msra.mxu0 %v1875
    %3415 = vmatmul.bf16.gmra.mxu0 %v3327
    %v3416 = vpop.f32.mrf.mxu0
    %v3417 = vadd.f32 0.0, %v3416
    %v3418 = vpop.f32.mrf.mxu0
    %3419 = vdwg.mxu0
    %3420 = vmatpush.bf16.msra.mxu0 %v1935
    %3421 = vmatpush.bf16.msra.mxu0 %v1931
    %3422 = vmatpush.bf16.msra.mxu0 %v1927
    %3423 = vmatpush.bf16.msra.mxu0 %v1923
    %3424 = vmatpush.bf16.msra.mxu0 %v1919
    %3425 = vmatpush.bf16.msra.mxu0 %v1915
    %3426 = vmatpush.bf16.msra.mxu0 %v1911
    %3427 = vmatpush.bf16.msra.mxu0 %v1907
    %3428 = vmatmul.bf16.gmra.mxu0 %v3328
    %v3429 = vpop.f32.mrf.mxu0
    %v3430 = vadd.f32 %v3417, %v3429
    %v3431 = vpop.f32.mrf.mxu0
    %3432 = vdwg.mxu0
    %v3433 = vadd.f32 %v3321, %v3352
    %v3434 = vadd.f32 %v3322, %v3378
    %v3435 = vadd.f32 %v3323, %v3404
    %v3436 = vadd.f32 %v3324, %v3430
    %v3437 = vxor.u32 %v3433, 2147483648
    %v3438 = vmul.f32 %v3437, 1.442695
    %v3439 = vpow.pop %v3438
    %v3440 = vadd.f32 %v3439, 1.0
    %v3441 = vrcp.pop %v3440
    %v3442 = vmul.f32 %v3440, %v3441
    %v3443 = vsub.f32 1.0, %v3442
    %v3444 = vmul.f32 %v3441, %v3443
    %v3445 = vadd.f32 %v3441, %v3444
    %vm3446 = vweird.f32 %v3440
    %vm3447 = vweird.f32 %v3441
    %vm3448 = vmor %vm3446, %vm3447
    %v3449 = vsel %vm3448, %v3441, %v3445
    %v3450 = vand.u32 2147483647, %v3440
    %vm3451 = vcmp.eq.f32.partialorder %v3450, 8.507059e+37
    %v3452 = vand.u32 %v3440, 2147483648
    %v3453 = vor.u32 1.1754944e-38, %v3452
    %v3454 = vsel %vm3451, %v3453, %v3449
    %v3455 = vmul.f32 1.0, %v3454
    %v3456 = vxor.u32 %v3434, 2147483648
    %v3457 = vmul.f32 %v3456, 1.442695
    %v3458 = vpow.pop %v3457
    %v3459 = vadd.f32 %v3458, 1.0
    %v3460 = vrcp.pop %v3459
    %v3461 = vmul.f32 %v3459, %v3460
    %v3462 = vsub.f32 1.0, %v3461
    %v3463 = vmul.f32 %v3460, %v3462
    %v3464 = vadd.f32 %v3460, %v3463
    %vm3465 = vweird.f32 %v3459
    %vm3466 = vweird.f32 %v3460
    %vm3467 = vmor %vm3465, %vm3466
    %v3468 = vsel %vm3467, %v3460, %v3464
    %v3469 = vand.u32 2147483647, %v3459
    %vm3470 = vcmp.eq.f32.partialorder %v3469, 8.507059e+37
    %v3471 = vand.u32 %v3459, 2147483648
    %v3472 = vor.u32 1.1754944e-38, %v3471
    %v3473 = vsel %vm3470, %v3472, %v3468
    %v3474 = vmul.f32 1.0, %v3473
    %v3475 = vtanh.pop %v3435
    %v3476 = vxor.u32 %v3436, 2147483648
    %v3477 = vmul.f32 %v3476, 1.442695
    %v3478 = vpow.pop %v3477
    %v3479 = vadd.f32 %v3478, 1.0
    %v3480 = vrcp.pop %v3479
    %v3481 = vmul.f32 %v3479, %v3480
    %v3482 = vsub.f32 1.0, %v3481
    %v3483 = vmul.f32 %v3480, %v3482
    %v3484 = vadd.f32 %v3480, %v3483
    %vm3485 = vweird.f32 %v3479
    %vm3486 = vweird.f32 %v3480
    %vm3487 = vmor %vm3485, %vm3486
    %v3488 = vsel %vm3487, %v3480, %v3484
    %v3489 = vand.u32 2147483647, %v3479
    %vm3490 = vcmp.eq.f32.partialorder %v3489, 8.507059e+37
    %v3491 = vand.u32 %v3479, 2147483648
    %v3492 = vor.u32 1.1754944e-38, %v3491
    %v3493 = vsel %vm3490, %v3492, %v3488
    %v3494 = vmul.f32 1.0, %v3493
    %v3495 = vmul.f32 %v3474, %v3254
    %v3496 = vmul.f32 %v3455, %v3475
    %v3497 = vadd.f32 %v3495, %v3496
    %v3498 = vmax.f32 %v3497, -3.0
    %v3499 = vmin.f32 %v3498, 3.0
    %v3500 = vtanh.pop %v3499
    %v3501 = vmul.f32 %v3494, %v3500
    %v3502 = vsel %vm1053, %v3501, 0.0
    %v3503 = vsel %vm1054, %v3501, 0.0
    %v3504 = vpack.c.bf16 %v3502, %v3502
    %v3505 = vpack.c.bf16 %v3503, %v3503
    %3506 = vmatpush.bf16.msra.mxu0 %v2280
    %3507 = vmatpush.bf16.msra.mxu0 %v2279
    %3508 = vmatpush.bf16.msra.mxu0 %v2278
    %3509 = vmatpush.bf16.msra.mxu0 %v2277
    %3510 = vmatpush.bf16.msra.mxu0 %v2276
    %3511 = vmatpush.bf16.msra.mxu0 %v2275
    %3512 = vmatpush.bf16.msra.mxu0 %v2274
    %3513 = vmatpush.bf16.msra.mxu0 %v2273
    %3514 = vmatmul.bf16.gmra.mxu0 %v3504
    %v3515 = vpop.f32.mrf.mxu0
    %v3516 = vadd.f32 0.0, %v3515
    %v3517 = vpop.f32.mrf.mxu0
    %3518 = vdwg.mxu0
    %3519 = vmatpush.bf16.msra.mxu0 %v2288
    %3520 = vmatpush.bf16.msra.mxu0 %v2287
    %3521 = vmatpush.bf16.msra.mxu0 %v2286
    %3522 = vmatpush.bf16.msra.mxu0 %v2285
    %3523 = vmatpush.bf16.msra.mxu0 %v2284
    %3524 = vmatpush.bf16.msra.mxu0 %v2283
    %3525 = vmatpush.bf16.msra.mxu0 %v2282
    %3526 = vmatpush.bf16.msra.mxu0 %v2281
    %3527 = vmatmul.bf16.gmra.mxu0 %v3505
    %v3528 = vpop.f32.mrf.mxu0
    %v3529 = vadd.f32 %v3516, %v3528
    %v3530 = vpop.f32.mrf.mxu0
    %3531 = vdwg.mxu0
    %v3532 = vmax.f32 %v3529, -3.0
    %v3533 = vmin.f32 %v3532, 3.0
    %v3534 = vld [vmem:[#allocation2 + $0x20] sm:$0x30]
    %v3535 = vld [vmem:[#allocation2 + $0x28] sm:$0x30]
    %v3536 = vld [vmem:[#allocation2 + $0x30] sm:$0x30]
    %v3537 = vld [vmem:[#allocation2 + $0x38] sm:$0x30]
    %v3538 = vld [vmem:[#allocation3] sm:$0xc]
    %v3539 = vld [vmem:[#allocation3 + $0x8] sm:$0xc]
    %v3540 = vld [vmem:[#allocation3 + $0x10] sm:$0xc]
    %v3541 = vld [vmem:[#allocation3 + $0x18] sm:$0xc]
    %v3546 = vrot.slane %v3534, 4
    %v3547 = vrot.slane %v3535, 4
    %v3548 = vrot.slane %v3536, 4
    %v3549 = vrot.slane %v3537, 4
    %v3554 = vsel %vm1610, %v3546, %v3538
    %v3555 = vsel %vm1610, %v3547, %v3539
    %v3556 = vsel %vm1610, %v3548, %v3540
    %v3557 = vsel %vm1610, %v3549, %v3541
    %v3558 = vsel %vm1053, %v3533, 0.0
    %v3559 = vsel %vm1054, %v3533, 0.0
    %v3560 = vpack.c.bf16 %v3558, %v3558
    %v3561 = vpack.c.bf16 %v3559, %v3559
    %3562 = vmatpush.bf16.msra.mxu0 %v1900
    %3563 = vmatpush.bf16.msra.mxu0 %v1896
    %3564 = vmatpush.bf16.msra.mxu0 %v1892
    %3565 = vmatpush.bf16.msra.mxu0 %v1888
    %3566 = vmatpush.bf16.msra.mxu0 %v1884
    %3567 = vmatpush.bf16.msra.mxu0 %v1880
    %3568 = vmatpush.bf16.msra.mxu0 %v1876
    %3569 = vmatpush.bf16.msra.mxu0 %v1872
    %3570 = vmatmul.bf16.gmra.mxu0 %v3560
    %v3571 = vpop.f32.mrf.mxu0
    %v3572 = vadd.f32 0.0, %v3571
    %v3573 = vpop.f32.mrf.mxu0
    %3574 = vdwg.mxu0
    %3575 = vmatpush.bf16.msra.mxu0 %v1932
    %3576 = vmatpush.bf16.msra.mxu0 %v1928
    %3577 = vmatpush.bf16.msra.mxu0 %v1924
    %3578 = vmatpush.bf16.msra.mxu0 %v1920
    %3579 = vmatpush.bf16.msra.mxu0 %v1916
    %3580 = vmatpush.bf16.msra.mxu0 %v1912
    %3581 = vmatpush.bf16.msra.mxu0 %v1908
    %3582 = vmatpush.bf16.msra.mxu0 %v1904
    %3583 = vmatmul.bf16.gmra.mxu0 %v3561
    %v3584 = vpop.f32.mrf.mxu0
    %v3585 = vadd.f32 %v3572, %v3584
    %v3586 = vpop.f32.mrf.mxu0
    %3587 = vdwg.mxu0
    %3588 = vmatpush.bf16.msra.mxu0 %v1901
    %3589 = vmatpush.bf16.msra.mxu0 %v1897
    %3590 = vmatpush.bf16.msra.mxu0 %v1893
    %3591 = vmatpush.bf16.msra.mxu0 %v1889
    %3592 = vmatpush.bf16.msra.mxu0 %v1885
    %3593 = vmatpush.bf16.msra.mxu0 %v1881
    %3594 = vmatpush.bf16.msra.mxu0 %v1877
    %3595 = vmatpush.bf16.msra.mxu0 %v1873
    %3596 = vmatmul.bf16.gmra.mxu0 %v3560
    %v3597 = vpop.f32.mrf.mxu0
    %v3598 = vadd.f32 0.0, %v3597
    %v3599 = vpop.f32.mrf.mxu0
    %3600 = vdwg.mxu0
    %3601 = vmatpush.bf16.msra.mxu0 %v1933
    %3602 = vmatpush.bf16.msra.mxu0 %v1929
    %3603 = vmatpush.bf16.msra.mxu0 %v1925
    %3604 = vmatpush.bf16.msra.mxu0 %v1921
    %3605 = vmatpush.bf16.msra.mxu0 %v1917
    %3606 = vmatpush.bf16.msra.mxu0 %v1913
    %3607 = vmatpush.bf16.msra.mxu0 %v1909
    %3608 = vmatpush.bf16.msra.mxu0 %v1905
    %3609 = vmatmul.bf16.gmra.mxu0 %v3561
    %v3610 = vpop.f32.mrf.mxu0
    %v3611 = vadd.f32 %v3598, %v3610
    %v3612 = vpop.f32.mrf.mxu0
    %3613 = vdwg.mxu0
    %3614 = vmatpush.bf16.msra.mxu0 %v1902
    %3615 = vmatpush.bf16.msra.mxu0 %v1898
    %3616 = vmatpush.bf16.msra.mxu0 %v1894
    %3617 = vmatpush.bf16.msra.mxu0 %v1890
    %3618 = vmatpush.bf16.msra.mxu0 %v1886
    %3619 = vmatpush.bf16.msra.mxu0 %v1882
    %3620 = vmatpush.bf16.msra.mxu0 %v1878
    %3621 = vmatpush.bf16.msra.mxu0 %v1874
    %3622 = vmatmul.bf16.gmra.mxu0 %v3560
    %v3623 = vpop.f32.mrf.mxu0
    %v3624 = vadd.f32 0.0, %v3623
    %v3625 = vpop.f32.mrf.mxu0
    %3626 = vdwg.mxu0
    %3627 = vmatpush.bf16.msra.mxu0 %v1934
    %3628 = vmatpush.bf16.msra.mxu0 %v1930
    %3629 = vmatpush.bf16.msra.mxu0 %v1926
    %3630 = vmatpush.bf16.msra.mxu0 %v1922
    %3631 = vmatpush.bf16.msra.mxu0 %v1918
    %3632 = vmatpush.bf16.msra.mxu0 %v1914
    %3633 = vmatpush.bf16.msra.mxu0 %v1910
    %3634 = vmatpush.bf16.msra.mxu0 %v1906
    %3635 = vmatmul.bf16.gmra.mxu0 %v3561
    %v3636 = vpop.f32.mrf.mxu0
    %v3637 = vadd.f32 %v3624, %v3636
    %v3638 = vpop.f32.mrf.mxu0
    %3639 = vdwg.mxu0
    %3640 = vmatpush.bf16.msra.mxu0 %v1903
    %3641 = vmatpush.bf16.msra.mxu0 %v1899
    %3642 = vmatpush.bf16.msra.mxu0 %v1895
    %3643 = vmatpush.bf16.msra.mxu0 %v1891
    %3644 = vmatpush.bf16.msra.mxu0 %v1887
    %3645 = vmatpush.bf16.msra.mxu0 %v1883
    %3646 = vmatpush.bf16.msra.mxu0 %v1879
    %3647 = vmatpush.bf16.msra.mxu0 %v1875
    %3648 = vmatmul.bf16.gmra.mxu0 %v3560
    %v3649 = vpop.f32.mrf.mxu0
    %v3650 = vadd.f32 0.0, %v3649
    %v3651 = vpop.f32.mrf.mxu0
    %3652 = vdwg.mxu0
    %3653 = vmatpush.bf16.msra.mxu0 %v1935
    %3654 = vmatpush.bf16.msra.mxu0 %v1931
    %3655 = vmatpush.bf16.msra.mxu0 %v1927
    %3656 = vmatpush.bf16.msra.mxu0 %v1923
    %3657 = vmatpush.bf16.msra.mxu0 %v1919
    %3658 = vmatpush.bf16.msra.mxu0 %v1915
    %3659 = vmatpush.bf16.msra.mxu0 %v1911
    %3660 = vmatpush.bf16.msra.mxu0 %v1907
    %3661 = vmatmul.bf16.gmra.mxu0 %v3561
    %v3662 = vpop.f32.mrf.mxu0
    %v3663 = vadd.f32 %v3650, %v3662
    %v3664 = vpop.f32.mrf.mxu0
    %3665 = vdwg.mxu0
    %v3666 = vadd.f32 %v3554, %v3585
    %v3667 = vadd.f32 %v3555, %v3611
    %v3668 = vadd.f32 %v3556, %v3637
    %v3669 = vadd.f32 %v3557, %v3663
    %v3670 = vxor.u32 %v3666, 2147483648
    %v3671 = vmul.f32 %v3670, 1.442695
    %v3672 = vpow.pop %v3671
    %v3673 = vadd.f32 %v3672, 1.0
    %v3674 = vrcp.pop %v3673
    %v3675 = vmul.f32 %v3673, %v3674
    %v3676 = vsub.f32 1.0, %v3675
    %v3677 = vmul.f32 %v3674, %v3676
    %v3678 = vadd.f32 %v3674, %v3677
    %vm3679 = vweird.f32 %v3673
    %vm3680 = vweird.f32 %v3674
    %vm3681 = vmor %vm3679, %vm3680
    %v3682 = vsel %vm3681, %v3674, %v3678
    %v3683 = vand.u32 2147483647, %v3673
    %vm3684 = vcmp.eq.f32.partialorder %v3683, 8.507059e+37
    %v3685 = vand.u32 %v3673, 2147483648
    %v3686 = vor.u32 1.1754944e-38, %v3685
    %v3687 = vsel %vm3684, %v3686, %v3682
    %v3688 = vmul.f32 1.0, %v3687
    %v3689 = vxor.u32 %v3667, 2147483648
    %v3690 = vmul.f32 %v3689, 1.442695
    %v3691 = vpow.pop %v3690
    %v3692 = vadd.f32 %v3691, 1.0
    %v3693 = vrcp.pop %v3692
    %v3694 = vmul.f32 %v3692, %v3693
    %v3695 = vsub.f32 1.0, %v3694
    %v3696 = vmul.f32 %v3693, %v3695
    %v3697 = vadd.f32 %v3693, %v3696
    %vm3698 = vweird.f32 %v3692
    %vm3699 = vweird.f32 %v3693
    %vm3700 = vmor %vm3698, %vm3699
    %v3701 = vsel %vm3700, %v3693, %v3697
    %v3702 = vand.u32 2147483647, %v3692
    %vm3703 = vcmp.eq.f32.partialorder %v3702, 8.507059e+37
    %v3704 = vand.u32 %v3692, 2147483648
    %v3705 = vor.u32 1.1754944e-38, %v3704
    %v3706 = vsel %vm3703, %v3705, %v3701
    %v3707 = vmul.f32 1.0, %v3706
    %v3708 = vtanh.pop %v3668
    %v3709 = vxor.u32 %v3669, 2147483648
    %v3710 = vmul.f32 %v3709, 1.442695
    %v3711 = vpow.pop %v3710
    %v3712 = vadd.f32 %v3711, 1.0
    %v3713 = vrcp.pop %v3712
    %v3714 = vmul.f32 %v3712, %v3713
    %v3715 = vsub.f32 1.0, %v3714
    %v3716 = vmul.f32 %v3713, %v3715
    %v3717 = vadd.f32 %v3713, %v3716
    %vm3718 = vweird.f32 %v3712
    %vm3719 = vweird.f32 %v3713
    %vm3720 = vmor %vm3718, %vm3719
    %v3721 = vsel %vm3720, %v3713, %v3717
    %v3722 = vand.u32 2147483647, %v3712
    %vm3723 = vcmp.eq.f32.partialorder %v3722, 8.507059e+37
    %v3724 = vand.u32 %v3712, 2147483648
    %v3725 = vor.u32 1.1754944e-38, %v3724
    %v3726 = vsel %vm3723, %v3725, %v3721
    %v3727 = vmul.f32 1.0, %v3726
    %v3728 = vmul.f32 %v3707, %v3499
    %v3729 = vmul.f32 %v3688, %v3708
    %v3730 = vadd.f32 %v3728, %v3729
    %v3731 = vmax.f32 %v3730, -3.0
    %v3732 = vmin.f32 %v3731, 3.0
    %v3733 = vtanh.pop %v3732
    %v3734 = vmul.f32 %v3727, %v3733
    %v3735 = vsel %vm1053, %v3734, 0.0
    %v3736 = vsel %vm1054, %v3734, 0.0
    %v3737 = vpack.c.bf16 %v3735, %v3735
    %v3738 = vpack.c.bf16 %v3736, %v3736
    %3739 = vmatpush.bf16.msra.mxu0 %v2280
    %3740 = vmatpush.bf16.msra.mxu0 %v2279
    %3741 = vmatpush.bf16.msra.mxu0 %v2278
    %3742 = vmatpush.bf16.msra.mxu0 %v2277
    %3743 = vmatpush.bf16.msra.mxu0 %v2276
    %3744 = vmatpush.bf16.msra.mxu0 %v2275
    %3745 = vmatpush.bf16.msra.mxu0 %v2274
    %3746 = vmatpush.bf16.msra.mxu0 %v2273
    %3747 = vmatmul.bf16.gmra.mxu0 %v3737
    %v3748 = vpop.f32.mrf.mxu0
    %v3749 = vadd.f32 0.0, %v3748
    %v3750 = vpop.f32.mrf.mxu0
    %3751 = vdwg.mxu0
    %3752 = vmatpush.bf16.msra.mxu0 %v2288
    %3753 = vmatpush.bf16.msra.mxu0 %v2287
    %3754 = vmatpush.bf16.msra.mxu0 %v2286
    %3755 = vmatpush.bf16.msra.mxu0 %v2285
    %3756 = vmatpush.bf16.msra.mxu0 %v2284
    %3757 = vmatpush.bf16.msra.mxu0 %v2283
    %3758 = vmatpush.bf16.msra.mxu0 %v2282
    %3759 = vmatpush.bf16.msra.mxu0 %v2281
    %3760 = vmatmul.bf16.gmra.mxu0 %v3738
    %v3761 = vpop.f32.mrf.mxu0
    %v3762 = vadd.f32 %v3749, %v3761
    %v3763 = vpop.f32.mrf.mxu0
    %3764 = vdwg.mxu0
    %v3765 = vmax.f32 %v3762, -3.0
    %v3766 = vmin.f32 %v3765, 3.0
    %v3767 = vld [vmem:[#allocation2 + $0x20] sm:$0xc0]
    %v3768 = vld [vmem:[#allocation2 + $0x28] sm:$0xc0]
    %v3769 = vld [vmem:[#allocation2 + $0x30] sm:$0xc0]
    %v3770 = vld [vmem:[#allocation2 + $0x38] sm:$0xc0]
    %v3771 = vld [vmem:[#allocation3] sm:$0x3]
    %v3772 = vld [vmem:[#allocation3 + $0x8] sm:$0x3]
    %v3773 = vld [vmem:[#allocation3 + $0x10] sm:$0x3]
    %v3774 = vld [vmem:[#allocation3 + $0x18] sm:$0x3]
    %v3779 = vrot.slane %v3767, 6
    %v3780 = vrot.slane %v3768, 6
    %v3781 = vrot.slane %v3769, 6
    %v3782 = vrot.slane %v3770, 6
    %v3791 = vrot.slane %v3771, 6
    %v3792 = vrot.slane %v3772, 6
    %v3793 = vrot.slane %v3773, 6
    %v3794 = vrot.slane %v3774, 6
    %v3799 = vsel %vm1610, %v3779, %v3791
    %v3800 = vsel %vm1610, %v3780, %v3792
    %v3801 = vsel %vm1610, %v3781, %v3793
    %v3802 = vsel %vm1610, %v3782, %v3794
    %v3803 = vsel %vm1053, %v3766, 0.0
    %v3804 = vsel %vm1054, %v3766, 0.0
    %v3805 = vpack.c.bf16 %v3803, %v3803
    %v3806 = vpack.c.bf16 %v3804, %v3804
    %3807 = vmatpush.bf16.msra.mxu0 %v1900
    %3808 = vmatpush.bf16.msra.mxu0 %v1896
    %3809 = vmatpush.bf16.msra.mxu0 %v1892
    %3810 = vmatpush.bf16.msra.mxu0 %v1888
    %3811 = vmatpush.bf16.msra.mxu0 %v1884
    %3812 = vmatpush.bf16.msra.mxu0 %v1880
    %3813 = vmatpush.bf16.msra.mxu0 %v1876
    %3814 = vmatpush.bf16.msra.mxu0 %v1872
    %3815 = vmatmul.bf16.gmra.mxu0 %v3805
    %v3816 = vpop.f32.mrf.mxu0
    %v3817 = vadd.f32 0.0, %v3816
    %v3818 = vpop.f32.mrf.mxu0
    %3819 = vdwg.mxu0
    %3820 = vmatpush.bf16.msra.mxu0 %v1932
    %3821 = vmatpush.bf16.msra.mxu0 %v1928
    %3822 = vmatpush.bf16.msra.mxu0 %v1924
    %3823 = vmatpush.bf16.msra.mxu0 %v1920
    %3824 = vmatpush.bf16.msra.mxu0 %v1916
    %3825 = vmatpush.bf16.msra.mxu0 %v1912
    %3826 = vmatpush.bf16.msra.mxu0 %v1908
    %3827 = vmatpush.bf16.msra.mxu0 %v1904
    %3828 = vmatmul.bf16.gmra.mxu0 %v3806
    %v3829 = vpop.f32.mrf.mxu0
    %v3830 = vadd.f32 %v3817, %v3829
    %v3831 = vpop.f32.mrf.mxu0
    %3832 = vdwg.mxu0
    %3833 = vmatpush.bf16.msra.mxu0 %v1901
    %3834 = vmatpush.bf16.msra.mxu0 %v1897
    %3835 = vmatpush.bf16.msra.mxu0 %v1893
    %3836 = vmatpush.bf16.msra.mxu0 %v1889
    %3837 = vmatpush.bf16.msra.mxu0 %v1885
    %3838 = vmatpush.bf16.msra.mxu0 %v1881
    %3839 = vmatpush.bf16.msra.mxu0 %v1877
    %3840 = vmatpush.bf16.msra.mxu0 %v1873
    %3841 = vmatmul.bf16.gmra.mxu0 %v3805
    %v3842 = vpop.f32.mrf.mxu0
    %v3843 = vadd.f32 0.0, %v3842
    %v3844 = vpop.f32.mrf.mxu0
    %3845 = vdwg.mxu0
    %3846 = vmatpush.bf16.msra.mxu0 %v1933
    %3847 = vmatpush.bf16.msra.mxu0 %v1929
    %3848 = vmatpush.bf16.msra.mxu0 %v1925
    %3849 = vmatpush.bf16.msra.mxu0 %v1921
    %3850 = vmatpush.bf16.msra.mxu0 %v1917
    %3851 = vmatpush.bf16.msra.mxu0 %v1913
    %3852 = vmatpush.bf16.msra.mxu0 %v1909
    %3853 = vmatpush.bf16.msra.mxu0 %v1905
    %3854 = vmatmul.bf16.gmra.mxu0 %v3806
    %v3855 = vpop.f32.mrf.mxu0
    %v3856 = vadd.f32 %v3843, %v3855
    %v3857 = vpop.f32.mrf.mxu0
    %3858 = vdwg.mxu0
    %3859 = vmatpush.bf16.msra.mxu0 %v1902
    %3860 = vmatpush.bf16.msra.mxu0 %v1898
    %3861 = vmatpush.bf16.msra.mxu0 %v1894
    %3862 = vmatpush.bf16.msra.mxu0 %v1890
    %3863 = vmatpush.bf16.msra.mxu0 %v1886
    %3864 = vmatpush.bf16.msra.mxu0 %v1882
    %3865 = vmatpush.bf16.msra.mxu0 %v1878
    %3866 = vmatpush.bf16.msra.mxu0 %v1874
    %3867 = vmatmul.bf16.gmra.mxu0 %v3805
    %v3868 = vpop.f32.mrf.mxu0
    %v3869 = vadd.f32 0.0, %v3868
    %v3870 = vpop.f32.mrf.mxu0
    %3871 = vdwg.mxu0
    %3872 = vmatpush.bf16.msra.mxu0 %v1934
    %3873 = vmatpush.bf16.msra.mxu0 %v1930
    %3874 = vmatpush.bf16.msra.mxu0 %v1926
    %3875 = vmatpush.bf16.msra.mxu0 %v1922
    %3876 = vmatpush.bf16.msra.mxu0 %v1918
    %3877 = vmatpush.bf16.msra.mxu0 %v1914
    %3878 = vmatpush.bf16.msra.mxu0 %v1910
    %3879 = vmatpush.bf16.msra.mxu0 %v1906
    %3880 = vmatmul.bf16.gmra.mxu0 %v3806
    %v3881 = vpop.f32.mrf.mxu0
    %v3882 = vadd.f32 %v3869, %v3881
    %v3883 = vpop.f32.mrf.mxu0
    %3884 = vdwg.mxu0
    %3885 = vmatpush.bf16.msra.mxu0 %v1903
    %3886 = vmatpush.bf16.msra.mxu0 %v1899
    %3887 = vmatpush.bf16.msra.mxu0 %v1895
    %3888 = vmatpush.bf16.msra.mxu0 %v1891
    %3889 = vmatpush.bf16.msra.mxu0 %v1887
    %3890 = vmatpush.bf16.msra.mxu0 %v1883
    %3891 = vmatpush.bf16.msra.mxu0 %v1879
    %3892 = vmatpush.bf16.msra.mxu0 %v1875
    %3893 = vmatmul.bf16.gmra.mxu0 %v3805
    %v3894 = vpop.f32.mrf.mxu0
    %v3895 = vadd.f32 0.0, %v3894
    %v3896 = vpop.f32.mrf.mxu0
    %3897 = vdwg.mxu0
    %3898 = vmatpush.bf16.msra.mxu0 %v1935
    %3899 = vmatpush.bf16.msra.mxu0 %v1931
    %3900 = vmatpush.bf16.msra.mxu0 %v1927
    %3901 = vmatpush.bf16.msra.mxu0 %v1923
    %3902 = vmatpush.bf16.msra.mxu0 %v1919
    %3903 = vmatpush.bf16.msra.mxu0 %v1915
    %3904 = vmatpush.bf16.msra.mxu0 %v1911
    %3905 = vmatpush.bf16.msra.mxu0 %v1907
    %3906 = vmatmul.bf16.gmra.mxu0 %v3806
    %v3907 = vpop.f32.mrf.mxu0
    %v3908 = vadd.f32 %v3895, %v3907
    %v3909 = vpop.f32.mrf.mxu0
    %3910 = vdwg.mxu0
    %v3911 = vadd.f32 %v3799, %v3830
    %v3912 = vadd.f32 %v3800, %v3856
    %v3913 = vadd.f32 %v3801, %v3882
    %v3914 = vadd.f32 %v3802, %v3908
    %v3915 = vxor.u32 %v3911, 2147483648
    %v3916 = vmul.f32 %v3915, 1.442695
    %v3917 = vpow.pop %v3916
    %v3918 = vadd.f32 %v3917, 1.0
    %v3919 = vrcp.pop %v3918
    %v3920 = vmul.f32 %v3918, %v3919
    %v3921 = vsub.f32 1.0, %v3920
    %v3922 = vmul.f32 %v3919, %v3921
    %v3923 = vadd.f32 %v3919, %v3922
    %vm3924 = vweird.f32 %v3918
    %vm3925 = vweird.f32 %v3919
    %vm3926 = vmor %vm3924, %vm3925
    %v3927 = vsel %vm3926, %v3919, %v3923
    %v3928 = vand.u32 2147483647, %v3918
    %vm3929 = vcmp.eq.f32.partialorder %v3928, 8.507059e+37
    %v3930 = vand.u32 %v3918, 2147483648
    %v3931 = vor.u32 1.1754944e-38, %v3930
    %v3932 = vsel %vm3929, %v3931, %v3927
    %v3933 = vmul.f32 1.0, %v3932
    %v3934 = vxor.u32 %v3912, 2147483648
    %v3935 = vmul.f32 %v3934, 1.442695
    %v3936 = vpow.pop %v3935
    %v3937 = vadd.f32 %v3936, 1.0
    %v3938 = vrcp.pop %v3937
    %v3939 = vmul.f32 %v3937, %v3938
    %v3940 = vsub.f32 1.0, %v3939
    %v3941 = vmul.f32 %v3938, %v3940
    %v3942 = vadd.f32 %v3938, %v3941
    %vm3943 = vweird.f32 %v3937
    %vm3944 = vweird.f32 %v3938
    %vm3945 = vmor %vm3943, %vm3944
    %v3946 = vsel %vm3945, %v3938, %v3942
    %v3947 = vand.u32 2147483647, %v3937
    %vm3948 = vcmp.eq.f32.partialorder %v3947, 8.507059e+37
    %v3949 = vand.u32 %v3937, 2147483648
    %v3950 = vor.u32 1.1754944e-38, %v3949
    %v3951 = vsel %vm3948, %v3950, %v3946
    %v3952 = vmul.f32 1.0, %v3951
    %v3953 = vtanh.pop %v3913
    %v3954 = vxor.u32 %v3914, 2147483648
    %v3955 = vmul.f32 %v3954, 1.442695
    %v3956 = vpow.pop %v3955
    %v3957 = vadd.f32 %v3956, 1.0
    %v3958 = vrcp.pop %v3957
    %v3959 = vmul.f32 %v3957, %v3958
    %v3960 = vsub.f32 1.0, %v3959
    %v3961 = vmul.f32 %v3958, %v3960
    %v3962 = vadd.f32 %v3958, %v3961
    %vm3963 = vweird.f32 %v3957
    %vm3964 = vweird.f32 %v3958
    %vm3965 = vmor %vm3963, %vm3964
    %v3966 = vsel %vm3965, %v3958, %v3962
    %v3967 = vand.u32 2147483647, %v3957
    %vm3968 = vcmp.eq.f32.partialorder %v3967, 8.507059e+37
    %v3969 = vand.u32 %v3957, 2147483648
    %v3970 = vor.u32 1.1754944e-38, %v3969
    %v3971 = vsel %vm3968, %v3970, %v3966
    %v3972 = vmul.f32 1.0, %v3971
    %v3973 = vmul.f32 %v3952, %v3732
    %v3974 = vmul.f32 %v3933, %v3953
    %v3975 = vadd.f32 %v3973, %v3974
    %v3976 = vmax.f32 %v3975, -3.0
    %v3977 = vmin.f32 %v3976, 3.0
    %v3978 = vtanh.pop %v3977
    %v3979 = vmul.f32 %v3972, %v3978
    %v3980 = vsel %vm1053, %v3979, 0.0
    %v3981 = vsel %vm1054, %v3979, 0.0
    %v3982 = vpack.c.bf16 %v3980, %v3980
    %v3983 = vpack.c.bf16 %v3981, %v3981
    %3984 = vmatpush.bf16.msra.mxu0 %v2280
    %3985 = vmatpush.bf16.msra.mxu0 %v2279
    %3986 = vmatpush.bf16.msra.mxu0 %v2278
    %3987 = vmatpush.bf16.msra.mxu0 %v2277
    %3988 = vmatpush.bf16.msra.mxu0 %v2276
    %3989 = vmatpush.bf16.msra.mxu0 %v2275
    %3990 = vmatpush.bf16.msra.mxu0 %v2274
    %3991 = vmatpush.bf16.msra.mxu0 %v2273
    %3992 = vmatmul.bf16.gmra.mxu0 %v3982
    %v3993 = vpop.f32.mrf.mxu0
    %v3994 = vadd.f32 0.0, %v3993
    %v3995 = vpop.f32.mrf.mxu0
    %3996 = vdwg.mxu0
    %3997 = vmatpush.bf16.msra.mxu0 %v2288
    %3998 = vmatpush.bf16.msra.mxu0 %v2287
    %3999 = vmatpush.bf16.msra.mxu0 %v2286
    %4000 = vmatpush.bf16.msra.mxu0 %v2285
    %4001 = vmatpush.bf16.msra.mxu0 %v2284
    %4002 = vmatpush.bf16.msra.mxu0 %v2283
    %4003 = vmatpush.bf16.msra.mxu0 %v2282
    %4004 = vmatpush.bf16.msra.mxu0 %v2281
    %4005 = vmatmul.bf16.gmra.mxu0 %v3983
    %v4006 = vpop.f32.mrf.mxu0
    %v4007 = vadd.f32 %v3994, %v4006
    %v4008 = vpop.f32.mrf.mxu0
    %4009 = vdwg.mxu0
    %v4010 = vmax.f32 %v4007, -3.0
    %v4011 = vmin.f32 %v4010, 3.0
    %v4013 = vrot.slane %v2577, 6
    %v4016 = vrot.slane %v2810, 4
    %v4019 = vrot.slane %v3055, 2
    %v4022 = vrot.slane %v3533, 6
    %v4025 = vrot.slane %v3766, 4
    %v4028 = vrot.slane %v4011, 2
    %v4030 = vsel %vm1610, %v2332, %v4013
    %vm4031 = vcmask 1043456
    %v4032 = vsel %vm4031, %v4030, %v4016
    %vm4033 = vcmask 1045504
    %v4034 = vsel %vm4033, %v4032, %v4019
    %v4035 = vsel %vm1610, %v3288, %v4022
    %v4036 = vsel %vm4031, %v4035, %v4025
    %v4037 = vsel %vm4033, %v4036, %v4028
    %v4039 = vrot.slane %v3288, 4
    %v4042 = vrot.slane %v2332, 4
    %v4044 = vsel %vm1610, %v4028, %v3766
    %v4045 = vsel %vm4031, %v4044, %v4022
    %v4046 = vsel %vm4033, %v4045, %v4039
    %v4047 = vsel %vm1610, %v4019, %v2810
    %v4048 = vsel %vm4031, %v4047, %v4013
    %v4049 = vsel %vm4033, %v4048, %v4042
    %4050 = vst [vmem:[#allocation4] sm:$0xff] %v4034
    %4051 = vst [vmem:[#allocation4 + $0x8] sm:$0xff] %v4037
    %4052 = vst [vmem:[#allocation5] sm:$0xff] %v4046
    %4053 = vst [vmem:[#allocation5 + $0x8] sm:$0xff] %v4049
    %v4054 = vld [vmem:[#allocation4] sm:$0xff]
    %v4055 = vld [vmem:[#allocation4 + $0x8] sm:$0xff]
    %v4056 = vld [vmem:[#allocation5] sm:$0xff]
    %v4057 = vld [vmem:[#allocation5 + $0x8] sm:$0xff]
    %v4058 = vpack.c.bf16 %v4055, %v4054
    %s4059 = scalar_lea.vmem %s12, 512
    %v4060 = vld [vmem:[%s4059] sm:$0xff]
    %v4061 = vld [vmem:[%s4059 + $0x8] sm:$0xff]
    %v4062 = vld [vmem:[%s4059 + $0x10] sm:$0xff]
    %v4063 = vld [vmem:[%s4059 + $0x18] sm:$0xff]
    %v4064 = vld [vmem:[%s4059 + $0x20] sm:$0xff]
    %v4065 = vld [vmem:[%s4059 + $0x28] sm:$0xff]
    %v4066 = vld [vmem:[%s4059 + $0x30] sm:$0xff]
    %v4067 = vld [vmem:[%s4059 + $0x38] sm:$0xff]
    %v4068 = vld [vmem:[%s4059 + $0x40] sm:$0xff]
    %v4069 = vld [vmem:[%s4059 + $0x48] sm:$0xff]
    %v4070 = vld [vmem:[%s4059 + $0x50] sm:$0xff]
    %v4071 = vld [vmem:[%s4059 + $0x58] sm:$0xff]
    %v4072 = vld [vmem:[%s4059 + $0x60] sm:$0xff]
    %v4073 = vld [vmem:[%s4059 + $0x68] sm:$0xff]
    %v4074 = vld [vmem:[%s4059 + $0x70] sm:$0xff]
    %v4075 = vld [vmem:[%s4059 + $0x78] sm:$0xff]
    %v4076 = vld [vmem:[%s4059 + $0x80] sm:$0xff]
    %v4077 = vld [vmem:[%s4059 + $0x88] sm:$0xff]
    %v4078 = vld [vmem:[%s4059 + $0x90] sm:$0xff]
    %v4079 = vld [vmem:[%s4059 + $0x98] sm:$0xff]
    %v4080 = vld [vmem:[%s4059 + $0xa0] sm:$0xff]
    %v4081 = vld [vmem:[%s4059 + $0xa8] sm:$0xff]
    %v4082 = vld [vmem:[%s4059 + $0xb0] sm:$0xff]
    %v4083 = vld [vmem:[%s4059 + $0xb8] sm:$0xff]
    %v4084 = vld [vmem:[%s4059 + $0xc0] sm:$0xff]
    %v4085 = vld [vmem:[%s4059 + $0xc8] sm:$0xff]
    %v4086 = vld [vmem:[%s4059 + $0xd0] sm:$0xff]
    %v4087 = vld [vmem:[%s4059 + $0xd8] sm:$0xff]
    %v4088 = vld [vmem:[%s4059 + $0xe0] sm:$0xff]
    %v4089 = vld [vmem:[%s4059 + $0xe8] sm:$0xff]
    %v4090 = vld [vmem:[%s4059 + $0xf0] sm:$0xff]
    %v4091 = vld [vmem:[%s4059 + $0xf8] sm:$0xff]
    %s4092 = scalar_lea.vmem [#allocation14], 8
    %v4093 = vld [vmem:[%s4092] sm:$0xf]
    %v4095 = vperm.slane %v4093, 0
    %v4096 = vperm.slane %v4093, 1
    %v4097 = vperm.slane %v4093, 2
    %v4098 = vperm.slane %v4093, 3
    %v4135 = vunpack.c.l.b16 %v4060
    %v4136 = vunpack.c.h.b16 %v4060
    %v4137 = vunpack.c.l.b16 %v4061
    %v4138 = vunpack.c.h.b16 %v4061
    %v4139 = vunpack.c.l.b16 %v4062
    %v4140 = vunpack.c.h.b16 %v4062
    %v4141 = vunpack.c.l.b16 %v4063
    %v4142 = vunpack.c.h.b16 %v4063
    %v4143 = vunpack.c.l.b16 %v4064
    %v4144 = vunpack.c.h.b16 %v4064
    %v4145 = vunpack.c.l.b16 %v4065
    %v4146 = vunpack.c.h.b16 %v4065
    %v4147 = vunpack.c.l.b16 %v4066
    %v4148 = vunpack.c.h.b16 %v4066
    %v4149 = vunpack.c.l.b16 %v4067
    %v4150 = vunpack.c.h.b16 %v4067
    %v4151 = vunpack.c.l.b16 %v4068
    %v4152 = vunpack.c.h.b16 %v4068
    %v4153 = vunpack.c.l.b16 %v4069
    %v4154 = vunpack.c.h.b16 %v4069
    %v4155 = vunpack.c.l.b16 %v4070
    %v4156 = vunpack.c.h.b16 %v4070
    %v4157 = vunpack.c.l.b16 %v4071
    %v4158 = vunpack.c.h.b16 %v4071
    %v4159 = vunpack.c.l.b16 %v4072
    %v4160 = vunpack.c.h.b16 %v4072
    %v4161 = vunpack.c.l.b16 %v4073
    %v4162 = vunpack.c.h.b16 %v4073
    %v4163 = vunpack.c.l.b16 %v4074
    %v4164 = vunpack.c.h.b16 %v4074
    %v4165 = vunpack.c.l.b16 %v4075
    %v4166 = vunpack.c.h.b16 %v4075
    %v4167 = vunpack.c.l.b16 %v4076
    %v4168 = vunpack.c.h.b16 %v4076
    %v4169 = vunpack.c.l.b16 %v4077
    %v4170 = vunpack.c.h.b16 %v4077
    %v4171 = vunpack.c.l.b16 %v4078
    %v4172 = vunpack.c.h.b16 %v4078
    %v4173 = vunpack.c.l.b16 %v4079
    %v4174 = vunpack.c.h.b16 %v4079
    %v4175 = vunpack.c.l.b16 %v4080
    %v4176 = vunpack.c.h.b16 %v4080
    %v4177 = vunpack.c.l.b16 %v4081
    %v4178 = vunpack.c.h.b16 %v4081
    %v4179 = vunpack.c.l.b16 %v4082
    %v4180 = vunpack.c.h.b16 %v4082
    %v4181 = vunpack.c.l.b16 %v4083
    %v4182 = vunpack.c.h.b16 %v4083
    %v4183 = vunpack.c.l.b16 %v4084
    %v4184 = vunpack.c.h.b16 %v4084
    %v4185 = vunpack.c.l.b16 %v4085
    %v4186 = vunpack.c.h.b16 %v4085
    %v4187 = vunpack.c.l.b16 %v4086
    %v4188 = vunpack.c.h.b16 %v4086
    %v4189 = vunpack.c.l.b16 %v4087
    %v4190 = vunpack.c.h.b16 %v4087
    %v4191 = vunpack.c.l.b16 %v4088
    %v4192 = vunpack.c.h.b16 %v4088
    %v4193 = vunpack.c.l.b16 %v4089
    %v4194 = vunpack.c.h.b16 %v4089
    %v4195 = vunpack.c.l.b16 %v4090
    %v4196 = vunpack.c.h.b16 %v4090
    %v4197 = vunpack.c.l.b16 %v4091
    %v4198 = vunpack.c.h.b16 %v4091
    %v4199 = vpack.c.b16 %v4139, %v4135
    %v4200 = vpack.c.b16 %v4140, %v4136
    %v4201 = vpack.c.b16 %v4141, %v4137
    %v4202 = vpack.c.b16 %v4142, %v4138
    %v4203 = vpack.c.b16 %v4147, %v4143
    %v4204 = vpack.c.b16 %v4148, %v4144
    %v4205 = vpack.c.b16 %v4149, %v4145
    %v4206 = vpack.c.b16 %v4150, %v4146
    %v4207 = vpack.c.b16 %v4155, %v4151
    %v4208 = vpack.c.b16 %v4156, %v4152
    %v4209 = vpack.c.b16 %v4157, %v4153
    %v4210 = vpack.c.b16 %v4158, %v4154
    %v4211 = vpack.c.b16 %v4163, %v4159
    %v4212 = vpack.c.b16 %v4164, %v4160
    %v4213 = vpack.c.b16 %v4165, %v4161
    %v4214 = vpack.c.b16 %v4166, %v4162
    %v4215 = vpack.c.b16 %v4171, %v4167
    %v4216 = vpack.c.b16 %v4172, %v4168
    %v4217 = vpack.c.b16 %v4173, %v4169
    %v4218 = vpack.c.b16 %v4174, %v4170
    %v4219 = vpack.c.b16 %v4179, %v4175
    %v4220 = vpack.c.b16 %v4180, %v4176
    %v4221 = vpack.c.b16 %v4181, %v4177
    %v4222 = vpack.c.b16 %v4182, %v4178
    %v4223 = vpack.c.b16 %v4187, %v4183
    %v4224 = vpack.c.b16 %v4188, %v4184
    %v4225 = vpack.c.b16 %v4189, %v4185
    %v4226 = vpack.c.b16 %v4190, %v4186
    %v4227 = vpack.c.b16 %v4195, %v4191
    %v4228 = vpack.c.b16 %v4196, %v4192
    %v4229 = vpack.c.b16 %v4197, %v4193
    %v4230 = vpack.c.b16 %v4198, %v4194
    %4263 = vmatpush.bf16.msra.mxu0 %v4227
    %4264 = vmatpush.bf16.msra.mxu0 %v4223
    %4265 = vmatpush.bf16.msra.mxu0 %v4219
    %4266 = vmatpush.bf16.msra.mxu0 %v4215
    %4267 = vmatpush.bf16.msra.mxu0 %v4211
    %4268 = vmatpush.bf16.msra.mxu0 %v4207
    %4269 = vmatpush.bf16.msra.mxu0 %v4203
    %4270 = vmatpush.bf16.msra.mxu0 %v4199
    %4271 = vmatmul.bf16.gmra.mxu0 %v4058
    %v4272 = vpop.f32.mrf.mxu0
    %v4273 = vadd.f32 %v4095, %v4272
    %v4274 = vpop.f32.mrf.mxu0
    %v4275 = vadd.f32 %v4095, %v4274
    %4276 = vdwg.mxu0
    %4277 = vmatpush.bf16.msra.mxu0 %v4228
    %4278 = vmatpush.bf16.msra.mxu0 %v4224
    %4279 = vmatpush.bf16.msra.mxu0 %v4220
    %4280 = vmatpush.bf16.msra.mxu0 %v4216
    %4281 = vmatpush.bf16.msra.mxu0 %v4212
    %4282 = vmatpush.bf16.msra.mxu0 %v4208
    %4283 = vmatpush.bf16.msra.mxu0 %v4204
    %4284 = vmatpush.bf16.msra.mxu0 %v4200
    %4285 = vmatmul.bf16.gmra.mxu0 %v4058
    %v4286 = vpop.f32.mrf.mxu0
    %v4287 = vadd.f32 %v4096, %v4286
    %v4288 = vpop.f32.mrf.mxu0
    %v4289 = vadd.f32 %v4096, %v4288
    %4290 = vdwg.mxu0
    %4291 = vmatpush.bf16.msra.mxu0 %v4229
    %4292 = vmatpush.bf16.msra.mxu0 %v4225
    %4293 = vmatpush.bf16.msra.mxu0 %v4221
    %4294 = vmatpush.bf16.msra.mxu0 %v4217
    %4295 = vmatpush.bf16.msra.mxu0 %v4213
    %4296 = vmatpush.bf16.msra.mxu0 %v4209
    %4297 = vmatpush.bf16.msra.mxu0 %v4205
    %4298 = vmatpush.bf16.msra.mxu0 %v4201
    %4299 = vmatmul.bf16.gmra.mxu0 %v4058
    %v4300 = vpop.f32.mrf.mxu0
    %v4301 = vadd.f32 %v4097, %v4300
    %v4302 = vpop.f32.mrf.mxu0
    %v4303 = vadd.f32 %v4097, %v4302
    %4304 = vdwg.mxu0
    %4305 = vmatpush.bf16.msra.mxu0 %v4230
    %4306 = vmatpush.bf16.msra.mxu0 %v4226
    %4307 = vmatpush.bf16.msra.mxu0 %v4222
    %4308 = vmatpush.bf16.msra.mxu0 %v4218
    %4309 = vmatpush.bf16.msra.mxu0 %v4214
    %4310 = vmatpush.bf16.msra.mxu0 %v4210
    %4311 = vmatpush.bf16.msra.mxu0 %v4206
    %4312 = vmatpush.bf16.msra.mxu0 %v4202
    %4313 = vmatmul.bf16.gmra.mxu0 %v4058
    %v4314 = vpop.f32.mrf.mxu0
    %v4315 = vadd.f32 %v4098, %v4314
    %v4316 = vpop.f32.mrf.mxu0
    %v4317 = vadd.f32 %v4098, %v4316
    %4318 = vdwg.mxu0
    %4319 = vst [vmem:[#allocation2] sm:$0xff] %v4273
    %4320 = vst [vmem:[#allocation2 + $0x8] sm:$0xff] %v4287
    %4321 = vst [vmem:[#allocation2 + $0x10] sm:$0xff] %v4301
    %4322 = vst [vmem:[#allocation2 + $0x18] sm:$0xff] %v4315
    %4323 = vst [vmem:[#allocation2 + $0x20] sm:$0xff] %v4275
    %4324 = vst [vmem:[#allocation2 + $0x28] sm:$0xff] %v4289
    %4325 = vst [vmem:[#allocation2 + $0x30] sm:$0xff] %v4303
    %4326 = vst [vmem:[#allocation2 + $0x38] sm:$0xff] %v4317
    %v4327 = vpack.c.bf16 %v4057, %v4056
    %s4328 = scalar_lea.vmem %s12, 768
    %v4329 = vld [vmem:[%s4328] sm:$0xff]
    %v4330 = vld [vmem:[%s4328 + $0x8] sm:$0xff]
    %v4331 = vld [vmem:[%s4328 + $0x10] sm:$0xff]
    %v4332 = vld [vmem:[%s4328 + $0x18] sm:$0xff]
    %v4333 = vld [vmem:[%s4328 + $0x20] sm:$0xff]
    %v4334 = vld [vmem:[%s4328 + $0x28] sm:$0xff]
    %v4335 = vld [vmem:[%s4328 + $0x30] sm:$0xff]
    %v4336 = vld [vmem:[%s4328 + $0x38] sm:$0xff]
    %v4337 = vld [vmem:[%s4328 + $0x40] sm:$0xff]
    %v4338 = vld [vmem:[%s4328 + $0x48] sm:$0xff]
    %v4339 = vld [vmem:[%s4328 + $0x50] sm:$0xff]
    %v4340 = vld [vmem:[%s4328 + $0x58] sm:$0xff]
    %v4341 = vld [vmem:[%s4328 + $0x60] sm:$0xff]
    %v4342 = vld [vmem:[%s4328 + $0x68] sm:$0xff]
    %v4343 = vld [vmem:[%s4328 + $0x70] sm:$0xff]
    %v4344 = vld [vmem:[%s4328 + $0x78] sm:$0xff]
    %v4345 = vld [vmem:[%s4328 + $0x80] sm:$0xff]
    %v4346 = vld [vmem:[%s4328 + $0x88] sm:$0xff]
    %v4347 = vld [vmem:[%s4328 + $0x90] sm:$0xff]
    %v4348 = vld [vmem:[%s4328 + $0x98] sm:$0xff]
    %v4349 = vld [vmem:[%s4328 + $0xa0] sm:$0xff]
    %v4350 = vld [vmem:[%s4328 + $0xa8] sm:$0xff]
    %v4351 = vld [vmem:[%s4328 + $0xb0] sm:$0xff]
    %v4352 = vld [vmem:[%s4328 + $0xb8] sm:$0xff]
    %v4353 = vld [vmem:[%s4328 + $0xc0] sm:$0xff]
    %v4354 = vld [vmem:[%s4328 + $0xc8] sm:$0xff]
    %v4355 = vld [vmem:[%s4328 + $0xd0] sm:$0xff]
    %v4356 = vld [vmem:[%s4328 + $0xd8] sm:$0xff]
    %v4357 = vld [vmem:[%s4328 + $0xe0] sm:$0xff]
    %v4358 = vld [vmem:[%s4328 + $0xe8] sm:$0xff]
    %v4359 = vld [vmem:[%s4328 + $0xf0] sm:$0xff]
    %v4360 = vld [vmem:[%s4328 + $0xf8] sm:$0xff]
    %s4361 = scalar_lea.vmem [#allocation14], 12
    %v4362 = vld [vmem:[%s4361] sm:$0xf]
    %v4364 = vperm.slane %v4362, 0
    %v4365 = vperm.slane %v4362, 1
    %v4366 = vperm.slane %v4362, 2
    %v4367 = vperm.slane %v4362, 3
    %v4404 = vunpack.c.l.b16 %v4329
    %v4405 = vunpack.c.h.b16 %v4329
    %v4406 = vunpack.c.l.b16 %v4330
    %v4407 = vunpack.c.h.b16 %v4330
    %v4408 = vunpack.c.l.b16 %v4331
    %v4409 = vunpack.c.h.b16 %v4331
    %v4410 = vunpack.c.l.b16 %v4332
    %v4411 = vunpack.c.h.b16 %v4332
    %v4412 = vunpack.c.l.b16 %v4333
    %v4413 = vunpack.c.h.b16 %v4333
    %v4414 = vunpack.c.l.b16 %v4334
    %v4415 = vunpack.c.h.b16 %v4334
    %v4416 = vunpack.c.l.b16 %v4335
    %v4417 = vunpack.c.h.b16 %v4335
    %v4418 = vunpack.c.l.b16 %v4336
    %v4419 = vunpack.c.h.b16 %v4336
    %v4420 = vunpack.c.l.b16 %v4337
    %v4421 = vunpack.c.h.b16 %v4337
    %v4422 = vunpack.c.l.b16 %v4338
    %v4423 = vunpack.c.h.b16 %v4338
    %v4424 = vunpack.c.l.b16 %v4339
    %v4425 = vunpack.c.h.b16 %v4339
    %v4426 = vunpack.c.l.b16 %v4340
    %v4427 = vunpack.c.h.b16 %v4340
    %v4428 = vunpack.c.l.b16 %v4341
    %v4429 = vunpack.c.h.b16 %v4341
    %v4430 = vunpack.c.l.b16 %v4342
    %v4431 = vunpack.c.h.b16 %v4342
    %v4432 = vunpack.c.l.b16 %v4343
    %v4433 = vunpack.c.h.b16 %v4343
    %v4434 = vunpack.c.l.b16 %v4344
    %v4435 = vunpack.c.h.b16 %v4344
    %v4436 = vunpack.c.l.b16 %v4345
    %v4437 = vunpack.c.h.b16 %v4345
    %v4438 = vunpack.c.l.b16 %v4346
    %v4439 = vunpack.c.h.b16 %v4346
    %v4440 = vunpack.c.l.b16 %v4347
    %v4441 = vunpack.c.h.b16 %v4347
    %v4442 = vunpack.c.l.b16 %v4348
    %v4443 = vunpack.c.h.b16 %v4348
    %v4444 = vunpack.c.l.b16 %v4349
    %v4445 = vunpack.c.h.b16 %v4349
    %v4446 = vunpack.c.l.b16 %v4350
    %v4447 = vunpack.c.h.b16 %v4350
    %v4448 = vunpack.c.l.b16 %v4351
    %v4449 = vunpack.c.h.b16 %v4351
    %v4450 = vunpack.c.l.b16 %v4352
    %v4451 = vunpack.c.h.b16 %v4352
    %v4452 = vunpack.c.l.b16 %v4353
    %v4453 = vunpack.c.h.b16 %v4353
    %v4454 = vunpack.c.l.b16 %v4354
    %v4455 = vunpack.c.h.b16 %v4354
    %v4456 = vunpack.c.l.b16 %v4355
    %v4457 = vunpack.c.h.b16 %v4355
    %v4458 = vunpack.c.l.b16 %v4356
    %v4459 = vunpack.c.h.b16 %v4356
    %v4460 = vunpack.c.l.b16 %v4357
    %v4461 = vunpack.c.h.b16 %v4357
    %v4462 = vunpack.c.l.b16 %v4358
    %v4463 = vunpack.c.h.b16 %v4358
    %v4464 = vunpack.c.l.b16 %v4359
    %v4465 = vunpack.c.h.b16 %v4359
    %v4466 = vunpack.c.l.b16 %v4360
    %v4467 = vunpack.c.h.b16 %v4360
    %v4468 = vpack.c.b16 %v4408, %v4404
    %v4469 = vpack.c.b16 %v4409, %v4405
    %v4470 = vpack.c.b16 %v4410, %v4406
    %v4471 = vpack.c.b16 %v4411, %v4407
    %v4472 = vpack.c.b16 %v4416, %v4412
    %v4473 = vpack.c.b16 %v4417, %v4413
    %v4474 = vpack.c.b16 %v4418, %v4414
    %v4475 = vpack.c.b16 %v4419, %v4415
    %v4476 = vpack.c.b16 %v4424, %v4420
    %v4477 = vpack.c.b16 %v4425, %v4421
    %v4478 = vpack.c.b16 %v4426, %v4422
    %v4479 = vpack.c.b16 %v4427, %v4423
    %v4480 = vpack.c.b16 %v4432, %v4428
    %v4481 = vpack.c.b16 %v4433, %v4429
    %v4482 = vpack.c.b16 %v4434, %v4430
    %v4483 = vpack.c.b16 %v4435, %v4431
    %v4484 = vpack.c.b16 %v4440, %v4436
    %v4485 = vpack.c.b16 %v4441, %v4437
    %v4486 = vpack.c.b16 %v4442, %v4438
    %v4487 = vpack.c.b16 %v4443, %v4439
    %v4488 = vpack.c.b16 %v4448, %v4444
    %v4489 = vpack.c.b16 %v4449, %v4445
    %v4490 = vpack.c.b16 %v4450, %v4446
    %v4491 = vpack.c.b16 %v4451, %v4447
    %v4492 = vpack.c.b16 %v4456, %v4452
    %v4493 = vpack.c.b16 %v4457, %v4453
    %v4494 = vpack.c.b16 %v4458, %v4454
    %v4495 = vpack.c.b16 %v4459, %v4455
    %v4496 = vpack.c.b16 %v4464, %v4460
    %v4497 = vpack.c.b16 %v4465, %v4461
    %v4498 = vpack.c.b16 %v4466, %v4462
    %v4499 = vpack.c.b16 %v4467, %v4463
    %4532 = vmatpush.bf16.msra.mxu0 %v4496
    %4533 = vmatpush.bf16.msra.mxu0 %v4492
    %4534 = vmatpush.bf16.msra.mxu0 %v4488
    %4535 = vmatpush.bf16.msra.mxu0 %v4484
    %4536 = vmatpush.bf16.msra.mxu0 %v4480
    %4537 = vmatpush.bf16.msra.mxu0 %v4476
    %4538 = vmatpush.bf16.msra.mxu0 %v4472
    %4539 = vmatpush.bf16.msra.mxu0 %v4468
    %4540 = vmatmul.bf16.gmra.mxu0 %v4327
    %v4541 = vpop.f32.mrf.mxu0
    %v4542 = vadd.f32 %v4364, %v4541
    %v4543 = vpop.f32.mrf.mxu0
    %v4544 = vadd.f32 %v4364, %v4543
    %4545 = vdwg.mxu0
    %4546 = vmatpush.bf16.msra.mxu0 %v4497
    %4547 = vmatpush.bf16.msra.mxu0 %v4493
    %4548 = vmatpush.bf16.msra.mxu0 %v4489
    %4549 = vmatpush.bf16.msra.mxu0 %v4485
    %4550 = vmatpush.bf16.msra.mxu0 %v4481
    %4551 = vmatpush.bf16.msra.mxu0 %v4477
    %4552 = vmatpush.bf16.msra.mxu0 %v4473
    %4553 = vmatpush.bf16.msra.mxu0 %v4469
    %4554 = vmatmul.bf16.gmra.mxu0 %v4327
    %v4555 = vpop.f32.mrf.mxu0
    %v4556 = vadd.f32 %v4365, %v4555
    %v4557 = vpop.f32.mrf.mxu0
    %v4558 = vadd.f32 %v4365, %v4557
    %4559 = vdwg.mxu0
    %4560 = vmatpush.bf16.msra.mxu0 %v4498
    %4561 = vmatpush.bf16.msra.mxu0 %v4494
    %4562 = vmatpush.bf16.msra.mxu0 %v4490
    %4563 = vmatpush.bf16.msra.mxu0 %v4486
    %4564 = vmatpush.bf16.msra.mxu0 %v4482
    %4565 = vmatpush.bf16.msra.mxu0 %v4478
    %4566 = vmatpush.bf16.msra.mxu0 %v4474
    %4567 = vmatpush.bf16.msra.mxu0 %v4470
    %4568 = vmatmul.bf16.gmra.mxu0 %v4327
    %v4569 = vpop.f32.mrf.mxu0
    %v4570 = vadd.f32 %v4366, %v4569
    %v4571 = vpop.f32.mrf.mxu0
    %v4572 = vadd.f32 %v4366, %v4571
    %4573 = vdwg.mxu0
    %4574 = vmatpush.bf16.msra.mxu0 %v4499
    %4575 = vmatpush.bf16.msra.mxu0 %v4495
    %4576 = vmatpush.bf16.msra.mxu0 %v4491
    %4577 = vmatpush.bf16.msra.mxu0 %v4487
    %4578 = vmatpush.bf16.msra.mxu0 %v4483
    %4579 = vmatpush.bf16.msra.mxu0 %v4479
    %4580 = vmatpush.bf16.msra.mxu0 %v4475
    %4581 = vmatpush.bf16.msra.mxu0 %v4471
    %4582 = vmatmul.bf16.gmra.mxu0 %v4327
    %v4583 = vpop.f32.mrf.mxu0
    %v4584 = vadd.f32 %v4367, %v4583
    %v4585 = vpop.f32.mrf.mxu0
    %v4586 = vadd.f32 %v4367, %v4585
    %4587 = vdwg.mxu0
    %4588 = vst [vmem:[#allocation3] sm:$0xff] %v4542
    %4589 = vst [vmem:[#allocation3 + $0x8] sm:$0xff] %v4556
    %4590 = vst [vmem:[#allocation3 + $0x10] sm:$0xff] %v4570
    %4591 = vst [vmem:[#allocation3 + $0x18] sm:$0xff] %v4584
    %4592 = vst [vmem:[#allocation3 + $0x20] sm:$0xff] %v4544
    %4593 = vst [vmem:[#allocation3 + $0x28] sm:$0xff] %v4558
    %4594 = vst [vmem:[#allocation3 + $0x30] sm:$0xff] %v4572
    %4595 = vst [vmem:[#allocation3 + $0x38] sm:$0xff] %v4586
    %v4596 = vld [vmem:[#allocation2] sm:$0x3]
    %v4597 = vld [vmem:[#allocation2 + $0x8] sm:$0x3]
    %v4598 = vld [vmem:[#allocation2 + $0x10] sm:$0x3]
    %v4599 = vld [vmem:[#allocation2 + $0x18] sm:$0x3]
    %v4600 = vld [vmem:[#allocation3 + $0x20] sm:$0xc0]
    %v4601 = vld [vmem:[#allocation3 + $0x28] sm:$0xc0]
    %v4602 = vld [vmem:[#allocation3 + $0x30] sm:$0xc0]
    %v4603 = vld [vmem:[#allocation3 + $0x38] sm:$0xc0]
    %v4608 = vrot.slane %v4600, 4
    %v4609 = vrot.slane %v4601, 4
    %v4610 = vrot.slane %v4602, 4
    %v4611 = vrot.slane %v4603, 4
    %v4616 = vsel %vm1610, %v4596, %v4608
    %v4617 = vsel %vm1610, %v4597, %v4609
    %v4618 = vsel %vm1610, %v4598, %v4610
    %v4619 = vsel %vm1610, %v4599, %v4611
    %s4620 = scalar_lea.vmem %s13, 512
    %v4621 = vld [vmem:[%s4620] sm:$0xff]
    %v4622 = vld [vmem:[%s4620 + $0x8] sm:$0xff]
    %v4623 = vld [vmem:[%s4620 + $0x10] sm:$0xff]
    %v4624 = vld [vmem:[%s4620 + $0x18] sm:$0xff]
    %v4625 = vld [vmem:[%s4620 + $0x20] sm:$0xff]
    %v4626 = vld [vmem:[%s4620 + $0x28] sm:$0xff]
    %v4627 = vld [vmem:[%s4620 + $0x30] sm:$0xff]
    %v4628 = vld [vmem:[%s4620 + $0x38] sm:$0xff]
    %v4629 = vld [vmem:[%s4620 + $0x40] sm:$0xff]
    %v4630 = vld [vmem:[%s4620 + $0x48] sm:$0xff]
    %v4631 = vld [vmem:[%s4620 + $0x50] sm:$0xff]
    %v4632 = vld [vmem:[%s4620 + $0x58] sm:$0xff]
    %v4633 = vld [vmem:[%s4620 + $0x60] sm:$0xff]
    %v4634 = vld [vmem:[%s4620 + $0x68] sm:$0xff]
    %v4635 = vld [vmem:[%s4620 + $0x70] sm:$0xff]
    %v4636 = vld [vmem:[%s4620 + $0x78] sm:$0xff]
    %v4637 = vld [vmem:[%s4620 + $0x80] sm:$0xff]
    %v4638 = vld [vmem:[%s4620 + $0x88] sm:$0xff]
    %v4639 = vld [vmem:[%s4620 + $0x90] sm:$0xff]
    %v4640 = vld [vmem:[%s4620 + $0x98] sm:$0xff]
    %v4641 = vld [vmem:[%s4620 + $0xa0] sm:$0xff]
    %v4642 = vld [vmem:[%s4620 + $0xa8] sm:$0xff]
    %v4643 = vld [vmem:[%s4620 + $0xb0] sm:$0xff]
    %v4644 = vld [vmem:[%s4620 + $0xb8] sm:$0xff]
    %v4645 = vld [vmem:[%s4620 + $0xc0] sm:$0xff]
    %v4646 = vld [vmem:[%s4620 + $0xc8] sm:$0xff]
    %v4647 = vld [vmem:[%s4620 + $0xd0] sm:$0xff]
    %v4648 = vld [vmem:[%s4620 + $0xd8] sm:$0xff]
    %v4649 = vld [vmem:[%s4620 + $0xe0] sm:$0xff]
    %v4650 = vld [vmem:[%s4620 + $0xe8] sm:$0xff]
    %v4651 = vld [vmem:[%s4620 + $0xf0] sm:$0xff]
    %v4652 = vld [vmem:[%s4620 + $0xf8] sm:$0xff]
    %v4653 = vld [vmem:[%s4620 + $0x100] sm:$0xff]
    %v4654 = vld [vmem:[%s4620 + $0x108] sm:$0xff]
    %v4655 = vld [vmem:[%s4620 + $0x110] sm:$0xff]
    %v4656 = vld [vmem:[%s4620 + $0x118] sm:$0xff]
    %v4657 = vld [vmem:[%s4620 + $0x120] sm:$0xff]
    %v4658 = vld [vmem:[%s4620 + $0x128] sm:$0xff]
    %v4659 = vld [vmem:[%s4620 + $0x130] sm:$0xff]
    %v4660 = vld [vmem:[%s4620 + $0x138] sm:$0xff]
    %v4661 = vld [vmem:[%s4620 + $0x140] sm:$0xff]
    %v4662 = vld [vmem:[%s4620 + $0x148] sm:$0xff]
    %v4663 = vld [vmem:[%s4620 + $0x150] sm:$0xff]
    %v4664 = vld [vmem:[%s4620 + $0x158] sm:$0xff]
    %v4665 = vld [vmem:[%s4620 + $0x160] sm:$0xff]
    %v4666 = vld [vmem:[%s4620 + $0x168] sm:$0xff]
    %v4667 = vld [vmem:[%s4620 + $0x170] sm:$0xff]
    %v4668 = vld [vmem:[%s4620 + $0x178] sm:$0xff]
    %v4669 = vld [vmem:[%s4620 + $0x180] sm:$0xff]
    %v4670 = vld [vmem:[%s4620 + $0x188] sm:$0xff]
    %v4671 = vld [vmem:[%s4620 + $0x190] sm:$0xff]
    %v4672 = vld [vmem:[%s4620 + $0x198] sm:$0xff]
    %v4673 = vld [vmem:[%s4620 + $0x1a0] sm:$0xff]
    %v4674 = vld [vmem:[%s4620 + $0x1a8] sm:$0xff]
    %v4675 = vld [vmem:[%s4620 + $0x1b0] sm:$0xff]
    %v4676 = vld [vmem:[%s4620 + $0x1b8] sm:$0xff]
    %v4677 = vld [vmem:[%s4620 + $0x1c0] sm:$0xff]
    %v4678 = vld [vmem:[%s4620 + $0x1c8] sm:$0xff]
    %v4679 = vld [vmem:[%s4620 + $0x1d0] sm:$0xff]
    %v4680 = vld [vmem:[%s4620 + $0x1d8] sm:$0xff]
    %v4681 = vld [vmem:[%s4620 + $0x1e0] sm:$0xff]
    %v4682 = vld [vmem:[%s4620 + $0x1e8] sm:$0xff]
    %v4683 = vld [vmem:[%s4620 + $0x1f0] sm:$0xff]
    %v4684 = vld [vmem:[%s4620 + $0x1f8] sm:$0xff]
    %v4749 = vunpack.c.l.b16 %v4621
    %v4750 = vunpack.c.h.b16 %v4621
    %v4751 = vunpack.c.l.b16 %v4622
    %v4752 = vunpack.c.h.b16 %v4622
    %v4753 = vunpack.c.l.b16 %v4623
    %v4754 = vunpack.c.h.b16 %v4623
    %v4755 = vunpack.c.l.b16 %v4624
    %v4756 = vunpack.c.h.b16 %v4624
    %v4757 = vunpack.c.l.b16 %v4625
    %v4758 = vunpack.c.h.b16 %v4625
    %v4759 = vunpack.c.l.b16 %v4626
    %v4760 = vunpack.c.h.b16 %v4626
    %v4761 = vunpack.c.l.b16 %v4627
    %v4762 = vunpack.c.h.b16 %v4627
    %v4763 = vunpack.c.l.b16 %v4628
    %v4764 = vunpack.c.h.b16 %v4628
    %v4765 = vunpack.c.l.b16 %v4629
    %v4766 = vunpack.c.h.b16 %v4629
    %v4767 = vunpack.c.l.b16 %v4630
    %v4768 = vunpack.c.h.b16 %v4630
    %v4769 = vunpack.c.l.b16 %v4631
    %v4770 = vunpack.c.h.b16 %v4631
    %v4771 = vunpack.c.l.b16 %v4632
    %v4772 = vunpack.c.h.b16 %v4632
    %v4773 = vunpack.c.l.b16 %v4633
    %v4774 = vunpack.c.h.b16 %v4633
    %v4775 = vunpack.c.l.b16 %v4634
    %v4776 = vunpack.c.h.b16 %v4634
    %v4777 = vunpack.c.l.b16 %v4635
    %v4778 = vunpack.c.h.b16 %v4635
    %v4779 = vunpack.c.l.b16 %v4636
    %v4780 = vunpack.c.h.b16 %v4636
    %v4781 = vunpack.c.l.b16 %v4637
    %v4782 = vunpack.c.h.b16 %v4637
    %v4783 = vunpack.c.l.b16 %v4638
    %v4784 = vunpack.c.h.b16 %v4638
    %v4785 = vunpack.c.l.b16 %v4639
    %v4786 = vunpack.c.h.b16 %v4639
    %v4787 = vunpack.c.l.b16 %v4640
    %v4788 = vunpack.c.h.b16 %v4640
    %v4789 = vunpack.c.l.b16 %v4641
    %v4790 = vunpack.c.h.b16 %v4641
    %v4791 = vunpack.c.l.b16 %v4642
    %v4792 = vunpack.c.h.b16 %v4642
    %v4793 = vunpack.c.l.b16 %v4643
    %v4794 = vunpack.c.h.b16 %v4643
    %v4795 = vunpack.c.l.b16 %v4644
    %v4796 = vunpack.c.h.b16 %v4644
    %v4797 = vunpack.c.l.b16 %v4645
    %v4798 = vunpack.c.h.b16 %v4645
    %v4799 = vunpack.c.l.b16 %v4646
    %v4800 = vunpack.c.h.b16 %v4646
    %v4801 = vunpack.c.l.b16 %v4647
    %v4802 = vunpack.c.h.b16 %v4647
    %v4803 = vunpack.c.l.b16 %v4648
    %v4804 = vunpack.c.h.b16 %v4648
    %v4805 = vunpack.c.l.b16 %v4649
    %v4806 = vunpack.c.h.b16 %v4649
    %v4807 = vunpack.c.l.b16 %v4650
    %v4808 = vunpack.c.h.b16 %v4650
    %v4809 = vunpack.c.l.b16 %v4651
    %v4810 = vunpack.c.h.b16 %v4651
    %v4811 = vunpack.c.l.b16 %v4652
    %v4812 = vunpack.c.h.b16 %v4652
    %v4813 = vunpack.c.l.b16 %v4653
    %v4814 = vunpack.c.h.b16 %v4653
    %v4815 = vunpack.c.l.b16 %v4654
    %v4816 = vunpack.c.h.b16 %v4654
    %v4817 = vunpack.c.l.b16 %v4655
    %v4818 = vunpack.c.h.b16 %v4655
    %v4819 = vunpack.c.l.b16 %v4656
    %v4820 = vunpack.c.h.b16 %v4656
    %v4821 = vunpack.c.l.b16 %v4657
    %v4822 = vunpack.c.h.b16 %v4657
    %v4823 = vunpack.c.l.b16 %v4658
    %v4824 = vunpack.c.h.b16 %v4658
    %v4825 = vunpack.c.l.b16 %v4659
    %v4826 = vunpack.c.h.b16 %v4659
    %v4827 = vunpack.c.l.b16 %v4660
    %v4828 = vunpack.c.h.b16 %v4660
    %v4829 = vunpack.c.l.b16 %v4661
    %v4830 = vunpack.c.h.b16 %v4661
    %v4831 = vunpack.c.l.b16 %v4662
    %v4832 = vunpack.c.h.b16 %v4662
    %v4833 = vunpack.c.l.b16 %v4663
    %v4834 = vunpack.c.h.b16 %v4663
    %v4835 = vunpack.c.l.b16 %v4664
    %v4836 = vunpack.c.h.b16 %v4664
    %v4837 = vunpack.c.l.b16 %v4665
    %v4838 = vunpack.c.h.b16 %v4665
    %v4839 = vunpack.c.l.b16 %v4666
    %v4840 = vunpack.c.h.b16 %v4666
    %v4841 = vunpack.c.l.b16 %v4667
    %v4842 = vunpack.c.h.b16 %v4667
    %v4843 = vunpack.c.l.b16 %v4668
    %v4844 = vunpack.c.h.b16 %v4668
    %v4845 = vunpack.c.l.b16 %v4669
    %v4846 = vunpack.c.h.b16 %v4669
    %v4847 = vunpack.c.l.b16 %v4670
    %v4848 = vunpack.c.h.b16 %v4670
    %v4849 = vunpack.c.l.b16 %v4671
    %v4850 = vunpack.c.h.b16 %v4671
    %v4851 = vunpack.c.l.b16 %v4672
    %v4852 = vunpack.c.h.b16 %v4672
    %v4853 = vunpack.c.l.b16 %v4673
    %v4854 = vunpack.c.h.b16 %v4673
    %v4855 = vunpack.c.l.b16 %v4674
    %v4856 = vunpack.c.h.b16 %v4674
    %v4857 = vunpack.c.l.b16 %v4675
    %v4858 = vunpack.c.h.b16 %v4675
    %v4859 = vunpack.c.l.b16 %v4676
    %v4860 = vunpack.c.h.b16 %v4676
    %v4861 = vunpack.c.l.b16 %v4677
    %v4862 = vunpack.c.h.b16 %v4677
    %v4863 = vunpack.c.l.b16 %v4678
    %v4864 = vunpack.c.h.b16 %v4678
    %v4865 = vunpack.c.l.b16 %v4679
    %v4866 = vunpack.c.h.b16 %v4679
    %v4867 = vunpack.c.l.b16 %v4680
    %v4868 = vunpack.c.h.b16 %v4680
    %v4869 = vunpack.c.l.b16 %v4681
    %v4870 = vunpack.c.h.b16 %v4681
    %v4871 = vunpack.c.l.b16 %v4682
    %v4872 = vunpack.c.h.b16 %v4682
    %v4873 = vunpack.c.l.b16 %v4683
    %v4874 = vunpack.c.h.b16 %v4683
    %v4875 = vunpack.c.l.b16 %v4684
    %v4876 = vunpack.c.h.b16 %v4684
    %v4877 = vpack.c.b16 %v4753, %v4749
    %v4878 = vpack.c.b16 %v4754, %v4750
    %v4879 = vpack.c.b16 %v4755, %v4751
    %v4880 = vpack.c.b16 %v4756, %v4752
    %v4881 = vpack.c.b16 %v4761, %v4757
    %v4882 = vpack.c.b16 %v4762, %v4758
    %v4883 = vpack.c.b16 %v4763, %v4759
    %v4884 = vpack.c.b16 %v4764, %v4760
    %v4885 = vpack.c.b16 %v4769, %v4765
    %v4886 = vpack.c.b16 %v4770, %v4766
    %v4887 = vpack.c.b16 %v4771, %v4767
    %v4888 = vpack.c.b16 %v4772, %v4768
    %v4889 = vpack.c.b16 %v4777, %v4773
    %v4890 = vpack.c.b16 %v4778, %v4774
    %v4891 = vpack.c.b16 %v4779, %v4775
    %v4892 = vpack.c.b16 %v4780, %v4776
    %v4893 = vpack.c.b16 %v4785, %v4781
    %v4894 = vpack.c.b16 %v4786, %v4782
    %v4895 = vpack.c.b16 %v4787, %v4783
    %v4896 = vpack.c.b16 %v4788, %v4784
    %v4897 = vpack.c.b16 %v4793, %v4789
    %v4898 = vpack.c.b16 %v4794, %v4790
    %v4899 = vpack.c.b16 %v4795, %v4791
    %v4900 = vpack.c.b16 %v4796, %v4792
    %v4901 = vpack.c.b16 %v4801, %v4797
    %v4902 = vpack.c.b16 %v4802, %v4798
    %v4903 = vpack.c.b16 %v4803, %v4799
    %v4904 = vpack.c.b16 %v4804, %v4800
    %v4905 = vpack.c.b16 %v4809, %v4805
    %v4906 = vpack.c.b16 %v4810, %v4806
    %v4907 = vpack.c.b16 %v4811, %v4807
    %v4908 = vpack.c.b16 %v4812, %v4808
    %v4909 = vpack.c.b16 %v4817, %v4813
    %v4910 = vpack.c.b16 %v4818, %v4814
    %v4911 = vpack.c.b16 %v4819, %v4815
    %v4912 = vpack.c.b16 %v4820, %v4816
    %v4913 = vpack.c.b16 %v4825, %v4821
    %v4914 = vpack.c.b16 %v4826, %v4822
    %v4915 = vpack.c.b16 %v4827, %v4823
    %v4916 = vpack.c.b16 %v4828, %v4824
    %v4917 = vpack.c.b16 %v4833, %v4829
    %v4918 = vpack.c.b16 %v4834, %v4830
    %v4919 = vpack.c.b16 %v4835, %v4831
    %v4920 = vpack.c.b16 %v4836, %v4832
    %v4921 = vpack.c.b16 %v4841, %v4837
    %v4922 = vpack.c.b16 %v4842, %v4838
    %v4923 = vpack.c.b16 %v4843, %v4839
    %v4924 = vpack.c.b16 %v4844, %v4840
    %v4925 = vpack.c.b16 %v4849, %v4845
    %v4926 = vpack.c.b16 %v4850, %v4846
    %v4927 = vpack.c.b16 %v4851, %v4847
    %v4928 = vpack.c.b16 %v4852, %v4848
    %v4929 = vpack.c.b16 %v4857, %v4853
    %v4930 = vpack.c.b16 %v4858, %v4854
    %v4931 = vpack.c.b16 %v4859, %v4855
    %v4932 = vpack.c.b16 %v4860, %v4856
    %v4933 = vpack.c.b16 %v4865, %v4861
    %v4934 = vpack.c.b16 %v4866, %v4862
    %v4935 = vpack.c.b16 %v4867, %v4863
    %v4936 = vpack.c.b16 %v4868, %v4864
    %v4937 = vpack.c.b16 %v4873, %v4869
    %v4938 = vpack.c.b16 %v4874, %v4870
    %v4939 = vpack.c.b16 %v4875, %v4871
    %v4940 = vpack.c.b16 %v4876, %v4872
    %5005 = vmatpush.bf16.msra.mxu0 %v4905
    %5006 = vmatpush.bf16.msra.mxu0 %v4901
    %5007 = vmatpush.bf16.msra.mxu0 %v4897
    %5008 = vmatpush.bf16.msra.mxu0 %v4893
    %5009 = vmatpush.bf16.msra.mxu0 %v4889
    %5010 = vmatpush.bf16.msra.mxu0 %v4885
    %5011 = vmatpush.bf16.msra.mxu0 %v4881
    %5012 = vmatpush.bf16.msra.mxu0 %v4877
    %5013 = vmatmul.bf16.gmra.mxu0 %v1615
    %v5014 = vpop.f32.mrf.mxu0
    %v5015 = vadd.f32 0.0, %v5014
    %v5016 = vpop.f32.mrf.mxu0
    %5017 = vdwg.mxu0
    %5018 = vmatpush.bf16.msra.mxu0 %v4937
    %5019 = vmatpush.bf16.msra.mxu0 %v4933
    %5020 = vmatpush.bf16.msra.mxu0 %v4929
    %5021 = vmatpush.bf16.msra.mxu0 %v4925
    %5022 = vmatpush.bf16.msra.mxu0 %v4921
    %5023 = vmatpush.bf16.msra.mxu0 %v4917
    %5024 = vmatpush.bf16.msra.mxu0 %v4913
    %5025 = vmatpush.bf16.msra.mxu0 %v4909
    %5026 = vmatmul.bf16.gmra.mxu0 %v1615
    %v5027 = vpop.f32.mrf.mxu0
    %v5028 = vadd.f32 %v5015, %v5027
    %v5029 = vpop.f32.mrf.mxu0
    %5030 = vdwg.mxu0
    %5031 = vmatpush.bf16.msra.mxu0 %v4906
    %5032 = vmatpush.bf16.msra.mxu0 %v4902
    %5033 = vmatpush.bf16.msra.mxu0 %v4898
    %5034 = vmatpush.bf16.msra.mxu0 %v4894
    %5035 = vmatpush.bf16.msra.mxu0 %v4890
    %5036 = vmatpush.bf16.msra.mxu0 %v4886
    %5037 = vmatpush.bf16.msra.mxu0 %v4882
    %5038 = vmatpush.bf16.msra.mxu0 %v4878
    %5039 = vmatmul.bf16.gmra.mxu0 %v1615
    %v5040 = vpop.f32.mrf.mxu0
    %v5041 = vadd.f32 0.0, %v5040
    %v5042 = vpop.f32.mrf.mxu0
    %5043 = vdwg.mxu0
    %5044 = vmatpush.bf16.msra.mxu0 %v4938
    %5045 = vmatpush.bf16.msra.mxu0 %v4934
    %5046 = vmatpush.bf16.msra.mxu0 %v4930
    %5047 = vmatpush.bf16.msra.mxu0 %v4926
    %5048 = vmatpush.bf16.msra.mxu0 %v4922
    %5049 = vmatpush.bf16.msra.mxu0 %v4918
    %5050 = vmatpush.bf16.msra.mxu0 %v4914
    %5051 = vmatpush.bf16.msra.mxu0 %v4910
    %5052 = vmatmul.bf16.gmra.mxu0 %v1615
    %v5053 = vpop.f32.mrf.mxu0
    %v5054 = vadd.f32 %v5041, %v5053
    %v5055 = vpop.f32.mrf.mxu0
    %5056 = vdwg.mxu0
    %5057 = vmatpush.bf16.msra.mxu0 %v4907
    %5058 = vmatpush.bf16.msra.mxu0 %v4903
    %5059 = vmatpush.bf16.msra.mxu0 %v4899
    %5060 = vmatpush.bf16.msra.mxu0 %v4895
    %5061 = vmatpush.bf16.msra.mxu0 %v4891
    %5062 = vmatpush.bf16.msra.mxu0 %v4887
    %5063 = vmatpush.bf16.msra.mxu0 %v4883
    %5064 = vmatpush.bf16.msra.mxu0 %v4879
    %5065 = vmatmul.bf16.gmra.mxu0 %v1615
    %v5066 = vpop.f32.mrf.mxu0
    %v5067 = vadd.f32 0.0, %v5066
    %v5068 = vpop.f32.mrf.mxu0
    %5069 = vdwg.mxu0
    %5070 = vmatpush.bf16.msra.mxu0 %v4939
    %5071 = vmatpush.bf16.msra.mxu0 %v4935
    %5072 = vmatpush.bf16.msra.mxu0 %v4931
    %5073 = vmatpush.bf16.msra.mxu0 %v4927
    %5074 = vmatpush.bf16.msra.mxu0 %v4923
    %5075 = vmatpush.bf16.msra.mxu0 %v4919
    %5076 = vmatpush.bf16.msra.mxu0 %v4915
    %5077 = vmatpush.bf16.msra.mxu0 %v4911
    %5078 = vmatmul.bf16.gmra.mxu0 %v1615
    %v5079 = vpop.f32.mrf.mxu0
    %v5080 = vadd.f32 %v5067, %v5079
    %v5081 = vpop.f32.mrf.mxu0
    %5082 = vdwg.mxu0
    %5083 = vmatpush.bf16.msra.mxu0 %v4908
    %5084 = vmatpush.bf16.msra.mxu0 %v4904
    %5085 = vmatpush.bf16.msra.mxu0 %v4900
    %5086 = vmatpush.bf16.msra.mxu0 %v4896
    %5087 = vmatpush.bf16.msra.mxu0 %v4892
    %5088 = vmatpush.bf16.msra.mxu0 %v4888
    %5089 = vmatpush.bf16.msra.mxu0 %v4884
    %5090 = vmatpush.bf16.msra.mxu0 %v4880
    %5091 = vmatmul.bf16.gmra.mxu0 %v1615
    %v5092 = vpop.f32.mrf.mxu0
    %v5093 = vadd.f32 0.0, %v5092
    %v5094 = vpop.f32.mrf.mxu0
    %5095 = vdwg.mxu0
    %5096 = vmatpush.bf16.msra.mxu0 %v4940
    %5097 = vmatpush.bf16.msra.mxu0 %v4936
    %5098 = vmatpush.bf16.msra.mxu0 %v4932
    %5099 = vmatpush.bf16.msra.mxu0 %v4928
    %5100 = vmatpush.bf16.msra.mxu0 %v4924
    %5101 = vmatpush.bf16.msra.mxu0 %v4920
    %5102 = vmatpush.bf16.msra.mxu0 %v4916
    %5103 = vmatpush.bf16.msra.mxu0 %v4912
    %5104 = vmatmul.bf16.gmra.mxu0 %v1615
    %v5105 = vpop.f32.mrf.mxu0
    %v5106 = vadd.f32 %v5093, %v5105
    %v5107 = vpop.f32.mrf.mxu0
    %5108 = vdwg.mxu0
    %v5109 = vadd.f32 %v4616, %v5028
    %v5110 = vadd.f32 %v4617, %v5054
    %v5111 = vadd.f32 %v4618, %v5080
    %v5112 = vadd.f32 %v4619, %v5106
    %v5113 = vxor.u32 %v5109, 2147483648
    %v5114 = vmul.f32 %v5113, 1.442695
    %v5115 = vpow.pop %v5114
    %v5116 = vadd.f32 %v5115, 1.0
    %v5117 = vrcp.pop %v5116
    %v5118 = vmul.f32 %v5116, %v5117
    %v5119 = vsub.f32 1.0, %v5118
    %v5120 = vmul.f32 %v5117, %v5119
    %v5121 = vadd.f32 %v5117, %v5120
    %vm5122 = vweird.f32 %v5116
    %vm5123 = vweird.f32 %v5117
    %vm5124 = vmor %vm5122, %vm5123
    %v5125 = vsel %vm5124, %v5117, %v5121
    %v5126 = vand.u32 2147483647, %v5116
    %vm5127 = vcmp.eq.f32.partialorder %v5126, 8.507059e+37
    %v5128 = vand.u32 %v5116, 2147483648
    %v5129 = vor.u32 1.1754944e-38, %v5128
    %v5130 = vsel %vm5127, %v5129, %v5125
    %v5131 = vmul.f32 1.0, %v5130
    %v5132 = vxor.u32 %v5110, 2147483648
    %v5133 = vmul.f32 %v5132, 1.442695
    %v5134 = vpow.pop %v5133
    %v5135 = vadd.f32 %v5134, 1.0
    %v5136 = vrcp.pop %v5135
    %v5137 = vmul.f32 %v5135, %v5136
    %v5138 = vsub.f32 1.0, %v5137
    %v5139 = vmul.f32 %v5136, %v5138
    %v5140 = vadd.f32 %v5136, %v5139
    %vm5141 = vweird.f32 %v5135
    %vm5142 = vweird.f32 %v5136
    %vm5143 = vmor %vm5141, %vm5142
    %v5144 = vsel %vm5143, %v5136, %v5140
    %v5145 = vand.u32 2147483647, %v5135
    %vm5146 = vcmp.eq.f32.partialorder %v5145, 8.507059e+37
    %v5147 = vand.u32 %v5135, 2147483648
    %v5148 = vor.u32 1.1754944e-38, %v5147
    %v5149 = vsel %vm5146, %v5148, %v5144
    %v5150 = vmul.f32 1.0, %v5149
    %v5151 = vtanh.pop %v5111
    %v5152 = vxor.u32 %v5112, 2147483648
    %v5153 = vmul.f32 %v5152, 1.442695
    %v5154 = vpow.pop %v5153
    %v5155 = vadd.f32 %v5154, 1.0
    %v5156 = vrcp.pop %v5155
    %v5157 = vmul.f32 %v5155, %v5156
    %v5158 = vsub.f32 1.0, %v5157
    %v5159 = vmul.f32 %v5156, %v5158
    %v5160 = vadd.f32 %v5156, %v5159
    %vm5161 = vweird.f32 %v5155
    %vm5162 = vweird.f32 %v5156
    %vm5163 = vmor %vm5161, %vm5162
    %v5164 = vsel %vm5163, %v5156, %v5160
    %v5165 = vand.u32 2147483647, %v5155
    %vm5166 = vcmp.eq.f32.partialorder %v5165, 8.507059e+37
    %v5167 = vand.u32 %v5155, 2147483648
    %v5168 = vor.u32 1.1754944e-38, %v5167
    %v5169 = vsel %vm5166, %v5168, %v5164
    %v5170 = vmul.f32 1.0, %v5169
    %v5171 = vmul.f32 %v5150, 0.0
    %v5172 = vmul.f32 %v5131, %v5151
    %v5173 = vadd.f32 %v5171, %v5172
    %v5174 = vmax.f32 %v5173, -3.0
    %v5175 = vmin.f32 %v5174, 3.0
    %v5176 = vtanh.pop %v5175
    %v5177 = vmul.f32 %v5170, %v5176
    %v5178 = vsel %vm1053, %v5177, 0.0
    %v5179 = vsel %vm1054, %v5177, 0.0
    %v5180 = vpack.c.bf16 %v5178, %v5178
    %v5181 = vpack.c.bf16 %v5179, %v5179
    %s5182 = scalar_lea.vmem %s15, 128
    %v5183 = vld [vmem:[%s5182] sm:$0xf]
    %v5184 = vld [vmem:[%s5182 + $0x4] sm:$0xf]
    %v5185 = vld [vmem:[%s5182 + $0x8] sm:$0xf]
    %v5186 = vld [vmem:[%s5182 + $0xc] sm:$0xf]
    %v5187 = vld [vmem:[%s5182 + $0x10] sm:$0xf]
    %v5188 = vld [vmem:[%s5182 + $0x14] sm:$0xf]
    %v5189 = vld [vmem:[%s5182 + $0x18] sm:$0xf]
    %v5190 = vld [vmem:[%s5182 + $0x1c] sm:$0xf]
    %v5191 = vld [vmem:[%s5182 + $0x20] sm:$0xf]
    %v5192 = vld [vmem:[%s5182 + $0x24] sm:$0xf]
    %v5193 = vld [vmem:[%s5182 + $0x28] sm:$0xf]
    %v5194 = vld [vmem:[%s5182 + $0x2c] sm:$0xf]
    %v5195 = vld [vmem:[%s5182 + $0x30] sm:$0xf]
    %v5196 = vld [vmem:[%s5182 + $0x34] sm:$0xf]
    %v5197 = vld [vmem:[%s5182 + $0x38] sm:$0xf]
    %v5198 = vld [vmem:[%s5182 + $0x3c] sm:$0xf]
    %v5199 = vld [vmem:[%s5182 + $0x40] sm:$0xf]
    %v5200 = vld [vmem:[%s5182 + $0x44] sm:$0xf]
    %v5201 = vld [vmem:[%s5182 + $0x48] sm:$0xf]
    %v5202 = vld [vmem:[%s5182 + $0x4c] sm:$0xf]
    %v5203 = vld [vmem:[%s5182 + $0x50] sm:$0xf]
    %v5204 = vld [vmem:[%s5182 + $0x54] sm:$0xf]
    %v5205 = vld [vmem:[%s5182 + $0x58] sm:$0xf]
    %v5206 = vld [vmem:[%s5182 + $0x5c] sm:$0xf]
    %v5207 = vld [vmem:[%s5182 + $0x60] sm:$0xf]
    %v5208 = vld [vmem:[%s5182 + $0x64] sm:$0xf]
    %v5209 = vld [vmem:[%s5182 + $0x68] sm:$0xf]
    %v5210 = vld [vmem:[%s5182 + $0x6c] sm:$0xf]
    %v5211 = vld [vmem:[%s5182 + $0x70] sm:$0xf]
    %v5212 = vld [vmem:[%s5182 + $0x74] sm:$0xf]
    %v5213 = vld [vmem:[%s5182 + $0x78] sm:$0xf]
    %v5214 = vld [vmem:[%s5182 + $0x7c] sm:$0xf]
    %v5247 = vunpack.c.l.b16 %v5183
    %v5248 = vunpack.c.l.b16 %v5184
    %v5249 = vunpack.c.l.b16 %v5185
    %v5250 = vunpack.c.l.b16 %v5186
    %v5251 = vunpack.c.l.b16 %v5187
    %v5252 = vunpack.c.l.b16 %v5188
    %v5253 = vunpack.c.l.b16 %v5189
    %v5254 = vunpack.c.l.b16 %v5190
    %v5255 = vunpack.c.l.b16 %v5191
    %v5256 = vunpack.c.l.b16 %v5192
    %v5257 = vunpack.c.l.b16 %v5193
    %v5258 = vunpack.c.l.b16 %v5194
    %v5259 = vunpack.c.l.b16 %v5195
    %v5260 = vunpack.c.l.b16 %v5196
    %v5261 = vunpack.c.l.b16 %v5197
    %v5262 = vunpack.c.l.b16 %v5198
    %v5263 = vunpack.c.l.b16 %v5199
    %v5264 = vunpack.c.l.b16 %v5200
    %v5265 = vunpack.c.l.b16 %v5201
    %v5266 = vunpack.c.l.b16 %v5202
    %v5267 = vunpack.c.l.b16 %v5203
    %v5268 = vunpack.c.l.b16 %v5204
    %v5269 = vunpack.c.l.b16 %v5205
    %v5270 = vunpack.c.l.b16 %v5206
    %v5271 = vunpack.c.l.b16 %v5207
    %v5272 = vunpack.c.l.b16 %v5208
    %v5273 = vunpack.c.l.b16 %v5209
    %v5274 = vunpack.c.l.b16 %v5210
    %v5275 = vunpack.c.l.b16 %v5211
    %v5276 = vunpack.c.l.b16 %v5212
    %v5277 = vunpack.c.l.b16 %v5213
    %v5278 = vunpack.c.l.b16 %v5214
    %v5279 = vpack.c.b16 %v5248, %v5247
    %v5280 = vpack.c.b16 %v5250, %v5249
    %v5281 = vpack.c.b16 %v5252, %v5251
    %v5282 = vpack.c.b16 %v5254, %v5253
    %v5283 = vpack.c.b16 %v5256, %v5255
    %v5284 = vpack.c.b16 %v5258, %v5257
    %v5285 = vpack.c.b16 %v5260, %v5259
    %v5286 = vpack.c.b16 %v5262, %v5261
    %v5287 = vpack.c.b16 %v5264, %v5263
    %v5288 = vpack.c.b16 %v5266, %v5265
    %v5289 = vpack.c.b16 %v5268, %v5267
    %v5290 = vpack.c.b16 %v5270, %v5269
    %v5291 = vpack.c.b16 %v5272, %v5271
    %v5292 = vpack.c.b16 %v5274, %v5273
    %v5293 = vpack.c.b16 %v5276, %v5275
    %v5294 = vpack.c.b16 %v5278, %v5277
    %5311 = vmatpush.bf16.msra.mxu0 %v5286
    %5312 = vmatpush.bf16.msra.mxu0 %v5285
    %5313 = vmatpush.bf16.msra.mxu0 %v5284
    %5314 = vmatpush.bf16.msra.mxu0 %v5283
    %5315 = vmatpush.bf16.msra.mxu0 %v5282
    %5316 = vmatpush.bf16.msra.mxu0 %v5281
    %5317 = vmatpush.bf16.msra.mxu0 %v5280
    %5318 = vmatpush.bf16.msra.mxu0 %v5279
    %5319 = vmatmul.bf16.gmra.mxu0 %v5180
    %v5320 = vpop.f32.mrf.mxu0
    %v5321 = vadd.f32 0.0, %v5320
    %v5322 = vpop.f32.mrf.mxu0
    %5323 = vdwg.mxu0
    %5324 = vmatpush.bf16.msra.mxu0 %v5294
    %5325 = vmatpush.bf16.msra.mxu0 %v5293
    %5326 = vmatpush.bf16.msra.mxu0 %v5292
    %5327 = vmatpush.bf16.msra.mxu0 %v5291
    %5328 = vmatpush.bf16.msra.mxu0 %v5290
    %5329 = vmatpush.bf16.msra.mxu0 %v5289
    %5330 = vmatpush.bf16.msra.mxu0 %v5288
    %5331 = vmatpush.bf16.msra.mxu0 %v5287
    %5332 = vmatmul.bf16.gmra.mxu0 %v5181
    %v5333 = vpop.f32.mrf.mxu0
    %v5334 = vadd.f32 %v5321, %v5333
    %v5335 = vpop.f32.mrf.mxu0
    %5336 = vdwg.mxu0
    %v5337 = vmax.f32 %v5334, -3.0
    %v5338 = vmin.f32 %v5337, 3.0
    %v5339 = vld [vmem:[#allocation2] sm:$0xc]
    %v5340 = vld [vmem:[#allocation2 + $0x8] sm:$0xc]
    %v5341 = vld [vmem:[#allocation2 + $0x10] sm:$0xc]
    %v5342 = vld [vmem:[#allocation2 + $0x18] sm:$0xc]
    %v5343 = vld [vmem:[#allocation3 + $0x20] sm:$0x30]
    %v5344 = vld [vmem:[#allocation3 + $0x28] sm:$0x30]
    %v5345 = vld [vmem:[#allocation3 + $0x30] sm:$0x30]
    %v5346 = vld [vmem:[#allocation3 + $0x38] sm:$0x30]
    %v5351 = vrot.slane %v5339, 2
    %v5352 = vrot.slane %v5340, 2
    %v5353 = vrot.slane %v5341, 2
    %v5354 = vrot.slane %v5342, 2
    %v5363 = vrot.slane %v5343, 2
    %v5364 = vrot.slane %v5344, 2
    %v5365 = vrot.slane %v5345, 2
    %v5366 = vrot.slane %v5346, 2
    %v5371 = vsel %vm1610, %v5351, %v5363
    %v5372 = vsel %vm1610, %v5352, %v5364
    %v5373 = vsel %vm1610, %v5353, %v5365
    %v5374 = vsel %vm1610, %v5354, %v5366
    %v5375 = vsel %vm1053, %v5338, 0.0
    %v5376 = vsel %vm1054, %v5338, 0.0
    %v5377 = vpack.c.bf16 %v5375, %v5375
    %v5378 = vpack.c.bf16 %v5376, %v5376
    %5379 = vmatpush.bf16.msra.mxu0 %v4905
    %5380 = vmatpush.bf16.msra.mxu0 %v4901
    %5381 = vmatpush.bf16.msra.mxu0 %v4897
    %5382 = vmatpush.bf16.msra.mxu0 %v4893
    %5383 = vmatpush.bf16.msra.mxu0 %v4889
    %5384 = vmatpush.bf16.msra.mxu0 %v4885
    %5385 = vmatpush.bf16.msra.mxu0 %v4881
    %5386 = vmatpush.bf16.msra.mxu0 %v4877
    %5387 = vmatmul.bf16.gmra.mxu0 %v5377
    %v5388 = vpop.f32.mrf.mxu0
    %v5389 = vadd.f32 0.0, %v5388
    %v5390 = vpop.f32.mrf.mxu0
    %5391 = vdwg.mxu0
    %5392 = vmatpush.bf16.msra.mxu0 %v4937
    %5393 = vmatpush.bf16.msra.mxu0 %v4933
    %5394 = vmatpush.bf16.msra.mxu0 %v4929
    %5395 = vmatpush.bf16.msra.mxu0 %v4925
    %5396 = vmatpush.bf16.msra.mxu0 %v4921
    %5397 = vmatpush.bf16.msra.mxu0 %v4917
    %5398 = vmatpush.bf16.msra.mxu0 %v4913
    %5399 = vmatpush.bf16.msra.mxu0 %v4909
    %5400 = vmatmul.bf16.gmra.mxu0 %v5378
    %v5401 = vpop.f32.mrf.mxu0
    %v5402 = vadd.f32 %v5389, %v5401
    %v5403 = vpop.f32.mrf.mxu0
    %5404 = vdwg.mxu0
    %5405 = vmatpush.bf16.msra.mxu0 %v4906
    %5406 = vmatpush.bf16.msra.mxu0 %v4902
    %5407 = vmatpush.bf16.msra.mxu0 %v4898
    %5408 = vmatpush.bf16.msra.mxu0 %v4894
    %5409 = vmatpush.bf16.msra.mxu0 %v4890
    %5410 = vmatpush.bf16.msra.mxu0 %v4886
    %5411 = vmatpush.bf16.msra.mxu0 %v4882
    %5412 = vmatpush.bf16.msra.mxu0 %v4878
    %5413 = vmatmul.bf16.gmra.mxu0 %v5377
    %v5414 = vpop.f32.mrf.mxu0
    %v5415 = vadd.f32 0.0, %v5414
    %v5416 = vpop.f32.mrf.mxu0
    %5417 = vdwg.mxu0
    %5418 = vmatpush.bf16.msra.mxu0 %v4938
    %5419 = vmatpush.bf16.msra.mxu0 %v4934
    %5420 = vmatpush.bf16.msra.mxu0 %v4930
    %5421 = vmatpush.bf16.msra.mxu0 %v4926
    %5422 = vmatpush.bf16.msra.mxu0 %v4922
    %5423 = vmatpush.bf16.msra.mxu0 %v4918
    %5424 = vmatpush.bf16.msra.mxu0 %v4914
    %5425 = vmatpush.bf16.msra.mxu0 %v4910
    %5426 = vmatmul.bf16.gmra.mxu0 %v5378
    %v5427 = vpop.f32.mrf.mxu0
    %v5428 = vadd.f32 %v5415, %v5427
    %v5429 = vpop.f32.mrf.mxu0
    %5430 = vdwg.mxu0
    %5431 = vmatpush.bf16.msra.mxu0 %v4907
    %5432 = vmatpush.bf16.msra.mxu0 %v4903
    %5433 = vmatpush.bf16.msra.mxu0 %v4899
    %5434 = vmatpush.bf16.msra.mxu0 %v4895
    %5435 = vmatpush.bf16.msra.mxu0 %v4891
    %5436 = vmatpush.bf16.msra.mxu0 %v4887
    %5437 = vmatpush.bf16.msra.mxu0 %v4883
    %5438 = vmatpush.bf16.msra.mxu0 %v4879
    %5439 = vmatmul.bf16.gmra.mxu0 %v5377
    %v5440 = vpop.f32.mrf.mxu0
    %v5441 = vadd.f32 0.0, %v5440
    %v5442 = vpop.f32.mrf.mxu0
    %5443 = vdwg.mxu0
    %5444 = vmatpush.bf16.msra.mxu0 %v4939
    %5445 = vmatpush.bf16.msra.mxu0 %v4935
    %5446 = vmatpush.bf16.msra.mxu0 %v4931
    %5447 = vmatpush.bf16.msra.mxu0 %v4927
    %5448 = vmatpush.bf16.msra.mxu0 %v4923
    %5449 = vmatpush.bf16.msra.mxu0 %v4919
    %5450 = vmatpush.bf16.msra.mxu0 %v4915
    %5451 = vmatpush.bf16.msra.mxu0 %v4911
    %5452 = vmatmul.bf16.gmra.mxu0 %v5378
    %v5453 = vpop.f32.mrf.mxu0
    %v5454 = vadd.f32 %v5441, %v5453
    %v5455 = vpop.f32.mrf.mxu0
    %5456 = vdwg.mxu0
    %5457 = vmatpush.bf16.msra.mxu0 %v4908
    %5458 = vmatpush.bf16.msra.mxu0 %v4904
    %5459 = vmatpush.bf16.msra.mxu0 %v4900
    %5460 = vmatpush.bf16.msra.mxu0 %v4896
    %5461 = vmatpush.bf16.msra.mxu0 %v4892
    %5462 = vmatpush.bf16.msra.mxu0 %v4888
    %5463 = vmatpush.bf16.msra.mxu0 %v4884
    %5464 = vmatpush.bf16.msra.mxu0 %v4880
    %5465 = vmatmul.bf16.gmra.mxu0 %v5377
    %v5466 = vpop.f32.mrf.mxu0
    %v5467 = vadd.f32 0.0, %v5466
    %v5468 = vpop.f32.mrf.mxu0
    %5469 = vdwg.mxu0
    %5470 = vmatpush.bf16.msra.mxu0 %v4940
    %5471 = vmatpush.bf16.msra.mxu0 %v4936
    %5472 = vmatpush.bf16.msra.mxu0 %v4932
    %5473 = vmatpush.bf16.msra.mxu0 %v4928
    %5474 = vmatpush.bf16.msra.mxu0 %v4924
    %5475 = vmatpush.bf16.msra.mxu0 %v4920
    %5476 = vmatpush.bf16.msra.mxu0 %v4916
    %5477 = vmatpush.bf16.msra.mxu0 %v4912
    %5478 = vmatmul.bf16.gmra.mxu0 %v5378
    %v5479 = vpop.f32.mrf.mxu0
    %v5480 = vadd.f32 %v5467, %v5479
    %v5481 = vpop.f32.mrf.mxu0
    %5482 = vdwg.mxu0
    %v5483 = vadd.f32 %v5371, %v5402
    %v5484 = vadd.f32 %v5372, %v5428
    %v5485 = vadd.f32 %v5373, %v5454
    %v5486 = vadd.f32 %v5374, %v5480
    %v5487 = vxor.u32 %v5483, 2147483648
    %v5488 = vmul.f32 %v5487, 1.442695
    %v5489 = vpow.pop %v5488
    %v5490 = vadd.f32 %v5489, 1.0
    %v5491 = vrcp.pop %v5490
    %v5492 = vmul.f32 %v5490, %v5491
    %v5493 = vsub.f32 1.0, %v5492
    %v5494 = vmul.f32 %v5491, %v5493
    %v5495 = vadd.f32 %v5491, %v5494
    %vm5496 = vweird.f32 %v5490
    %vm5497 = vweird.f32 %v5491
    %vm5498 = vmor %vm5496, %vm5497
    %v5499 = vsel %vm5498, %v5491, %v5495
    %v5500 = vand.u32 2147483647, %v5490
    %vm5501 = vcmp.eq.f32.partialorder %v5500, 8.507059e+37
    %v5502 = vand.u32 %v5490, 2147483648
    %v5503 = vor.u32 1.1754944e-38, %v5502
    %v5504 = vsel %vm5501, %v5503, %v5499
    %v5505 = vmul.f32 1.0, %v5504
    %v5506 = vxor.u32 %v5484, 2147483648
    %v5507 = vmul.f32 %v5506, 1.442695
    %v5508 = vpow.pop %v5507
    %v5509 = vadd.f32 %v5508, 1.0
    %v5510 = vrcp.pop %v5509
    %v5511 = vmul.f32 %v5509, %v5510
    %v5512 = vsub.f32 1.0, %v5511
    %v5513 = vmul.f32 %v5510, %v5512
    %v5514 = vadd.f32 %v5510, %v5513
    %vm5515 = vweird.f32 %v5509
    %vm5516 = vweird.f32 %v5510
    %vm5517 = vmor %vm5515, %vm5516
    %v5518 = vsel %vm5517, %v5510, %v5514
    %v5519 = vand.u32 2147483647, %v5509
    %vm5520 = vcmp.eq.f32.partialorder %v5519, 8.507059e+37
    %v5521 = vand.u32 %v5509, 2147483648
    %v5522 = vor.u32 1.1754944e-38, %v5521
    %v5523 = vsel %vm5520, %v5522, %v5518
    %v5524 = vmul.f32 1.0, %v5523
    %v5525 = vtanh.pop %v5485
    %v5526 = vxor.u32 %v5486, 2147483648
    %v5527 = vmul.f32 %v5526, 1.442695
    %v5528 = vpow.pop %v5527
    %v5529 = vadd.f32 %v5528, 1.0
    %v5530 = vrcp.pop %v5529
    %v5531 = vmul.f32 %v5529, %v5530
    %v5532 = vsub.f32 1.0, %v5531
    %v5533 = vmul.f32 %v5530, %v5532
    %v5534 = vadd.f32 %v5530, %v5533
    %vm5535 = vweird.f32 %v5529
    %vm5536 = vweird.f32 %v5530
    %vm5537 = vmor %vm5535, %vm5536
    %v5538 = vsel %vm5537, %v5530, %v5534
    %v5539 = vand.u32 2147483647, %v5529
    %vm5540 = vcmp.eq.f32.partialorder %v5539, 8.507059e+37
    %v5541 = vand.u32 %v5529, 2147483648
    %v5542 = vor.u32 1.1754944e-38, %v5541
    %v5543 = vsel %vm5540, %v5542, %v5538
    %v5544 = vmul.f32 1.0, %v5543
    %v5545 = vmul.f32 %v5524, %v5175
    %v5546 = vmul.f32 %v5505, %v5525
    %v5547 = vadd.f32 %v5545, %v5546
    %v5548 = vmax.f32 %v5547, -3.0
    %v5549 = vmin.f32 %v5548, 3.0
    %v5550 = vtanh.pop %v5549
    %v5551 = vmul.f32 %v5544, %v5550
    %v5552 = vsel %vm1053, %v5551, 0.0
    %v5553 = vsel %vm1054, %v5551, 0.0
    %v5554 = vpack.c.bf16 %v5552, %v5552
    %v5555 = vpack.c.bf16 %v5553, %v5553
    %5556 = vmatpush.bf16.msra.mxu0 %v5286
    %5557 = vmatpush.bf16.msra.mxu0 %v5285
    %5558 = vmatpush.bf16.msra.mxu0 %v5284
    %5559 = vmatpush.bf16.msra.mxu0 %v5283
    %5560 = vmatpush.bf16.msra.mxu0 %v5282
    %5561 = vmatpush.bf16.msra.mxu0 %v5281
    %5562 = vmatpush.bf16.msra.mxu0 %v5280
    %5563 = vmatpush.bf16.msra.mxu0 %v5279
    %5564 = vmatmul.bf16.gmra.mxu0 %v5554
    %v5565 = vpop.f32.mrf.mxu0
    %v5566 = vadd.f32 0.0, %v5565
    %v5567 = vpop.f32.mrf.mxu0
    %5568 = vdwg.mxu0
    %5569 = vmatpush.bf16.msra.mxu0 %v5294
    %5570 = vmatpush.bf16.msra.mxu0 %v5293
    %5571 = vmatpush.bf16.msra.mxu0 %v5292
    %5572 = vmatpush.bf16.msra.mxu0 %v5291
    %5573 = vmatpush.bf16.msra.mxu0 %v5290
    %5574 = vmatpush.bf16.msra.mxu0 %v5289
    %5575 = vmatpush.bf16.msra.mxu0 %v5288
    %5576 = vmatpush.bf16.msra.mxu0 %v5287
    %5577 = vmatmul.bf16.gmra.mxu0 %v5555
    %v5578 = vpop.f32.mrf.mxu0
    %v5579 = vadd.f32 %v5566, %v5578
    %v5580 = vpop.f32.mrf.mxu0
    %5581 = vdwg.mxu0
    %v5582 = vmax.f32 %v5579, -3.0
    %v5583 = vmin.f32 %v5582, 3.0
    %v5584 = vld [vmem:[#allocation2] sm:$0x30]
    %v5585 = vld [vmem:[#allocation2 + $0x8] sm:$0x30]
    %v5586 = vld [vmem:[#allocation2 + $0x10] sm:$0x30]
    %v5587 = vld [vmem:[#allocation2 + $0x18] sm:$0x30]
    %v5588 = vld [vmem:[#allocation3 + $0x20] sm:$0xc]
    %v5589 = vld [vmem:[#allocation3 + $0x28] sm:$0xc]
    %v5590 = vld [vmem:[#allocation3 + $0x30] sm:$0xc]
    %v5591 = vld [vmem:[#allocation3 + $0x38] sm:$0xc]
    %v5596 = vrot.slane %v5584, 4
    %v5597 = vrot.slane %v5585, 4
    %v5598 = vrot.slane %v5586, 4
    %v5599 = vrot.slane %v5587, 4
    %v5604 = vsel %vm1610, %v5596, %v5588
    %v5605 = vsel %vm1610, %v5597, %v5589
    %v5606 = vsel %vm1610, %v5598, %v5590
    %v5607 = vsel %vm1610, %v5599, %v5591
    %v5608 = vsel %vm1053, %v5583, 0.0
    %v5609 = vsel %vm1054, %v5583, 0.0
    %v5610 = vpack.c.bf16 %v5608, %v5608
    %v5611 = vpack.c.bf16 %v5609, %v5609
    %5612 = vmatpush.bf16.msra.mxu0 %v4905
    %5613 = vmatpush.bf16.msra.mxu0 %v4901
    %5614 = vmatpush.bf16.msra.mxu0 %v4897
    %5615 = vmatpush.bf16.msra.mxu0 %v4893
    %5616 = vmatpush.bf16.msra.mxu0 %v4889
    %5617 = vmatpush.bf16.msra.mxu0 %v4885
    %5618 = vmatpush.bf16.msra.mxu0 %v4881
    %5619 = vmatpush.bf16.msra.mxu0 %v4877
    %5620 = vmatmul.bf16.gmra.mxu0 %v5610
    %v5621 = vpop.f32.mrf.mxu0
    %v5622 = vadd.f32 0.0, %v5621
    %v5623 = vpop.f32.mrf.mxu0
    %5624 = vdwg.mxu0
    %5625 = vmatpush.bf16.msra.mxu0 %v4937
    %5626 = vmatpush.bf16.msra.mxu0 %v4933
    %5627 = vmatpush.bf16.msra.mxu0 %v4929
    %5628 = vmatpush.bf16.msra.mxu0 %v4925
    %5629 = vmatpush.bf16.msra.mxu0 %v4921
    %5630 = vmatpush.bf16.msra.mxu0 %v4917
    %5631 = vmatpush.bf16.msra.mxu0 %v4913
    %5632 = vmatpush.bf16.msra.mxu0 %v4909
    %5633 = vmatmul.bf16.gmra.mxu0 %v5611
    %v5634 = vpop.f32.mrf.mxu0
    %v5635 = vadd.f32 %v5622, %v5634
    %v5636 = vpop.f32.mrf.mxu0
    %5637 = vdwg.mxu0
    %5638 = vmatpush.bf16.msra.mxu0 %v4906
    %5639 = vmatpush.bf16.msra.mxu0 %v4902
    %5640 = vmatpush.bf16.msra.mxu0 %v4898
    %5641 = vmatpush.bf16.msra.mxu0 %v4894
    %5642 = vmatpush.bf16.msra.mxu0 %v4890
    %5643 = vmatpush.bf16.msra.mxu0 %v4886
    %5644 = vmatpush.bf16.msra.mxu0 %v4882
    %5645 = vmatpush.bf16.msra.mxu0 %v4878
    %5646 = vmatmul.bf16.gmra.mxu0 %v5610
    %v5647 = vpop.f32.mrf.mxu0
    %v5648 = vadd.f32 0.0, %v5647
    %v5649 = vpop.f32.mrf.mxu0
    %5650 = vdwg.mxu0
    %5651 = vmatpush.bf16.msra.mxu0 %v4938
    %5652 = vmatpush.bf16.msra.mxu0 %v4934
    %5653 = vmatpush.bf16.msra.mxu0 %v4930
    %5654 = vmatpush.bf16.msra.mxu0 %v4926
    %5655 = vmatpush.bf16.msra.mxu0 %v4922
    %5656 = vmatpush.bf16.msra.mxu0 %v4918
    %5657 = vmatpush.bf16.msra.mxu0 %v4914
    %5658 = vmatpush.bf16.msra.mxu0 %v4910
    %5659 = vmatmul.bf16.gmra.mxu0 %v5611
    %v5660 = vpop.f32.mrf.mxu0
    %v5661 = vadd.f32 %v5648, %v5660
    %v5662 = vpop.f32.mrf.mxu0
    %5663 = vdwg.mxu0
    %5664 = vmatpush.bf16.msra.mxu0 %v4907
    %5665 = vmatpush.bf16.msra.mxu0 %v4903
    %5666 = vmatpush.bf16.msra.mxu0 %v4899
    %5667 = vmatpush.bf16.msra.mxu0 %v4895
    %5668 = vmatpush.bf16.msra.mxu0 %v4891
    %5669 = vmatpush.bf16.msra.mxu0 %v4887
    %5670 = vmatpush.bf16.msra.mxu0 %v4883
    %5671 = vmatpush.bf16.msra.mxu0 %v4879
    %5672 = vmatmul.bf16.gmra.mxu0 %v5610
    %v5673 = vpop.f32.mrf.mxu0
    %v5674 = vadd.f32 0.0, %v5673
    %v5675 = vpop.f32.mrf.mxu0
    %5676 = vdwg.mxu0
    %5677 = vmatpush.bf16.msra.mxu0 %v4939
    %5678 = vmatpush.bf16.msra.mxu0 %v4935
    %5679 = vmatpush.bf16.msra.mxu0 %v4931
    %5680 = vmatpush.bf16.msra.mxu0 %v4927
    %5681 = vmatpush.bf16.msra.mxu0 %v4923
    %5682 = vmatpush.bf16.msra.mxu0 %v4919
    %5683 = vmatpush.bf16.msra.mxu0 %v4915
    %5684 = vmatpush.bf16.msra.mxu0 %v4911
    %5685 = vmatmul.bf16.gmra.mxu0 %v5611
    %v5686 = vpop.f32.mrf.mxu0
    %v5687 = vadd.f32 %v5674, %v5686
    %v5688 = vpop.f32.mrf.mxu0
    %5689 = vdwg.mxu0
    %5690 = vmatpush.bf16.msra.mxu0 %v4908
    %5691 = vmatpush.bf16.msra.mxu0 %v4904
    %5692 = vmatpush.bf16.msra.mxu0 %v4900
    %5693 = vmatpush.bf16.msra.mxu0 %v4896
    %5694 = vmatpush.bf16.msra.mxu0 %v4892
    %5695 = vmatpush.bf16.msra.mxu0 %v4888
    %5696 = vmatpush.bf16.msra.mxu0 %v4884
    %5697 = vmatpush.bf16.msra.mxu0 %v4880
    %5698 = vmatmul.bf16.gmra.mxu0 %v5610
    %v5699 = vpop.f32.mrf.mxu0
    %v5700 = vadd.f32 0.0, %v5699
    %v5701 = vpop.f32.mrf.mxu0
    %5702 = vdwg.mxu0
    %5703 = vmatpush.bf16.msra.mxu0 %v4940
    %5704 = vmatpush.bf16.msra.mxu0 %v4936
    %5705 = vmatpush.bf16.msra.mxu0 %v4932
    %5706 = vmatpush.bf16.msra.mxu0 %v4928
    %5707 = vmatpush.bf16.msra.mxu0 %v4924
    %5708 = vmatpush.bf16.msra.mxu0 %v4920
    %5709 = vmatpush.bf16.msra.mxu0 %v4916
    %5710 = vmatpush.bf16.msra.mxu0 %v4912
    %5711 = vmatmul.bf16.gmra.mxu0 %v5611
    %v5712 = vpop.f32.mrf.mxu0
    %v5713 = vadd.f32 %v5700, %v5712
    %v5714 = vpop.f32.mrf.mxu0
    %5715 = vdwg.mxu0
    %v5716 = vadd.f32 %v5604, %v5635
    %v5717 = vadd.f32 %v5605, %v5661
    %v5718 = vadd.f32 %v5606, %v5687
    %v5719 = vadd.f32 %v5607, %v5713
    %v5720 = vxor.u32 %v5716, 2147483648
    %v5721 = vmul.f32 %v5720, 1.442695
    %v5722 = vpow.pop %v5721
    %v5723 = vadd.f32 %v5722, 1.0
    %v5724 = vrcp.pop %v5723
    %v5725 = vmul.f32 %v5723, %v5724
    %v5726 = vsub.f32 1.0, %v5725
    %v5727 = vmul.f32 %v5724, %v5726
    %v5728 = vadd.f32 %v5724, %v5727
    %vm5729 = vweird.f32 %v5723
    %vm5730 = vweird.f32 %v5724
    %vm5731 = vmor %vm5729, %vm5730
    %v5732 = vsel %vm5731, %v5724, %v5728
    %v5733 = vand.u32 2147483647, %v5723
    %vm5734 = vcmp.eq.f32.partialorder %v5733, 8.507059e+37
    %v5735 = vand.u32 %v5723, 2147483648
    %v5736 = vor.u32 1.1754944e-38, %v5735
    %v5737 = vsel %vm5734, %v5736, %v5732
    %v5738 = vmul.f32 1.0, %v5737
    %v5739 = vxor.u32 %v5717, 2147483648
    %v5740 = vmul.f32 %v5739, 1.442695
    %v5741 = vpow.pop %v5740
    %v5742 = vadd.f32 %v5741, 1.0
    %v5743 = vrcp.pop %v5742
    %v5744 = vmul.f32 %v5742, %v5743
    %v5745 = vsub.f32 1.0, %v5744
    %v5746 = vmul.f32 %v5743, %v5745
    %v5747 = vadd.f32 %v5743, %v5746
    %vm5748 = vweird.f32 %v5742
    %vm5749 = vweird.f32 %v5743
    %vm5750 = vmor %vm5748, %vm5749
    %v5751 = vsel %vm5750, %v5743, %v5747
    %v5752 = vand.u32 2147483647, %v5742
    %vm5753 = vcmp.eq.f32.partialorder %v5752, 8.507059e+37
    %v5754 = vand.u32 %v5742, 2147483648
    %v5755 = vor.u32 1.1754944e-38, %v5754
    %v5756 = vsel %vm5753, %v5755, %v5751
    %v5757 = vmul.f32 1.0, %v5756
    %v5758 = vtanh.pop %v5718
    %v5759 = vxor.u32 %v5719, 2147483648
    %v5760 = vmul.f32 %v5759, 1.442695
    %v5761 = vpow.pop %v5760
    %v5762 = vadd.f32 %v5761, 1.0
    %v5763 = vrcp.pop %v5762
    %v5764 = vmul.f32 %v5762, %v5763
    %v5765 = vsub.f32 1.0, %v5764
    %v5766 = vmul.f32 %v5763, %v5765
    %v5767 = vadd.f32 %v5763, %v5766
    %vm5768 = vweird.f32 %v5762
    %vm5769 = vweird.f32 %v5763
    %vm5770 = vmor %vm5768, %vm5769
    %v5771 = vsel %vm5770, %v5763, %v5767
    %v5772 = vand.u32 2147483647, %v5762
    %vm5773 = vcmp.eq.f32.partialorder %v5772, 8.507059e+37
    %v5774 = vand.u32 %v5762, 2147483648
    %v5775 = vor.u32 1.1754944e-38, %v5774
    %v5776 = vsel %vm5773, %v5775, %v5771
    %v5777 = vmul.f32 1.0, %v5776
    %v5778 = vmul.f32 %v5757, %v5549
    %v5779 = vmul.f32 %v5738, %v5758
    %v5780 = vadd.f32 %v5778, %v5779
    %v5781 = vmax.f32 %v5780, -3.0
    %v5782 = vmin.f32 %v5781, 3.0
    %v5783 = vtanh.pop %v5782
    %v5784 = vmul.f32 %v5777, %v5783
    %v5785 = vsel %vm1053, %v5784, 0.0
    %v5786 = vsel %vm1054, %v5784, 0.0
    %v5787 = vpack.c.bf16 %v5785, %v5785
    %v5788 = vpack.c.bf16 %v5786, %v5786
    %5789 = vmatpush.bf16.msra.mxu0 %v5286
    %5790 = vmatpush.bf16.msra.mxu0 %v5285
    %5791 = vmatpush.bf16.msra.mxu0 %v5284
    %5792 = vmatpush.bf16.msra.mxu0 %v5283
    %5793 = vmatpush.bf16.msra.mxu0 %v5282
    %5794 = vmatpush.bf16.msra.mxu0 %v5281
    %5795 = vmatpush.bf16.msra.mxu0 %v5280
    %5796 = vmatpush.bf16.msra.mxu0 %v5279
    %5797 = vmatmul.bf16.gmra.mxu0 %v5787
    %v5798 = vpop.f32.mrf.mxu0
    %v5799 = vadd.f32 0.0, %v5798
    %v5800 = vpop.f32.mrf.mxu0
    %5801 = vdwg.mxu0
    %5802 = vmatpush.bf16.msra.mxu0 %v5294
    %5803 = vmatpush.bf16.msra.mxu0 %v5293
    %5804 = vmatpush.bf16.msra.mxu0 %v5292
    %5805 = vmatpush.bf16.msra.mxu0 %v5291
    %5806 = vmatpush.bf16.msra.mxu0 %v5290
    %5807 = vmatpush.bf16.msra.mxu0 %v5289
    %5808 = vmatpush.bf16.msra.mxu0 %v5288
    %5809 = vmatpush.bf16.msra.mxu0 %v5287
    %5810 = vmatmul.bf16.gmra.mxu0 %v5788
    %v5811 = vpop.f32.mrf.mxu0
    %v5812 = vadd.f32 %v5799, %v5811
    %v5813 = vpop.f32.mrf.mxu0
    %5814 = vdwg.mxu0
    %v5815 = vmax.f32 %v5812, -3.0
    %v5816 = vmin.f32 %v5815, 3.0
    %v5817 = vld [vmem:[#allocation2] sm:$0xc0]
    %v5818 = vld [vmem:[#allocation2 + $0x8] sm:$0xc0]
    %v5819 = vld [vmem:[#allocation2 + $0x10] sm:$0xc0]
    %v5820 = vld [vmem:[#allocation2 + $0x18] sm:$0xc0]
    %v5821 = vld [vmem:[#allocation3 + $0x20] sm:$0x3]
    %v5822 = vld [vmem:[#allocation3 + $0x28] sm:$0x3]
    %v5823 = vld [vmem:[#allocation3 + $0x30] sm:$0x3]
    %v5824 = vld [vmem:[#allocation3 + $0x38] sm:$0x3]
    %v5829 = vrot.slane %v5817, 6
    %v5830 = vrot.slane %v5818, 6
    %v5831 = vrot.slane %v5819, 6
    %v5832 = vrot.slane %v5820, 6
    %v5841 = vrot.slane %v5821, 6
    %v5842 = vrot.slane %v5822, 6
    %v5843 = vrot.slane %v5823, 6
    %v5844 = vrot.slane %v5824, 6
    %v5849 = vsel %vm1610, %v5829, %v5841
    %v5850 = vsel %vm1610, %v5830, %v5842
    %v5851 = vsel %vm1610, %v5831, %v5843
    %v5852 = vsel %vm1610, %v5832, %v5844
    %v5853 = vsel %vm1053, %v5816, 0.0
    %v5854 = vsel %vm1054, %v5816, 0.0
    %v5855 = vpack.c.bf16 %v5853, %v5853
    %v5856 = vpack.c.bf16 %v5854, %v5854
    %5857 = vmatpush.bf16.msra.mxu0 %v4905
    %5858 = vmatpush.bf16.msra.mxu0 %v4901
    %5859 = vmatpush.bf16.msra.mxu0 %v4897
    %5860 = vmatpush.bf16.msra.mxu0 %v4893
    %5861 = vmatpush.bf16.msra.mxu0 %v4889
    %5862 = vmatpush.bf16.msra.mxu0 %v4885
    %5863 = vmatpush.bf16.msra.mxu0 %v4881
    %5864 = vmatpush.bf16.msra.mxu0 %v4877
    %5865 = vmatmul.bf16.gmra.mxu0 %v5855
    %v5866 = vpop.f32.mrf.mxu0
    %v5867 = vadd.f32 0.0, %v5866
    %v5868 = vpop.f32.mrf.mxu0
    %5869 = vdwg.mxu0
    %5870 = vmatpush.bf16.msra.mxu0 %v4937
    %5871 = vmatpush.bf16.msra.mxu0 %v4933
    %5872 = vmatpush.bf16.msra.mxu0 %v4929
    %5873 = vmatpush.bf16.msra.mxu0 %v4925
    %5874 = vmatpush.bf16.msra.mxu0 %v4921
    %5875 = vmatpush.bf16.msra.mxu0 %v4917
    %5876 = vmatpush.bf16.msra.mxu0 %v4913
    %5877 = vmatpush.bf16.msra.mxu0 %v4909
    %5878 = vmatmul.bf16.gmra.mxu0 %v5856
    %v5879 = vpop.f32.mrf.mxu0
    %v5880 = vadd.f32 %v5867, %v5879
    %v5881 = vpop.f32.mrf.mxu0
    %5882 = vdwg.mxu0
    %5883 = vmatpush.bf16.msra.mxu0 %v4906
    %5884 = vmatpush.bf16.msra.mxu0 %v4902
    %5885 = vmatpush.bf16.msra.mxu0 %v4898
    %5886 = vmatpush.bf16.msra.mxu0 %v4894
    %5887 = vmatpush.bf16.msra.mxu0 %v4890
    %5888 = vmatpush.bf16.msra.mxu0 %v4886
    %5889 = vmatpush.bf16.msra.mxu0 %v4882
    %5890 = vmatpush.bf16.msra.mxu0 %v4878
    %5891 = vmatmul.bf16.gmra.mxu0 %v5855
    %v5892 = vpop.f32.mrf.mxu0
    %v5893 = vadd.f32 0.0, %v5892
    %v5894 = vpop.f32.mrf.mxu0
    %5895 = vdwg.mxu0
    %5896 = vmatpush.bf16.msra.mxu0 %v4938
    %5897 = vmatpush.bf16.msra.mxu0 %v4934
    %5898 = vmatpush.bf16.msra.mxu0 %v4930
    %5899 = vmatpush.bf16.msra.mxu0 %v4926
    %5900 = vmatpush.bf16.msra.mxu0 %v4922
    %5901 = vmatpush.bf16.msra.mxu0 %v4918
    %5902 = vmatpush.bf16.msra.mxu0 %v4914
    %5903 = vmatpush.bf16.msra.mxu0 %v4910
    %5904 = vmatmul.bf16.gmra.mxu0 %v5856
    %v5905 = vpop.f32.mrf.mxu0
    %v5906 = vadd.f32 %v5893, %v5905
    %v5907 = vpop.f32.mrf.mxu0
    %5908 = vdwg.mxu0
    %5909 = vmatpush.bf16.msra.mxu0 %v4907
    %5910 = vmatpush.bf16.msra.mxu0 %v4903
    %5911 = vmatpush.bf16.msra.mxu0 %v4899
    %5912 = vmatpush.bf16.msra.mxu0 %v4895
    %5913 = vmatpush.bf16.msra.mxu0 %v4891
    %5914 = vmatpush.bf16.msra.mxu0 %v4887
    %5915 = vmatpush.bf16.msra.mxu0 %v4883
    %5916 = vmatpush.bf16.msra.mxu0 %v4879
    %5917 = vmatmul.bf16.gmra.mxu0 %v5855
    %v5918 = vpop.f32.mrf.mxu0
    %v5919 = vadd.f32 0.0, %v5918
    %v5920 = vpop.f32.mrf.mxu0
    %5921 = vdwg.mxu0
    %5922 = vmatpush.bf16.msra.mxu0 %v4939
    %5923 = vmatpush.bf16.msra.mxu0 %v4935
    %5924 = vmatpush.bf16.msra.mxu0 %v4931
    %5925 = vmatpush.bf16.msra.mxu0 %v4927
    %5926 = vmatpush.bf16.msra.mxu0 %v4923
    %5927 = vmatpush.bf16.msra.mxu0 %v4919
    %5928 = vmatpush.bf16.msra.mxu0 %v4915
    %5929 = vmatpush.bf16.msra.mxu0 %v4911
    %5930 = vmatmul.bf16.gmra.mxu0 %v5856
    %v5931 = vpop.f32.mrf.mxu0
    %v5932 = vadd.f32 %v5919, %v5931
    %v5933 = vpop.f32.mrf.mxu0
    %5934 = vdwg.mxu0
    %5935 = vmatpush.bf16.msra.mxu0 %v4908
    %5936 = vmatpush.bf16.msra.mxu0 %v4904
    %5937 = vmatpush.bf16.msra.mxu0 %v4900
    %5938 = vmatpush.bf16.msra.mxu0 %v4896
    %5939 = vmatpush.bf16.msra.mxu0 %v4892
    %5940 = vmatpush.bf16.msra.mxu0 %v4888
    %5941 = vmatpush.bf16.msra.mxu0 %v4884
    %5942 = vmatpush.bf16.msra.mxu0 %v4880
    %5943 = vmatmul.bf16.gmra.mxu0 %v5855
    %v5944 = vpop.f32.mrf.mxu0
    %v5945 = vadd.f32 0.0, %v5944
    %v5946 = vpop.f32.mrf.mxu0
    %5947 = vdwg.mxu0
    %5948 = vmatpush.bf16.msra.mxu0 %v4940
    %5949 = vmatpush.bf16.msra.mxu0 %v4936
    %5950 = vmatpush.bf16.msra.mxu0 %v4932
    %5951 = vmatpush.bf16.msra.mxu0 %v4928
    %5952 = vmatpush.bf16.msra.mxu0 %v4924
    %5953 = vmatpush.bf16.msra.mxu0 %v4920
    %5954 = vmatpush.bf16.msra.mxu0 %v4916
    %5955 = vmatpush.bf16.msra.mxu0 %v4912
    %5956 = vmatmul.bf16.gmra.mxu0 %v5856
    %v5957 = vpop.f32.mrf.mxu0
    %v5958 = vadd.f32 %v5945, %v5957
    %v5959 = vpop.f32.mrf.mxu0
    %5960 = vdwg.mxu0
    %v5961 = vadd.f32 %v5849, %v5880
    %v5962 = vadd.f32 %v5850, %v5906
    %v5963 = vadd.f32 %v5851, %v5932
    %v5964 = vadd.f32 %v5852, %v5958
    %v5965 = vxor.u32 %v5961, 2147483648
    %v5966 = vmul.f32 %v5965, 1.442695
    %v5967 = vpow.pop %v5966
    %v5968 = vadd.f32 %v5967, 1.0
    %v5969 = vrcp.pop %v5968
    %v5970 = vmul.f32 %v5968, %v5969
    %v5971 = vsub.f32 1.0, %v5970
    %v5972 = vmul.f32 %v5969, %v5971
    %v5973 = vadd.f32 %v5969, %v5972
    %vm5974 = vweird.f32 %v5968
    %vm5975 = vweird.f32 %v5969
    %vm5976 = vmor %vm5974, %vm5975
    %v5977 = vsel %vm5976, %v5969, %v5973
    %v5978 = vand.u32 2147483647, %v5968
    %vm5979 = vcmp.eq.f32.partialorder %v5978, 8.507059e+37
    %v5980 = vand.u32 %v5968, 2147483648
    %v5981 = vor.u32 1.1754944e-38, %v5980
    %v5982 = vsel %vm5979, %v5981, %v5977
    %v5983 = vmul.f32 1.0, %v5982
    %v5984 = vxor.u32 %v5962, 2147483648
    %v5985 = vmul.f32 %v5984, 1.442695
    %v5986 = vpow.pop %v5985
    %v5987 = vadd.f32 %v5986, 1.0
    %v5988 = vrcp.pop %v5987
    %v5989 = vmul.f32 %v5987, %v5988
    %v5990 = vsub.f32 1.0, %v5989
    %v5991 = vmul.f32 %v5988, %v5990
    %v5992 = vadd.f32 %v5988, %v5991
    %vm5993 = vweird.f32 %v5987
    %vm5994 = vweird.f32 %v5988
    %vm5995 = vmor %vm5993, %vm5994
    %v5996 = vsel %vm5995, %v5988, %v5992
    %v5997 = vand.u32 2147483647, %v5987
    %vm5998 = vcmp.eq.f32.partialorder %v5997, 8.507059e+37
    %v5999 = vand.u32 %v5987, 2147483648
    %v6000 = vor.u32 1.1754944e-38, %v5999
    %v6001 = vsel %vm5998, %v6000, %v5996
    %v6002 = vmul.f32 1.0, %v6001
    %v6003 = vtanh.pop %v5963
    %v6004 = vxor.u32 %v5964, 2147483648
    %v6005 = vmul.f32 %v6004, 1.442695
    %v6006 = vpow.pop %v6005
    %v6007 = vadd.f32 %v6006, 1.0
    %v6008 = vrcp.pop %v6007
    %v6009 = vmul.f32 %v6007, %v6008
    %v6010 = vsub.f32 1.0, %v6009
    %v6011 = vmul.f32 %v6008, %v6010
    %v6012 = vadd.f32 %v6008, %v6011
    %vm6013 = vweird.f32 %v6007
    %vm6014 = vweird.f32 %v6008
    %vm6015 = vmor %vm6013, %vm6014
    %v6016 = vsel %vm6015, %v6008, %v6012
    %v6017 = vand.u32 2147483647, %v6007
    %vm6018 = vcmp.eq.f32.partialorder %v6017, 8.507059e+37
    %v6019 = vand.u32 %v6007, 2147483648
    %v6020 = vor.u32 1.1754944e-38, %v6019
    %v6021 = vsel %vm6018, %v6020, %v6016
    %v6022 = vmul.f32 1.0, %v6021
    %v6023 = vmul.f32 %v6002, %v5782
    %v6024 = vmul.f32 %v5983, %v6003
    %v6025 = vadd.f32 %v6023, %v6024
    %v6026 = vmax.f32 %v6025, -3.0
    %v6027 = vmin.f32 %v6026, 3.0
    %v6028 = vtanh.pop %v6027
    %v6029 = vmul.f32 %v6022, %v6028
    %v6030 = vsel %vm1053, %v6029, 0.0
    %v6031 = vsel %vm1054, %v6029, 0.0
    %v6032 = vpack.c.bf16 %v6030, %v6030
    %v6033 = vpack.c.bf16 %v6031, %v6031
    %6034 = vmatpush.bf16.msra.mxu0 %v5286
    %6035 = vmatpush.bf16.msra.mxu0 %v5285
    %6036 = vmatpush.bf16.msra.mxu0 %v5284
    %6037 = vmatpush.bf16.msra.mxu0 %v5283
    %6038 = vmatpush.bf16.msra.mxu0 %v5282
    %6039 = vmatpush.bf16.msra.mxu0 %v5281
    %6040 = vmatpush.bf16.msra.mxu0 %v5280
    %6041 = vmatpush.bf16.msra.mxu0 %v5279
    %6042 = vmatmul.bf16.gmra.mxu0 %v6032
    %v6043 = vpop.f32.mrf.mxu0
    %v6044 = vadd.f32 0.0, %v6043
    %v6045 = vpop.f32.mrf.mxu0
    %6046 = vdwg.mxu0
    %6047 = vmatpush.bf16.msra.mxu0 %v5294
    %6048 = vmatpush.bf16.msra.mxu0 %v5293
    %6049 = vmatpush.bf16.msra.mxu0 %v5292
    %6050 = vmatpush.bf16.msra.mxu0 %v5291
    %6051 = vmatpush.bf16.msra.mxu0 %v5290
    %6052 = vmatpush.bf16.msra.mxu0 %v5289
    %6053 = vmatpush.bf16.msra.mxu0 %v5288
    %6054 = vmatpush.bf16.msra.mxu0 %v5287
    %6055 = vmatmul.bf16.gmra.mxu0 %v6033
    %v6056 = vpop.f32.mrf.mxu0
    %v6057 = vadd.f32 %v6044, %v6056
    %v6058 = vpop.f32.mrf.mxu0
    %6059 = vdwg.mxu0
    %v6060 = vmax.f32 %v6057, -3.0
    %v6061 = vmin.f32 %v6060, 3.0
    %v6062 = vld [vmem:[#allocation2 + $0x20] sm:$0x3]
    %v6063 = vld [vmem:[#allocation2 + $0x28] sm:$0x3]
    %v6064 = vld [vmem:[#allocation2 + $0x30] sm:$0x3]
    %v6065 = vld [vmem:[#allocation2 + $0x38] sm:$0x3]
    %v6066 = vld [vmem:[#allocation3] sm:$0xc0]
    %v6067 = vld [vmem:[#allocation3 + $0x8] sm:$0xc0]
    %v6068 = vld [vmem:[#allocation3 + $0x10] sm:$0xc0]
    %v6069 = vld [vmem:[#allocation3 + $0x18] sm:$0xc0]
    %v6074 = vrot.slane %v6066, 4
    %v6075 = vrot.slane %v6067, 4
    %v6076 = vrot.slane %v6068, 4
    %v6077 = vrot.slane %v6069, 4
    %v6082 = vsel %vm1610, %v6062, %v6074
    %v6083 = vsel %vm1610, %v6063, %v6075
    %v6084 = vsel %vm1610, %v6064, %v6076
    %v6085 = vsel %vm1610, %v6065, %v6077
    %v6086 = vsel %vm1053, %v6061, 0.0
    %v6087 = vsel %vm1054, %v6061, 0.0
    %v6088 = vpack.c.bf16 %v6086, %v6086
    %v6089 = vpack.c.bf16 %v6087, %v6087
    %6090 = vmatpush.bf16.msra.mxu0 %v4905
    %6091 = vmatpush.bf16.msra.mxu0 %v4901
    %6092 = vmatpush.bf16.msra.mxu0 %v4897
    %6093 = vmatpush.bf16.msra.mxu0 %v4893
    %6094 = vmatpush.bf16.msra.mxu0 %v4889
    %6095 = vmatpush.bf16.msra.mxu0 %v4885
    %6096 = vmatpush.bf16.msra.mxu0 %v4881
    %6097 = vmatpush.bf16.msra.mxu0 %v4877
    %6098 = vmatmul.bf16.gmra.mxu0 %v6088
    %v6099 = vpop.f32.mrf.mxu0
    %v6100 = vadd.f32 0.0, %v6099
    %v6101 = vpop.f32.mrf.mxu0
    %6102 = vdwg.mxu0
    %6103 = vmatpush.bf16.msra.mxu0 %v4937
    %6104 = vmatpush.bf16.msra.mxu0 %v4933
    %6105 = vmatpush.bf16.msra.mxu0 %v4929
    %6106 = vmatpush.bf16.msra.mxu0 %v4925
    %6107 = vmatpush.bf16.msra.mxu0 %v4921
    %6108 = vmatpush.bf16.msra.mxu0 %v4917
    %6109 = vmatpush.bf16.msra.mxu0 %v4913
    %6110 = vmatpush.bf16.msra.mxu0 %v4909
    %6111 = vmatmul.bf16.gmra.mxu0 %v6089
    %v6112 = vpop.f32.mrf.mxu0
    %v6113 = vadd.f32 %v6100, %v6112
    %v6114 = vpop.f32.mrf.mxu0
    %6115 = vdwg.mxu0
    %6116 = vmatpush.bf16.msra.mxu0 %v4906
    %6117 = vmatpush.bf16.msra.mxu0 %v4902
    %6118 = vmatpush.bf16.msra.mxu0 %v4898
    %6119 = vmatpush.bf16.msra.mxu0 %v4894
    %6120 = vmatpush.bf16.msra.mxu0 %v4890
    %6121 = vmatpush.bf16.msra.mxu0 %v4886
    %6122 = vmatpush.bf16.msra.mxu0 %v4882
    %6123 = vmatpush.bf16.msra.mxu0 %v4878
    %6124 = vmatmul.bf16.gmra.mxu0 %v6088
    %v6125 = vpop.f32.mrf.mxu0
    %v6126 = vadd.f32 0.0, %v6125
    %v6127 = vpop.f32.mrf.mxu0
    %6128 = vdwg.mxu0
    %6129 = vmatpush.bf16.msra.mxu0 %v4938
    %6130 = vmatpush.bf16.msra.mxu0 %v4934
    %6131 = vmatpush.bf16.msra.mxu0 %v4930
    %6132 = vmatpush.bf16.msra.mxu0 %v4926
    %6133 = vmatpush.bf16.msra.mxu0 %v4922
    %6134 = vmatpush.bf16.msra.mxu0 %v4918
    %6135 = vmatpush.bf16.msra.mxu0 %v4914
    %6136 = vmatpush.bf16.msra.mxu0 %v4910
    %6137 = vmatmul.bf16.gmra.mxu0 %v6089
    %v6138 = vpop.f32.mrf.mxu0
    %v6139 = vadd.f32 %v6126, %v6138
    %v6140 = vpop.f32.mrf.mxu0
    %6141 = vdwg.mxu0
    %6142 = vmatpush.bf16.msra.mxu0 %v4907
    %6143 = vmatpush.bf16.msra.mxu0 %v4903
    %6144 = vmatpush.bf16.msra.mxu0 %v4899
    %6145 = vmatpush.bf16.msra.mxu0 %v4895
    %6146 = vmatpush.bf16.msra.mxu0 %v4891
    %6147 = vmatpush.bf16.msra.mxu0 %v4887
    %6148 = vmatpush.bf16.msra.mxu0 %v4883
    %6149 = vmatpush.bf16.msra.mxu0 %v4879
    %6150 = vmatmul.bf16.gmra.mxu0 %v6088
    %v6151 = vpop.f32.mrf.mxu0
    %v6152 = vadd.f32 0.0, %v6151
    %v6153 = vpop.f32.mrf.mxu0
    %6154 = vdwg.mxu0
    %6155 = vmatpush.bf16.msra.mxu0 %v4939
    %6156 = vmatpush.bf16.msra.mxu0 %v4935
    %6157 = vmatpush.bf16.msra.mxu0 %v4931
    %6158 = vmatpush.bf16.msra.mxu0 %v4927
    %6159 = vmatpush.bf16.msra.mxu0 %v4923
    %6160 = vmatpush.bf16.msra.mxu0 %v4919
    %6161 = vmatpush.bf16.msra.mxu0 %v4915
    %6162 = vmatpush.bf16.msra.mxu0 %v4911
    %6163 = vmatmul.bf16.gmra.mxu0 %v6089
    %v6164 = vpop.f32.mrf.mxu0
    %v6165 = vadd.f32 %v6152, %v6164
    %v6166 = vpop.f32.mrf.mxu0
    %6167 = vdwg.mxu0
    %6168 = vmatpush.bf16.msra.mxu0 %v4908
    %6169 = vmatpush.bf16.msra.mxu0 %v4904
    %6170 = vmatpush.bf16.msra.mxu0 %v4900
    %6171 = vmatpush.bf16.msra.mxu0 %v4896
    %6172 = vmatpush.bf16.msra.mxu0 %v4892
    %6173 = vmatpush.bf16.msra.mxu0 %v4888
    %6174 = vmatpush.bf16.msra.mxu0 %v4884
    %6175 = vmatpush.bf16.msra.mxu0 %v4880
    %6176 = vmatmul.bf16.gmra.mxu0 %v6088
    %v6177 = vpop.f32.mrf.mxu0
    %v6178 = vadd.f32 0.0, %v6177
    %v6179 = vpop.f32.mrf.mxu0
    %6180 = vdwg.mxu0
    %6181 = vmatpush.bf16.msra.mxu0 %v4940
    %6182 = vmatpush.bf16.msra.mxu0 %v4936
    %6183 = vmatpush.bf16.msra.mxu0 %v4932
    %6184 = vmatpush.bf16.msra.mxu0 %v4928
    %6185 = vmatpush.bf16.msra.mxu0 %v4924
    %6186 = vmatpush.bf16.msra.mxu0 %v4920
    %6187 = vmatpush.bf16.msra.mxu0 %v4916
    %6188 = vmatpush.bf16.msra.mxu0 %v4912
    %6189 = vmatmul.bf16.gmra.mxu0 %v6089
    %v6190 = vpop.f32.mrf.mxu0
    %v6191 = vadd.f32 %v6178, %v6190
    %v6192 = vpop.f32.mrf.mxu0
    %6193 = vdwg.mxu0
    %v6194 = vadd.f32 %v6082, %v6113
    %v6195 = vadd.f32 %v6083, %v6139
    %v6196 = vadd.f32 %v6084, %v6165
    %v6197 = vadd.f32 %v6085, %v6191
    %v6198 = vxor.u32 %v6194, 2147483648
    %v6199 = vmul.f32 %v6198, 1.442695
    %v6200 = vpow.pop %v6199
    %v6201 = vadd.f32 %v6200, 1.0
    %v6202 = vrcp.pop %v6201
    %v6203 = vmul.f32 %v6201, %v6202
    %v6204 = vsub.f32 1.0, %v6203
    %v6205 = vmul.f32 %v6202, %v6204
    %v6206 = vadd.f32 %v6202, %v6205
    %vm6207 = vweird.f32 %v6201
    %vm6208 = vweird.f32 %v6202
    %vm6209 = vmor %vm6207, %vm6208
    %v6210 = vsel %vm6209, %v6202, %v6206
    %v6211 = vand.u32 2147483647, %v6201
    %vm6212 = vcmp.eq.f32.partialorder %v6211, 8.507059e+37
    %v6213 = vand.u32 %v6201, 2147483648
    %v6214 = vor.u32 1.1754944e-38, %v6213
    %v6215 = vsel %vm6212, %v6214, %v6210
    %v6216 = vmul.f32 1.0, %v6215
    %v6217 = vxor.u32 %v6195, 2147483648
    %v6218 = vmul.f32 %v6217, 1.442695
    %v6219 = vpow.pop %v6218
    %v6220 = vadd.f32 %v6219, 1.0
    %v6221 = vrcp.pop %v6220
    %v6222 = vmul.f32 %v6220, %v6221
    %v6223 = vsub.f32 1.0, %v6222
    %v6224 = vmul.f32 %v6221, %v6223
    %v6225 = vadd.f32 %v6221, %v6224
    %vm6226 = vweird.f32 %v6220
    %vm6227 = vweird.f32 %v6221
    %vm6228 = vmor %vm6226, %vm6227
    %v6229 = vsel %vm6228, %v6221, %v6225
    %v6230 = vand.u32 2147483647, %v6220
    %vm6231 = vcmp.eq.f32.partialorder %v6230, 8.507059e+37
    %v6232 = vand.u32 %v6220, 2147483648
    %v6233 = vor.u32 1.1754944e-38, %v6232
    %v6234 = vsel %vm6231, %v6233, %v6229
    %v6235 = vmul.f32 1.0, %v6234
    %v6236 = vtanh.pop %v6196
    %v6237 = vxor.u32 %v6197, 2147483648
    %v6238 = vmul.f32 %v6237, 1.442695
    %v6239 = vpow.pop %v6238
    %v6240 = vadd.f32 %v6239, 1.0
    %v6241 = vrcp.pop %v6240
    %v6242 = vmul.f32 %v6240, %v6241
    %v6243 = vsub.f32 1.0, %v6242
    %v6244 = vmul.f32 %v6241, %v6243
    %v6245 = vadd.f32 %v6241, %v6244
    %vm6246 = vweird.f32 %v6240
    %vm6247 = vweird.f32 %v6241
    %vm6248 = vmor %vm6246, %vm6247
    %v6249 = vsel %vm6248, %v6241, %v6245
    %v6250 = vand.u32 2147483647, %v6240
    %vm6251 = vcmp.eq.f32.partialorder %v6250, 8.507059e+37
    %v6252 = vand.u32 %v6240, 2147483648
    %v6253 = vor.u32 1.1754944e-38, %v6252
    %v6254 = vsel %vm6251, %v6253, %v6249
    %v6255 = vmul.f32 1.0, %v6254
    %v6256 = vmul.f32 %v6235, %v6027
    %v6257 = vmul.f32 %v6216, %v6236
    %v6258 = vadd.f32 %v6256, %v6257
    %v6259 = vmax.f32 %v6258, -3.0
    %v6260 = vmin.f32 %v6259, 3.0
    %v6261 = vtanh.pop %v6260
    %v6262 = vmul.f32 %v6255, %v6261
    %v6263 = vsel %vm1053, %v6262, 0.0
    %v6264 = vsel %vm1054, %v6262, 0.0
    %v6265 = vpack.c.bf16 %v6263, %v6263
    %v6266 = vpack.c.bf16 %v6264, %v6264
    %6267 = vmatpush.bf16.msra.mxu0 %v5286
    %6268 = vmatpush.bf16.msra.mxu0 %v5285
    %6269 = vmatpush.bf16.msra.mxu0 %v5284
    %6270 = vmatpush.bf16.msra.mxu0 %v5283
    %6271 = vmatpush.bf16.msra.mxu0 %v5282
    %6272 = vmatpush.bf16.msra.mxu0 %v5281
    %6273 = vmatpush.bf16.msra.mxu0 %v5280
    %6274 = vmatpush.bf16.msra.mxu0 %v5279
    %6275 = vmatmul.bf16.gmra.mxu0 %v6265
    %v6276 = vpop.f32.mrf.mxu0
    %v6277 = vadd.f32 0.0, %v6276
    %v6278 = vpop.f32.mrf.mxu0
    %6279 = vdwg.mxu0
    %6280 = vmatpush.bf16.msra.mxu0 %v5294
    %6281 = vmatpush.bf16.msra.mxu0 %v5293
    %6282 = vmatpush.bf16.msra.mxu0 %v5292
    %6283 = vmatpush.bf16.msra.mxu0 %v5291
    %6284 = vmatpush.bf16.msra.mxu0 %v5290
    %6285 = vmatpush.bf16.msra.mxu0 %v5289
    %6286 = vmatpush.bf16.msra.mxu0 %v5288
    %6287 = vmatpush.bf16.msra.mxu0 %v5287
    %6288 = vmatmul.bf16.gmra.mxu0 %v6266
    %v6289 = vpop.f32.mrf.mxu0
    %v6290 = vadd.f32 %v6277, %v6289
    %v6291 = vpop.f32.mrf.mxu0
    %6292 = vdwg.mxu0
    %v6293 = vmax.f32 %v6290, -3.0
    %v6294 = vmin.f32 %v6293, 3.0
    %v6295 = vld [vmem:[#allocation2 + $0x20] sm:$0xc]
    %v6296 = vld [vmem:[#allocation2 + $0x28] sm:$0xc]
    %v6297 = vld [vmem:[#allocation2 + $0x30] sm:$0xc]
    %v6298 = vld [vmem:[#allocation2 + $0x38] sm:$0xc]
    %v6299 = vld [vmem:[#allocation3] sm:$0x30]
    %v6300 = vld [vmem:[#allocation3 + $0x8] sm:$0x30]
    %v6301 = vld [vmem:[#allocation3 + $0x10] sm:$0x30]
    %v6302 = vld [vmem:[#allocation3 + $0x18] sm:$0x30]
    %v6307 = vrot.slane %v6295, 2
    %v6308 = vrot.slane %v6296, 2
    %v6309 = vrot.slane %v6297, 2
    %v6310 = vrot.slane %v6298, 2
    %v6319 = vrot.slane %v6299, 2
    %v6320 = vrot.slane %v6300, 2
    %v6321 = vrot.slane %v6301, 2
    %v6322 = vrot.slane %v6302, 2
    %v6327 = vsel %vm1610, %v6307, %v6319
    %v6328 = vsel %vm1610, %v6308, %v6320
    %v6329 = vsel %vm1610, %v6309, %v6321
    %v6330 = vsel %vm1610, %v6310, %v6322
    %v6331 = vsel %vm1053, %v6294, 0.0
    %v6332 = vsel %vm1054, %v6294, 0.0
    %v6333 = vpack.c.bf16 %v6331, %v6331
    %v6334 = vpack.c.bf16 %v6332, %v6332
    %6335 = vmatpush.bf16.msra.mxu0 %v4905
    %6336 = vmatpush.bf16.msra.mxu0 %v4901
    %6337 = vmatpush.bf16.msra.mxu0 %v4897
    %6338 = vmatpush.bf16.msra.mxu0 %v4893
    %6339 = vmatpush.bf16.msra.mxu0 %v4889
    %6340 = vmatpush.bf16.msra.mxu0 %v4885
    %6341 = vmatpush.bf16.msra.mxu0 %v4881
    %6342 = vmatpush.bf16.msra.mxu0 %v4877
    %6343 = vmatmul.bf16.gmra.mxu0 %v6333
    %v6344 = vpop.f32.mrf.mxu0
    %v6345 = vadd.f32 0.0, %v6344
    %v6346 = vpop.f32.mrf.mxu0
    %6347 = vdwg.mxu0
    %6348 = vmatpush.bf16.msra.mxu0 %v4937
    %6349 = vmatpush.bf16.msra.mxu0 %v4933
    %6350 = vmatpush.bf16.msra.mxu0 %v4929
    %6351 = vmatpush.bf16.msra.mxu0 %v4925
    %6352 = vmatpush.bf16.msra.mxu0 %v4921
    %6353 = vmatpush.bf16.msra.mxu0 %v4917
    %6354 = vmatpush.bf16.msra.mxu0 %v4913
    %6355 = vmatpush.bf16.msra.mxu0 %v4909
    %6356 = vmatmul.bf16.gmra.mxu0 %v6334
    %v6357 = vpop.f32.mrf.mxu0
    %v6358 = vadd.f32 %v6345, %v6357
    %v6359 = vpop.f32.mrf.mxu0
    %6360 = vdwg.mxu0
    %6361 = vmatpush.bf16.msra.mxu0 %v4906
    %6362 = vmatpush.bf16.msra.mxu0 %v4902
    %6363 = vmatpush.bf16.msra.mxu0 %v4898
    %6364 = vmatpush.bf16.msra.mxu0 %v4894
    %6365 = vmatpush.bf16.msra.mxu0 %v4890
    %6366 = vmatpush.bf16.msra.mxu0 %v4886
    %6367 = vmatpush.bf16.msra.mxu0 %v4882
    %6368 = vmatpush.bf16.msra.mxu0 %v4878
    %6369 = vmatmul.bf16.gmra.mxu0 %v6333
    %v6370 = vpop.f32.mrf.mxu0
    %v6371 = vadd.f32 0.0, %v6370
    %v6372 = vpop.f32.mrf.mxu0
    %6373 = vdwg.mxu0
    %6374 = vmatpush.bf16.msra.mxu0 %v4938
    %6375 = vmatpush.bf16.msra.mxu0 %v4934
    %6376 = vmatpush.bf16.msra.mxu0 %v4930
    %6377 = vmatpush.bf16.msra.mxu0 %v4926
    %6378 = vmatpush.bf16.msra.mxu0 %v4922
    %6379 = vmatpush.bf16.msra.mxu0 %v4918
    %6380 = vmatpush.bf16.msra.mxu0 %v4914
    %6381 = vmatpush.bf16.msra.mxu0 %v4910
    %6382 = vmatmul.bf16.gmra.mxu0 %v6334
    %v6383 = vpop.f32.mrf.mxu0
    %v6384 = vadd.f32 %v6371, %v6383
    %v6385 = vpop.f32.mrf.mxu0
    %6386 = vdwg.mxu0
    %6387 = vmatpush.bf16.msra.mxu0 %v4907
    %6388 = vmatpush.bf16.msra.mxu0 %v4903
    %6389 = vmatpush.bf16.msra.mxu0 %v4899
    %6390 = vmatpush.bf16.msra.mxu0 %v4895
    %6391 = vmatpush.bf16.msra.mxu0 %v4891
    %6392 = vmatpush.bf16.msra.mxu0 %v4887
    %6393 = vmatpush.bf16.msra.mxu0 %v4883
    %6394 = vmatpush.bf16.msra.mxu0 %v4879
    %6395 = vmatmul.bf16.gmra.mxu0 %v6333
    %v6396 = vpop.f32.mrf.mxu0
    %v6397 = vadd.f32 0.0, %v6396
    %v6398 = vpop.f32.mrf.mxu0
    %6399 = vdwg.mxu0
    %6400 = vmatpush.bf16.msra.mxu0 %v4939
    %6401 = vmatpush.bf16.msra.mxu0 %v4935
    %6402 = vmatpush.bf16.msra.mxu0 %v4931
    %6403 = vmatpush.bf16.msra.mxu0 %v4927
    %6404 = vmatpush.bf16.msra.mxu0 %v4923
    %6405 = vmatpush.bf16.msra.mxu0 %v4919
    %6406 = vmatpush.bf16.msra.mxu0 %v4915
    %6407 = vmatpush.bf16.msra.mxu0 %v4911
    %6408 = vmatmul.bf16.gmra.mxu0 %v6334
    %v6409 = vpop.f32.mrf.mxu0
    %v6410 = vadd.f32 %v6397, %v6409
    %v6411 = vpop.f32.mrf.mxu0
    %6412 = vdwg.mxu0
    %6413 = vmatpush.bf16.msra.mxu0 %v4908
    %6414 = vmatpush.bf16.msra.mxu0 %v4904
    %6415 = vmatpush.bf16.msra.mxu0 %v4900
    %6416 = vmatpush.bf16.msra.mxu0 %v4896
    %6417 = vmatpush.bf16.msra.mxu0 %v4892
    %6418 = vmatpush.bf16.msra.mxu0 %v4888
    %6419 = vmatpush.bf16.msra.mxu0 %v4884
    %6420 = vmatpush.bf16.msra.mxu0 %v4880
    %6421 = vmatmul.bf16.gmra.mxu0 %v6333
    %v6422 = vpop.f32.mrf.mxu0
    %v6423 = vadd.f32 0.0, %v6422
    %v6424 = vpop.f32.mrf.mxu0
    %6425 = vdwg.mxu0
    %6426 = vmatpush.bf16.msra.mxu0 %v4940
    %6427 = vmatpush.bf16.msra.mxu0 %v4936
    %6428 = vmatpush.bf16.msra.mxu0 %v4932
    %6429 = vmatpush.bf16.msra.mxu0 %v4928
    %6430 = vmatpush.bf16.msra.mxu0 %v4924
    %6431 = vmatpush.bf16.msra.mxu0 %v4920
    %6432 = vmatpush.bf16.msra.mxu0 %v4916
    %6433 = vmatpush.bf16.msra.mxu0 %v4912
    %6434 = vmatmul.bf16.gmra.mxu0 %v6334
    %v6435 = vpop.f32.mrf.mxu0
    %v6436 = vadd.f32 %v6423, %v6435
    %v6437 = vpop.f32.mrf.mxu0
    %6438 = vdwg.mxu0
    %v6439 = vadd.f32 %v6327, %v6358
    %v6440 = vadd.f32 %v6328, %v6384
    %v6441 = vadd.f32 %v6329, %v6410
    %v6442 = vadd.f32 %v6330, %v6436
    %v6443 = vxor.u32 %v6439, 2147483648
    %v6444 = vmul.f32 %v6443, 1.442695
    %v6445 = vpow.pop %v6444
    %v6446 = vadd.f32 %v6445, 1.0
    %v6447 = vrcp.pop %v6446
    %v6448 = vmul.f32 %v6446, %v6447
    %v6449 = vsub.f32 1.0, %v6448
    %v6450 = vmul.f32 %v6447, %v6449
    %v6451 = vadd.f32 %v6447, %v6450
    %vm6452 = vweird.f32 %v6446
    %vm6453 = vweird.f32 %v6447
    %vm6454 = vmor %vm6452, %vm6453
    %v6455 = vsel %vm6454, %v6447, %v6451
    %v6456 = vand.u32 2147483647, %v6446
    %vm6457 = vcmp.eq.f32.partialorder %v6456, 8.507059e+37
    %v6458 = vand.u32 %v6446, 2147483648
    %v6459 = vor.u32 1.1754944e-38, %v6458
    %v6460 = vsel %vm6457, %v6459, %v6455
    %v6461 = vmul.f32 1.0, %v6460
    %v6462 = vxor.u32 %v6440, 2147483648
    %v6463 = vmul.f32 %v6462, 1.442695
    %v6464 = vpow.pop %v6463
    %v6465 = vadd.f32 %v6464, 1.0
    %v6466 = vrcp.pop %v6465
    %v6467 = vmul.f32 %v6465, %v6466
    %v6468 = vsub.f32 1.0, %v6467
    %v6469 = vmul.f32 %v6466, %v6468
    %v6470 = vadd.f32 %v6466, %v6469
    %vm6471 = vweird.f32 %v6465
    %vm6472 = vweird.f32 %v6466
    %vm6473 = vmor %vm6471, %vm6472
    %v6474 = vsel %vm6473, %v6466, %v6470
    %v6475 = vand.u32 2147483647, %v6465
    %vm6476 = vcmp.eq.f32.partialorder %v6475, 8.507059e+37
    %v6477 = vand.u32 %v6465, 2147483648
    %v6478 = vor.u32 1.1754944e-38, %v6477
    %v6479 = vsel %vm6476, %v6478, %v6474
    %v6480 = vmul.f32 1.0, %v6479
    %v6481 = vtanh.pop %v6441
    %v6482 = vxor.u32 %v6442, 2147483648
    %v6483 = vmul.f32 %v6482, 1.442695
    %v6484 = vpow.pop %v6483
    %v6485 = vadd.f32 %v6484, 1.0
    %v6486 = vrcp.pop %v6485
    %v6487 = vmul.f32 %v6485, %v6486
    %v6488 = vsub.f32 1.0, %v6487
    %v6489 = vmul.f32 %v6486, %v6488
    %v6490 = vadd.f32 %v6486, %v6489
    %vm6491 = vweird.f32 %v6485
    %vm6492 = vweird.f32 %v6486
    %vm6493 = vmor %vm6491, %vm6492
    %v6494 = vsel %vm6493, %v6486, %v6490
    %v6495 = vand.u32 2147483647, %v6485
    %vm6496 = vcmp.eq.f32.partialorder %v6495, 8.507059e+37
    %v6497 = vand.u32 %v6485, 2147483648
    %v6498 = vor.u32 1.1754944e-38, %v6497
    %v6499 = vsel %vm6496, %v6498, %v6494
    %v6500 = vmul.f32 1.0, %v6499
    %v6501 = vmul.f32 %v6480, %v6260
    %v6502 = vmul.f32 %v6461, %v6481
    %v6503 = vadd.f32 %v6501, %v6502
    %v6504 = vmax.f32 %v6503, -3.0
    %v6505 = vmin.f32 %v6504, 3.0
    %v6506 = vtanh.pop %v6505
    %v6507 = vmul.f32 %v6500, %v6506
    %v6508 = vsel %vm1053, %v6507, 0.0
    %v6509 = vsel %vm1054, %v6507, 0.0
    %v6510 = vpack.c.bf16 %v6508, %v6508
    %v6511 = vpack.c.bf16 %v6509, %v6509
    %6512 = vmatpush.bf16.msra.mxu0 %v5286
    %6513 = vmatpush.bf16.msra.mxu0 %v5285
    %6514 = vmatpush.bf16.msra.mxu0 %v5284
    %6515 = vmatpush.bf16.msra.mxu0 %v5283
    %6516 = vmatpush.bf16.msra.mxu0 %v5282
    %6517 = vmatpush.bf16.msra.mxu0 %v5281
    %6518 = vmatpush.bf16.msra.mxu0 %v5280
    %6519 = vmatpush.bf16.msra.mxu0 %v5279
    %6520 = vmatmul.bf16.gmra.mxu0 %v6510
    %v6521 = vpop.f32.mrf.mxu0
    %v6522 = vadd.f32 0.0, %v6521
    %v6523 = vpop.f32.mrf.mxu0
    %6524 = vdwg.mxu0
    %6525 = vmatpush.bf16.msra.mxu0 %v5294
    %6526 = vmatpush.bf16.msra.mxu0 %v5293
    %6527 = vmatpush.bf16.msra.mxu0 %v5292
    %6528 = vmatpush.bf16.msra.mxu0 %v5291
    %6529 = vmatpush.bf16.msra.mxu0 %v5290
    %6530 = vmatpush.bf16.msra.mxu0 %v5289
    %6531 = vmatpush.bf16.msra.mxu0 %v5288
    %6532 = vmatpush.bf16.msra.mxu0 %v5287
    %6533 = vmatmul.bf16.gmra.mxu0 %v6511
    %v6534 = vpop.f32.mrf.mxu0
    %v6535 = vadd.f32 %v6522, %v6534
    %v6536 = vpop.f32.mrf.mxu0
    %6537 = vdwg.mxu0
    %v6538 = vmax.f32 %v6535, -3.0
    %v6539 = vmin.f32 %v6538, 3.0
    %v6540 = vld [vmem:[#allocation2 + $0x20] sm:$0x30]
    %v6541 = vld [vmem:[#allocation2 + $0x28] sm:$0x30]
    %v6542 = vld [vmem:[#allocation2 + $0x30] sm:$0x30]
    %v6543 = vld [vmem:[#allocation2 + $0x38] sm:$0x30]
    %v6544 = vld [vmem:[#allocation3] sm:$0xc]
    %v6545 = vld [vmem:[#allocation3 + $0x8] sm:$0xc]
    %v6546 = vld [vmem:[#allocation3 + $0x10] sm:$0xc]
    %v6547 = vld [vmem:[#allocation3 + $0x18] sm:$0xc]
    %v6552 = vrot.slane %v6540, 4
    %v6553 = vrot.slane %v6541, 4
    %v6554 = vrot.slane %v6542, 4
    %v6555 = vrot.slane %v6543, 4
    %v6560 = vsel %vm1610, %v6552, %v6544
    %v6561 = vsel %vm1610, %v6553, %v6545
    %v6562 = vsel %vm1610, %v6554, %v6546
    %v6563 = vsel %vm1610, %v6555, %v6547
    %v6564 = vsel %vm1053, %v6539, 0.0
    %v6565 = vsel %vm1054, %v6539, 0.0
    %v6566 = vpack.c.bf16 %v6564, %v6564
    %v6567 = vpack.c.bf16 %v6565, %v6565
    %6568 = vmatpush.bf16.msra.mxu0 %v4905
    %6569 = vmatpush.bf16.msra.mxu0 %v4901
    %6570 = vmatpush.bf16.msra.mxu0 %v4897
    %6571 = vmatpush.bf16.msra.mxu0 %v4893
    %6572 = vmatpush.bf16.msra.mxu0 %v4889
    %6573 = vmatpush.bf16.msra.mxu0 %v4885
    %6574 = vmatpush.bf16.msra.mxu0 %v4881
    %6575 = vmatpush.bf16.msra.mxu0 %v4877
    %6576 = vmatmul.bf16.gmra.mxu0 %v6566
    %v6577 = vpop.f32.mrf.mxu0
    %v6578 = vadd.f32 0.0, %v6577
    %v6579 = vpop.f32.mrf.mxu0
    %6580 = vdwg.mxu0
    %6581 = vmatpush.bf16.msra.mxu0 %v4937
    %6582 = vmatpush.bf16.msra.mxu0 %v4933
    %6583 = vmatpush.bf16.msra.mxu0 %v4929
    %6584 = vmatpush.bf16.msra.mxu0 %v4925
    %6585 = vmatpush.bf16.msra.mxu0 %v4921
    %6586 = vmatpush.bf16.msra.mxu0 %v4917
    %6587 = vmatpush.bf16.msra.mxu0 %v4913
    %6588 = vmatpush.bf16.msra.mxu0 %v4909
    %6589 = vmatmul.bf16.gmra.mxu0 %v6567
    %v6590 = vpop.f32.mrf.mxu0
    %v6591 = vadd.f32 %v6578, %v6590
    %v6592 = vpop.f32.mrf.mxu0
    %6593 = vdwg.mxu0
    %6594 = vmatpush.bf16.msra.mxu0 %v4906
    %6595 = vmatpush.bf16.msra.mxu0 %v4902
    %6596 = vmatpush.bf16.msra.mxu0 %v4898
    %6597 = vmatpush.bf16.msra.mxu0 %v4894
    %6598 = vmatpush.bf16.msra.mxu0 %v4890
    %6599 = vmatpush.bf16.msra.mxu0 %v4886
    %6600 = vmatpush.bf16.msra.mxu0 %v4882
    %6601 = vmatpush.bf16.msra.mxu0 %v4878
    %6602 = vmatmul.bf16.gmra.mxu0 %v6566
    %v6603 = vpop.f32.mrf.mxu0
    %v6604 = vadd.f32 0.0, %v6603
    %v6605 = vpop.f32.mrf.mxu0
    %6606 = vdwg.mxu0
    %6607 = vmatpush.bf16.msra.mxu0 %v4938
    %6608 = vmatpush.bf16.msra.mxu0 %v4934
    %6609 = vmatpush.bf16.msra.mxu0 %v4930
    %6610 = vmatpush.bf16.msra.mxu0 %v4926
    %6611 = vmatpush.bf16.msra.mxu0 %v4922
    %6612 = vmatpush.bf16.msra.mxu0 %v4918
    %6613 = vmatpush.bf16.msra.mxu0 %v4914
    %6614 = vmatpush.bf16.msra.mxu0 %v4910
    %6615 = vmatmul.bf16.gmra.mxu0 %v6567
    %v6616 = vpop.f32.mrf.mxu0
    %v6617 = vadd.f32 %v6604, %v6616
    %v6618 = vpop.f32.mrf.mxu0
    %6619 = vdwg.mxu0
    %6620 = vmatpush.bf16.msra.mxu0 %v4907
    %6621 = vmatpush.bf16.msra.mxu0 %v4903
    %6622 = vmatpush.bf16.msra.mxu0 %v4899
    %6623 = vmatpush.bf16.msra.mxu0 %v4895
    %6624 = vmatpush.bf16.msra.mxu0 %v4891
    %6625 = vmatpush.bf16.msra.mxu0 %v4887
    %6626 = vmatpush.bf16.msra.mxu0 %v4883
    %6627 = vmatpush.bf16.msra.mxu0 %v4879
    %6628 = vmatmul.bf16.gmra.mxu0 %v6566
    %v6629 = vpop.f32.mrf.mxu0
    %v6630 = vadd.f32 0.0, %v6629
    %v6631 = vpop.f32.mrf.mxu0
    %6632 = vdwg.mxu0
    %6633 = vmatpush.bf16.msra.mxu0 %v4939
    %6634 = vmatpush.bf16.msra.mxu0 %v4935
    %6635 = vmatpush.bf16.msra.mxu0 %v4931
    %6636 = vmatpush.bf16.msra.mxu0 %v4927
    %6637 = vmatpush.bf16.msra.mxu0 %v4923
    %6638 = vmatpush.bf16.msra.mxu0 %v4919
    %6639 = vmatpush.bf16.msra.mxu0 %v4915
    %6640 = vmatpush.bf16.msra.mxu0 %v4911
    %6641 = vmatmul.bf16.gmra.mxu0 %v6567
    %v6642 = vpop.f32.mrf.mxu0
    %v6643 = vadd.f32 %v6630, %v6642
    %v6644 = vpop.f32.mrf.mxu0
    %6645 = vdwg.mxu0
    %6646 = vmatpush.bf16.msra.mxu0 %v4908
    %6647 = vmatpush.bf16.msra.mxu0 %v4904
    %6648 = vmatpush.bf16.msra.mxu0 %v4900
    %6649 = vmatpush.bf16.msra.mxu0 %v4896
    %6650 = vmatpush.bf16.msra.mxu0 %v4892
    %6651 = vmatpush.bf16.msra.mxu0 %v4888
    %6652 = vmatpush.bf16.msra.mxu0 %v4884
    %6653 = vmatpush.bf16.msra.mxu0 %v4880
    %6654 = vmatmul.bf16.gmra.mxu0 %v6566
    %v6655 = vpop.f32.mrf.mxu0
    %v6656 = vadd.f32 0.0, %v6655
    %v6657 = vpop.f32.mrf.mxu0
    %6658 = vdwg.mxu0
    %6659 = vmatpush.bf16.msra.mxu0 %v4940
    %6660 = vmatpush.bf16.msra.mxu0 %v4936
    %6661 = vmatpush.bf16.msra.mxu0 %v4932
    %6662 = vmatpush.bf16.msra.mxu0 %v4928
    %6663 = vmatpush.bf16.msra.mxu0 %v4924
    %6664 = vmatpush.bf16.msra.mxu0 %v4920
    %6665 = vmatpush.bf16.msra.mxu0 %v4916
    %6666 = vmatpush.bf16.msra.mxu0 %v4912
    %6667 = vmatmul.bf16.gmra.mxu0 %v6567
    %v6668 = vpop.f32.mrf.mxu0
    %v6669 = vadd.f32 %v6656, %v6668
    %v6670 = vpop.f32.mrf.mxu0
    %6671 = vdwg.mxu0
    %v6672 = vadd.f32 %v6560, %v6591
    %v6673 = vadd.f32 %v6561, %v6617
    %v6674 = vadd.f32 %v6562, %v6643
    %v6675 = vadd.f32 %v6563, %v6669
    %v6676 = vxor.u32 %v6672, 2147483648
    %v6677 = vmul.f32 %v6676, 1.442695
    %v6678 = vpow.pop %v6677
    %v6679 = vadd.f32 %v6678, 1.0
    %v6680 = vrcp.pop %v6679
    %v6681 = vmul.f32 %v6679, %v6680
    %v6682 = vsub.f32 1.0, %v6681
    %v6683 = vmul.f32 %v6680, %v6682
    %v6684 = vadd.f32 %v6680, %v6683
    %vm6685 = vweird.f32 %v6679
    %vm6686 = vweird.f32 %v6680
    %vm6687 = vmor %vm6685, %vm6686
    %v6688 = vsel %vm6687, %v6680, %v6684
    %v6689 = vand.u32 2147483647, %v6679
    %vm6690 = vcmp.eq.f32.partialorder %v6689, 8.507059e+37
    %v6691 = vand.u32 %v6679, 2147483648
    %v6692 = vor.u32 1.1754944e-38, %v6691
    %v6693 = vsel %vm6690, %v6692, %v6688
    %v6694 = vmul.f32 1.0, %v6693
    %v6695 = vxor.u32 %v6673, 2147483648
    %v6696 = vmul.f32 %v6695, 1.442695
    %v6697 = vpow.pop %v6696
    %v6698 = vadd.f32 %v6697, 1.0
    %v6699 = vrcp.pop %v6698
    %v6700 = vmul.f32 %v6698, %v6699
    %v6701 = vsub.f32 1.0, %v6700
    %v6702 = vmul.f32 %v6699, %v6701
    %v6703 = vadd.f32 %v6699, %v6702
    %vm6704 = vweird.f32 %v6698
    %vm6705 = vweird.f32 %v6699
    %vm6706 = vmor %vm6704, %vm6705
    %v6707 = vsel %vm6706, %v6699, %v6703
    %v6708 = vand.u32 2147483647, %v6698
    %vm6709 = vcmp.eq.f32.partialorder %v6708, 8.507059e+37
    %v6710 = vand.u32 %v6698, 2147483648
    %v6711 = vor.u32 1.1754944e-38, %v6710
    %v6712 = vsel %vm6709, %v6711, %v6707
    %v6713 = vmul.f32 1.0, %v6712
    %v6714 = vtanh.pop %v6674
    %v6715 = vxor.u32 %v6675, 2147483648
    %v6716 = vmul.f32 %v6715, 1.442695
    %v6717 = vpow.pop %v6716
    %v6718 = vadd.f32 %v6717, 1.0
    %v6719 = vrcp.pop %v6718
    %v6720 = vmul.f32 %v6718, %v6719
    %v6721 = vsub.f32 1.0, %v6720
    %v6722 = vmul.f32 %v6719, %v6721
    %v6723 = vadd.f32 %v6719, %v6722
    %vm6724 = vweird.f32 %v6718
    %vm6725 = vweird.f32 %v6719
    %vm6726 = vmor %vm6724, %vm6725
    %v6727 = vsel %vm6726, %v6719, %v6723
    %v6728 = vand.u32 2147483647, %v6718
    %vm6729 = vcmp.eq.f32.partialorder %v6728, 8.507059e+37
    %v6730 = vand.u32 %v6718, 2147483648
    %v6731 = vor.u32 1.1754944e-38, %v6730
    %v6732 = vsel %vm6729, %v6731, %v6727
    %v6733 = vmul.f32 1.0, %v6732
    %v6734 = vmul.f32 %v6713, %v6505
    %v6735 = vmul.f32 %v6694, %v6714
    %v6736 = vadd.f32 %v6734, %v6735
    %v6737 = vmax.f32 %v6736, -3.0
    %v6738 = vmin.f32 %v6737, 3.0
    %v6739 = vtanh.pop %v6738
    %v6740 = vmul.f32 %v6733, %v6739
    %v6741 = vsel %vm1053, %v6740, 0.0
    %v6742 = vsel %vm1054, %v6740, 0.0
    %v6743 = vpack.c.bf16 %v6741, %v6741
    %v6744 = vpack.c.bf16 %v6742, %v6742
    %6745 = vmatpush.bf16.msra.mxu0 %v5286
    %6746 = vmatpush.bf16.msra.mxu0 %v5285
    %6747 = vmatpush.bf16.msra.mxu0 %v5284
    %6748 = vmatpush.bf16.msra.mxu0 %v5283
    %6749 = vmatpush.bf16.msra.mxu0 %v5282
    %6750 = vmatpush.bf16.msra.mxu0 %v5281
    %6751 = vmatpush.bf16.msra.mxu0 %v5280
    %6752 = vmatpush.bf16.msra.mxu0 %v5279
    %6753 = vmatmul.bf16.gmra.mxu0 %v6743
    %v6754 = vpop.f32.mrf.mxu0
    %v6755 = vadd.f32 0.0, %v6754
    %v6756 = vpop.f32.mrf.mxu0
    %6757 = vdwg.mxu0
    %6758 = vmatpush.bf16.msra.mxu0 %v5294
    %6759 = vmatpush.bf16.msra.mxu0 %v5293
    %6760 = vmatpush.bf16.msra.mxu0 %v5292
    %6761 = vmatpush.bf16.msra.mxu0 %v5291
    %6762 = vmatpush.bf16.msra.mxu0 %v5290
    %6763 = vmatpush.bf16.msra.mxu0 %v5289
    %6764 = vmatpush.bf16.msra.mxu0 %v5288
    %6765 = vmatpush.bf16.msra.mxu0 %v5287
    %6766 = vmatmul.bf16.gmra.mxu0 %v6744
    %v6767 = vpop.f32.mrf.mxu0
    %v6768 = vadd.f32 %v6755, %v6767
    %v6769 = vpop.f32.mrf.mxu0
    %6770 = vdwg.mxu0
    %v6771 = vmax.f32 %v6768, -3.0
    %v6772 = vmin.f32 %v6771, 3.0
    %v6773 = vld [vmem:[#allocation2 + $0x20] sm:$0xc0]
    %v6774 = vld [vmem:[#allocation2 + $0x28] sm:$0xc0]
    %v6775 = vld [vmem:[#allocation2 + $0x30] sm:$0xc0]
    %v6776 = vld [vmem:[#allocation2 + $0x38] sm:$0xc0]
    %v6777 = vld [vmem:[#allocation3] sm:$0x3]
    %v6778 = vld [vmem:[#allocation3 + $0x8] sm:$0x3]
    %v6779 = vld [vmem:[#allocation3 + $0x10] sm:$0x3]
    %v6780 = vld [vmem:[#allocation3 + $0x18] sm:$0x3]
    %v6785 = vrot.slane %v6773, 6
    %v6786 = vrot.slane %v6774, 6
    %v6787 = vrot.slane %v6775, 6
    %v6788 = vrot.slane %v6776, 6
    %v6797 = vrot.slane %v6777, 6
    %v6798 = vrot.slane %v6778, 6
    %v6799 = vrot.slane %v6779, 6
    %v6800 = vrot.slane %v6780, 6
    %v6805 = vsel %vm1610, %v6785, %v6797
    %v6806 = vsel %vm1610, %v6786, %v6798
    %v6807 = vsel %vm1610, %v6787, %v6799
    %v6808 = vsel %vm1610, %v6788, %v6800
    %v6809 = vsel %vm1053, %v6772, 0.0
    %v6810 = vsel %vm1054, %v6772, 0.0
    %v6811 = vpack.c.bf16 %v6809, %v6809
    %v6812 = vpack.c.bf16 %v6810, %v6810
    %6813 = vmatpush.bf16.msra.mxu0 %v4905
    %6814 = vmatpush.bf16.msra.mxu0 %v4901
    %6815 = vmatpush.bf16.msra.mxu0 %v4897
    %6816 = vmatpush.bf16.msra.mxu0 %v4893
    %6817 = vmatpush.bf16.msra.mxu0 %v4889
    %6818 = vmatpush.bf16.msra.mxu0 %v4885
    %6819 = vmatpush.bf16.msra.mxu0 %v4881
    %6820 = vmatpush.bf16.msra.mxu0 %v4877
    %6821 = vmatmul.bf16.gmra.mxu0 %v6811
    %v6822 = vpop.f32.mrf.mxu0
    %v6823 = vadd.f32 0.0, %v6822
    %v6824 = vpop.f32.mrf.mxu0
    %6825 = vdwg.mxu0
    %6826 = vmatpush.bf16.msra.mxu0 %v4937
    %6827 = vmatpush.bf16.msra.mxu0 %v4933
    %6828 = vmatpush.bf16.msra.mxu0 %v4929
    %6829 = vmatpush.bf16.msra.mxu0 %v4925
    %6830 = vmatpush.bf16.msra.mxu0 %v4921
    %6831 = vmatpush.bf16.msra.mxu0 %v4917
    %6832 = vmatpush.bf16.msra.mxu0 %v4913
    %6833 = vmatpush.bf16.msra.mxu0 %v4909
    %6834 = vmatmul.bf16.gmra.mxu0 %v6812
    %v6835 = vpop.f32.mrf.mxu0
    %v6836 = vadd.f32 %v6823, %v6835
    %v6837 = vpop.f32.mrf.mxu0
    %6838 = vdwg.mxu0
    %6839 = vmatpush.bf16.msra.mxu0 %v4906
    %6840 = vmatpush.bf16.msra.mxu0 %v4902
    %6841 = vmatpush.bf16.msra.mxu0 %v4898
    %6842 = vmatpush.bf16.msra.mxu0 %v4894
    %6843 = vmatpush.bf16.msra.mxu0 %v4890
    %6844 = vmatpush.bf16.msra.mxu0 %v4886
    %6845 = vmatpush.bf16.msra.mxu0 %v4882
    %6846 = vmatpush.bf16.msra.mxu0 %v4878
    %6847 = vmatmul.bf16.gmra.mxu0 %v6811
    %v6848 = vpop.f32.mrf.mxu0
    %v6849 = vadd.f32 0.0, %v6848
    %v6850 = vpop.f32.mrf.mxu0
    %6851 = vdwg.mxu0
    %6852 = vmatpush.bf16.msra.mxu0 %v4938
    %6853 = vmatpush.bf16.msra.mxu0 %v4934
    %6854 = vmatpush.bf16.msra.mxu0 %v4930
    %6855 = vmatpush.bf16.msra.mxu0 %v4926
    %6856 = vmatpush.bf16.msra.mxu0 %v4922
    %6857 = vmatpush.bf16.msra.mxu0 %v4918
    %6858 = vmatpush.bf16.msra.mxu0 %v4914
    %6859 = vmatpush.bf16.msra.mxu0 %v4910
    %6860 = vmatmul.bf16.gmra.mxu0 %v6812
    %v6861 = vpop.f32.mrf.mxu0
    %v6862 = vadd.f32 %v6849, %v6861
    %v6863 = vpop.f32.mrf.mxu0
    %6864 = vdwg.mxu0
    %6865 = vmatpush.bf16.msra.mxu0 %v4907
    %6866 = vmatpush.bf16.msra.mxu0 %v4903
    %6867 = vmatpush.bf16.msra.mxu0 %v4899
    %6868 = vmatpush.bf16.msra.mxu0 %v4895
    %6869 = vmatpush.bf16.msra.mxu0 %v4891
    %6870 = vmatpush.bf16.msra.mxu0 %v4887
    %6871 = vmatpush.bf16.msra.mxu0 %v4883
    %6872 = vmatpush.bf16.msra.mxu0 %v4879
    %6873 = vmatmul.bf16.gmra.mxu0 %v6811
    %v6874 = vpop.f32.mrf.mxu0
    %v6875 = vadd.f32 0.0, %v6874
    %v6876 = vpop.f32.mrf.mxu0
    %6877 = vdwg.mxu0
    %6878 = vmatpush.bf16.msra.mxu0 %v4939
    %6879 = vmatpush.bf16.msra.mxu0 %v4935
    %6880 = vmatpush.bf16.msra.mxu0 %v4931
    %6881 = vmatpush.bf16.msra.mxu0 %v4927
    %6882 = vmatpush.bf16.msra.mxu0 %v4923
    %6883 = vmatpush.bf16.msra.mxu0 %v4919
    %6884 = vmatpush.bf16.msra.mxu0 %v4915
    %6885 = vmatpush.bf16.msra.mxu0 %v4911
    %6886 = vmatmul.bf16.gmra.mxu0 %v6812
    %v6887 = vpop.f32.mrf.mxu0
    %v6888 = vadd.f32 %v6875, %v6887
    %v6889 = vpop.f32.mrf.mxu0
    %6890 = vdwg.mxu0
    %6891 = vmatpush.bf16.msra.mxu0 %v4908
    %6892 = vmatpush.bf16.msra.mxu0 %v4904
    %6893 = vmatpush.bf16.msra.mxu0 %v4900
    %6894 = vmatpush.bf16.msra.mxu0 %v4896
    %6895 = vmatpush.bf16.msra.mxu0 %v4892
    %6896 = vmatpush.bf16.msra.mxu0 %v4888
    %6897 = vmatpush.bf16.msra.mxu0 %v4884
    %6898 = vmatpush.bf16.msra.mxu0 %v4880
    %6899 = vmatmul.bf16.gmra.mxu0 %v6811
    %v6900 = vpop.f32.mrf.mxu0
    %v6901 = vadd.f32 0.0, %v6900
    %v6902 = vpop.f32.mrf.mxu0
    %6903 = vdwg.mxu0
    %6904 = vmatpush.bf16.msra.mxu0 %v4940
    %6905 = vmatpush.bf16.msra.mxu0 %v4936
    %6906 = vmatpush.bf16.msra.mxu0 %v4932
    %6907 = vmatpush.bf16.msra.mxu0 %v4928
    %6908 = vmatpush.bf16.msra.mxu0 %v4924
    %6909 = vmatpush.bf16.msra.mxu0 %v4920
    %6910 = vmatpush.bf16.msra.mxu0 %v4916
    %6911 = vmatpush.bf16.msra.mxu0 %v4912
    %6912 = vmatmul.bf16.gmra.mxu0 %v6812
    %v6913 = vpop.f32.mrf.mxu0
    %v6914 = vadd.f32 %v6901, %v6913
    %v6915 = vpop.f32.mrf.mxu0
    %6916 = vdwg.mxu0
    %v6917 = vadd.f32 %v6805, %v6836
    %v6918 = vadd.f32 %v6806, %v6862
    %v6919 = vadd.f32 %v6807, %v6888
    %v6920 = vadd.f32 %v6808, %v6914
    %v6921 = vxor.u32 %v6917, 2147483648
    %v6922 = vmul.f32 %v6921, 1.442695
    %v6923 = vpow.pop %v6922
    %v6924 = vadd.f32 %v6923, 1.0
    %v6925 = vrcp.pop %v6924
    %v6926 = vmul.f32 %v6924, %v6925
    %v6927 = vsub.f32 1.0, %v6926
    %v6928 = vmul.f32 %v6925, %v6927
    %v6929 = vadd.f32 %v6925, %v6928
    %vm6930 = vweird.f32 %v6924
    %vm6931 = vweird.f32 %v6925
    %vm6932 = vmor %vm6930, %vm6931
    %v6933 = vsel %vm6932, %v6925, %v6929
    %v6934 = vand.u32 2147483647, %v6924
    %vm6935 = vcmp.eq.f32.partialorder %v6934, 8.507059e+37
    %v6936 = vand.u32 %v6924, 2147483648
    %v6937 = vor.u32 1.1754944e-38, %v6936
    %v6938 = vsel %vm6935, %v6937, %v6933
    %v6939 = vmul.f32 1.0, %v6938
    %v6940 = vxor.u32 %v6918, 2147483648
    %v6941 = vmul.f32 %v6940, 1.442695
    %v6942 = vpow.pop %v6941
    %v6943 = vadd.f32 %v6942, 1.0
    %v6944 = vrcp.pop %v6943
    %v6945 = vmul.f32 %v6943, %v6944
    %v6946 = vsub.f32 1.0, %v6945
    %v6947 = vmul.f32 %v6944, %v6946
    %v6948 = vadd.f32 %v6944, %v6947
    %vm6949 = vweird.f32 %v6943
    %vm6950 = vweird.f32 %v6944
    %vm6951 = vmor %vm6949, %vm6950
    %v6952 = vsel %vm6951, %v6944, %v6948
    %v6953 = vand.u32 2147483647, %v6943
    %vm6954 = vcmp.eq.f32.partialorder %v6953, 8.507059e+37
    %v6955 = vand.u32 %v6943, 2147483648
    %v6956 = vor.u32 1.1754944e-38, %v6955
    %v6957 = vsel %vm6954, %v6956, %v6952
    %v6958 = vmul.f32 1.0, %v6957
    %v6959 = vtanh.pop %v6919
    %v6960 = vxor.u32 %v6920, 2147483648
    %v6961 = vmul.f32 %v6960, 1.442695
    %v6962 = vpow.pop %v6961
    %v6963 = vadd.f32 %v6962, 1.0
    %v6964 = vrcp.pop %v6963
    %v6965 = vmul.f32 %v6963, %v6964
    %v6966 = vsub.f32 1.0, %v6965
    %v6967 = vmul.f32 %v6964, %v6966
    %v6968 = vadd.f32 %v6964, %v6967
    %vm6969 = vweird.f32 %v6963
    %vm6970 = vweird.f32 %v6964
    %vm6971 = vmor %vm6969, %vm6970
    %v6972 = vsel %vm6971, %v6964, %v6968
    %v6973 = vand.u32 2147483647, %v6963
    %vm6974 = vcmp.eq.f32.partialorder %v6973, 8.507059e+37
    %v6975 = vand.u32 %v6963, 2147483648
    %v6976 = vor.u32 1.1754944e-38, %v6975
    %v6977 = vsel %vm6974, %v6976, %v6972
    %v6978 = vmul.f32 1.0, %v6977
    %v6979 = vmul.f32 %v6958, %v6738
    %v6980 = vmul.f32 %v6939, %v6959
    %v6981 = vadd.f32 %v6979, %v6980
    %v6982 = vmax.f32 %v6981, -3.0
    %v6983 = vmin.f32 %v6982, 3.0
    %v6984 = vtanh.pop %v6983
    %v6985 = vmul.f32 %v6978, %v6984
    %v6986 = vsel %vm1053, %v6985, 0.0
    %v6987 = vsel %vm1054, %v6985, 0.0
    %v6988 = vpack.c.bf16 %v6986, %v6986
    %v6989 = vpack.c.bf16 %v6987, %v6987
    %6990 = vmatpush.bf16.msra.mxu0 %v5286
    %6991 = vmatpush.bf16.msra.mxu0 %v5285
    %6992 = vmatpush.bf16.msra.mxu0 %v5284
    %6993 = vmatpush.bf16.msra.mxu0 %v5283
    %6994 = vmatpush.bf16.msra.mxu0 %v5282
    %6995 = vmatpush.bf16.msra.mxu0 %v5281
    %6996 = vmatpush.bf16.msra.mxu0 %v5280
    %6997 = vmatpush.bf16.msra.mxu0 %v5279
    %6998 = vmatmul.bf16.gmra.mxu0 %v6988
    %v6999 = vpop.f32.mrf.mxu0
    %v7000 = vadd.f32 0.0, %v6999
    %v7001 = vpop.f32.mrf.mxu0
    %7002 = vdwg.mxu0
    %7003 = vmatpush.bf16.msra.mxu0 %v5294
    %7004 = vmatpush.bf16.msra.mxu0 %v5293
    %7005 = vmatpush.bf16.msra.mxu0 %v5292
    %7006 = vmatpush.bf16.msra.mxu0 %v5291
    %7007 = vmatpush.bf16.msra.mxu0 %v5290
    %7008 = vmatpush.bf16.msra.mxu0 %v5289
    %7009 = vmatpush.bf16.msra.mxu0 %v5288
    %7010 = vmatpush.bf16.msra.mxu0 %v5287
    %7011 = vmatmul.bf16.gmra.mxu0 %v6989
    %v7012 = vpop.f32.mrf.mxu0
    %v7013 = vadd.f32 %v7000, %v7012
    %v7014 = vpop.f32.mrf.mxu0
    %7015 = vdwg.mxu0
    %v7016 = vmax.f32 %v7013, -3.0
    %v7017 = vmin.f32 %v7016, 3.0
    %v7019 = vrot.slane %v5583, 6
    %v7022 = vrot.slane %v5816, 4
    %v7025 = vrot.slane %v6061, 2
    %v7028 = vrot.slane %v6539, 6
    %v7031 = vrot.slane %v6772, 4
    %v7034 = vrot.slane %v7017, 2
    %v7036 = vsel %vm1610, %v5338, %v7019
    %v7037 = vsel %vm4031, %v7036, %v7022
    %v7038 = vsel %vm4033, %v7037, %v7025
    %v7039 = vsel %vm1610, %v6294, %v7028
    %v7040 = vsel %vm4031, %v7039, %v7031
    %v7041 = vsel %vm4033, %v7040, %v7034
    %v7043 = vrot.slane %v6294, 4
    %v7046 = vrot.slane %v5338, 4
    %v7048 = vsel %vm1610, %v7034, %v6772
    %v7049 = vsel %vm4031, %v7048, %v7028
    %v7050 = vsel %vm4033, %v7049, %v7043
    %v7051 = vsel %vm1610, %v7025, %v5816
    %v7052 = vsel %vm4031, %v7051, %v7019
    %v7053 = vsel %vm4033, %v7052, %v7046
    %v7054 = vld [vmem:[#allocation4] sm:$0xff]
    %v7055 = vld [vmem:[#allocation4 + $0x8] sm:$0xff]
    %v7056 = vadd.f32 %v7038, %v7054
    %v7057 = vadd.f32 %v7041, %v7055
    %v7058 = vld [vmem:[#allocation5] sm:$0xff]
    %v7059 = vld [vmem:[#allocation5 + $0x8] sm:$0xff]
    %v7060 = vadd.f32 %v7050, %v7058
    %v7061 = vadd.f32 %v7053, %v7059
    %7062 = vst [vmem:[%s16] sm:$0xff] %v7056
    %7063 = vst [vmem:[%s16 + $0x8] sm:$0xff] %v7060
    %7064 = vst [vmem:[%s16 + $0x10] sm:$0xff] %v7057
    %7065 = vst [vmem:[%s16 + $0x18] sm:$0xff] %v7061
    // Predicated region
    $region90: #{elmo_forward.1} parent=1 // pred_check
      _
    $region91: #{elmo_forward.1} parent=1 // pred_check_branch
      %7067 = sbr.rel (0) target = $region93
    $region92: #{elmo_forward.1} parent=1 // pred_region
      _
    $region93: #{elmo_forward.1} parent=1 // pred_fallthru
      _
    // Predicated region
    $region94: #{elmo_forward.1} parent=1 // pred_check
      _
    $region95: #{elmo_forward.1} parent=1 // pred_check_branch
      %7069 = sbr.rel (0) target = $region97
    $region96: #{elmo_forward.1} parent=1 // pred_region
      _
    $region97: #{elmo_forward.1} parent=1 // pred_fallthru
      _
    %7070 = vsyncpa [#allocation7], 1
    %7071 = vsyncpa [#allocation9], 1
    %7072 = vsyncpa [#allocation12], 1
    %7073 = vsyncpa [#allocation15], 1

</llo_original>
